<compile_context>
chip_gen: v7x
topology: tpu7x:2x2x1
jax: 0.10.0
libtpu: 0.0.40
codegen_flags: <defaults>
</compile_context>

<pallas_src>
import functools
import math

import jax
import jax.numpy as jnp
from jax.experimental import pallas as pl
from jax.experimental.pallas import tpu as pltpu

LORA_R = 4
LORA_ALPHA = 16
LORA_SCALE = float(LORA_ALPHA) / float(LORA_R)


def _bf16(x):
    return x.astype(jnp.bfloat16)


def _layernorm(x, g, b, eps=1e-5):
    mu = jnp.mean(x, axis=-1, keepdims=True)
    var = jnp.mean(jnp.square(x - mu), axis=-1, keepdims=True)
    return (x - mu) * jax.lax.rsqrt(var + eps) * g + b


# ------------------------- fused whole-model kernel -------------------------

def _svgd_kernel(xp_ref,
                 patch_w_ref, cls_ref, pos_ref, lnpre_g_ref, lnpre_b_ref,
                 ln1g_ref, ln1b_ref, qkvw_ref, qkvb_ref, outw_ref, outb_ref,
                 ln2g_ref, ln2b_ref, wfc_ref, bfc_ref, wpj_ref, bpj_ref,
                 lnpost_g_ref, lnpost_b_ref, headw_ref, headb_ref,
                 o_ref,
                 x_scr,
                 *, layers, heads, dh, scale):
    """Entire forward pass of ONE particle (grid index) for the full batch.

    Activations live in the x_scr VMEM scratch; weights for this particle are
    the (1, ...) / (1, L, ...) blocks selected by the index_maps.
    """
    N, P2, _ = xp_ref.shape
    W = heads * dh

    # ---- patch embed + [cls] token + positional embedding + ln_pre ----
    pos = pos_ref[0]                                   # (S, W) f32
    g0 = lnpre_g_ref[0]
    b0 = lnpre_b_ref[0]
    cls_row = _layernorm(cls_ref[0] + pos[0:1, :], g0, b0)          # (1, W)
    pw = patch_w_ref[0]                                # (PD, W) bf16
    for n in range(N):
        patches = jnp.dot(_bf16(xp_ref[n]), pw,
                          preferred_element_type=jnp.float32)       # (P2, W)
        x_scr[n, 0:1, :] = cls_row
        x_scr[n, 1:, :] = _layernorm(patches + pos[1:, :], g0, b0)

    # ---- transformer blocks (weights for all layers already in VMEM) ----
    for l in range(layers):
        ln1g = ln1g_ref[0, l]
        ln1b = ln1b_ref[0, l]
        wqkv = qkvw_ref[0, l]                          # (W, 3W) bf16
        bqkv = qkvb_ref[0, l]
        wout = outw_ref[0, l]                          # (W, W) bf16
        bout = outb_ref[0, l]
        ln2g = ln2g_ref[0, l]
        ln2b = ln2b_ref[0, l]
        wfc = wfc_ref[0, l]                            # (W, 4W) bf16 (LoRA folded)
        bfc = bfc_ref[0, l]
        wpj = wpj_ref[0, l]                            # (4W, W) bf16 (LoRA folded)
        bpj = bpj_ref[0, l]

        for n in range(N):
            x = x_scr[n]                               # (S, W) f32

            # -- attention --
            h = _layernorm(x, ln1g, ln1b)
            qkv = (jnp.dot(_bf16(h), wqkv,
                           preferred_element_type=jnp.float32) + bqkv)   # (S, 3W)
            # Accumulate the out-projection head-by-head:
            #   att @ Wout == sum_h head_out_h @ Wout[h*dh:(h+1)*dh, :]
            attn = jnp.zeros((x.shape[0], W), jnp.float32)
            for hd in range(heads):
                q = _bf16(qkv[:, hd * dh:(hd + 1) * dh])
                k = _bf16(qkv[:, W + hd * dh:W + (hd + 1) * dh])
                v = _bf16(qkv[:, 2 * W + hd * dh:2 * W + (hd + 1) * dh])
                s = jax.lax.dot_general(q, k, (((1,), (1,)), ((), ())),
                                        preferred_element_type=jnp.float32)
                s = s * scale
                s = s - jnp.max(s, axis=-1, keepdims=True)
                pr = jnp.exp(s)                                          # f32
                pr = pr * pl.reciprocal(jnp.sum(pr, axis=-1, keepdims=True),
                                        approx=True)
                ho = jnp.dot(_bf16(pr), v,
                             preferred_element_type=jnp.float32)         # (S, dh)
                attn = attn + jnp.dot(
                    _bf16(ho), wout[hd * dh:(hd + 1) * dh, :],
                    preferred_element_type=jnp.float32)
            x = x + attn + bout

            # -- MLP (QuickGELU, LoRA pre-folded) --
            h = _layernorm(x, ln2g, ln2b)
            a = (jnp.dot(_bf16(h), wfc,
                         preferred_element_type=jnp.float32) + bfc)
            a = a * jax.nn.sigmoid(1.702 * a)
            y = (jnp.dot(_bf16(a), wpj,
                         preferred_element_type=jnp.float32) + bpj)
            x_scr[n] = x + y

    # ---- ln_post on the class token + classification head (padded lanes) ----
    gpo = lnpost_g_ref[0]
    bpo = lnpost_b_ref[0]
    hw = headw_ref[0]                                  # (W, Cpad) bf16
    hb = headb_ref[0]
    for n in range(N):
        feat = _layernorm(x_scr[n, 0:1, :], gpo, bpo)                  # (1, W)
        o_ref[0, n:n + 1, :] = (jnp.dot(_bf16(feat), hw,
                                        preferred_element_type=jnp.float32) + hb)


def svgd_forward(stacked, image):
    """SVGD.forward: run every particle (one fused kernel, particle grid) and
    average the logits."""
    cfg = stacked["cfg"]
    heads, patch, in_ch, img = cfg["heads"], cfg["patch"], cfg["in_ch"], cfg["img"]
    W, L, Cpad = cfg["width"], cfg["layers"], cfg["pad_classes"]
    Pn = stacked["patch_w"].shape[0]
    N = image.shape[0]
    G = img // patch
    dh = W // heads

    # Patch extraction is pure layout plumbing; the embedding matmul runs
    # in-kernel.  TODO(synk): with a real checkpoint this flatten order must
    # match how the torch conv1 weight is reshaped.
    xp = image.reshape(N, in_ch, G, patch, G, patch)
    xp = xp.transpose(0, 2, 4, 1, 3, 5).reshape(N, G * G, in_ch * patch * patch)
    P2, PD = xp.shape[1], xp.shape[2]
    S = P2 + 1

    def pspec(*dims):
        nrest = len(dims)
        return pl.BlockSpec((1,) + tuple(dims),
                            lambda p, _n=nrest: (p,) + (0,) * _n)

    kern = functools.partial(_svgd_kernel, layers=L, heads=heads, dh=dh,
                             scale=1.0 / math.sqrt(dh))

    logits_pad = pl.pallas_call(
        kern,
        out_shape=jax.ShapeDtypeStruct((Pn, N, Cpad), jnp.float32),
        grid=(Pn,),
        in_specs=[
            pl.BlockSpec((N, P2, PD), lambda p: (0, 0, 0)),   # patches (shared)
            pspec(PD, W),                                     # patch_w
            pspec(1, W), pspec(S, W),                         # cls, pos
            pspec(1, W), pspec(1, W),                         # ln_pre g/b
            pspec(L, 1, W), pspec(L, 1, W),                   # ln1 g/b
            pspec(L, W, 3 * W), pspec(L, 1, 3 * W),           # qkv w/b
            pspec(L, W, W), pspec(L, 1, W),                   # out-proj w/b
            pspec(L, 1, W), pspec(L, 1, W),                   # ln2 g/b
            pspec(L, W, 4 * W), pspec(L, 1, 4 * W),           # c_fc (folded) w/b
            pspec(L, 4 * W, W), pspec(L, 1, W),               # c_proj (folded) w/b
            pspec(1, W), pspec(1, W),                         # ln_post g/b
            pspec(W, Cpad), pspec(1, Cpad),                   # head w/b (padded)
        ],
        out_specs=pl.BlockSpec((1, N, Cpad), lambda p: (p, 0, 0)),
        scratch_shapes=[pltpu.VMEM((N, S, W), jnp.float32)],
        compiler_params=pltpu.CompilerParams(
            dimension_semantics=("parallel",),
            vmem_limit_bytes=32 * 1024 * 1024),
    )(xp,
      stacked["patch_w"], stacked["cls"], stacked["pos"],
      stacked["ln_pre_g"], stacked["ln_pre_b"],
      stacked["ln1_g"], stacked["ln1_b"],
      stacked["qkv_w"], stacked["qkv_b"],
      stacked["out_w"], stacked["out_b"],
      stacked["ln2_g"], stacked["ln2_b"],
      stacked["w_fc"], stacked["b_fc"],
      stacked["w_proj"], stacked["b_proj"],
      stacked["ln_post_g"], stacked["ln_post_b"],
      stacked["head_w"], stacked["head_b"])

    mean_logits = jnp.mean(logits_pad, axis=0)        # torch.stack(logits).mean(0)
    return mean_logits[:, :cfg["num_classes"]]


# ------------------------- particle params (synthetic) ----------------------

def init_particle_params(seed, *, width=128, layers=2, heads=4, patch=8,
                         in_ch=3, img=16, num_classes=10, r=LORA_R):
    key = jax.random.PRNGKey(seed)
    keys = iter(jax.random.split(key, 64 + 16 * layers))

    def nrm(shape, s=0.02):
        return (s * jax.random.normal(next(keys), shape)).astype(jnp.float32)

    patch_dim = in_ch * patch * patch
    n_tok = (img // patch) ** 2 + 1
    params = {
        "patch_w": nrm((patch_dim, width)),      # conv1 as matmul (bias=False)
        "cls": nrm((1, width)),
        "pos": nrm((n_tok, width)),
        "ln_pre_g": jnp.ones((1, width), jnp.float32),
        "ln_pre_b": jnp.zeros((1, width), jnp.float32),
        "ln_post_g": jnp.ones((1, width), jnp.float32),
        "ln_post_b": jnp.zeros((1, width), jnp.float32),
        "head_w": nrm((width, num_classes)),
        "head_b": jnp.zeros((1, num_classes), jnp.float32),
        "blocks": [],
    }
    for _ in range(layers):
        params["blocks"].append({
            "ln1_g": jnp.ones((1, width), jnp.float32),
            "ln1_b": jnp.zeros((1, width), jnp.float32),
            "qkv_w": nrm((width, 3 * width)),
            "qkv_b": jnp.zeros((1, 3 * width), jnp.float32),
            "out_w": nrm((width, width)),
            "out_b": jnp.zeros((1, width), jnp.float32),
            "ln2_g": jnp.ones((1, width), jnp.float32),
            "ln2_b": jnp.zeros((1, width), jnp.float32),
            "w_fc": nrm((width, 4 * width)),
            "b_fc": jnp.zeros((1, 4 * width), jnp.float32),
            "a_fc": nrm((width, r)),
            # standard LoRA inits B to zero; small nonzero values so the LoRA
            # branch is numerically exercised in this synthetic run.
            "b_fc_lora": nrm((r, 4 * width), 0.01),
            "w_proj": nrm((4 * width, width)),
            "b_proj": jnp.zeros((1, width), jnp.float32),
            "a_proj": nrm((4 * width, r)),
            "b_proj_lora": nrm((r, width), 0.01),
        })
    params["cfg"] = dict(width=width, heads=heads, patch=patch, in_ch=in_ch,
                         img=img, num_classes=num_classes, layers=layers)
    return params


def prep_particle(params, *, pad_classes=128):
    """Inference-time prep: fold rank-4 LoRA into the dense weights, stack the
    per-layer weights along a layer axis, cast MXU weight operands to bf16,
    zero-pad the head to a lane-dense width."""
    cfg = params["cfg"]
    W, C = cfg["width"], cfg["num_classes"]
    blocks = params["blocks"]

    head_w = jnp.zeros((W, pad_classes), jnp.float32).at[:, :C].set(params["head_w"])
    head_b = jnp.zeros((1, pad_classes), jnp.float32).at[:, :C].set(params["head_b"])

    def stack(key_):
        return jnp.stack([blk[key_] for blk in blocks])

    w_fc_eff = jnp.stack([b["w_fc"] + LORA_SCALE * (b["a_fc"] @ b["b_fc_lora"])
                          for b in blocks])
    w_pj_eff = jnp.stack([b["w_proj"] + LORA_SCALE * (b["a_proj"] @ b["b_proj_lora"])
                          for b in blocks])

    return {
        "cfg": dict(cfg, pad_classes=pad_classes),
        "patch_w": _bf16(params["patch_w"]),
        "cls": params["cls"],
        "pos": params["pos"],
        "ln_pre_g": params["ln_pre_g"], "ln_pre_b": params["ln_pre_b"],
        "ln1_g": stack("ln1_g"), "ln1_b": stack("ln1_b"),
        "qkv_w": _bf16(stack("qkv_w")), "qkv_b": stack("qkv_b"),
        "out_w": _bf16(stack("out_w")), "out_b": stack("out_b"),
        "ln2_g": stack("ln2_g"), "ln2_b": stack("ln2_b"),
        "w_fc": _bf16(w_fc_eff), "b_fc": stack("b_fc"),
        "w_proj": _bf16(w_pj_eff), "b_proj": stack("b_proj"),
        "ln_post_g": params["ln_post_g"], "ln_post_b": params["ln_post_b"],
        "head_w": _bf16(head_w), "head_b": head_b,
    }


def stack_particles(prepped):
    """Stack every prepped particle's arrays along a leading particle axis so
    one pallas_call (grid over particles) can index them."""
    cfg = prepped[0]["cfg"]
    stacked = {k: jnp.stack([p[k] for p in prepped])
               for k in prepped[0] if k != "cfg"}
    stacked["cfg"] = dict(cfg, num_particles=len(prepped))
    return stacked


# --------------------------------- main --------------------------------------

if __name__ == "__main__":
    num_particles = 3   # stand-in for int(config('opt'))
    prepped = [prep_particle(init_particle_params(seed))
               for seed in range(num_particles)]
    stacked = stack_particles(prepped)

    image = jax.random.normal(jax.random.PRNGKey(0), (2, 3, 16, 16),
                              dtype=jnp.float32)  # NCHW
    fwd = jax.jit(functools.partial(svgd_forward, stacked))
    logits = jax.block_until_ready(fwd(image))
    assert logits.shape == (2, 10)
    assert bool(jnp.all(jnp.isfinite(logits)))
    print("KERNEL_OK")
</pallas_src>

<mosaic_0001>
module attributes {stable_mosaic.version = 11 : i64} {
  func.func @_svgd_kernel(%arg0: i32, %arg1: memref<2x4x192xf32, #tpu.memory_space<vmem>>, %arg2: memref<1x192x128xbf16, #tpu.memory_space<vmem>>, %arg3: memref<1x1x128xf32, #tpu.memory_space<vmem>>, %arg4: memref<1x5x128xf32, #tpu.memory_space<vmem>>, %arg5: memref<1x1x128xf32, #tpu.memory_space<vmem>>, %arg6: memref<1x1x128xf32, #tpu.memory_space<vmem>>, %arg7: memref<1x2x1x128xf32, #tpu.memory_space<vmem>>, %arg8: memref<1x2x1x128xf32, #tpu.memory_space<vmem>>, %arg9: memref<1x2x128x384xbf16, #tpu.memory_space<vmem>>, %arg10: memref<1x2x1x384xf32, #tpu.memory_space<vmem>>, %arg11: memref<1x2x128x128xbf16, #tpu.memory_space<vmem>>, %arg12: memref<1x2x1x128xf32, #tpu.memory_space<vmem>>, %arg13: memref<1x2x1x128xf32, #tpu.memory_space<vmem>>, %arg14: memref<1x2x1x128xf32, #tpu.memory_space<vmem>>, %arg15: memref<1x2x128x512xbf16, #tpu.memory_space<vmem>>, %arg16: memref<1x2x1x512xf32, #tpu.memory_space<vmem>>, %arg17: memref<1x2x512x128xbf16, #tpu.memory_space<vmem>>, %arg18: memref<1x2x1x128xf32, #tpu.memory_space<vmem>>, %arg19: memref<1x1x128xf32, #tpu.memory_space<vmem>>, %arg20: memref<1x1x128xf32, #tpu.memory_space<vmem>>, %arg21: memref<1x128x128xbf16, #tpu.memory_space<vmem>>, %arg22: memref<1x1x128xf32, #tpu.memory_space<vmem>>, %arg23: memref<1x2x128xf32, #tpu.memory_space<vmem>>, %arg24: memref<2x5x128xf32, #tpu.memory_space<vmem>>) attributes {dimension_semantics = [#tpu.dimension_semantics<parallel>], iteration_bounds = array<i64: 3>, scalar_prefetch = 0 : i64, scratch_operands = 1 : i64, tpu.core_type = #tpu.core_type<tc>, window_params = [{pipeline_mode = #tpu.pipeline_mode<synchronous>, transform_indices = @transform_0, window_bounds = array<i64: 2, 4, 192>}, {transform_indices = @transform_1, window_bounds = array<i64: 1, 192, 128>}, {transform_indices = @transform_2, window_bounds = array<i64: 1, 1, 128>}, {transform_indices = @transform_3, window_bounds = array<i64: 1, 5, 128>}, {transform_indices = @transform_4, window_bounds = array<i64: 1, 1, 128>}, {transform_indices = @transform_5, window_bounds = array<i64: 1, 1, 128>}, {transform_indices = @transform_6, window_bounds = array<i64: 1, 2, 1, 128>}, {transform_indices = @transform_7, window_bounds = array<i64: 1, 2, 1, 128>}, {transform_indices = @transform_8, window_bounds = array<i64: 1, 2, 128, 384>}, {transform_indices = @transform_9, window_bounds = array<i64: 1, 2, 1, 384>}, {transform_indices = @transform_10, window_bounds = array<i64: 1, 2, 128, 128>}, {transform_indices = @transform_11, window_bounds = array<i64: 1, 2, 1, 128>}, {transform_indices = @transform_12, window_bounds = array<i64: 1, 2, 1, 128>}, {transform_indices = @transform_13, window_bounds = array<i64: 1, 2, 1, 128>}, {transform_indices = @transform_14, window_bounds = array<i64: 1, 2, 128, 512>}, {transform_indices = @transform_15, window_bounds = array<i64: 1, 2, 1, 512>}, {transform_indices = @transform_16, window_bounds = array<i64: 1, 2, 512, 128>}, {transform_indices = @transform_17, window_bounds = array<i64: 1, 2, 1, 128>}, {transform_indices = @transform_18, window_bounds = array<i64: 1, 1, 128>}, {transform_indices = @transform_19, window_bounds = array<i64: 1, 1, 128>}, {transform_indices = @transform_20, window_bounds = array<i64: 1, 128, 128>}, {transform_indices = @transform_21, window_bounds = array<i64: 1, 1, 128>}, {transform_indices = @transform_22, window_bounds = array<i64: 1, 2, 128>}]} {
    %c0 = arith.constant 0 : index
    %c0_0 = arith.constant 0 : index
    %c0_1 = arith.constant 0 : index
    %0 = vector.load %arg4[%c0, %c0_0, %c0_1] : memref<1x5x128xf32, #tpu.memory_space<vmem>>, vector<1x5x128xf32>
    %1 = vector.shape_cast %0 : vector<1x5x128xf32> to vector<5x128xf32>
    %c0_2 = arith.constant 0 : index
    %c0_3 = arith.constant 0 : index
    %c0_4 = arith.constant 0 : index
    %2 = vector.load %arg5[%c0_2, %c0_3, %c0_4] : memref<1x1x128xf32, #tpu.memory_space<vmem>>, vector<1x1x128xf32>
    %3 = vector.shape_cast %2 : vector<1x1x128xf32> to vector<1x128xf32>
    %c0_5 = arith.constant 0 : index
    %c0_6 = arith.constant 0 : index
    %c0_7 = arith.constant 0 : index
    %4 = vector.load %arg6[%c0_5, %c0_6, %c0_7] : memref<1x1x128xf32, #tpu.memory_space<vmem>>, vector<1x1x128xf32>
    %5 = vector.shape_cast %4 : vector<1x1x128xf32> to vector<1x128xf32>
    %c0_8 = arith.constant 0 : index
    %c0_9 = arith.constant 0 : index
    %c0_10 = arith.constant 0 : index
    %6 = vector.load %arg3[%c0_8, %c0_9, %c0_10] : memref<1x1x128xf32, #tpu.memory_space<vmem>>, vector<1x1x128xf32>
    %7 = vector.shape_cast %6 : vector<1x1x128xf32> to vector<1x128xf32>
    %8 = vector.extract_strided_slice %1 {offsets = [0, 0], sizes = [1, 128], strides = [1, 1]} : vector<5x128xf32> to vector<1x128xf32>
    %9 = arith.addf %7, %8 : vector<1x128xf32>
    %cst = arith.constant dense<0.000000e+00> : vector<1xf32>
    %10 = vector.multi_reduction <add>, %9, %cst [1] : vector<1x128xf32> to vector<1xf32>
    %11 = vector.shape_cast %10 : vector<1xf32> to vector<1x1xf32>
    %cst_11 = arith.constant 1.280000e+02 : f32
    %12 = vector.broadcast %cst_11 : f32 to vector<1x1xf32>
    %13 = arith.divf %11, %12 : vector<1x1xf32>
    %14 = vector.broadcast %13 : vector<1x1xf32> to vector<1x128xf32>
    %15 = arith.subf %9, %14 : vector<1x128xf32>
    %16 = arith.mulf %15, %15 : vector<1x128xf32>
    %cst_12 = arith.constant dense<0.000000e+00> : vector<1xf32>
    %17 = vector.multi_reduction <add>, %16, %cst_12 [1] : vector<1x128xf32> to vector<1xf32>
    %18 = vector.shape_cast %17 : vector<1xf32> to vector<1x1xf32>
    %cst_13 = arith.constant 1.280000e+02 : f32
    %19 = vector.broadcast %cst_13 : f32 to vector<1x1xf32>
    %20 = arith.divf %18, %19 : vector<1x1xf32>
    %21 = vector.broadcast %13 : vector<1x1xf32> to vector<1x128xf32>
    %22 = arith.subf %9, %21 : vector<1x128xf32>
    %cst_14 = arith.constant 9.99999974E-6 : f32
    %23 = vector.broadcast %cst_14 : f32 to vector<1x1xf32>
    %24 = arith.addf %20, %23 : vector<1x1xf32>
    %25 = math.rsqrt %24 : vector<1x1xf32>
    %26 = vector.broadcast %25 : vector<1x1xf32> to vector<1x128xf32>
    %27 = arith.mulf %22, %26 : vector<1x128xf32>
    %28 = arith.mulf %27, %3 : vector<1x128xf32>
    %29 = arith.addf %28, %5 : vector<1x128xf32>
    %c0_15 = arith.constant 0 : index
    %c0_16 = arith.constant 0 : index
    %c0_17 = arith.constant 0 : index
    %30 = vector.load %arg2[%c0_15, %c0_16, %c0_17] : memref<1x192x128xbf16, #tpu.memory_space<vmem>>, vector<1x192x128xbf16>
    %31 = vector.shape_cast %30 : vector<1x192x128xbf16> to vector<192x128xbf16>
    %c0_18 = arith.constant 0 : index
    %c0_19 = arith.constant 0 : index
    %c0_20 = arith.constant 0 : index
    %32 = vector.load %arg1[%c0_18, %c0_19, %c0_20] : memref<2x4x192xf32, #tpu.memory_space<vmem>>, vector<1x4x192xf32>
    %33 = vector.shape_cast %32 : vector<1x4x192xf32> to vector<4x192xf32>
    %34 = arith.truncf %33 : vector<4x192xf32> to vector<4x192xbf16>
    %cst_21 = arith.constant dense<0.000000e+00> : vector<4x128xf32>
    %35 = tpu.matmul %34, %31, %cst_21 {dimension_numbers = #tpu.dot_dimension_numbers<[1], [0], [0], [1], [0, 0, 1, 1], [], []>} : vector<4x192xbf16>, vector<192x128xbf16>, vector<4x128xf32> -> vector<4x128xf32>
    %c0_22 = arith.constant 0 : index
    %c0_23 = arith.constant 0 : index
    %c0_24 = arith.constant 0 : index
    %36 = vector.load %arg24[%c0_22, %c0_23, %c0_24] : memref<2x5x128xf32, #tpu.memory_space<vmem>>, vector<1x1x128xf32>
    %37 = vector.shape_cast %36 : vector<1x1x128xf32> to vector<1x128xf32>
    %38 = vector.shape_cast %29 : vector<1x128xf32> to vector<1x1x128xf32>
    tpu.vector_store %arg24[%c0_22, %c0_23, %c0_24], %38 {strides = array<i32>} : memref<2x5x128xf32, #tpu.memory_space<vmem>>, vector<1x1x128xf32>,
    %39 = vector.extract_strided_slice %1 {offsets = [1, 0], sizes = [4, 128], strides = [1, 1]} : vector<5x128xf32> to vector<4x128xf32>
    %40 = arith.addf %35, %39 : vector<4x128xf32>
    %cst_25 = arith.constant dense<0.000000e+00> : vector<4xf32>
    %41 = vector.multi_reduction <add>, %40, %cst_25 [1] : vector<4x128xf32> to vector<4xf32>
    %42 = vector.shape_cast %41 : vector<4xf32> to vector<4x1xf32>
    %cst_26 = arith.constant 1.280000e+02 : f32
    %43 = vector.broadcast %cst_26 : f32 to vector<4x1xf32>
    %44 = arith.divf %42, %43 : vector<4x1xf32>
    %45 = vector.broadcast %44 : vector<4x1xf32> to vector<4x128xf32>
    %46 = arith.subf %40, %45 : vector<4x128xf32>
    %47 = arith.mulf %46, %46 : vector<4x128xf32>
    %cst_27 = arith.constant dense<0.000000e+00> : vector<4xf32>
    %48 = vector.multi_reduction <add>, %47, %cst_27 [1] : vector<4x128xf32> to vector<4xf32>
    %49 = vector.shape_cast %48 : vector<4xf32> to vector<4x1xf32>
    %cst_28 = arith.constant 1.280000e+02 : f32
    %50 = vector.broadcast %cst_28 : f32 to vector<4x1xf32>
    %51 = arith.divf %49, %50 : vector<4x1xf32>
    %52 = vector.broadcast %44 : vector<4x1xf32> to vector<4x128xf32>
    %53 = arith.subf %40, %52 : vector<4x128xf32>
    %cst_29 = arith.constant 9.99999974E-6 : f32
    %54 = vector.broadcast %cst_29 : f32 to vector<4x1xf32>
    %55 = arith.addf %51, %54 : vector<4x1xf32>
    %56 = math.rsqrt %55 : vector<4x1xf32>
    %57 = vector.broadcast %56 : vector<4x1xf32> to vector<4x128xf32>
    %58 = arith.mulf %53, %57 : vector<4x128xf32>
    %59 = vector.broadcast %3 : vector<1x128xf32> to vector<4x128xf32>
    %60 = arith.mulf %58, %59 : vector<4x128xf32>
    %61 = vector.broadcast %5 : vector<1x128xf32> to vector<4x128xf32>
    %62 = arith.addf %60, %61 : vector<4x128xf32>
    %c0_30 = arith.constant 0 : index
    %c1 = arith.constant 1 : index
    %c0_31 = arith.constant 0 : index
    %63 = vector.load %arg24[%c0_30, %c1, %c0_31] : memref<2x5x128xf32, #tpu.memory_space<vmem>>, vector<1x4x128xf32>
    %64 = vector.shape_cast %63 : vector<1x4x128xf32> to vector<4x128xf32>
    %65 = vector.shape_cast %62 : vector<4x128xf32> to vector<1x4x128xf32>
    tpu.vector_store %arg24[%c0_30, %c1, %c0_31], %65 {strides = array<i32>} : memref<2x5x128xf32, #tpu.memory_space<vmem>>, vector<1x4x128xf32>,
    %c1_32 = arith.constant 1 : index
    %c0_33 = arith.constant 0 : index
    %c0_34 = arith.constant 0 : index
    %66 = vector.load %arg1[%c1_32, %c0_33, %c0_34] : memref<2x4x192xf32, #tpu.memory_space<vmem>>, vector<1x4x192xf32>
    %67 = vector.shape_cast %66 : vector<1x4x192xf32> to vector<4x192xf32>
    %68 = arith.truncf %67 : vector<4x192xf32> to vector<4x192xbf16>
    %cst_35 = arith.constant dense<0.000000e+00> : vector<4x128xf32>
    %69 = tpu.matmul %68, %31, %cst_35 {dimension_numbers = #tpu.dot_dimension_numbers<[1], [0], [0], [1], [0, 0, 1, 1], [], []>} : vector<4x192xbf16>, vector<192x128xbf16>, vector<4x128xf32> -> vector<4x128xf32>
    %c1_36 = arith.constant 1 : index
    %c0_37 = arith.constant 0 : index
    %c0_38 = arith.constant 0 : index
    %70 = vector.load %arg24[%c1_36, %c0_37, %c0_38] : memref<2x5x128xf32, #tpu.memory_space<vmem>>, vector<1x1x128xf32>
    %71 = vector.shape_cast %70 : vector<1x1x128xf32> to vector<1x128xf32>
    %72 = vector.shape_cast %29 : vector<1x128xf32> to vector<1x1x128xf32>
    tpu.vector_store %arg24[%c1_36, %c0_37, %c0_38], %72 {strides = array<i32>} : memref<2x5x128xf32, #tpu.memory_space<vmem>>, vector<1x1x128xf32>,
    %73 = vector.extract_strided_slice %1 {offsets = [1, 0], sizes = [4, 128], strides = [1, 1]} : vector<5x128xf32> to vector<4x128xf32>
    %74 = arith.addf %69, %73 : vector<4x128xf32>
    %cst_39 = arith.constant dense<0.000000e+00> : vector<4xf32>
    %75 = vector.multi_reduction <add>, %74, %cst_39 [1] : vector<4x128xf32> to vector<4xf32>
    %76 = vector.shape_cast %75 : vector<4xf32> to vector<4x1xf32>
    %cst_40 = arith.constant 1.280000e+02 : f32
    %77 = vector.broadcast %cst_40 : f32 to vector<4x1xf32>
    %78 = arith.divf %76, %77 : vector<4x1xf32>
    %79 = vector.broadcast %78 : vector<4x1xf32> to vector<4x128xf32>
    %80 = arith.subf %74, %79 : vector<4x128xf32>
    %81 = arith.mulf %80, %80 : vector<4x128xf32>
    %cst_41 = arith.constant dense<0.000000e+00> : vector<4xf32>
    %82 = vector.multi_reduction <add>, %81, %cst_41 [1] : vector<4x128xf32> to vector<4xf32>
    %83 = vector.shape_cast %82 : vector<4xf32> to vector<4x1xf32>
    %cst_42 = arith.constant 1.280000e+02 : f32
    %84 = vector.broadcast %cst_42 : f32 to vector<4x1xf32>
    %85 = arith.divf %83, %84 : vector<4x1xf32>
    %86 = vector.broadcast %78 : vector<4x1xf32> to vector<4x128xf32>
    %87 = arith.subf %74, %86 : vector<4x128xf32>
    %cst_43 = arith.constant 9.99999974E-6 : f32
    %88 = vector.broadcast %cst_43 : f32 to vector<4x1xf32>
    %89 = arith.addf %85, %88 : vector<4x1xf32>
    %90 = math.rsqrt %89 : vector<4x1xf32>
    %91 = vector.broadcast %90 : vector<4x1xf32> to vector<4x128xf32>
    %92 = arith.mulf %87, %91 : vector<4x128xf32>
    %93 = vector.broadcast %3 : vector<1x128xf32> to vector<4x128xf32>
    %94 = arith.mulf %92, %93 : vector<4x128xf32>
    %95 = vector.broadcast %5 : vector<1x128xf32> to vector<4x128xf32>
    %96 = arith.addf %94, %95 : vector<4x128xf32>
    %c1_44 = arith.constant 1 : index
    %c1_45 = arith.constant 1 : index
    %c0_46 = arith.constant 0 : index
    %97 = vector.load %arg24[%c1_44, %c1_45, %c0_46] : memref<2x5x128xf32, #tpu.memory_space<vmem>>, vector<1x4x128xf32>
    %98 = vector.shape_cast %97 : vector<1x4x128xf32> to vector<4x128xf32>
    %99 = vector.shape_cast %96 : vector<4x128xf32> to vector<1x4x128xf32>
    tpu.vector_store %arg24[%c1_44, %c1_45, %c0_46], %99 {strides = array<i32>} : memref<2x5x128xf32, #tpu.memory_space<vmem>>, vector<1x4x128xf32>,
    %c0_47 = arith.constant 0 : index
    %c0_48 = arith.constant 0 : index
    %c0_49 = arith.constant 0 : index
    %c0_50 = arith.constant 0 : index
    %100 = vector.load %arg7[%c0_47, %c0_48, %c0_49, %c0_50] : memref<1x2x1x128xf32, #tpu.memory_space<vmem>>, vector<1x1x1x128xf32>
    %101 = vector.shape_cast %100 : vector<1x1x1x128xf32> to vector<1x128xf32>
    %c0_51 = arith.constant 0 : index
    %c0_52 = arith.constant 0 : index
    %c0_53 = arith.constant 0 : index
    %c0_54 = arith.constant 0 : index
    %102 = vector.load %arg8[%c0_51, %c0_52, %c0_53, %c0_54] : memref<1x2x1x128xf32, #tpu.memory_space<vmem>>, vector<1x1x1x128xf32>
    %103 = vector.shape_cast %102 : vector<1x1x1x128xf32> to vector<1x128xf32>
    %c0_55 = arith.constant 0 : index
    %c0_56 = arith.constant 0 : index
    %c0_57 = arith.constant 0 : index
    %c0_58 = arith.constant 0 : index
    %104 = vector.load %arg9[%c0_55, %c0_56, %c0_57, %c0_58] : memref<1x2x128x384xbf16, #tpu.memory_space<vmem>>, vector<1x1x128x384xbf16>
    %105 = vector.shape_cast %104 : vector<1x1x128x384xbf16> to vector<128x384xbf16>
    %c0_59 = arith.constant 0 : index
    %c0_60 = arith.constant 0 : index
    %c0_61 = arith.constant 0 : index
    %c0_62 = arith.constant 0 : index
    %106 = vector.load %arg10[%c0_59, %c0_60, %c0_61, %c0_62] : memref<1x2x1x384xf32, #tpu.memory_space<vmem>>, vector<1x1x1x384xf32>
    %107 = vector.shape_cast %106 : vector<1x1x1x384xf32> to vector<1x384xf32>
    %c0_63 = arith.constant 0 : index
    %c0_64 = arith.constant 0 : index
    %c0_65 = arith.constant 0 : index
    %c0_66 = arith.constant 0 : index
    %108 = vector.load %arg11[%c0_63, %c0_64, %c0_65, %c0_66] : memref<1x2x128x128xbf16, #tpu.memory_space<vmem>>, vector<1x1x128x128xbf16>
    %109 = vector.shape_cast %108 : vector<1x1x128x128xbf16> to vector<128x128xbf16>
    %c0_67 = arith.constant 0 : index
    %c0_68 = arith.constant 0 : index
    %c0_69 = arith.constant 0 : index
    %c0_70 = arith.constant 0 : index
    %110 = vector.load %arg12[%c0_67, %c0_68, %c0_69, %c0_70] : memref<1x2x1x128xf32, #tpu.memory_space<vmem>>, vector<1x1x1x128xf32>
    %111 = vector.shape_cast %110 : vector<1x1x1x128xf32> to vector<1x128xf32>
    %c0_71 = arith.constant 0 : index
    %c0_72 = arith.constant 0 : index
    %c0_73 = arith.constant 0 : index
    %c0_74 = arith.constant 0 : index
    %112 = vector.load %arg13[%c0_71, %c0_72, %c0_73, %c0_74] : memref<1x2x1x128xf32, #tpu.memory_space<vmem>>, vector<1x1x1x128xf32>
    %113 = vector.shape_cast %112 : vector<1x1x1x128xf32> to vector<1x128xf32>
    %c0_75 = arith.constant 0 : index
    %c0_76 = arith.constant 0 : index
    %c0_77 = arith.constant 0 : index
    %c0_78 = arith.constant 0 : index
    %114 = vector.load %arg14[%c0_75, %c0_76, %c0_77, %c0_78] : memref<1x2x1x128xf32, #tpu.memory_space<vmem>>, vector<1x1x1x128xf32>
    %115 = vector.shape_cast %114 : vector<1x1x1x128xf32> to vector<1x128xf32>
    %c0_79 = arith.constant 0 : index
    %c0_80 = arith.constant 0 : index
    %c0_81 = arith.constant 0 : index
    %c0_82 = arith.constant 0 : index
    %116 = vector.load %arg15[%c0_79, %c0_80, %c0_81, %c0_82] : memref<1x2x128x512xbf16, #tpu.memory_space<vmem>>, vector<1x1x128x512xbf16>
    %117 = vector.shape_cast %116 : vector<1x1x128x512xbf16> to vector<128x512xbf16>
    %c0_83 = arith.constant 0 : index
    %c0_84 = arith.constant 0 : index
    %c0_85 = arith.constant 0 : index
    %c0_86 = arith.constant 0 : index
    %118 = vector.load %arg16[%c0_83, %c0_84, %c0_85, %c0_86] : memref<1x2x1x512xf32, #tpu.memory_space<vmem>>, vector<1x1x1x512xf32>
    %119 = vector.shape_cast %118 : vector<1x1x1x512xf32> to vector<1x512xf32>
    %c0_87 = arith.constant 0 : index
    %c0_88 = arith.constant 0 : index
    %c0_89 = arith.constant 0 : index
    %c0_90 = arith.constant 0 : index
    %120 = vector.load %arg17[%c0_87, %c0_88, %c0_89, %c0_90] : memref<1x2x512x128xbf16, #tpu.memory_space<vmem>>, vector<1x1x512x128xbf16>
    %121 = vector.shape_cast %120 : vector<1x1x512x128xbf16> to vector<512x128xbf16>
    %c0_91 = arith.constant 0 : index
    %c0_92 = arith.constant 0 : index
    %c0_93 = arith.constant 0 : index
    %c0_94 = arith.constant 0 : index
    %122 = vector.load %arg18[%c0_91, %c0_92, %c0_93, %c0_94] : memref<1x2x1x128xf32, #tpu.memory_space<vmem>>, vector<1x1x1x128xf32>
    %123 = vector.shape_cast %122 : vector<1x1x1x128xf32> to vector<1x128xf32>
    %c0_95 = arith.constant 0 : index
    %c0_96 = arith.constant 0 : index
    %c0_97 = arith.constant 0 : index
    %124 = vector.load %arg24[%c0_95, %c0_96, %c0_97] : memref<2x5x128xf32, #tpu.memory_space<vmem>>, vector<1x5x128xf32>
    %125 = vector.shape_cast %124 : vector<1x5x128xf32> to vector<5x128xf32>
    %cst_98 = arith.constant dense<0.000000e+00> : vector<5xf32>
    %126 = vector.multi_reduction <add>, %125, %cst_98 [1] : vector<5x128xf32> to vector<5xf32>
    %127 = vector.shape_cast %126 : vector<5xf32> to vector<5x1xf32>
    %cst_99 = arith.constant 1.280000e+02 : f32
    %128 = vector.broadcast %cst_99 : f32 to vector<5x1xf32>
    %129 = arith.divf %127, %128 : vector<5x1xf32>
    %130 = vector.broadcast %129 : vector<5x1xf32> to vector<5x128xf32>
    %131 = arith.subf %125, %130 : vector<5x128xf32>
    %132 = arith.mulf %131, %131 : vector<5x128xf32>
    %cst_100 = arith.constant dense<0.000000e+00> : vector<5xf32>
    %133 = vector.multi_reduction <add>, %132, %cst_100 [1] : vector<5x128xf32> to vector<5xf32>
    %134 = vector.shape_cast %133 : vector<5xf32> to vector<5x1xf32>
    %cst_101 = arith.constant 1.280000e+02 : f32
    %135 = vector.broadcast %cst_101 : f32 to vector<5x1xf32>
    %136 = arith.divf %134, %135 : vector<5x1xf32>
    %137 = vector.broadcast %129 : vector<5x1xf32> to vector<5x128xf32>
    %138 = arith.subf %125, %137 : vector<5x128xf32>
    %cst_102 = arith.constant 9.99999974E-6 : f32
    %139 = vector.broadcast %cst_102 : f32 to vector<5x1xf32>
    %140 = arith.addf %136, %139 : vector<5x1xf32>
    %141 = math.rsqrt %140 : vector<5x1xf32>
    %142 = vector.broadcast %141 : vector<5x1xf32> to vector<5x128xf32>
    %143 = arith.mulf %138, %142 : vector<5x128xf32>
    %144 = vector.broadcast %101 : vector<1x128xf32> to vector<5x128xf32>
    %145 = arith.mulf %143, %144 : vector<5x128xf32>
    %146 = vector.broadcast %103 : vector<1x128xf32> to vector<5x128xf32>
    %147 = arith.addf %145, %146 : vector<5x128xf32>
    %148 = arith.truncf %147 : vector<5x128xf32> to vector<5x128xbf16>
    %cst_103 = arith.constant dense<0.000000e+00> : vector<5x384xf32>
    %149 = tpu.matmul %148, %105, %cst_103 {dimension_numbers = #tpu.dot_dimension_numbers<[1], [0], [0], [1], [0, 0, 1, 1], [], []>} : vector<5x128xbf16>, vector<128x384xbf16>, vector<5x384xf32> -> vector<5x384xf32>
    %150 = vector.broadcast %107 : vector<1x384xf32> to vector<5x384xf32>
    %151 = arith.addf %149, %150 : vector<5x384xf32>
    %cst_104 = arith.constant 0.000000e+00 : f32
    %152 = vector.broadcast %cst_104 : f32 to vector<5x128xf32>
    %153 = vector.extract_strided_slice %151 {offsets = [0, 0], sizes = [5, 32], strides = [1, 1]} : vector<5x384xf32> to vector<5x32xf32>
    %154 = arith.truncf %153 : vector<5x32xf32> to vector<5x32xbf16>
    %155 = vector.extract_strided_slice %151 {offsets = [0, 128], sizes = [5, 32], strides = [1, 1]} : vector<5x384xf32> to vector<5x32xf32>
    %156 = arith.truncf %155 : vector<5x32xf32> to vector<5x32xbf16>
    %157 = vector.extract_strided_slice %151 {offsets = [0, 256], sizes = [5, 32], strides = [1, 1]} : vector<5x384xf32> to vector<5x32xf32>
    %158 = arith.truncf %157 : vector<5x32xf32> to vector<5x32xbf16>
    %cst_105 = arith.constant dense<0.000000e+00> : vector<5x5xf32>
    %159 = tpu.matmul %154, %156, %cst_105 {dimension_numbers = #tpu.dot_dimension_numbers<[1], [1], [0], [0], [0, 0, 1, 0], [], []>} : vector<5x32xbf16>, vector<5x32xbf16>, vector<5x5xf32> -> vector<5x5xf32>
    %cst_106 = arith.constant 0.176776692 : f32
    %160 = vector.broadcast %cst_106 : f32 to vector<5x5xf32>
    %161 = arith.mulf %159, %160 : vector<5x5xf32>
    %cst_107 = arith.constant dense<0xFF800000> : vector<5xf32>
    %162 = vector.multi_reduction <maximumf>, %161, %cst_107 [1] : vector<5x5xf32> to vector<5xf32>
    %163 = vector.shape_cast %162 : vector<5xf32> to vector<5x1xf32>
    %164 = vector.broadcast %163 : vector<5x1xf32> to vector<5x5xf32>
    %165 = arith.subf %161, %164 : vector<5x5xf32>
    %166 = math.exp %165 : vector<5x5xf32>
    %cst_108 = arith.constant dense<0.000000e+00> : vector<5xf32>
    %167 = vector.multi_reduction <add>, %166, %cst_108 [1] : vector<5x5xf32> to vector<5xf32>
    %168 = vector.shape_cast %167 : vector<5xf32> to vector<5x1xf32>
    %169 = tpu.reciprocal %168 {approx = true} : vector<5x1xf32> -> vector<5x1xf32>
    %170 = vector.broadcast %169 : vector<5x1xf32> to vector<5x5xf32>
    %171 = arith.mulf %166, %170 : vector<5x5xf32>
    %172 = arith.truncf %171 : vector<5x5xf32> to vector<5x5xbf16>
    %cst_109 = arith.constant dense<0.000000e+00> : vector<5x32xf32>
    %173 = tpu.matmul %172, %158, %cst_109 {dimension_numbers = #tpu.dot_dimension_numbers<[1], [0], [0], [1], [0, 0, 1, 1], [], []>} : vector<5x5xbf16>, vector<5x32xbf16>, vector<5x32xf32> -> vector<5x32xf32>
    %174 = arith.truncf %173 : vector<5x32xf32> to vector<5x32xbf16>
    %175 = vector.extract_strided_slice %109 {offsets = [0, 0], sizes = [32, 128], strides = [1, 1]} : vector<128x128xbf16> to vector<32x128xbf16>
    %cst_110 = arith.constant dense<0.000000e+00> : vector<5x128xf32>
    %176 = tpu.matmul %174, %175, %cst_110 {dimension_numbers = #tpu.dot_dimension_numbers<[1], [0], [0], [1], [0, 0, 1, 1], [], []>} : vector<5x32xbf16>, vector<32x128xbf16>, vector<5x128xf32> -> vector<5x128xf32>
    %177 = arith.addf %152, %176 : vector<5x128xf32>
    %178 = vector.extract_strided_slice %151 {offsets = [0, 32], sizes = [5, 32], strides = [1, 1]} : vector<5x384xf32> to vector<5x32xf32>
    %179 = arith.truncf %178 : vector<5x32xf32> to vector<5x32xbf16>
    %180 = vector.extract_strided_slice %151 {offsets = [0, 160], sizes = [5, 32], strides = [1, 1]} : vector<5x384xf32> to vector<5x32xf32>
    %181 = arith.truncf %180 : vector<5x32xf32> to vector<5x32xbf16>
    %182 = vector.extract_strided_slice %151 {offsets = [0, 288], sizes = [5, 32], strides = [1, 1]} : vector<5x384xf32> to vector<5x32xf32>
    %183 = arith.truncf %182 : vector<5x32xf32> to vector<5x32xbf16>
    %cst_111 = arith.constant dense<0.000000e+00> : vector<5x5xf32>
    %184 = tpu.matmul %179, %181, %cst_111 {dimension_numbers = #tpu.dot_dimension_numbers<[1], [1], [0], [0], [0, 0, 1, 0], [], []>} : vector<5x32xbf16>, vector<5x32xbf16>, vector<5x5xf32> -> vector<5x5xf32>
    %cst_112 = arith.constant 0.176776692 : f32
    %185 = vector.broadcast %cst_112 : f32 to vector<5x5xf32>
    %186 = arith.mulf %184, %185 : vector<5x5xf32>
    %cst_113 = arith.constant dense<0xFF800000> : vector<5xf32>
    %187 = vector.multi_reduction <maximumf>, %186, %cst_113 [1] : vector<5x5xf32> to vector<5xf32>
    %188 = vector.shape_cast %187 : vector<5xf32> to vector<5x1xf32>
    %189 = vector.broadcast %188 : vector<5x1xf32> to vector<5x5xf32>
    %190 = arith.subf %186, %189 : vector<5x5xf32>
    %191 = math.exp %190 : vector<5x5xf32>
    %cst_114 = arith.constant dense<0.000000e+00> : vector<5xf32>
    %192 = vector.multi_reduction <add>, %191, %cst_114 [1] : vector<5x5xf32> to vector<5xf32>
    %193 = vector.shape_cast %192 : vector<5xf32> to vector<5x1xf32>
    %194 = tpu.reciprocal %193 {approx = true} : vector<5x1xf32> -> vector<5x1xf32>
    %195 = vector.broadcast %194 : vector<5x1xf32> to vector<5x5xf32>
    %196 = arith.mulf %191, %195 : vector<5x5xf32>
    %197 = arith.truncf %196 : vector<5x5xf32> to vector<5x5xbf16>
    %cst_115 = arith.constant dense<0.000000e+00> : vector<5x32xf32>
    %198 = tpu.matmul %197, %183, %cst_115 {dimension_numbers = #tpu.dot_dimension_numbers<[1], [0], [0], [1], [0, 0, 1, 1], [], []>} : vector<5x5xbf16>, vector<5x32xbf16>, vector<5x32xf32> -> vector<5x32xf32>
    %199 = arith.truncf %198 : vector<5x32xf32> to vector<5x32xbf16>
    %200 = vector.extract_strided_slice %109 {offsets = [32, 0], sizes = [32, 128], strides = [1, 1]} : vector<128x128xbf16> to vector<32x128xbf16>
    %cst_116 = arith.constant dense<0.000000e+00> : vector<5x128xf32>
    %201 = tpu.matmul %199, %200, %cst_116 {dimension_numbers = #tpu.dot_dimension_numbers<[1], [0], [0], [1], [0, 0, 1, 1], [], []>} : vector<5x32xbf16>, vector<32x128xbf16>, vector<5x128xf32> -> vector<5x128xf32>
    %202 = arith.addf %177, %201 : vector<5x128xf32>
    %203 = vector.extract_strided_slice %151 {offsets = [0, 64], sizes = [5, 32], strides = [1, 1]} : vector<5x384xf32> to vector<5x32xf32>
    %204 = arith.truncf %203 : vector<5x32xf32> to vector<5x32xbf16>
    %205 = vector.extract_strided_slice %151 {offsets = [0, 192], sizes = [5, 32], strides = [1, 1]} : vector<5x384xf32> to vector<5x32xf32>
    %206 = arith.truncf %205 : vector<5x32xf32> to vector<5x32xbf16>
    %207 = vector.extract_strided_slice %151 {offsets = [0, 320], sizes = [5, 32], strides = [1, 1]} : vector<5x384xf32> to vector<5x32xf32>
    %208 = arith.truncf %207 : vector<5x32xf32> to vector<5x32xbf16>
    %cst_117 = arith.constant dense<0.000000e+00> : vector<5x5xf32>
    %209 = tpu.matmul %204, %206, %cst_117 {dimension_numbers = #tpu.dot_dimension_numbers<[1], [1], [0], [0], [0, 0, 1, 0], [], []>} : vector<5x32xbf16>, vector<5x32xbf16>, vector<5x5xf32> -> vector<5x5xf32>
    %cst_118 = arith.constant 0.176776692 : f32
    %210 = vector.broadcast %cst_118 : f32 to vector<5x5xf32>
    %211 = arith.mulf %209, %210 : vector<5x5xf32>
    %cst_119 = arith.constant dense<0xFF800000> : vector<5xf32>
    %212 = vector.multi_reduction <maximumf>, %211, %cst_119 [1] : vector<5x5xf32> to vector<5xf32>
    %213 = vector.shape_cast %212 : vector<5xf32> to vector<5x1xf32>
    %214 = vector.broadcast %213 : vector<5x1xf32> to vector<5x5xf32>
    %215 = arith.subf %211, %214 : vector<5x5xf32>
    %216 = math.exp %215 : vector<5x5xf32>
    %cst_120 = arith.constant dense<0.000000e+00> : vector<5xf32>
    %217 = vector.multi_reduction <add>, %216, %cst_120 [1] : vector<5x5xf32> to vector<5xf32>
    %218 = vector.shape_cast %217 : vector<5xf32> to vector<5x1xf32>
    %219 = tpu.reciprocal %218 {approx = true} : vector<5x1xf32> -> vector<5x1xf32>
    %220 = vector.broadcast %219 : vector<5x1xf32> to vector<5x5xf32>
    %221 = arith.mulf %216, %220 : vector<5x5xf32>
    %222 = arith.truncf %221 : vector<5x5xf32> to vector<5x5xbf16>
    %cst_121 = arith.constant dense<0.000000e+00> : vector<5x32xf32>
    %223 = tpu.matmul %222, %208, %cst_121 {dimension_numbers = #tpu.dot_dimension_numbers<[1], [0], [0], [1], [0, 0, 1, 1], [], []>} : vector<5x5xbf16>, vector<5x32xbf16>, vector<5x32xf32> -> vector<5x32xf32>
    %224 = arith.truncf %223 : vector<5x32xf32> to vector<5x32xbf16>
    %225 = vector.extract_strided_slice %109 {offsets = [64, 0], sizes = [32, 128], strides = [1, 1]} : vector<128x128xbf16> to vector<32x128xbf16>
    %cst_122 = arith.constant dense<0.000000e+00> : vector<5x128xf32>
    %226 = tpu.matmul %224, %225, %cst_122 {dimension_numbers = #tpu.dot_dimension_numbers<[1], [0], [0], [1], [0, 0, 1, 1], [], []>} : vector<5x32xbf16>, vector<32x128xbf16>, vector<5x128xf32> -> vector<5x128xf32>
    %227 = arith.addf %202, %226 : vector<5x128xf32>
    %228 = vector.extract_strided_slice %151 {offsets = [0, 96], sizes = [5, 32], strides = [1, 1]} : vector<5x384xf32> to vector<5x32xf32>
    %229 = arith.truncf %228 : vector<5x32xf32> to vector<5x32xbf16>
    %230 = vector.extract_strided_slice %151 {offsets = [0, 224], sizes = [5, 32], strides = [1, 1]} : vector<5x384xf32> to vector<5x32xf32>
    %231 = arith.truncf %230 : vector<5x32xf32> to vector<5x32xbf16>
    %232 = vector.extract_strided_slice %151 {offsets = [0, 352], sizes = [5, 32], strides = [1, 1]} : vector<5x384xf32> to vector<5x32xf32>
    %233 = arith.truncf %232 : vector<5x32xf32> to vector<5x32xbf16>
    %cst_123 = arith.constant dense<0.000000e+00> : vector<5x5xf32>
    %234 = tpu.matmul %229, %231, %cst_123 {dimension_numbers = #tpu.dot_dimension_numbers<[1], [1], [0], [0], [0, 0, 1, 0], [], []>} : vector<5x32xbf16>, vector<5x32xbf16>, vector<5x5xf32> -> vector<5x5xf32>
    %cst_124 = arith.constant 0.176776692 : f32
    %235 = vector.broadcast %cst_124 : f32 to vector<5x5xf32>
    %236 = arith.mulf %234, %235 : vector<5x5xf32>
    %cst_125 = arith.constant dense<0xFF800000> : vector<5xf32>
    %237 = vector.multi_reduction <maximumf>, %236, %cst_125 [1] : vector<5x5xf32> to vector<5xf32>
    %238 = vector.shape_cast %237 : vector<5xf32> to vector<5x1xf32>
    %239 = vector.broadcast %238 : vector<5x1xf32> to vector<5x5xf32>
    %240 = arith.subf %236, %239 : vector<5x5xf32>
    %241 = math.exp %240 : vector<5x5xf32>
    %cst_126 = arith.constant dense<0.000000e+00> : vector<5xf32>
    %242 = vector.multi_reduction <add>, %241, %cst_126 [1] : vector<5x5xf32> to vector<5xf32>
    %243 = vector.shape_cast %242 : vector<5xf32> to vector<5x1xf32>
    %244 = tpu.reciprocal %243 {approx = true} : vector<5x1xf32> -> vector<5x1xf32>
    %245 = vector.broadcast %244 : vector<5x1xf32> to vector<5x5xf32>
    %246 = arith.mulf %241, %245 : vector<5x5xf32>
    %247 = arith.truncf %246 : vector<5x5xf32> to vector<5x5xbf16>
    %cst_127 = arith.constant dense<0.000000e+00> : vector<5x32xf32>
    %248 = tpu.matmul %247, %233, %cst_127 {dimension_numbers = #tpu.dot_dimension_numbers<[1], [0], [0], [1], [0, 0, 1, 1], [], []>} : vector<5x5xbf16>, vector<5x32xbf16>, vector<5x32xf32> -> vector<5x32xf32>
    %249 = arith.truncf %248 : vector<5x32xf32> to vector<5x32xbf16>
    %250 = vector.extract_strided_slice %109 {offsets = [96, 0], sizes = [32, 128], strides = [1, 1]} : vector<128x128xbf16> to vector<32x128xbf16>
    %cst_128 = arith.constant dense<0.000000e+00> : vector<5x128xf32>
    %251 = tpu.matmul %249, %250, %cst_128 {dimension_numbers = #tpu.dot_dimension_numbers<[1], [0], [0], [1], [0, 0, 1, 1], [], []>} : vector<5x32xbf16>, vector<32x128xbf16>, vector<5x128xf32> -> vector<5x128xf32>
    %252 = arith.addf %227, %251 : vector<5x128xf32>
    %253 = arith.addf %125, %252 : vector<5x128xf32>
    %254 = vector.broadcast %111 : vector<1x128xf32> to vector<5x128xf32>
    %255 = arith.addf %253, %254 : vector<5x128xf32>
    %cst_129 = arith.constant dense<0.000000e+00> : vector<5xf32>
    %256 = vector.multi_reduction <add>, %255, %cst_129 [1] : vector<5x128xf32> to vector<5xf32>
    %257 = vector.shape_cast %256 : vector<5xf32> to vector<5x1xf32>
    %cst_130 = arith.constant 1.280000e+02 : f32
    %258 = vector.broadcast %cst_130 : f32 to vector<5x1xf32>
    %259 = arith.divf %257, %258 : vector<5x1xf32>
    %260 = vector.broadcast %259 : vector<5x1xf32> to vector<5x128xf32>
    %261 = arith.subf %255, %260 : vector<5x128xf32>
    %262 = arith.mulf %261, %261 : vector<5x128xf32>
    %cst_131 = arith.constant dense<0.000000e+00> : vector<5xf32>
    %263 = vector.multi_reduction <add>, %262, %cst_131 [1] : vector<5x128xf32> to vector<5xf32>
    %264 = vector.shape_cast %263 : vector<5xf32> to vector<5x1xf32>
    %cst_132 = arith.constant 1.280000e+02 : f32
    %265 = vector.broadcast %cst_132 : f32 to vector<5x1xf32>
    %266 = arith.divf %264, %265 : vector<5x1xf32>
    %267 = vector.broadcast %259 : vector<5x1xf32> to vector<5x128xf32>
    %268 = arith.subf %255, %267 : vector<5x128xf32>
    %cst_133 = arith.constant 9.99999974E-6 : f32
    %269 = vector.broadcast %cst_133 : f32 to vector<5x1xf32>
    %270 = arith.addf %266, %269 : vector<5x1xf32>
    %271 = math.rsqrt %270 : vector<5x1xf32>
    %272 = vector.broadcast %271 : vector<5x1xf32> to vector<5x128xf32>
    %273 = arith.mulf %268, %272 : vector<5x128xf32>
    %274 = vector.broadcast %113 : vector<1x128xf32> to vector<5x128xf32>
    %275 = arith.mulf %273, %274 : vector<5x128xf32>
    %276 = vector.broadcast %115 : vector<1x128xf32> to vector<5x128xf32>
    %277 = arith.addf %275, %276 : vector<5x128xf32>
    %278 = arith.truncf %277 : vector<5x128xf32> to vector<5x128xbf16>
    %cst_134 = arith.constant dense<0.000000e+00> : vector<5x512xf32>
    %279 = tpu.matmul %278, %117, %cst_134 {dimension_numbers = #tpu.dot_dimension_numbers<[1], [0], [0], [1], [0, 0, 1, 1], [], []>} : vector<5x128xbf16>, vector<128x512xbf16>, vector<5x512xf32> -> vector<5x512xf32>
    %280 = vector.broadcast %119 : vector<1x512xf32> to vector<5x512xf32>
    %281 = arith.addf %279, %280 : vector<5x512xf32>
    %cst_135 = arith.constant 1.702000e+00 : f32
    %282 = vector.broadcast %cst_135 : f32 to vector<5x512xf32>
    %283 = arith.mulf %282, %281 : vector<5x512xf32>
    %284 = arith.negf %283 : vector<5x512xf32>
    %285 = math.exp %284 : vector<5x512xf32>
    %cst_136 = arith.constant 1.000000e+00 : f32
    %286 = vector.broadcast %cst_136 : f32 to vector<5x512xf32>
    %287 = arith.addf %286, %285 : vector<5x512xf32>
    %288 = arith.divf %286, %287 : vector<5x512xf32>
    %289 = arith.mulf %281, %288 : vector<5x512xf32>
    %290 = arith.truncf %289 : vector<5x512xf32> to vector<5x512xbf16>
    %cst_137 = arith.constant dense<0.000000e+00> : vector<5x128xf32>
    %291 = tpu.matmul %290, %121, %cst_137 {dimension_numbers = #tpu.dot_dimension_numbers<[1], [0], [0], [1], [0, 0, 1, 1], [], []>} : vector<5x512xbf16>, vector<512x128xbf16>, vector<5x128xf32> -> vector<5x128xf32>
    %292 = vector.broadcast %123 : vector<1x128xf32> to vector<5x128xf32>
    %293 = arith.addf %291, %292 : vector<5x128xf32>
    %294 = arith.addf %255, %293 : vector<5x128xf32>
    %c0_138 = arith.constant 0 : index
    %c0_139 = arith.constant 0 : index
    %c0_140 = arith.constant 0 : index
    %295 = vector.load %arg24[%c0_138, %c0_139, %c0_140] : memref<2x5x128xf32, #tpu.memory_space<vmem>>, vector<1x5x128xf32>
    %296 = vector.shape_cast %295 : vector<1x5x128xf32> to vector<5x128xf32>
    %297 = vector.shape_cast %294 : vector<5x128xf32> to vector<1x5x128xf32>
    tpu.vector_store %arg24[%c0_138, %c0_139, %c0_140], %297 {strides = array<i32>} : memref<2x5x128xf32, #tpu.memory_space<vmem>>, vector<1x5x128xf32>,
    %c1_141 = arith.constant 1 : index
    %c0_142 = arith.constant 0 : index
    %c0_143 = arith.constant 0 : index
    %298 = vector.load %arg24[%c1_141, %c0_142, %c0_143] : memref<2x5x128xf32, #tpu.memory_space<vmem>>, vector<1x5x128xf32>
    %299 = vector.shape_cast %298 : vector<1x5x128xf32> to vector<5x128xf32>
    %cst_144 = arith.constant dense<0.000000e+00> : vector<5xf32>
    %300 = vector.multi_reduction <add>, %299, %cst_144 [1] : vector<5x128xf32> to vector<5xf32>
    %301 = vector.shape_cast %300 : vector<5xf32> to vector<5x1xf32>
    %cst_145 = arith.constant 1.280000e+02 : f32
    %302 = vector.broadcast %cst_145 : f32 to vector<5x1xf32>
    %303 = arith.divf %301, %302 : vector<5x1xf32>
    %304 = vector.broadcast %303 : vector<5x1xf32> to vector<5x128xf32>
    %305 = arith.subf %299, %304 : vector<5x128xf32>
    %306 = arith.mulf %305, %305 : vector<5x128xf32>
    %cst_146 = arith.constant dense<0.000000e+00> : vector<5xf32>
    %307 = vector.multi_reduction <add>, %306, %cst_146 [1] : vector<5x128xf32> to vector<5xf32>
    %308 = vector.shape_cast %307 : vector<5xf32> to vector<5x1xf32>
    %cst_147 = arith.constant 1.280000e+02 : f32
    %309 = vector.broadcast %cst_147 : f32 to vector<5x1xf32>
    %310 = arith.divf %308, %309 : vector<5x1xf32>
    %311 = vector.broadcast %303 : vector<5x1xf32> to vector<5x128xf32>
    %312 = arith.subf %299, %311 : vector<5x128xf32>
    %cst_148 = arith.constant 9.99999974E-6 : f32
    %313 = vector.broadcast %cst_148 : f32 to vector<5x1xf32>
    %314 = arith.addf %310, %313 : vector<5x1xf32>
    %315 = math.rsqrt %314 : vector<5x1xf32>
    %316 = vector.broadcast %315 : vector<5x1xf32> to vector<5x128xf32>
    %317 = arith.mulf %312, %316 : vector<5x128xf32>
    %318 = vector.broadcast %101 : vector<1x128xf32> to vector<5x128xf32>
    %319 = arith.mulf %317, %318 : vector<5x128xf32>
    %320 = vector.broadcast %103 : vector<1x128xf32> to vector<5x128xf32>
    %321 = arith.addf %319, %320 : vector<5x128xf32>
    %322 = arith.truncf %321 : vector<5x128xf32> to vector<5x128xbf16>
    %cst_149 = arith.constant dense<0.000000e+00> : vector<5x384xf32>
    %323 = tpu.matmul %322, %105, %cst_149 {dimension_numbers = #tpu.dot_dimension_numbers<[1], [0], [0], [1], [0, 0, 1, 1], [], []>} : vector<5x128xbf16>, vector<128x384xbf16>, vector<5x384xf32> -> vector<5x384xf32>
    %324 = vector.broadcast %107 : vector<1x384xf32> to vector<5x384xf32>
    %325 = arith.addf %323, %324 : vector<5x384xf32>
    %cst_150 = arith.constant 0.000000e+00 : f32
    %326 = vector.broadcast %cst_150 : f32 to vector<5x128xf32>
    %327 = vector.extract_strided_slice %325 {offsets = [0, 0], sizes = [5, 32], strides = [1, 1]} : vector<5x384xf32> to vector<5x32xf32>
    %328 = arith.truncf %327 : vector<5x32xf32> to vector<5x32xbf16>
    %329 = vector.extract_strided_slice %325 {offsets = [0, 128], sizes = [5, 32], strides = [1, 1]} : vector<5x384xf32> to vector<5x32xf32>
    %330 = arith.truncf %329 : vector<5x32xf32> to vector<5x32xbf16>
    %331 = vector.extract_strided_slice %325 {offsets = [0, 256], sizes = [5, 32], strides = [1, 1]} : vector<5x384xf32> to vector<5x32xf32>
    %332 = arith.truncf %331 : vector<5x32xf32> to vector<5x32xbf16>
    %cst_151 = arith.constant dense<0.000000e+00> : vector<5x5xf32>
    %333 = tpu.matmul %328, %330, %cst_151 {dimension_numbers = #tpu.dot_dimension_numbers<[1], [1], [0], [0], [0, 0, 1, 0], [], []>} : vector<5x32xbf16>, vector<5x32xbf16>, vector<5x5xf32> -> vector<5x5xf32>
    %cst_152 = arith.constant 0.176776692 : f32
    %334 = vector.broadcast %cst_152 : f32 to vector<5x5xf32>
    %335 = arith.mulf %333, %334 : vector<5x5xf32>
    %cst_153 = arith.constant dense<0xFF800000> : vector<5xf32>
    %336 = vector.multi_reduction <maximumf>, %335, %cst_153 [1] : vector<5x5xf32> to vector<5xf32>
    %337 = vector.shape_cast %336 : vector<5xf32> to vector<5x1xf32>
    %338 = vector.broadcast %337 : vector<5x1xf32> to vector<5x5xf32>
    %339 = arith.subf %335, %338 : vector<5x5xf32>
    %340 = math.exp %339 : vector<5x5xf32>
    %cst_154 = arith.constant dense<0.000000e+00> : vector<5xf32>
    %341 = vector.multi_reduction <add>, %340, %cst_154 [1] : vector<5x5xf32> to vector<5xf32>
    %342 = vector.shape_cast %341 : vector<5xf32> to vector<5x1xf32>
    %343 = tpu.reciprocal %342 {approx = true} : vector<5x1xf32> -> vector<5x1xf32>
    %344 = vector.broadcast %343 : vector<5x1xf32> to vector<5x5xf32>
    %345 = arith.mulf %340, %344 : vector<5x5xf32>
    %346 = arith.truncf %345 : vector<5x5xf32> to vector<5x5xbf16>
    %cst_155 = arith.constant dense<0.000000e+00> : vector<5x32xf32>
    %347 = tpu.matmul %346, %332, %cst_155 {dimension_numbers = #tpu.dot_dimension_numbers<[1], [0], [0], [1], [0, 0, 1, 1], [], []>} : vector<5x5xbf16>, vector<5x32xbf16>, vector<5x32xf32> -> vector<5x32xf32>
    %348 = arith.truncf %347 : vector<5x32xf32> to vector<5x32xbf16>
    %349 = vector.extract_strided_slice %109 {offsets = [0, 0], sizes = [32, 128], strides = [1, 1]} : vector<128x128xbf16> to vector<32x128xbf16>
    %cst_156 = arith.constant dense<0.000000e+00> : vector<5x128xf32>
    %350 = tpu.matmul %348, %349, %cst_156 {dimension_numbers = #tpu.dot_dimension_numbers<[1], [0], [0], [1], [0, 0, 1, 1], [], []>} : vector<5x32xbf16>, vector<32x128xbf16>, vector<5x128xf32> -> vector<5x128xf32>
    %351 = arith.addf %326, %350 : vector<5x128xf32>
    %352 = vector.extract_strided_slice %325 {offsets = [0, 32], sizes = [5, 32], strides = [1, 1]} : vector<5x384xf32> to vector<5x32xf32>
    %353 = arith.truncf %352 : vector<5x32xf32> to vector<5x32xbf16>
    %354 = vector.extract_strided_slice %325 {offsets = [0, 160], sizes = [5, 32], strides = [1, 1]} : vector<5x384xf32> to vector<5x32xf32>
    %355 = arith.truncf %354 : vector<5x32xf32> to vector<5x32xbf16>
    %356 = vector.extract_strided_slice %325 {offsets = [0, 288], sizes = [5, 32], strides = [1, 1]} : vector<5x384xf32> to vector<5x32xf32>
    %357 = arith.truncf %356 : vector<5x32xf32> to vector<5x32xbf16>
    %cst_157 = arith.constant dense<0.000000e+00> : vector<5x5xf32>
    %358 = tpu.matmul %353, %355, %cst_157 {dimension_numbers = #tpu.dot_dimension_numbers<[1], [1], [0], [0], [0, 0, 1, 0], [], []>} : vector<5x32xbf16>, vector<5x32xbf16>, vector<5x5xf32> -> vector<5x5xf32>
    %cst_158 = arith.constant 0.176776692 : f32
    %359 = vector.broadcast %cst_158 : f32 to vector<5x5xf32>
    %360 = arith.mulf %358, %359 : vector<5x5xf32>
    %cst_159 = arith.constant dense<0xFF800000> : vector<5xf32>
    %361 = vector.multi_reduction <maximumf>, %360, %cst_159 [1] : vector<5x5xf32> to vector<5xf32>
    %362 = vector.shape_cast %361 : vector<5xf32> to vector<5x1xf32>
    %363 = vector.broadcast %362 : vector<5x1xf32> to vector<5x5xf32>
    %364 = arith.subf %360, %363 : vector<5x5xf32>
    %365 = math.exp %364 : vector<5x5xf32>
    %cst_160 = arith.constant dense<0.000000e+00> : vector<5xf32>
    %366 = vector.multi_reduction <add>, %365, %cst_160 [1] : vector<5x5xf32> to vector<5xf32>
    %367 = vector.shape_cast %366 : vector<5xf32> to vector<5x1xf32>
    %368 = tpu.reciprocal %367 {approx = true} : vector<5x1xf32> -> vector<5x1xf32>
    %369 = vector.broadcast %368 : vector<5x1xf32> to vector<5x5xf32>
    %370 = arith.mulf %365, %369 : vector<5x5xf32>
    %371 = arith.truncf %370 : vector<5x5xf32> to vector<5x5xbf16>
    %cst_161 = arith.constant dense<0.000000e+00> : vector<5x32xf32>
    %372 = tpu.matmul %371, %357, %cst_161 {dimension_numbers = #tpu.dot_dimension_numbers<[1], [0], [0], [1], [0, 0, 1, 1], [], []>} : vector<5x5xbf16>, vector<5x32xbf16>, vector<5x32xf32> -> vector<5x32xf32>
    %373 = arith.truncf %372 : vector<5x32xf32> to vector<5x32xbf16>
    %374 = vector.extract_strided_slice %109 {offsets = [32, 0], sizes = [32, 128], strides = [1, 1]} : vector<128x128xbf16> to vector<32x128xbf16>
    %cst_162 = arith.constant dense<0.000000e+00> : vector<5x128xf32>
    %375 = tpu.matmul %373, %374, %cst_162 {dimension_numbers = #tpu.dot_dimension_numbers<[1], [0], [0], [1], [0, 0, 1, 1], [], []>} : vector<5x32xbf16>, vector<32x128xbf16>, vector<5x128xf32> -> vector<5x128xf32>
    %376 = arith.addf %351, %375 : vector<5x128xf32>
    %377 = vector.extract_strided_slice %325 {offsets = [0, 64], sizes = [5, 32], strides = [1, 1]} : vector<5x384xf32> to vector<5x32xf32>
    %378 = arith.truncf %377 : vector<5x32xf32> to vector<5x32xbf16>
    %379 = vector.extract_strided_slice %325 {offsets = [0, 192], sizes = [5, 32], strides = [1, 1]} : vector<5x384xf32> to vector<5x32xf32>
    %380 = arith.truncf %379 : vector<5x32xf32> to vector<5x32xbf16>
    %381 = vector.extract_strided_slice %325 {offsets = [0, 320], sizes = [5, 32], strides = [1, 1]} : vector<5x384xf32> to vector<5x32xf32>
    %382 = arith.truncf %381 : vector<5x32xf32> to vector<5x32xbf16>
    %cst_163 = arith.constant dense<0.000000e+00> : vector<5x5xf32>
    %383 = tpu.matmul %378, %380, %cst_163 {dimension_numbers = #tpu.dot_dimension_numbers<[1], [1], [0], [0], [0, 0, 1, 0], [], []>} : vector<5x32xbf16>, vector<5x32xbf16>, vector<5x5xf32> -> vector<5x5xf32>
    %cst_164 = arith.constant 0.176776692 : f32
    %384 = vector.broadcast %cst_164 : f32 to vector<5x5xf32>
    %385 = arith.mulf %383, %384 : vector<5x5xf32>
    %cst_165 = arith.constant dense<0xFF800000> : vector<5xf32>
    %386 = vector.multi_reduction <maximumf>, %385, %cst_165 [1] : vector<5x5xf32> to vector<5xf32>
    %387 = vector.shape_cast %386 : vector<5xf32> to vector<5x1xf32>
    %388 = vector.broadcast %387 : vector<5x1xf32> to vector<5x5xf32>
    %389 = arith.subf %385, %388 : vector<5x5xf32>
    %390 = math.exp %389 : vector<5x5xf32>
    %cst_166 = arith.constant dense<0.000000e+00> : vector<5xf32>
    %391 = vector.multi_reduction <add>, %390, %cst_166 [1] : vector<5x5xf32> to vector<5xf32>
    %392 = vector.shape_cast %391 : vector<5xf32> to vector<5x1xf32>
    %393 = tpu.reciprocal %392 {approx = true} : vector<5x1xf32> -> vector<5x1xf32>
    %394 = vector.broadcast %393 : vector<5x1xf32> to vector<5x5xf32>
    %395 = arith.mulf %390, %394 : vector<5x5xf32>
    %396 = arith.truncf %395 : vector<5x5xf32> to vector<5x5xbf16>
    %cst_167 = arith.constant dense<0.000000e+00> : vector<5x32xf32>
    %397 = tpu.matmul %396, %382, %cst_167 {dimension_numbers = #tpu.dot_dimension_numbers<[1], [0], [0], [1], [0, 0, 1, 1], [], []>} : vector<5x5xbf16>, vector<5x32xbf16>, vector<5x32xf32> -> vector<5x32xf32>
    %398 = arith.truncf %397 : vector<5x32xf32> to vector<5x32xbf16>
    %399 = vector.extract_strided_slice %109 {offsets = [64, 0], sizes = [32, 128], strides = [1, 1]} : vector<128x128xbf16> to vector<32x128xbf16>
    %cst_168 = arith.constant dense<0.000000e+00> : vector<5x128xf32>
    %400 = tpu.matmul %398, %399, %cst_168 {dimension_numbers = #tpu.dot_dimension_numbers<[1], [0], [0], [1], [0, 0, 1, 1], [], []>} : vector<5x32xbf16>, vector<32x128xbf16>, vector<5x128xf32> -> vector<5x128xf32>
    %401 = arith.addf %376, %400 : vector<5x128xf32>
    %402 = vector.extract_strided_slice %325 {offsets = [0, 96], sizes = [5, 32], strides = [1, 1]} : vector<5x384xf32> to vector<5x32xf32>
    %403 = arith.truncf %402 : vector<5x32xf32> to vector<5x32xbf16>
    %404 = vector.extract_strided_slice %325 {offsets = [0, 224], sizes = [5, 32], strides = [1, 1]} : vector<5x384xf32> to vector<5x32xf32>
    %405 = arith.truncf %404 : vector<5x32xf32> to vector<5x32xbf16>
    %406 = vector.extract_strided_slice %325 {offsets = [0, 352], sizes = [5, 32], strides = [1, 1]} : vector<5x384xf32> to vector<5x32xf32>
    %407 = arith.truncf %406 : vector<5x32xf32> to vector<5x32xbf16>
    %cst_169 = arith.constant dense<0.000000e+00> : vector<5x5xf32>
    %408 = tpu.matmul %403, %405, %cst_169 {dimension_numbers = #tpu.dot_dimension_numbers<[1], [1], [0], [0], [0, 0, 1, 0], [], []>} : vector<5x32xbf16>, vector<5x32xbf16>, vector<5x5xf32> -> vector<5x5xf32>
    %cst_170 = arith.constant 0.176776692 : f32
    %409 = vector.broadcast %cst_170 : f32 to vector<5x5xf32>
    %410 = arith.mulf %408, %409 : vector<5x5xf32>
    %cst_171 = arith.constant dense<0xFF800000> : vector<5xf32>
    %411 = vector.multi_reduction <maximumf>, %410, %cst_171 [1] : vector<5x5xf32> to vector<5xf32>
    %412 = vector.shape_cast %411 : vector<5xf32> to vector<5x1xf32>
    %413 = vector.broadcast %412 : vector<5x1xf32> to vector<5x5xf32>
    %414 = arith.subf %410, %413 : vector<5x5xf32>
    %415 = math.exp %414 : vector<5x5xf32>
    %cst_172 = arith.constant dense<0.000000e+00> : vector<5xf32>
    %416 = vector.multi_reduction <add>, %415, %cst_172 [1] : vector<5x5xf32> to vector<5xf32>
    %417 = vector.shape_cast %416 : vector<5xf32> to vector<5x1xf32>
    %418 = tpu.reciprocal %417 {approx = true} : vector<5x1xf32> -> vector<5x1xf32>
    %419 = vector.broadcast %418 : vector<5x1xf32> to vector<5x5xf32>
    %420 = arith.mulf %415, %419 : vector<5x5xf32>
    %421 = arith.truncf %420 : vector<5x5xf32> to vector<5x5xbf16>
    %cst_173 = arith.constant dense<0.000000e+00> : vector<5x32xf32>
    %422 = tpu.matmul %421, %407, %cst_173 {dimension_numbers = #tpu.dot_dimension_numbers<[1], [0], [0], [1], [0, 0, 1, 1], [], []>} : vector<5x5xbf16>, vector<5x32xbf16>, vector<5x32xf32> -> vector<5x32xf32>
    %423 = arith.truncf %422 : vector<5x32xf32> to vector<5x32xbf16>
    %424 = vector.extract_strided_slice %109 {offsets = [96, 0], sizes = [32, 128], strides = [1, 1]} : vector<128x128xbf16> to vector<32x128xbf16>
    %cst_174 = arith.constant dense<0.000000e+00> : vector<5x128xf32>
    %425 = tpu.matmul %423, %424, %cst_174 {dimension_numbers = #tpu.dot_dimension_numbers<[1], [0], [0], [1], [0, 0, 1, 1], [], []>} : vector<5x32xbf16>, vector<32x128xbf16>, vector<5x128xf32> -> vector<5x128xf32>
    %426 = arith.addf %401, %425 : vector<5x128xf32>
    %427 = arith.addf %299, %426 : vector<5x128xf32>
    %428 = vector.broadcast %111 : vector<1x128xf32> to vector<5x128xf32>
    %429 = arith.addf %427, %428 : vector<5x128xf32>
    %cst_175 = arith.constant dense<0.000000e+00> : vector<5xf32>
    %430 = vector.multi_reduction <add>, %429, %cst_175 [1] : vector<5x128xf32> to vector<5xf32>
    %431 = vector.shape_cast %430 : vector<5xf32> to vector<5x1xf32>
    %cst_176 = arith.constant 1.280000e+02 : f32
    %432 = vector.broadcast %cst_176 : f32 to vector<5x1xf32>
    %433 = arith.divf %431, %432 : vector<5x1xf32>
    %434 = vector.broadcast %433 : vector<5x1xf32> to vector<5x128xf32>
    %435 = arith.subf %429, %434 : vector<5x128xf32>
    %436 = arith.mulf %435, %435 : vector<5x128xf32>
    %cst_177 = arith.constant dense<0.000000e+00> : vector<5xf32>
    %437 = vector.multi_reduction <add>, %436, %cst_177 [1] : vector<5x128xf32> to vector<5xf32>
    %438 = vector.shape_cast %437 : vector<5xf32> to vector<5x1xf32>
    %cst_178 = arith.constant 1.280000e+02 : f32
    %439 = vector.broadcast %cst_178 : f32 to vector<5x1xf32>
    %440 = arith.divf %438, %439 : vector<5x1xf32>
    %441 = vector.broadcast %433 : vector<5x1xf32> to vector<5x128xf32>
    %442 = arith.subf %429, %441 : vector<5x128xf32>
    %cst_179 = arith.constant 9.99999974E-6 : f32
    %443 = vector.broadcast %cst_179 : f32 to vector<5x1xf32>
    %444 = arith.addf %440, %443 : vector<5x1xf32>
    %445 = math.rsqrt %444 : vector<5x1xf32>
    %446 = vector.broadcast %445 : vector<5x1xf32> to vector<5x128xf32>
    %447 = arith.mulf %442, %446 : vector<5x128xf32>
    %448 = vector.broadcast %113 : vector<1x128xf32> to vector<5x128xf32>
    %449 = arith.mulf %447, %448 : vector<5x128xf32>
    %450 = vector.broadcast %115 : vector<1x128xf32> to vector<5x128xf32>
    %451 = arith.addf %449, %450 : vector<5x128xf32>
    %452 = arith.truncf %451 : vector<5x128xf32> to vector<5x128xbf16>
    %cst_180 = arith.constant dense<0.000000e+00> : vector<5x512xf32>
    %453 = tpu.matmul %452, %117, %cst_180 {dimension_numbers = #tpu.dot_dimension_numbers<[1], [0], [0], [1], [0, 0, 1, 1], [], []>} : vector<5x128xbf16>, vector<128x512xbf16>, vector<5x512xf32> -> vector<5x512xf32>
    %454 = vector.broadcast %119 : vector<1x512xf32> to vector<5x512xf32>
    %455 = arith.addf %453, %454 : vector<5x512xf32>
    %cst_181 = arith.constant 1.702000e+00 : f32
    %456 = vector.broadcast %cst_181 : f32 to vector<5x512xf32>
    %457 = arith.mulf %456, %455 : vector<5x512xf32>
    %458 = arith.negf %457 : vector<5x512xf32>
    %459 = math.exp %458 : vector<5x512xf32>
    %cst_182 = arith.constant 1.000000e+00 : f32
    %460 = vector.broadcast %cst_182 : f32 to vector<5x512xf32>
    %461 = arith.addf %460, %459 : vector<5x512xf32>
    %462 = arith.divf %460, %461 : vector<5x512xf32>
    %463 = arith.mulf %455, %462 : vector<5x512xf32>
    %464 = arith.truncf %463 : vector<5x512xf32> to vector<5x512xbf16>
    %cst_183 = arith.constant dense<0.000000e+00> : vector<5x128xf32>
    %465 = tpu.matmul %464, %121, %cst_183 {dimension_numbers = #tpu.dot_dimension_numbers<[1], [0], [0], [1], [0, 0, 1, 1], [], []>} : vector<5x512xbf16>, vector<512x128xbf16>, vector<5x128xf32> -> vector<5x128xf32>
    %466 = vector.broadcast %123 : vector<1x128xf32> to vector<5x128xf32>
    %467 = arith.addf %465, %466 : vector<5x128xf32>
    %468 = arith.addf %429, %467 : vector<5x128xf32>
    %c1_184 = arith.constant 1 : index
    %c0_185 = arith.constant 0 : index
    %c0_186 = arith.constant 0 : index
    %469 = vector.load %arg24[%c1_184, %c0_185, %c0_186] : memref<2x5x128xf32, #tpu.memory_space<vmem>>, vector<1x5x128xf32>
    %470 = vector.shape_cast %469 : vector<1x5x128xf32> to vector<5x128xf32>
    %471 = vector.shape_cast %468 : vector<5x128xf32> to vector<1x5x128xf32>
    tpu.vector_store %arg24[%c1_184, %c0_185, %c0_186], %471 {strides = array<i32>} : memref<2x5x128xf32, #tpu.memory_space<vmem>>, vector<1x5x128xf32>,
    %c0_187 = arith.constant 0 : index
    %c1_188 = arith.constant 1 : index
    %c0_189 = arith.constant 0 : index
    %c0_190 = arith.constant 0 : index
    %472 = vector.load %arg7[%c0_187, %c1_188, %c0_189, %c0_190] : memref<1x2x1x128xf32, #tpu.memory_space<vmem>>, vector<1x1x1x128xf32>
    %473 = vector.shape_cast %472 : vector<1x1x1x128xf32> to vector<1x128xf32>
    %c0_191 = arith.constant 0 : index
    %c1_192 = arith.constant 1 : index
    %c0_193 = arith.constant 0 : index
    %c0_194 = arith.constant 0 : index
    %474 = vector.load %arg8[%c0_191, %c1_192, %c0_193, %c0_194] : memref<1x2x1x128xf32, #tpu.memory_space<vmem>>, vector<1x1x1x128xf32>
    %475 = vector.shape_cast %474 : vector<1x1x1x128xf32> to vector<1x128xf32>
    %c0_195 = arith.constant 0 : index
    %c1_196 = arith.constant 1 : index
    %c0_197 = arith.constant 0 : index
    %c0_198 = arith.constant 0 : index
    %476 = vector.load %arg9[%c0_195, %c1_196, %c0_197, %c0_198] : memref<1x2x128x384xbf16, #tpu.memory_space<vmem>>, vector<1x1x128x384xbf16>
    %477 = vector.shape_cast %476 : vector<1x1x128x384xbf16> to vector<128x384xbf16>
    %c0_199 = arith.constant 0 : index
    %c1_200 = arith.constant 1 : index
    %c0_201 = arith.constant 0 : index
    %c0_202 = arith.constant 0 : index
    %478 = vector.load %arg10[%c0_199, %c1_200, %c0_201, %c0_202] : memref<1x2x1x384xf32, #tpu.memory_space<vmem>>, vector<1x1x1x384xf32>
    %479 = vector.shape_cast %478 : vector<1x1x1x384xf32> to vector<1x384xf32>
    %c0_203 = arith.constant 0 : index
    %c1_204 = arith.constant 1 : index
    %c0_205 = arith.constant 0 : index
    %c0_206 = arith.constant 0 : index
    %480 = vector.load %arg11[%c0_203, %c1_204, %c0_205, %c0_206] : memref<1x2x128x128xbf16, #tpu.memory_space<vmem>>, vector<1x1x128x128xbf16>
    %481 = vector.shape_cast %480 : vector<1x1x128x128xbf16> to vector<128x128xbf16>
    %c0_207 = arith.constant 0 : index
    %c1_208 = arith.constant 1 : index
    %c0_209 = arith.constant 0 : index
    %c0_210 = arith.constant 0 : index
    %482 = vector.load %arg12[%c0_207, %c1_208, %c0_209, %c0_210] : memref<1x2x1x128xf32, #tpu.memory_space<vmem>>, vector<1x1x1x128xf32>
    %483 = vector.shape_cast %482 : vector<1x1x1x128xf32> to vector<1x128xf32>
    %c0_211 = arith.constant 0 : index
    %c1_212 = arith.constant 1 : index
    %c0_213 = arith.constant 0 : index
    %c0_214 = arith.constant 0 : index
    %484 = vector.load %arg13[%c0_211, %c1_212, %c0_213, %c0_214] : memref<1x2x1x128xf32, #tpu.memory_space<vmem>>, vector<1x1x1x128xf32>
    %485 = vector.shape_cast %484 : vector<1x1x1x128xf32> to vector<1x128xf32>
    %c0_215 = arith.constant 0 : index
    %c1_216 = arith.constant 1 : index
    %c0_217 = arith.constant 0 : index
    %c0_218 = arith.constant 0 : index
    %486 = vector.load %arg14[%c0_215, %c1_216, %c0_217, %c0_218] : memref<1x2x1x128xf32, #tpu.memory_space<vmem>>, vector<1x1x1x128xf32>
    %487 = vector.shape_cast %486 : vector<1x1x1x128xf32> to vector<1x128xf32>
    %c0_219 = arith.constant 0 : index
    %c1_220 = arith.constant 1 : index
    %c0_221 = arith.constant 0 : index
    %c0_222 = arith.constant 0 : index
    %488 = vector.load %arg15[%c0_219, %c1_220, %c0_221, %c0_222] : memref<1x2x128x512xbf16, #tpu.memory_space<vmem>>, vector<1x1x128x512xbf16>
    %489 = vector.shape_cast %488 : vector<1x1x128x512xbf16> to vector<128x512xbf16>
    %c0_223 = arith.constant 0 : index
    %c1_224 = arith.constant 1 : index
    %c0_225 = arith.constant 0 : index
    %c0_226 = arith.constant 0 : index
    %490 = vector.load %arg16[%c0_223, %c1_224, %c0_225, %c0_226] : memref<1x2x1x512xf32, #tpu.memory_space<vmem>>, vector<1x1x1x512xf32>
    %491 = vector.shape_cast %490 : vector<1x1x1x512xf32> to vector<1x512xf32>
    %c0_227 = arith.constant 0 : index
    %c1_228 = arith.constant 1 : index
    %c0_229 = arith.constant 0 : index
    %c0_230 = arith.constant 0 : index
    %492 = vector.load %arg17[%c0_227, %c1_228, %c0_229, %c0_230] : memref<1x2x512x128xbf16, #tpu.memory_space<vmem>>, vector<1x1x512x128xbf16>
    %493 = vector.shape_cast %492 : vector<1x1x512x128xbf16> to vector<512x128xbf16>
    %c0_231 = arith.constant 0 : index
    %c1_232 = arith.constant 1 : index
    %c0_233 = arith.constant 0 : index
    %c0_234 = arith.constant 0 : index
    %494 = vector.load %arg18[%c0_231, %c1_232, %c0_233, %c0_234] : memref<1x2x1x128xf32, #tpu.memory_space<vmem>>, vector<1x1x1x128xf32>
    %495 = vector.shape_cast %494 : vector<1x1x1x128xf32> to vector<1x128xf32>
    %c0_235 = arith.constant 0 : index
    %c0_236 = arith.constant 0 : index
    %c0_237 = arith.constant 0 : index
    %496 = vector.load %arg24[%c0_235, %c0_236, %c0_237] : memref<2x5x128xf32, #tpu.memory_space<vmem>>, vector<1x5x128xf32>
    %497 = vector.shape_cast %496 : vector<1x5x128xf32> to vector<5x128xf32>
    %cst_238 = arith.constant dense<0.000000e+00> : vector<5xf32>
    %498 = vector.multi_reduction <add>, %497, %cst_238 [1] : vector<5x128xf32> to vector<5xf32>
    %499 = vector.shape_cast %498 : vector<5xf32> to vector<5x1xf32>
    %cst_239 = arith.constant 1.280000e+02 : f32
    %500 = vector.broadcast %cst_239 : f32 to vector<5x1xf32>
    %501 = arith.divf %499, %500 : vector<5x1xf32>
    %502 = vector.broadcast %501 : vector<5x1xf32> to vector<5x128xf32>
    %503 = arith.subf %497, %502 : vector<5x128xf32>
    %504 = arith.mulf %503, %503 : vector<5x128xf32>
    %cst_240 = arith.constant dense<0.000000e+00> : vector<5xf32>
    %505 = vector.multi_reduction <add>, %504, %cst_240 [1] : vector<5x128xf32> to vector<5xf32>
    %506 = vector.shape_cast %505 : vector<5xf32> to vector<5x1xf32>
    %cst_241 = arith.constant 1.280000e+02 : f32
    %507 = vector.broadcast %cst_241 : f32 to vector<5x1xf32>
    %508 = arith.divf %506, %507 : vector<5x1xf32>
    %509 = vector.broadcast %501 : vector<5x1xf32> to vector<5x128xf32>
    %510 = arith.subf %497, %509 : vector<5x128xf32>
    %cst_242 = arith.constant 9.99999974E-6 : f32
    %511 = vector.broadcast %cst_242 : f32 to vector<5x1xf32>
    %512 = arith.addf %508, %511 : vector<5x1xf32>
    %513 = math.rsqrt %512 : vector<5x1xf32>
    %514 = vector.broadcast %513 : vector<5x1xf32> to vector<5x128xf32>
    %515 = arith.mulf %510, %514 : vector<5x128xf32>
    %516 = vector.broadcast %473 : vector<1x128xf32> to vector<5x128xf32>
    %517 = arith.mulf %515, %516 : vector<5x128xf32>
    %518 = vector.broadcast %475 : vector<1x128xf32> to vector<5x128xf32>
    %519 = arith.addf %517, %518 : vector<5x128xf32>
    %520 = arith.truncf %519 : vector<5x128xf32> to vector<5x128xbf16>
    %cst_243 = arith.constant dense<0.000000e+00> : vector<5x384xf32>
    %521 = tpu.matmul %520, %477, %cst_243 {dimension_numbers = #tpu.dot_dimension_numbers<[1], [0], [0], [1], [0, 0, 1, 1], [], []>} : vector<5x128xbf16>, vector<128x384xbf16>, vector<5x384xf32> -> vector<5x384xf32>
    %522 = vector.broadcast %479 : vector<1x384xf32> to vector<5x384xf32>
    %523 = arith.addf %521, %522 : vector<5x384xf32>
    %cst_244 = arith.constant 0.000000e+00 : f32
    %524 = vector.broadcast %cst_244 : f32 to vector<5x128xf32>
    %525 = vector.extract_strided_slice %523 {offsets = [0, 0], sizes = [5, 32], strides = [1, 1]} : vector<5x384xf32> to vector<5x32xf32>
    %526 = arith.truncf %525 : vector<5x32xf32> to vector<5x32xbf16>
    %527 = vector.extract_strided_slice %523 {offsets = [0, 128], sizes = [5, 32], strides = [1, 1]} : vector<5x384xf32> to vector<5x32xf32>
    %528 = arith.truncf %527 : vector<5x32xf32> to vector<5x32xbf16>
    %529 = vector.extract_strided_slice %523 {offsets = [0, 256], sizes = [5, 32], strides = [1, 1]} : vector<5x384xf32> to vector<5x32xf32>
    %530 = arith.truncf %529 : vector<5x32xf32> to vector<5x32xbf16>
    %cst_245 = arith.constant dense<0.000000e+00> : vector<5x5xf32>
    %531 = tpu.matmul %526, %528, %cst_245 {dimension_numbers = #tpu.dot_dimension_numbers<[1], [1], [0], [0], [0, 0, 1, 0], [], []>} : vector<5x32xbf16>, vector<5x32xbf16>, vector<5x5xf32> -> vector<5x5xf32>
    %cst_246 = arith.constant 0.176776692 : f32
    %532 = vector.broadcast %cst_246 : f32 to vector<5x5xf32>
    %533 = arith.mulf %531, %532 : vector<5x5xf32>
    %cst_247 = arith.constant dense<0xFF800000> : vector<5xf32>
    %534 = vector.multi_reduction <maximumf>, %533, %cst_247 [1] : vector<5x5xf32> to vector<5xf32>
    %535 = vector.shape_cast %534 : vector<5xf32> to vector<5x1xf32>
    %536 = vector.broadcast %535 : vector<5x1xf32> to vector<5x5xf32>
    %537 = arith.subf %533, %536 : vector<5x5xf32>
    %538 = math.exp %537 : vector<5x5xf32>
    %cst_248 = arith.constant dense<0.000000e+00> : vector<5xf32>
    %539 = vector.multi_reduction <add>, %538, %cst_248 [1] : vector<5x5xf32> to vector<5xf32>
    %540 = vector.shape_cast %539 : vector<5xf32> to vector<5x1xf32>
    %541 = tpu.reciprocal %540 {approx = true} : vector<5x1xf32> -> vector<5x1xf32>
    %542 = vector.broadcast %541 : vector<5x1xf32> to vector<5x5xf32>
    %543 = arith.mulf %538, %542 : vector<5x5xf32>
    %544 = arith.truncf %543 : vector<5x5xf32> to vector<5x5xbf16>
    %cst_249 = arith.constant dense<0.000000e+00> : vector<5x32xf32>
    %545 = tpu.matmul %544, %530, %cst_249 {dimension_numbers = #tpu.dot_dimension_numbers<[1], [0], [0], [1], [0, 0, 1, 1], [], []>} : vector<5x5xbf16>, vector<5x32xbf16>, vector<5x32xf32> -> vector<5x32xf32>
    %546 = arith.truncf %545 : vector<5x32xf32> to vector<5x32xbf16>
    %547 = vector.extract_strided_slice %481 {offsets = [0, 0], sizes = [32, 128], strides = [1, 1]} : vector<128x128xbf16> to vector<32x128xbf16>
    %cst_250 = arith.constant dense<0.000000e+00> : vector<5x128xf32>
    %548 = tpu.matmul %546, %547, %cst_250 {dimension_numbers = #tpu.dot_dimension_numbers<[1], [0], [0], [1], [0, 0, 1, 1], [], []>} : vector<5x32xbf16>, vector<32x128xbf16>, vector<5x128xf32> -> vector<5x128xf32>
    %549 = arith.addf %524, %548 : vector<5x128xf32>
    %550 = vector.extract_strided_slice %523 {offsets = [0, 32], sizes = [5, 32], strides = [1, 1]} : vector<5x384xf32> to vector<5x32xf32>
    %551 = arith.truncf %550 : vector<5x32xf32> to vector<5x32xbf16>
    %552 = vector.extract_strided_slice %523 {offsets = [0, 160], sizes = [5, 32], strides = [1, 1]} : vector<5x384xf32> to vector<5x32xf32>
    %553 = arith.truncf %552 : vector<5x32xf32> to vector<5x32xbf16>
    %554 = vector.extract_strided_slice %523 {offsets = [0, 288], sizes = [5, 32], strides = [1, 1]} : vector<5x384xf32> to vector<5x32xf32>
    %555 = arith.truncf %554 : vector<5x32xf32> to vector<5x32xbf16>
    %cst_251 = arith.constant dense<0.000000e+00> : vector<5x5xf32>
    %556 = tpu.matmul %551, %553, %cst_251 {dimension_numbers = #tpu.dot_dimension_numbers<[1], [1], [0], [0], [0, 0, 1, 0], [], []>} : vector<5x32xbf16>, vector<5x32xbf16>, vector<5x5xf32> -> vector<5x5xf32>
    %cst_252 = arith.constant 0.176776692 : f32
    %557 = vector.broadcast %cst_252 : f32 to vector<5x5xf32>
    %558 = arith.mulf %556, %557 : vector<5x5xf32>
    %cst_253 = arith.constant dense<0xFF800000> : vector<5xf32>
    %559 = vector.multi_reduction <maximumf>, %558, %cst_253 [1] : vector<5x5xf32> to vector<5xf32>
    %560 = vector.shape_cast %559 : vector<5xf32> to vector<5x1xf32>
    %561 = vector.broadcast %560 : vector<5x1xf32> to vector<5x5xf32>
    %562 = arith.subf %558, %561 : vector<5x5xf32>
    %563 = math.exp %562 : vector<5x5xf32>
    %cst_254 = arith.constant dense<0.000000e+00> : vector<5xf32>
    %564 = vector.multi_reduction <add>, %563, %cst_254 [1] : vector<5x5xf32> to vector<5xf32>
    %565 = vector.shape_cast %564 : vector<5xf32> to vector<5x1xf32>
    %566 = tpu.reciprocal %565 {approx = true} : vector<5x1xf32> -> vector<5x1xf32>
    %567 = vector.broadcast %566 : vector<5x1xf32> to vector<5x5xf32>
    %568 = arith.mulf %563, %567 : vector<5x5xf32>
    %569 = arith.truncf %568 : vector<5x5xf32> to vector<5x5xbf16>
    %cst_255 = arith.constant dense<0.000000e+00> : vector<5x32xf32>
    %570 = tpu.matmul %569, %555, %cst_255 {dimension_numbers = #tpu.dot_dimension_numbers<[1], [0], [0], [1], [0, 0, 1, 1], [], []>} : vector<5x5xbf16>, vector<5x32xbf16>, vector<5x32xf32> -> vector<5x32xf32>
    %571 = arith.truncf %570 : vector<5x32xf32> to vector<5x32xbf16>
    %572 = vector.extract_strided_slice %481 {offsets = [32, 0], sizes = [32, 128], strides = [1, 1]} : vector<128x128xbf16> to vector<32x128xbf16>
    %cst_256 = arith.constant dense<0.000000e+00> : vector<5x128xf32>
    %573 = tpu.matmul %571, %572, %cst_256 {dimension_numbers = #tpu.dot_dimension_numbers<[1], [0], [0], [1], [0, 0, 1, 1], [], []>} : vector<5x32xbf16>, vector<32x128xbf16>, vector<5x128xf32> -> vector<5x128xf32>
    %574 = arith.addf %549, %573 : vector<5x128xf32>
    %575 = vector.extract_strided_slice %523 {offsets = [0, 64], sizes = [5, 32], strides = [1, 1]} : vector<5x384xf32> to vector<5x32xf32>
    %576 = arith.truncf %575 : vector<5x32xf32> to vector<5x32xbf16>
    %577 = vector.extract_strided_slice %523 {offsets = [0, 192], sizes = [5, 32], strides = [1, 1]} : vector<5x384xf32> to vector<5x32xf32>
    %578 = arith.truncf %577 : vector<5x32xf32> to vector<5x32xbf16>
    %579 = vector.extract_strided_slice %523 {offsets = [0, 320], sizes = [5, 32], strides = [1, 1]} : vector<5x384xf32> to vector<5x32xf32>
    %580 = arith.truncf %579 : vector<5x32xf32> to vector<5x32xbf16>
    %cst_257 = arith.constant dense<0.000000e+00> : vector<5x5xf32>
    %581 = tpu.matmul %576, %578, %cst_257 {dimension_numbers = #tpu.dot_dimension_numbers<[1], [1], [0], [0], [0, 0, 1, 0], [], []>} : vector<5x32xbf16>, vector<5x32xbf16>, vector<5x5xf32> -> vector<5x5xf32>
    %cst_258 = arith.constant 0.176776692 : f32
    %582 = vector.broadcast %cst_258 : f32 to vector<5x5xf32>
    %583 = arith.mulf %581, %582 : vector<5x5xf32>
    %cst_259 = arith.constant dense<0xFF800000> : vector<5xf32>
    %584 = vector.multi_reduction <maximumf>, %583, %cst_259 [1] : vector<5x5xf32> to vector<5xf32>
    %585 = vector.shape_cast %584 : vector<5xf32> to vector<5x1xf32>
    %586 = vector.broadcast %585 : vector<5x1xf32> to vector<5x5xf32>
    %587 = arith.subf %583, %586 : vector<5x5xf32>
    %588 = math.exp %587 : vector<5x5xf32>
    %cst_260 = arith.constant dense<0.000000e+00> : vector<5xf32>
    %589 = vector.multi_reduction <add>, %588, %cst_260 [1] : vector<5x5xf32> to vector<5xf32>
    %590 = vector.shape_cast %589 : vector<5xf32> to vector<5x1xf32>
    %591 = tpu.reciprocal %590 {approx = true} : vector<5x1xf32> -> vector<5x1xf32>
    %592 = vector.broadcast %591 : vector<5x1xf32> to vector<5x5xf32>
    %593 = arith.mulf %588, %592 : vector<5x5xf32>
    %594 = arith.truncf %593 : vector<5x5xf32> to vector<5x5xbf16>
    %cst_261 = arith.constant dense<0.000000e+00> : vector<5x32xf32>
    %595 = tpu.matmul %594, %580, %cst_261 {dimension_numbers = #tpu.dot_dimension_numbers<[1], [0], [0], [1], [0, 0, 1, 1], [], []>} : vector<5x5xbf16>, vector<5x32xbf16>, vector<5x32xf32> -> vector<5x32xf32>
    %596 = arith.truncf %595 : vector<5x32xf32> to vector<5x32xbf16>
    %597 = vector.extract_strided_slice %481 {offsets = [64, 0], sizes = [32, 128], strides = [1, 1]} : vector<128x128xbf16> to vector<32x128xbf16>
    %cst_262 = arith.constant dense<0.000000e+00> : vector<5x128xf32>
    %598 = tpu.matmul %596, %597, %cst_262 {dimension_numbers = #tpu.dot_dimension_numbers<[1], [0], [0], [1], [0, 0, 1, 1], [], []>} : vector<5x32xbf16>, vector<32x128xbf16>, vector<5x128xf32> -> vector<5x128xf32>
    %599 = arith.addf %574, %598 : vector<5x128xf32>
    %600 = vector.extract_strided_slice %523 {offsets = [0, 96], sizes = [5, 32], strides = [1, 1]} : vector<5x384xf32> to vector<5x32xf32>
    %601 = arith.truncf %600 : vector<5x32xf32> to vector<5x32xbf16>
    %602 = vector.extract_strided_slice %523 {offsets = [0, 224], sizes = [5, 32], strides = [1, 1]} : vector<5x384xf32> to vector<5x32xf32>
    %603 = arith.truncf %602 : vector<5x32xf32> to vector<5x32xbf16>
    %604 = vector.extract_strided_slice %523 {offsets = [0, 352], sizes = [5, 32], strides = [1, 1]} : vector<5x384xf32> to vector<5x32xf32>
    %605 = arith.truncf %604 : vector<5x32xf32> to vector<5x32xbf16>
    %cst_263 = arith.constant dense<0.000000e+00> : vector<5x5xf32>
    %606 = tpu.matmul %601, %603, %cst_263 {dimension_numbers = #tpu.dot_dimension_numbers<[1], [1], [0], [0], [0, 0, 1, 0], [], []>} : vector<5x32xbf16>, vector<5x32xbf16>, vector<5x5xf32> -> vector<5x5xf32>
    %cst_264 = arith.constant 0.176776692 : f32
    %607 = vector.broadcast %cst_264 : f32 to vector<5x5xf32>
    %608 = arith.mulf %606, %607 : vector<5x5xf32>
    %cst_265 = arith.constant dense<0xFF800000> : vector<5xf32>
    %609 = vector.multi_reduction <maximumf>, %608, %cst_265 [1] : vector<5x5xf32> to vector<5xf32>
    %610 = vector.shape_cast %609 : vector<5xf32> to vector<5x1xf32>
    %611 = vector.broadcast %610 : vector<5x1xf32> to vector<5x5xf32>
    %612 = arith.subf %608, %611 : vector<5x5xf32>
    %613 = math.exp %612 : vector<5x5xf32>
    %cst_266 = arith.constant dense<0.000000e+00> : vector<5xf32>
    %614 = vector.multi_reduction <add>, %613, %cst_266 [1] : vector<5x5xf32> to vector<5xf32>
    %615 = vector.shape_cast %614 : vector<5xf32> to vector<5x1xf32>
    %616 = tpu.reciprocal %615 {approx = true} : vector<5x1xf32> -> vector<5x1xf32>
    %617 = vector.broadcast %616 : vector<5x1xf32> to vector<5x5xf32>
    %618 = arith.mulf %613, %617 : vector<5x5xf32>
    %619 = arith.truncf %618 : vector<5x5xf32> to vector<5x5xbf16>
    %cst_267 = arith.constant dense<0.000000e+00> : vector<5x32xf32>
    %620 = tpu.matmul %619, %605, %cst_267 {dimension_numbers = #tpu.dot_dimension_numbers<[1], [0], [0], [1], [0, 0, 1, 1], [], []>} : vector<5x5xbf16>, vector<5x32xbf16>, vector<5x32xf32> -> vector<5x32xf32>
    %621 = arith.truncf %620 : vector<5x32xf32> to vector<5x32xbf16>
    %622 = vector.extract_strided_slice %481 {offsets = [96, 0], sizes = [32, 128], strides = [1, 1]} : vector<128x128xbf16> to vector<32x128xbf16>
    %cst_268 = arith.constant dense<0.000000e+00> : vector<5x128xf32>
    %623 = tpu.matmul %621, %622, %cst_268 {dimension_numbers = #tpu.dot_dimension_numbers<[1], [0], [0], [1], [0, 0, 1, 1], [], []>} : vector<5x32xbf16>, vector<32x128xbf16>, vector<5x128xf32> -> vector<5x128xf32>
    %624 = arith.addf %599, %623 : vector<5x128xf32>
    %625 = arith.addf %497, %624 : vector<5x128xf32>
    %626 = vector.broadcast %483 : vector<1x128xf32> to vector<5x128xf32>
    %627 = arith.addf %625, %626 : vector<5x128xf32>
    %cst_269 = arith.constant dense<0.000000e+00> : vector<5xf32>
    %628 = vector.multi_reduction <add>, %627, %cst_269 [1] : vector<5x128xf32> to vector<5xf32>
    %629 = vector.shape_cast %628 : vector<5xf32> to vector<5x1xf32>
    %cst_270 = arith.constant 1.280000e+02 : f32
    %630 = vector.broadcast %cst_270 : f32 to vector<5x1xf32>
    %631 = arith.divf %629, %630 : vector<5x1xf32>
    %632 = vector.broadcast %631 : vector<5x1xf32> to vector<5x128xf32>
    %633 = arith.subf %627, %632 : vector<5x128xf32>
    %634 = arith.mulf %633, %633 : vector<5x128xf32>
    %cst_271 = arith.constant dense<0.000000e+00> : vector<5xf32>
    %635 = vector.multi_reduction <add>, %634, %cst_271 [1] : vector<5x128xf32> to vector<5xf32>
    %636 = vector.shape_cast %635 : vector<5xf32> to vector<5x1xf32>
    %cst_272 = arith.constant 1.280000e+02 : f32
    %637 = vector.broadcast %cst_272 : f32 to vector<5x1xf32>
    %638 = arith.divf %636, %637 : vector<5x1xf32>
    %639 = vector.broadcast %631 : vector<5x1xf32> to vector<5x128xf32>
    %640 = arith.subf %627, %639 : vector<5x128xf32>
    %cst_273 = arith.constant 9.99999974E-6 : f32
    %641 = vector.broadcast %cst_273 : f32 to vector<5x1xf32>
    %642 = arith.addf %638, %641 : vector<5x1xf32>
    %643 = math.rsqrt %642 : vector<5x1xf32>
    %644 = vector.broadcast %643 : vector<5x1xf32> to vector<5x128xf32>
    %645 = arith.mulf %640, %644 : vector<5x128xf32>
    %646 = vector.broadcast %485 : vector<1x128xf32> to vector<5x128xf32>
    %647 = arith.mulf %645, %646 : vector<5x128xf32>
    %648 = vector.broadcast %487 : vector<1x128xf32> to vector<5x128xf32>
    %649 = arith.addf %647, %648 : vector<5x128xf32>
    %650 = arith.truncf %649 : vector<5x128xf32> to vector<5x128xbf16>
    %cst_274 = arith.constant dense<0.000000e+00> : vector<5x512xf32>
    %651 = tpu.matmul %650, %489, %cst_274 {dimension_numbers = #tpu.dot_dimension_numbers<[1], [0], [0], [1], [0, 0, 1, 1], [], []>} : vector<5x128xbf16>, vector<128x512xbf16>, vector<5x512xf32> -> vector<5x512xf32>
    %652 = vector.broadcast %491 : vector<1x512xf32> to vector<5x512xf32>
    %653 = arith.addf %651, %652 : vector<5x512xf32>
    %cst_275 = arith.constant 1.702000e+00 : f32
    %654 = vector.broadcast %cst_275 : f32 to vector<5x512xf32>
    %655 = arith.mulf %654, %653 : vector<5x512xf32>
    %656 = arith.negf %655 : vector<5x512xf32>
    %657 = math.exp %656 : vector<5x512xf32>
    %cst_276 = arith.constant 1.000000e+00 : f32
    %658 = vector.broadcast %cst_276 : f32 to vector<5x512xf32>
    %659 = arith.addf %658, %657 : vector<5x512xf32>
    %660 = arith.divf %658, %659 : vector<5x512xf32>
    %661 = arith.mulf %653, %660 : vector<5x512xf32>
    %662 = arith.truncf %661 : vector<5x512xf32> to vector<5x512xbf16>
    %cst_277 = arith.constant dense<0.000000e+00> : vector<5x128xf32>
    %663 = tpu.matmul %662, %493, %cst_277 {dimension_numbers = #tpu.dot_dimension_numbers<[1], [0], [0], [1], [0, 0, 1, 1], [], []>} : vector<5x512xbf16>, vector<512x128xbf16>, vector<5x128xf32> -> vector<5x128xf32>
    %664 = vector.broadcast %495 : vector<1x128xf32> to vector<5x128xf32>
    %665 = arith.addf %663, %664 : vector<5x128xf32>
    %666 = arith.addf %627, %665 : vector<5x128xf32>
    %c0_278 = arith.constant 0 : index
    %c0_279 = arith.constant 0 : index
    %c0_280 = arith.constant 0 : index
    %667 = vector.load %arg24[%c0_278, %c0_279, %c0_280] : memref<2x5x128xf32, #tpu.memory_space<vmem>>, vector<1x5x128xf32>
    %668 = vector.shape_cast %667 : vector<1x5x128xf32> to vector<5x128xf32>
    %669 = vector.shape_cast %666 : vector<5x128xf32> to vector<1x5x128xf32>
    tpu.vector_store %arg24[%c0_278, %c0_279, %c0_280], %669 {strides = array<i32>} : memref<2x5x128xf32, #tpu.memory_space<vmem>>, vector<1x5x128xf32>,
    %c1_281 = arith.constant 1 : index
    %c0_282 = arith.constant 0 : index
    %c0_283 = arith.constant 0 : index
    %670 = vector.load %arg24[%c1_281, %c0_282, %c0_283] : memref<2x5x128xf32, #tpu.memory_space<vmem>>, vector<1x5x128xf32>
    %671 = vector.shape_cast %670 : vector<1x5x128xf32> to vector<5x128xf32>
    %cst_284 = arith.constant dense<0.000000e+00> : vector<5xf32>
    %672 = vector.multi_reduction <add>, %671, %cst_284 [1] : vector<5x128xf32> to vector<5xf32>
    %673 = vector.shape_cast %672 : vector<5xf32> to vector<5x1xf32>
    %cst_285 = arith.constant 1.280000e+02 : f32
    %674 = vector.broadcast %cst_285 : f32 to vector<5x1xf32>
    %675 = arith.divf %673, %674 : vector<5x1xf32>
    %676 = vector.broadcast %675 : vector<5x1xf32> to vector<5x128xf32>
    %677 = arith.subf %671, %676 : vector<5x128xf32>
    %678 = arith.mulf %677, %677 : vector<5x128xf32>
    %cst_286 = arith.constant dense<0.000000e+00> : vector<5xf32>
    %679 = vector.multi_reduction <add>, %678, %cst_286 [1] : vector<5x128xf32> to vector<5xf32>
    %680 = vector.shape_cast %679 : vector<5xf32> to vector<5x1xf32>
    %cst_287 = arith.constant 1.280000e+02 : f32
    %681 = vector.broadcast %cst_287 : f32 to vector<5x1xf32>
    %682 = arith.divf %680, %681 : vector<5x1xf32>
    %683 = vector.broadcast %675 : vector<5x1xf32> to vector<5x128xf32>
    %684 = arith.subf %671, %683 : vector<5x128xf32>
    %cst_288 = arith.constant 9.99999974E-6 : f32
    %685 = vector.broadcast %cst_288 : f32 to vector<5x1xf32>
    %686 = arith.addf %682, %685 : vector<5x1xf32>
    %687 = math.rsqrt %686 : vector<5x1xf32>
    %688 = vector.broadcast %687 : vector<5x1xf32> to vector<5x128xf32>
    %689 = arith.mulf %684, %688 : vector<5x128xf32>
    %690 = vector.broadcast %473 : vector<1x128xf32> to vector<5x128xf32>
    %691 = arith.mulf %689, %690 : vector<5x128xf32>
    %692 = vector.broadcast %475 : vector<1x128xf32> to vector<5x128xf32>
    %693 = arith.addf %691, %692 : vector<5x128xf32>
    %694 = arith.truncf %693 : vector<5x128xf32> to vector<5x128xbf16>
    %cst_289 = arith.constant dense<0.000000e+00> : vector<5x384xf32>
    %695 = tpu.matmul %694, %477, %cst_289 {dimension_numbers = #tpu.dot_dimension_numbers<[1], [0], [0], [1], [0, 0, 1, 1], [], []>} : vector<5x128xbf16>, vector<128x384xbf16>, vector<5x384xf32> -> vector<5x384xf32>
    %696 = vector.broadcast %479 : vector<1x384xf32> to vector<5x384xf32>
    %697 = arith.addf %695, %696 : vector<5x384xf32>
    %cst_290 = arith.constant 0.000000e+00 : f32
    %698 = vector.broadcast %cst_290 : f32 to vector<5x128xf32>
    %699 = vector.extract_strided_slice %697 {offsets = [0, 0], sizes = [5, 32], strides = [1, 1]} : vector<5x384xf32> to vector<5x32xf32>
    %700 = arith.truncf %699 : vector<5x32xf32> to vector<5x32xbf16>
    %701 = vector.extract_strided_slice %697 {offsets = [0, 128], sizes = [5, 32], strides = [1, 1]} : vector<5x384xf32> to vector<5x32xf32>
    %702 = arith.truncf %701 : vector<5x32xf32> to vector<5x32xbf16>
    %703 = vector.extract_strided_slice %697 {offsets = [0, 256], sizes = [5, 32], strides = [1, 1]} : vector<5x384xf32> to vector<5x32xf32>
    %704 = arith.truncf %703 : vector<5x32xf32> to vector<5x32xbf16>
    %cst_291 = arith.constant dense<0.000000e+00> : vector<5x5xf32>
    %705 = tpu.matmul %700, %702, %cst_291 {dimension_numbers = #tpu.dot_dimension_numbers<[1], [1], [0], [0], [0, 0, 1, 0], [], []>} : vector<5x32xbf16>, vector<5x32xbf16>, vector<5x5xf32> -> vector<5x5xf32>
    %cst_292 = arith.constant 0.176776692 : f32
    %706 = vector.broadcast %cst_292 : f32 to vector<5x5xf32>
    %707 = arith.mulf %705, %706 : vector<5x5xf32>
    %cst_293 = arith.constant dense<0xFF800000> : vector<5xf32>
    %708 = vector.multi_reduction <maximumf>, %707, %cst_293 [1] : vector<5x5xf32> to vector<5xf32>
    %709 = vector.shape_cast %708 : vector<5xf32> to vector<5x1xf32>
    %710 = vector.broadcast %709 : vector<5x1xf32> to vector<5x5xf32>
    %711 = arith.subf %707, %710 : vector<5x5xf32>
    %712 = math.exp %711 : vector<5x5xf32>
    %cst_294 = arith.constant dense<0.000000e+00> : vector<5xf32>
    %713 = vector.multi_reduction <add>, %712, %cst_294 [1] : vector<5x5xf32> to vector<5xf32>
    %714 = vector.shape_cast %713 : vector<5xf32> to vector<5x1xf32>
    %715 = tpu.reciprocal %714 {approx = true} : vector<5x1xf32> -> vector<5x1xf32>
    %716 = vector.broadcast %715 : vector<5x1xf32> to vector<5x5xf32>
    %717 = arith.mulf %712, %716 : vector<5x5xf32>
    %718 = arith.truncf %717 : vector<5x5xf32> to vector<5x5xbf16>
    %cst_295 = arith.constant dense<0.000000e+00> : vector<5x32xf32>
    %719 = tpu.matmul %718, %704, %cst_295 {dimension_numbers = #tpu.dot_dimension_numbers<[1], [0], [0], [1], [0, 0, 1, 1], [], []>} : vector<5x5xbf16>, vector<5x32xbf16>, vector<5x32xf32> -> vector<5x32xf32>
    %720 = arith.truncf %719 : vector<5x32xf32> to vector<5x32xbf16>
    %721 = vector.extract_strided_slice %481 {offsets = [0, 0], sizes = [32, 128], strides = [1, 1]} : vector<128x128xbf16> to vector<32x128xbf16>
    %cst_296 = arith.constant dense<0.000000e+00> : vector<5x128xf32>
    %722 = tpu.matmul %720, %721, %cst_296 {dimension_numbers = #tpu.dot_dimension_numbers<[1], [0], [0], [1], [0, 0, 1, 1], [], []>} : vector<5x32xbf16>, vector<32x128xbf16>, vector<5x128xf32> -> vector<5x128xf32>
    %723 = arith.addf %698, %722 : vector<5x128xf32>
    %724 = vector.extract_strided_slice %697 {offsets = [0, 32], sizes = [5, 32], strides = [1, 1]} : vector<5x384xf32> to vector<5x32xf32>
    %725 = arith.truncf %724 : vector<5x32xf32> to vector<5x32xbf16>
    %726 = vector.extract_strided_slice %697 {offsets = [0, 160], sizes = [5, 32], strides = [1, 1]} : vector<5x384xf32> to vector<5x32xf32>
    %727 = arith.truncf %726 : vector<5x32xf32> to vector<5x32xbf16>
    %728 = vector.extract_strided_slice %697 {offsets = [0, 288], sizes = [5, 32], strides = [1, 1]} : vector<5x384xf32> to vector<5x32xf32>
    %729 = arith.truncf %728 : vector<5x32xf32> to vector<5x32xbf16>
    %cst_297 = arith.constant dense<0.000000e+00> : vector<5x5xf32>
    %730 = tpu.matmul %725, %727, %cst_297 {dimension_numbers = #tpu.dot_dimension_numbers<[1], [1], [0], [0], [0, 0, 1, 0], [], []>} : vector<5x32xbf16>, vector<5x32xbf16>, vector<5x5xf32> -> vector<5x5xf32>
    %cst_298 = arith.constant 0.176776692 : f32
    %731 = vector.broadcast %cst_298 : f32 to vector<5x5xf32>
    %732 = arith.mulf %730, %731 : vector<5x5xf32>
    %cst_299 = arith.constant dense<0xFF800000> : vector<5xf32>
    %733 = vector.multi_reduction <maximumf>, %732, %cst_299 [1] : vector<5x5xf32> to vector<5xf32>
    %734 = vector.shape_cast %733 : vector<5xf32> to vector<5x1xf32>
    %735 = vector.broadcast %734 : vector<5x1xf32> to vector<5x5xf32>
    %736 = arith.subf %732, %735 : vector<5x5xf32>
    %737 = math.exp %736 : vector<5x5xf32>
    %cst_300 = arith.constant dense<0.000000e+00> : vector<5xf32>
    %738 = vector.multi_reduction <add>, %737, %cst_300 [1] : vector<5x5xf32> to vector<5xf32>
    %739 = vector.shape_cast %738 : vector<5xf32> to vector<5x1xf32>
    %740 = tpu.reciprocal %739 {approx = true} : vector<5x1xf32> -> vector<5x1xf32>
    %741 = vector.broadcast %740 : vector<5x1xf32> to vector<5x5xf32>
    %742 = arith.mulf %737, %741 : vector<5x5xf32>
    %743 = arith.truncf %742 : vector<5x5xf32> to vector<5x5xbf16>
    %cst_301 = arith.constant dense<0.000000e+00> : vector<5x32xf32>
    %744 = tpu.matmul %743, %729, %cst_301 {dimension_numbers = #tpu.dot_dimension_numbers<[1], [0], [0], [1], [0, 0, 1, 1], [], []>} : vector<5x5xbf16>, vector<5x32xbf16>, vector<5x32xf32> -> vector<5x32xf32>
    %745 = arith.truncf %744 : vector<5x32xf32> to vector<5x32xbf16>
    %746 = vector.extract_strided_slice %481 {offsets = [32, 0], sizes = [32, 128], strides = [1, 1]} : vector<128x128xbf16> to vector<32x128xbf16>
    %cst_302 = arith.constant dense<0.000000e+00> : vector<5x128xf32>
    %747 = tpu.matmul %745, %746, %cst_302 {dimension_numbers = #tpu.dot_dimension_numbers<[1], [0], [0], [1], [0, 0, 1, 1], [], []>} : vector<5x32xbf16>, vector<32x128xbf16>, vector<5x128xf32> -> vector<5x128xf32>
    %748 = arith.addf %723, %747 : vector<5x128xf32>
    %749 = vector.extract_strided_slice %697 {offsets = [0, 64], sizes = [5, 32], strides = [1, 1]} : vector<5x384xf32> to vector<5x32xf32>
    %750 = arith.truncf %749 : vector<5x32xf32> to vector<5x32xbf16>
    %751 = vector.extract_strided_slice %697 {offsets = [0, 192], sizes = [5, 32], strides = [1, 1]} : vector<5x384xf32> to vector<5x32xf32>
    %752 = arith.truncf %751 : vector<5x32xf32> to vector<5x32xbf16>
    %753 = vector.extract_strided_slice %697 {offsets = [0, 320], sizes = [5, 32], strides = [1, 1]} : vector<5x384xf32> to vector<5x32xf32>
    %754 = arith.truncf %753 : vector<5x32xf32> to vector<5x32xbf16>
    %cst_303 = arith.constant dense<0.000000e+00> : vector<5x5xf32>
    %755 = tpu.matmul %750, %752, %cst_303 {dimension_numbers = #tpu.dot_dimension_numbers<[1], [1], [0], [0], [0, 0, 1, 0], [], []>} : vector<5x32xbf16>, vector<5x32xbf16>, vector<5x5xf32> -> vector<5x5xf32>
    %cst_304 = arith.constant 0.176776692 : f32
    %756 = vector.broadcast %cst_304 : f32 to vector<5x5xf32>
    %757 = arith.mulf %755, %756 : vector<5x5xf32>
    %cst_305 = arith.constant dense<0xFF800000> : vector<5xf32>
    %758 = vector.multi_reduction <maximumf>, %757, %cst_305 [1] : vector<5x5xf32> to vector<5xf32>
    %759 = vector.shape_cast %758 : vector<5xf32> to vector<5x1xf32>
    %760 = vector.broadcast %759 : vector<5x1xf32> to vector<5x5xf32>
    %761 = arith.subf %757, %760 : vector<5x5xf32>
    %762 = math.exp %761 : vector<5x5xf32>
    %cst_306 = arith.constant dense<0.000000e+00> : vector<5xf32>
    %763 = vector.multi_reduction <add>, %762, %cst_306 [1] : vector<5x5xf32> to vector<5xf32>
    %764 = vector.shape_cast %763 : vector<5xf32> to vector<5x1xf32>
    %765 = tpu.reciprocal %764 {approx = true} : vector<5x1xf32> -> vector<5x1xf32>
    %766 = vector.broadcast %765 : vector<5x1xf32> to vector<5x5xf32>
    %767 = arith.mulf %762, %766 : vector<5x5xf32>
    %768 = arith.truncf %767 : vector<5x5xf32> to vector<5x5xbf16>
    %cst_307 = arith.constant dense<0.000000e+00> : vector<5x32xf32>
    %769 = tpu.matmul %768, %754, %cst_307 {dimension_numbers = #tpu.dot_dimension_numbers<[1], [0], [0], [1], [0, 0, 1, 1], [], []>} : vector<5x5xbf16>, vector<5x32xbf16>, vector<5x32xf32> -> vector<5x32xf32>
    %770 = arith.truncf %769 : vector<5x32xf32> to vector<5x32xbf16>
    %771 = vector.extract_strided_slice %481 {offsets = [64, 0], sizes = [32, 128], strides = [1, 1]} : vector<128x128xbf16> to vector<32x128xbf16>
    %cst_308 = arith.constant dense<0.000000e+00> : vector<5x128xf32>
    %772 = tpu.matmul %770, %771, %cst_308 {dimension_numbers = #tpu.dot_dimension_numbers<[1], [0], [0], [1], [0, 0, 1, 1], [], []>} : vector<5x32xbf16>, vector<32x128xbf16>, vector<5x128xf32> -> vector<5x128xf32>
    %773 = arith.addf %748, %772 : vector<5x128xf32>
    %774 = vector.extract_strided_slice %697 {offsets = [0, 96], sizes = [5, 32], strides = [1, 1]} : vector<5x384xf32> to vector<5x32xf32>
    %775 = arith.truncf %774 : vector<5x32xf32> to vector<5x32xbf16>
    %776 = vector.extract_strided_slice %697 {offsets = [0, 224], sizes = [5, 32], strides = [1, 1]} : vector<5x384xf32> to vector<5x32xf32>
    %777 = arith.truncf %776 : vector<5x32xf32> to vector<5x32xbf16>
    %778 = vector.extract_strided_slice %697 {offsets = [0, 352], sizes = [5, 32], strides = [1, 1]} : vector<5x384xf32> to vector<5x32xf32>
    %779 = arith.truncf %778 : vector<5x32xf32> to vector<5x32xbf16>
    %cst_309 = arith.constant dense<0.000000e+00> : vector<5x5xf32>
    %780 = tpu.matmul %775, %777, %cst_309 {dimension_numbers = #tpu.dot_dimension_numbers<[1], [1], [0], [0], [0, 0, 1, 0], [], []>} : vector<5x32xbf16>, vector<5x32xbf16>, vector<5x5xf32> -> vector<5x5xf32>
    %cst_310 = arith.constant 0.176776692 : f32
    %781 = vector.broadcast %cst_310 : f32 to vector<5x5xf32>
    %782 = arith.mulf %780, %781 : vector<5x5xf32>
    %cst_311 = arith.constant dense<0xFF800000> : vector<5xf32>
    %783 = vector.multi_reduction <maximumf>, %782, %cst_311 [1] : vector<5x5xf32> to vector<5xf32>
    %784 = vector.shape_cast %783 : vector<5xf32> to vector<5x1xf32>
    %785 = vector.broadcast %784 : vector<5x1xf32> to vector<5x5xf32>
    %786 = arith.subf %782, %785 : vector<5x5xf32>
    %787 = math.exp %786 : vector<5x5xf32>
    %cst_312 = arith.constant dense<0.000000e+00> : vector<5xf32>
    %788 = vector.multi_reduction <add>, %787, %cst_312 [1] : vector<5x5xf32> to vector<5xf32>
    %789 = vector.shape_cast %788 : vector<5xf32> to vector<5x1xf32>
    %790 = tpu.reciprocal %789 {approx = true} : vector<5x1xf32> -> vector<5x1xf32>
    %791 = vector.broadcast %790 : vector<5x1xf32> to vector<5x5xf32>
    %792 = arith.mulf %787, %791 : vector<5x5xf32>
    %793 = arith.truncf %792 : vector<5x5xf32> to vector<5x5xbf16>
    %cst_313 = arith.constant dense<0.000000e+00> : vector<5x32xf32>
    %794 = tpu.matmul %793, %779, %cst_313 {dimension_numbers = #tpu.dot_dimension_numbers<[1], [0], [0], [1], [0, 0, 1, 1], [], []>} : vector<5x5xbf16>, vector<5x32xbf16>, vector<5x32xf32> -> vector<5x32xf32>
    %795 = arith.truncf %794 : vector<5x32xf32> to vector<5x32xbf16>
    %796 = vector.extract_strided_slice %481 {offsets = [96, 0], sizes = [32, 128], strides = [1, 1]} : vector<128x128xbf16> to vector<32x128xbf16>
    %cst_314 = arith.constant dense<0.000000e+00> : vector<5x128xf32>
    %797 = tpu.matmul %795, %796, %cst_314 {dimension_numbers = #tpu.dot_dimension_numbers<[1], [0], [0], [1], [0, 0, 1, 1], [], []>} : vector<5x32xbf16>, vector<32x128xbf16>, vector<5x128xf32> -> vector<5x128xf32>
    %798 = arith.addf %773, %797 : vector<5x128xf32>
    %799 = arith.addf %671, %798 : vector<5x128xf32>
    %800 = vector.broadcast %483 : vector<1x128xf32> to vector<5x128xf32>
    %801 = arith.addf %799, %800 : vector<5x128xf32>
    %cst_315 = arith.constant dense<0.000000e+00> : vector<5xf32>
    %802 = vector.multi_reduction <add>, %801, %cst_315 [1] : vector<5x128xf32> to vector<5xf32>
    %803 = vector.shape_cast %802 : vector<5xf32> to vector<5x1xf32>
    %cst_316 = arith.constant 1.280000e+02 : f32
    %804 = vector.broadcast %cst_316 : f32 to vector<5x1xf32>
    %805 = arith.divf %803, %804 : vector<5x1xf32>
    %806 = vector.broadcast %805 : vector<5x1xf32> to vector<5x128xf32>
    %807 = arith.subf %801, %806 : vector<5x128xf32>
    %808 = arith.mulf %807, %807 : vector<5x128xf32>
    %cst_317 = arith.constant dense<0.000000e+00> : vector<5xf32>
    %809 = vector.multi_reduction <add>, %808, %cst_317 [1] : vector<5x128xf32> to vector<5xf32>
    %810 = vector.shape_cast %809 : vector<5xf32> to vector<5x1xf32>
    %cst_318 = arith.constant 1.280000e+02 : f32
    %811 = vector.broadcast %cst_318 : f32 to vector<5x1xf32>
    %812 = arith.divf %810, %811 : vector<5x1xf32>
    %813 = vector.broadcast %805 : vector<5x1xf32> to vector<5x128xf32>
    %814 = arith.subf %801, %813 : vector<5x128xf32>
    %cst_319 = arith.constant 9.99999974E-6 : f32
    %815 = vector.broadcast %cst_319 : f32 to vector<5x1xf32>
    %816 = arith.addf %812, %815 : vector<5x1xf32>
    %817 = math.rsqrt %816 : vector<5x1xf32>
    %818 = vector.broadcast %817 : vector<5x1xf32> to vector<5x128xf32>
    %819 = arith.mulf %814, %818 : vector<5x128xf32>
    %820 = vector.broadcast %485 : vector<1x128xf32> to vector<5x128xf32>
    %821 = arith.mulf %819, %820 : vector<5x128xf32>
    %822 = vector.broadcast %487 : vector<1x128xf32> to vector<5x128xf32>
    %823 = arith.addf %821, %822 : vector<5x128xf32>
    %824 = arith.truncf %823 : vector<5x128xf32> to vector<5x128xbf16>
    %cst_320 = arith.constant dense<0.000000e+00> : vector<5x512xf32>
    %825 = tpu.matmul %824, %489, %cst_320 {dimension_numbers = #tpu.dot_dimension_numbers<[1], [0], [0], [1], [0, 0, 1, 1], [], []>} : vector<5x128xbf16>, vector<128x512xbf16>, vector<5x512xf32> -> vector<5x512xf32>
    %826 = vector.broadcast %491 : vector<1x512xf32> to vector<5x512xf32>
    %827 = arith.addf %825, %826 : vector<5x512xf32>
    %cst_321 = arith.constant 1.702000e+00 : f32
    %828 = vector.broadcast %cst_321 : f32 to vector<5x512xf32>
    %829 = arith.mulf %828, %827 : vector<5x512xf32>
    %830 = arith.negf %829 : vector<5x512xf32>
    %831 = math.exp %830 : vector<5x512xf32>
    %cst_322 = arith.constant 1.000000e+00 : f32
    %832 = vector.broadcast %cst_322 : f32 to vector<5x512xf32>
    %833 = arith.addf %832, %831 : vector<5x512xf32>
    %834 = arith.divf %832, %833 : vector<5x512xf32>
    %835 = arith.mulf %827, %834 : vector<5x512xf32>
    %836 = arith.truncf %835 : vector<5x512xf32> to vector<5x512xbf16>
    %cst_323 = arith.constant dense<0.000000e+00> : vector<5x128xf32>
    %837 = tpu.matmul %836, %493, %cst_323 {dimension_numbers = #tpu.dot_dimension_numbers<[1], [0], [0], [1], [0, 0, 1, 1], [], []>} : vector<5x512xbf16>, vector<512x128xbf16>, vector<5x128xf32> -> vector<5x128xf32>
    %838 = vector.broadcast %495 : vector<1x128xf32> to vector<5x128xf32>
    %839 = arith.addf %837, %838 : vector<5x128xf32>
    %840 = arith.addf %801, %839 : vector<5x128xf32>
    %c1_324 = arith.constant 1 : index
    %c0_325 = arith.constant 0 : index
    %c0_326 = arith.constant 0 : index
    %841 = vector.load %arg24[%c1_324, %c0_325, %c0_326] : memref<2x5x128xf32, #tpu.memory_space<vmem>>, vector<1x5x128xf32>
    %842 = vector.shape_cast %841 : vector<1x5x128xf32> to vector<5x128xf32>
    %843 = vector.shape_cast %840 : vector<5x128xf32> to vector<1x5x128xf32>
    tpu.vector_store %arg24[%c1_324, %c0_325, %c0_326], %843 {strides = array<i32>} : memref<2x5x128xf32, #tpu.memory_space<vmem>>, vector<1x5x128xf32>,
    %c0_327 = arith.constant 0 : index
    %c0_328 = arith.constant 0 : index
    %c0_329 = arith.constant 0 : index
    %844 = vector.load %arg19[%c0_327, %c0_328, %c0_329] : memref<1x1x128xf32, #tpu.memory_space<vmem>>, vector<1x1x128xf32>
    %845 = vector.shape_cast %844 : vector<1x1x128xf32> to vector<1x128xf32>
    %c0_330 = arith.constant 0 : index
    %c0_331 = arith.constant 0 : index
    %c0_332 = arith.constant 0 : index
    %846 = vector.load %arg20[%c0_330, %c0_331, %c0_332] : memref<1x1x128xf32, #tpu.memory_space<vmem>>, vector<1x1x128xf32>
    %847 = vector.shape_cast %846 : vector<1x1x128xf32> to vector<1x128xf32>
    %c0_333 = arith.constant 0 : index
    %c0_334 = arith.constant 0 : index
    %c0_335 = arith.constant 0 : index
    %848 = vector.load %arg21[%c0_333, %c0_334, %c0_335] : memref<1x128x128xbf16, #tpu.memory_space<vmem>>, vector<1x128x128xbf16>
    %849 = vector.shape_cast %848 : vector<1x128x128xbf16> to vector<128x128xbf16>
    %c0_336 = arith.constant 0 : index
    %c0_337 = arith.constant 0 : index
    %c0_338 = arith.constant 0 : index
    %850 = vector.load %arg22[%c0_336, %c0_337, %c0_338] : memref<1x1x128xf32, #tpu.memory_space<vmem>>, vector<1x1x128xf32>
    %851 = vector.shape_cast %850 : vector<1x1x128xf32> to vector<1x128xf32>
    %c0_339 = arith.constant 0 : index
    %c0_340 = arith.constant 0 : index
    %c0_341 = arith.constant 0 : index
    %852 = vector.load %arg24[%c0_339, %c0_340, %c0_341] : memref<2x5x128xf32, #tpu.memory_space<vmem>>, vector<1x1x128xf32>
    %853 = vector.shape_cast %852 : vector<1x1x128xf32> to vector<1x128xf32>
    %cst_342 = arith.constant dense<0.000000e+00> : vector<1xf32>
    %854 = vector.multi_reduction <add>, %853, %cst_342 [1] : vector<1x128xf32> to vector<1xf32>
    %855 = vector.shape_cast %854 : vector<1xf32> to vector<1x1xf32>
    %cst_343 = arith.constant 1.280000e+02 : f32
    %856 = vector.broadcast %cst_343 : f32 to vector<1x1xf32>
    %857 = arith.divf %855, %856 : vector<1x1xf32>
    %858 = vector.broadcast %857 : vector<1x1xf32> to vector<1x128xf32>
    %859 = arith.subf %853, %858 : vector<1x128xf32>
    %860 = arith.mulf %859, %859 : vector<1x128xf32>
    %cst_344 = arith.constant dense<0.000000e+00> : vector<1xf32>
    %861 = vector.multi_reduction <add>, %860, %cst_344 [1] : vector<1x128xf32> to vector<1xf32>
    %862 = vector.shape_cast %861 : vector<1xf32> to vector<1x1xf32>
    %cst_345 = arith.constant 1.280000e+02 : f32
    %863 = vector.broadcast %cst_345 : f32 to vector<1x1xf32>
    %864 = arith.divf %862, %863 : vector<1x1xf32>
    %865 = vector.broadcast %857 : vector<1x1xf32> to vector<1x128xf32>
    %866 = arith.subf %853, %865 : vector<1x128xf32>
    %cst_346 = arith.constant 9.99999974E-6 : f32
    %867 = vector.broadcast %cst_346 : f32 to vector<1x1xf32>
    %868 = arith.addf %864, %867 : vector<1x1xf32>
    %869 = math.rsqrt %868 : vector<1x1xf32>
    %870 = vector.broadcast %869 : vector<1x1xf32> to vector<1x128xf32>
    %871 = arith.mulf %866, %870 : vector<1x128xf32>
    %872 = arith.mulf %871, %845 : vector<1x128xf32>
    %873 = arith.addf %872, %847 : vector<1x128xf32>
    %874 = arith.truncf %873 : vector<1x128xf32> to vector<1x128xbf16>
    %cst_347 = arith.constant dense<0.000000e+00> : vector<1x128xf32>
    %875 = tpu.matmul %874, %849, %cst_347 {dimension_numbers = #tpu.dot_dimension_numbers<[1], [0], [0], [1], [0, 0, 1, 1], [], []>} : vector<1x128xbf16>, vector<128x128xbf16>, vector<1x128xf32> -> vector<1x128xf32>
    %876 = arith.addf %875, %851 : vector<1x128xf32>
    %c0_348 = arith.constant 0 : index
    %c0_349 = arith.constant 0 : index
    %c0_350 = arith.constant 0 : index
    %877 = vector.load %arg23[%c0_348, %c0_349, %c0_350] : memref<1x2x128xf32, #tpu.memory_space<vmem>>, vector<1x1x128xf32>
    %878 = vector.shape_cast %877 : vector<1x1x128xf32> to vector<1x128xf32>
    %879 = vector.shape_cast %876 : vector<1x128xf32> to vector<1x1x128xf32>
    tpu.vector_store %arg23[%c0_348, %c0_349, %c0_350], %879 {strides = array<i32>} : memref<1x2x128xf32, #tpu.memory_space<vmem>>, vector<1x1x128xf32>,
    %c1_351 = arith.constant 1 : index
    %c0_352 = arith.constant 0 : index
    %c0_353 = arith.constant 0 : index
    %880 = vector.load %arg24[%c1_351, %c0_352, %c0_353] : memref<2x5x128xf32, #tpu.memory_space<vmem>>, vector<1x1x128xf32>
    %881 = vector.shape_cast %880 : vector<1x1x128xf32> to vector<1x128xf32>
    %cst_354 = arith.constant dense<0.000000e+00> : vector<1xf32>
    %882 = vector.multi_reduction <add>, %881, %cst_354 [1] : vector<1x128xf32> to vector<1xf32>
    %883 = vector.shape_cast %882 : vector<1xf32> to vector<1x1xf32>
    %cst_355 = arith.constant 1.280000e+02 : f32
    %884 = vector.broadcast %cst_355 : f32 to vector<1x1xf32>
    %885 = arith.divf %883, %884 : vector<1x1xf32>
    %886 = vector.broadcast %885 : vector<1x1xf32> to vector<1x128xf32>
    %887 = arith.subf %881, %886 : vector<1x128xf32>
    %888 = arith.mulf %887, %887 : vector<1x128xf32>
    %cst_356 = arith.constant dense<0.000000e+00> : vector<1xf32>
    %889 = vector.multi_reduction <add>, %888, %cst_356 [1] : vector<1x128xf32> to vector<1xf32>
    %890 = vector.shape_cast %889 : vector<1xf32> to vector<1x1xf32>
    %cst_357 = arith.constant 1.280000e+02 : f32
    %891 = vector.broadcast %cst_357 : f32 to vector<1x1xf32>
    %892 = arith.divf %890, %891 : vector<1x1xf32>
    %893 = vector.broadcast %885 : vector<1x1xf32> to vector<1x128xf32>
    %894 = arith.subf %881, %893 : vector<1x128xf32>
    %cst_358 = arith.constant 9.99999974E-6 : f32
    %895 = vector.broadcast %cst_358 : f32 to vector<1x1xf32>
    %896 = arith.addf %892, %895 : vector<1x1xf32>
    %897 = math.rsqrt %896 : vector<1x1xf32>
    %898 = vector.broadcast %897 : vector<1x1xf32> to vector<1x128xf32>
    %899 = arith.mulf %894, %898 : vector<1x128xf32>
    %900 = arith.mulf %899, %845 : vector<1x128xf32>
    %901 = arith.addf %900, %847 : vector<1x128xf32>
    %902 = arith.truncf %901 : vector<1x128xf32> to vector<1x128xbf16>
    %cst_359 = arith.constant dense<0.000000e+00> : vector<1x128xf32>
    %903 = tpu.matmul %902, %849, %cst_359 {dimension_numbers = #tpu.dot_dimension_numbers<[1], [0], [0], [1], [0, 0, 1, 1], [], []>} : vector<1x128xbf16>, vector<128x128xbf16>, vector<1x128xf32> -> vector<1x128xf32>
    %904 = arith.addf %903, %851 : vector<1x128xf32>
    %c0_360 = arith.constant 0 : index
    %c1_361 = arith.constant 1 : index
    %c0_362 = arith.constant 0 : index
    %905 = vector.load %arg23[%c0_360, %c1_361, %c0_362] : memref<1x2x128xf32, #tpu.memory_space<vmem>>, vector<1x1x128xf32>
    %906 = vector.shape_cast %905 : vector<1x1x128xf32> to vector<1x128xf32>
    %907 = vector.shape_cast %904 : vector<1x128xf32> to vector<1x1x128xf32>
    tpu.vector_store %arg23[%c0_360, %c1_361, %c0_362], %907 {strides = array<i32>} : memref<1x2x128xf32, #tpu.memory_space<vmem>>, vector<1x1x128xf32>,
    return
  }
  func.func @transform_0(%arg0: i32) -> (i32, i32, i32) {
    %c0_i32 = arith.constant 0 : i32
    %c0_i32_0 = arith.constant 0 : i32
    %c0_i32_1 = arith.constant 0 : i32
    %c0_i32_2 = arith.constant 0 : i32
    return %c0_i32, %c0_i32_0, %c0_i32_1 : i32, i32, i32
  }
  func.func @transform_1(%arg0: i32) -> (i32, i32, i32) {
    %c0_i32 = arith.constant 0 : i32
    %c0_i32_0 = arith.constant 0 : i32
    %c0_i32_1 = arith.constant 0 : i32
    return %arg0, %c0_i32, %c0_i32_0 : i32, i32, i32
  }
  func.func @transform_2(%arg0: i32) -> (i32, i32, i32) {
    %c0_i32 = arith.constant 0 : i32
    %c0_i32_0 = arith.constant 0 : i32
    %c0_i32_1 = arith.constant 0 : i32
    return %arg0, %c0_i32, %c0_i32_0 : i32, i32, i32
  }
  func.func @transform_3(%arg0: i32) -> (i32, i32, i32) {
    %c0_i32 = arith.constant 0 : i32
    %c0_i32_0 = arith.constant 0 : i32
    %c0_i32_1 = arith.constant 0 : i32
    return %arg0, %c0_i32, %c0_i32_0 : i32, i32, i32
  }
  func.func @transform_4(%arg0: i32) -> (i32, i32, i32) {
    %c0_i32 = arith.constant 0 : i32
    %c0_i32_0 = arith.constant 0 : i32
    %c0_i32_1 = arith.constant 0 : i32
    return %arg0, %c0_i32, %c0_i32_0 : i32, i32, i32
  }
  func.func @transform_5(%arg0: i32) -> (i32, i32, i32) {
    %c0_i32 = arith.constant 0 : i32
    %c0_i32_0 = arith.constant 0 : i32
    %c0_i32_1 = arith.constant 0 : i32
    return %arg0, %c0_i32, %c0_i32_0 : i32, i32, i32
  }
  func.func @transform_6(%arg0: i32) -> (i32, i32, i32, i32) {
    %c0_i32 = arith.constant 0 : i32
    %c0_i32_0 = arith.constant 0 : i32
    %c0_i32_1 = arith.constant 0 : i32
    %c0_i32_2 = arith.constant 0 : i32
    return %arg0, %c0_i32, %c0_i32_0, %c0_i32_1 : i32, i32, i32, i32
  }
  func.func @transform_7(%arg0: i32) -> (i32, i32, i32, i32) {
    %c0_i32 = arith.constant 0 : i32
    %c0_i32_0 = arith.constant 0 : i32
    %c0_i32_1 = arith.constant 0 : i32
    %c0_i32_2 = arith.constant 0 : i32
    return %arg0, %c0_i32, %c0_i32_0, %c0_i32_1 : i32, i32, i32, i32
  }
  func.func @transform_8(%arg0: i32) -> (i32, i32, i32, i32) {
    %c0_i32 = arith.constant 0 : i32
    %c0_i32_0 = arith.constant 0 : i32
    %c0_i32_1 = arith.constant 0 : i32
    %c0_i32_2 = arith.constant 0 : i32
    return %arg0, %c0_i32, %c0_i32_0, %c0_i32_1 : i32, i32, i32, i32
  }
  func.func @transform_9(%arg0: i32) -> (i32, i32, i32, i32) {
    %c0_i32 = arith.constant 0 : i32
    %c0_i32_0 = arith.constant 0 : i32
    %c0_i32_1 = arith.constant 0 : i32
    %c0_i32_2 = arith.constant 0 : i32
    return %arg0, %c0_i32, %c0_i32_0, %c0_i32_1 : i32, i32, i32, i32
  }
  func.func @transform_10(%arg0: i32) -> (i32, i32, i32, i32) {
    %c0_i32 = arith.constant 0 : i32
    %c0_i32_0 = arith.constant 0 : i32
    %c0_i32_1 = arith.constant 0 : i32
    %c0_i32_2 = arith.constant 0 : i32
    return %arg0, %c0_i32, %c0_i32_0, %c0_i32_1 : i32, i32, i32, i32
  }
  func.func @transform_11(%arg0: i32) -> (i32, i32, i32, i32) {
    %c0_i32 = arith.constant 0 : i32
    %c0_i32_0 = arith.constant 0 : i32
    %c0_i32_1 = arith.constant 0 : i32
    %c0_i32_2 = arith.constant 0 : i32
    return %arg0, %c0_i32, %c0_i32_0, %c0_i32_1 : i32, i32, i32, i32
  }
  func.func @transform_12(%arg0: i32) -> (i32, i32, i32, i32) {
    %c0_i32 = arith.constant 0 : i32
    %c0_i32_0 = arith.constant 0 : i32
    %c0_i32_1 = arith.constant 0 : i32
    %c0_i32_2 = arith.constant 0 : i32
    return %arg0, %c0_i32, %c0_i32_0, %c0_i32_1 : i32, i32, i32, i32
  }
  func.func @transform_13(%arg0: i32) -> (i32, i32, i32, i32) {
    %c0_i32 = arith.constant 0 : i32
    %c0_i32_0 = arith.constant 0 : i32
    %c0_i32_1 = arith.constant 0 : i32
    %c0_i32_2 = arith.constant 0 : i32
    return %arg0, %c0_i32, %c0_i32_0, %c0_i32_1 : i32, i32, i32, i32
  }
  func.func @transform_14(%arg0: i32) -> (i32, i32, i32, i32) {
    %c0_i32 = arith.constant 0 : i32
    %c0_i32_0 = arith.constant 0 : i32
    %c0_i32_1 = arith.constant 0 : i32
    %c0_i32_2 = arith.constant 0 : i32
    return %arg0, %c0_i32, %c0_i32_0, %c0_i32_1 : i32, i32, i32, i32
  }
  func.func @transform_15(%arg0: i32) -> (i32, i32, i32, i32) {
    %c0_i32 = arith.constant 0 : i32
    %c0_i32_0 = arith.constant 0 : i32
    %c0_i32_1 = arith.constant 0 : i32
    %c0_i32_2 = arith.constant 0 : i32
    return %arg0, %c0_i32, %c0_i32_0, %c0_i32_1 : i32, i32, i32, i32
  }
  func.func @transform_16(%arg0: i32) -> (i32, i32, i32, i32) {
    %c0_i32 = arith.constant 0 : i32
    %c0_i32_0 = arith.constant 0 : i32
    %c0_i32_1 = arith.constant 0 : i32
    %c0_i32_2 = arith.constant 0 : i32
    return %arg0, %c0_i32, %c0_i32_0, %c0_i32_1 : i32, i32, i32, i32
  }
  func.func @transform_17(%arg0: i32) -> (i32, i32, i32, i32) {
    %c0_i32 = arith.constant 0 : i32
    %c0_i32_0 = arith.constant 0 : i32
    %c0_i32_1 = arith.constant 0 : i32
    %c0_i32_2 = arith.constant 0 : i32
    return %arg0, %c0_i32, %c0_i32_0, %c0_i32_1 : i32, i32, i32, i32
  }
  func.func @transform_18(%arg0: i32) -> (i32, i32, i32) {
    %c0_i32 = arith.constant 0 : i32
    %c0_i32_0 = arith.constant 0 : i32
    %c0_i32_1 = arith.constant 0 : i32
    return %arg0, %c0_i32, %c0_i32_0 : i32, i32, i32
  }
  func.func @transform_19(%arg0: i32) -> (i32, i32, i32) {
    %c0_i32 = arith.constant 0 : i32
    %c0_i32_0 = arith.constant 0 : i32
    %c0_i32_1 = arith.constant 0 : i32
    return %arg0, %c0_i32, %c0_i32_0 : i32, i32, i32
  }
  func.func @transform_20(%arg0: i32) -> (i32, i32, i32) {
    %c0_i32 = arith.constant 0 : i32
    %c0_i32_0 = arith.constant 0 : i32
    %c0_i32_1 = arith.constant 0 : i32
    return %arg0, %c0_i32, %c0_i32_0 : i32, i32, i32
  }
  func.func @transform_21(%arg0: i32) -> (i32, i32, i32) {
    %c0_i32 = arith.constant 0 : i32
    %c0_i32_0 = arith.constant 0 : i32
    %c0_i32_1 = arith.constant 0 : i32
    return %arg0, %c0_i32, %c0_i32_0 : i32, i32, i32
  }
  func.func @transform_22(%arg0: i32) -> (i32, i32, i32) {
    %c0_i32 = arith.constant 0 : i32
    %c0_i32_0 = arith.constant 0 : i32
    %c0_i32_1 = arith.constant 0 : i32
    return %arg0, %c0_i32, %c0_i32_0 : i32, i32, i32
  }
}

</mosaic_0001>

<llo_original>
// kernel: svgd_forward.1
$region0: #{svgd_forward.1}
  #allocation0 [shape = 'u32[]', space=smem, size = 0x4, offset = 0x4, fixed_abs, tag = 'smem constant byte address 0x4 - core index']
  #allocation1 [shape = 'u32[144,128]{1,0:T(1,128)}', space=vmem, size = 0x12000, scoped, tag = 'internal scratch']
  #allocation2 [shape = 'f32[2,5,128]{2,1,0:T(8,128)}', space=vmem, size = 0x2000, scoped, tag = 'scratch operand']
  %s0 = inlined_call_operand.vmem [shape: f32[2,4,192], index: 0, kind: input, shape index: {}]
  %s1 = inlined_call_operand.vmem [shape: bf16[3,192,128], index: 1, kind: input, shape index: {}]
  %s2 = inlined_call_operand.vmem [shape: f32[3,1,128], index: 2, kind: input, shape index: {}]
  %s3 = inlined_call_operand.vmem [shape: f32[3,5,128], index: 3, kind: input, shape index: {}]
  %s4 = inlined_call_operand.vmem [shape: f32[3,1,128], index: 4, kind: input, shape index: {}, may-alias: {4,18}]
  %s5 = inlined_call_operand.vmem [shape: f32[3,1,128], index: 5, kind: input, shape index: {}, may-alias: {5,19,21}]
  %s6 = inlined_call_operand.vmem [shape: f32[3,2,1,128], index: 6, kind: input, shape index: {}, may-alias: {6,12}]
  %s7 = inlined_call_operand.vmem [shape: f32[3,2,1,128], index: 7, kind: input, shape index: {}, may-alias: {7,11,13,17}]
  %s8 = inlined_call_operand.vmem [shape: bf16[3,2,128,384], index: 8, kind: input, shape index: {}]
  %s9 = inlined_call_operand.vmem [shape: f32[3,2,1,384], index: 9, kind: input, shape index: {}]
  %s10 = inlined_call_operand.vmem [shape: bf16[3,2,128,128], index: 10, kind: input, shape index: {}]
  %s11 = inlined_call_operand.vmem [shape: f32[3,2,1,128], index: 11, kind: input, shape index: {}, may-alias: {7,11,13,17}]
  %s12 = inlined_call_operand.vmem [shape: f32[3,2,1,128], index: 12, kind: input, shape index: {}, may-alias: {6,12}]
  %s13 = inlined_call_operand.vmem [shape: f32[3,2,1,128], index: 13, kind: input, shape index: {}, may-alias: {7,11,13,17}]
  %s14 = inlined_call_operand.vmem [shape: bf16[3,2,128,512], index: 14, kind: input, shape index: {}]
  %s15 = inlined_call_operand.vmem [shape: f32[3,2,1,512], index: 15, kind: input, shape index: {}]
  %s16 = inlined_call_operand.vmem [shape: bf16[3,2,512,128], index: 16, kind: input, shape index: {}]
  %s17 = inlined_call_operand.vmem [shape: f32[3,2,1,128], index: 17, kind: input, shape index: {}, may-alias: {7,11,13,17}]
  %s18 = inlined_call_operand.vmem [shape: f32[3,1,128], index: 18, kind: input, shape index: {}, may-alias: {4,18}]
  %s19 = inlined_call_operand.vmem [shape: f32[3,1,128], index: 19, kind: input, shape index: {}, may-alias: {5,19,21}]
  %s20 = inlined_call_operand.vmem [shape: bf16[3,128,128], index: 20, kind: input, shape index: {}]
  %s21 = inlined_call_operand.vmem [shape: f32[3,1,128], index: 21, kind: input, shape index: {}, may-alias: {5,19,21}]
  %s22 = inlined_call_operand.vmem [shape: f32[3,2,128], index: 22, kind: output, shape index: {}]
  %s23 = sld [smem:[#allocation0]]
  $region121: #{svgd_forward.1} parent=0
    _
  %s25 = ssub.s32 1, %s23
  %s26 = scalar_select 0, %s25, %s23
  loop: start=0, step=1, limit=5
  $region2: #{svgd_forward.1} parent=0 // loop_pre_header
    _
  $region3: #{svgd_forward.1} parent=0 // loop_header
    %s28 = sphi 0, %s32
    %p29 = scmp.ge.s32.totalorder %s28, 5
    %s36 = sphi 0, %s36
    %s38 = sphi 0, %s36
    %s39 = sphi 0, %s38
    %s53 = sphi 0, %s39
    %s59 = sphi 0, %s61
    %s62 = sphi 0, %s59
    %s63 = sphi 0, %s62
    %s79 = sphi 0, %s63
    %s85 = sphi 0, %s87
    %s88 = sphi 0, %s85
    %s89 = sphi 0, %s88
    %s105 = sphi 0, %s89
    %s111 = sphi 0, %s113
    %s114 = sphi 0, %s111
    %s115 = sphi 0, %s114
    %s131 = sphi 0, %s115
    %s137 = sphi 0, %s139
    %s140 = sphi 0, %s137
    %s141 = sphi 0, %s140
    %s157 = sphi 0, %s141
    %s163 = sphi 0, %s165
    %s166 = sphi 0, %s163
    %s167 = sphi 0, %s166
    %s183 = sphi 0, %s167
    %s189 = sphi 0, %s191
    %s192 = sphi 0, %s189
    %s193 = sphi 0, %s192
    %s209 = sphi 0, %s193
    %s215 = sphi 0, %s217
    %s218 = sphi 0, %s215
    %s219 = sphi 0, %s218
    %s235 = sphi 0, %s219
    %s241 = sphi 0, %s243
    %s244 = sphi 0, %s241
    %s245 = sphi 0, %s244
    %s261 = sphi 0, %s245
    %s267 = sphi 0, %s269
    %s270 = sphi 0, %s267
    %s271 = sphi 0, %s270
    %s287 = sphi 0, %s271
    %s293 = sphi 0, %s295
    %s296 = sphi 0, %s293
    %s297 = sphi 0, %s296
    %s313 = sphi 0, %s297
    %s319 = sphi 0, %s321
    %s322 = sphi 0, %s319
    %s323 = sphi 0, %s322
    %s339 = sphi 0, %s323
    %s345 = sphi 0, %s347
    %s348 = sphi 0, %s345
    %s349 = sphi 0, %s348
    %s365 = sphi 0, %s349
    %s371 = sphi 0, %s373
    %s374 = sphi 0, %s371
    %s375 = sphi 0, %s374
    %s391 = sphi 0, %s375
    %s397 = sphi 0, %s399
    %s400 = sphi 0, %s397
    %s401 = sphi 0, %s400
    %s417 = sphi 0, %s401
    %s423 = sphi 0, %s425
    %s426 = sphi 0, %s423
    %s427 = sphi 0, %s426
    %s443 = sphi 0, %s427
    %s449 = sphi 0, %s451
    %s452 = sphi 0, %s449
    %s453 = sphi 0, %s452
    %s469 = sphi 0, %s453
    %s475 = sphi 0, %s477
    %s478 = sphi 0, %s475
    %s479 = sphi 0, %s478
    %s495 = sphi 0, %s479
    %s501 = sphi 0, %s503
    %s504 = sphi 0, %s501
    %s505 = sphi 0, %s504
    %s521 = sphi 0, %s505
    %s527 = sphi 0, %s529
    %s530 = sphi 0, %s527
    %s531 = sphi 0, %s530
    %s547 = sphi 0, %s531
    %s553 = sphi 0, %s555
    %s556 = sphi 0, %s553
    %s557 = sphi 0, %s556
    %s573 = sphi 0, %s557
    %s579 = sphi 0, %s581
    %s582 = sphi 0, %s579
    %s583 = sphi 0, %s582
    %s599 = sphi 0, %s583
    %s605 = sphi 0, %s607
    %s608 = sphi 0, %s605
    %s609 = sphi 0, %s608
    %s625 = sphi 0, %s609
  $region4: #{svgd_forward.1} parent=0 // loop_header_branch
    %31 = sbr.rel (%p29) target = $region8
  $region5: #{svgd_forward.1} parent=0 // loop_body
    %s33 = ssub.s32 %s28, 1
    %s34 = ssub.s32 %s28, 2
    %s35 = sadd.s32 %s28, 1
    %s37 = sadd.s32 %s36, 1
    %p40 = scmp.eq.s32.totalorder %s28, 2
    %p41 = scmp.ne.s32.totalorder %s36, %s38
    %p42 = scmp.eq.s32.totalorder %s28, 0
    %p43 = por %p41, %p42
    %p44 = scmp.ne.s32.totalorder %s36, %s38
    %p45 = scmp.eq.s32.totalorder %s33, 2
    %p46 = por %p44, %p45
    %p47 = scmp.ne.s32.totalorder %s38, %s39
    %p48 = scmp.eq.s32.totalorder %s33, 0
    %p49 = por %p47, %p48
    %p50 = scmp.ne.s32.totalorder %s38, %s39
    %p51 = scmp.eq.s32.totalorder %s34, 2
    %p52 = por %p50, %p51
    %p54 = scmp.ne.s32.totalorder %s39, %s53
    %p55 = scmp.eq.s32.totalorder %s34, 0
    %p56 = por %p54, %p55
    %s57 = ssub.s32 %s28, %s35
    %p58 = scmp.eq.s32.totalorder %s57, 0
    %s60 = sadd.s32 %s59, 1
    %s61 = scalar_select %p58, %s59, %s60
    %p64 = pneg %p58
    %p65 = scmp.eq.s32.totalorder %s28, 2
    %p66 = por %p64, %p65
    %p67 = scmp.ne.s32.totalorder %s59, %s62
    %p68 = scmp.eq.s32.totalorder %s28, 0
    %p69 = por %p67, %p68
    %p70 = scmp.ne.s32.totalorder %s59, %s62
    %p71 = scmp.eq.s32.totalorder %s33, 2
    %p72 = por %p70, %p71
    %p73 = scmp.ne.s32.totalorder %s62, %s63
    %p74 = scmp.eq.s32.totalorder %s33, 0
    %p75 = por %p73, %p74
    %p76 = scmp.ne.s32.totalorder %s62, %s63
    %p77 = scmp.eq.s32.totalorder %s34, 2
    %p78 = por %p76, %p77
    %p80 = scmp.ne.s32.totalorder %s63, %s79
    %p81 = scmp.eq.s32.totalorder %s34, 0
    %p82 = por %p80, %p81
    %s83 = ssub.s32 %s28, %s35
    %p84 = scmp.eq.s32.totalorder %s83, 0
    %s86 = sadd.s32 %s85, 1
    %s87 = scalar_select %p84, %s85, %s86
    %p90 = pneg %p84
    %p91 = scmp.eq.s32.totalorder %s28, 2
    %p92 = por %p90, %p91
    %p93 = scmp.ne.s32.totalorder %s85, %s88
    %p94 = scmp.eq.s32.totalorder %s28, 0
    %p95 = por %p93, %p94
    %p96 = scmp.ne.s32.totalorder %s85, %s88
    %p97 = scmp.eq.s32.totalorder %s33, 2
    %p98 = por %p96, %p97
    %p99 = scmp.ne.s32.totalorder %s88, %s89
    %p100 = scmp.eq.s32.totalorder %s33, 0
    %p101 = por %p99, %p100
    %p102 = scmp.ne.s32.totalorder %s88, %s89
    %p103 = scmp.eq.s32.totalorder %s34, 2
    %p104 = por %p102, %p103
    %p106 = scmp.ne.s32.totalorder %s89, %s105
    %p107 = scmp.eq.s32.totalorder %s34, 0
    %p108 = por %p106, %p107
    %s109 = ssub.s32 %s28, %s35
    %p110 = scmp.eq.s32.totalorder %s109, 0
    %s112 = sadd.s32 %s111, 1
    %s113 = scalar_select %p110, %s111, %s112
    %p116 = pneg %p110
    %p117 = scmp.eq.s32.totalorder %s28, 2
    %p118 = por %p116, %p117
    %p119 = scmp.ne.s32.totalorder %s111, %s114
    %p120 = scmp.eq.s32.totalorder %s28, 0
    %p121 = por %p119, %p120
    %p122 = scmp.ne.s32.totalorder %s111, %s114
    %p123 = scmp.eq.s32.totalorder %s33, 2
    %p124 = por %p122, %p123
    %p125 = scmp.ne.s32.totalorder %s114, %s115
    %p126 = scmp.eq.s32.totalorder %s33, 0
    %p127 = por %p125, %p126
    %p128 = scmp.ne.s32.totalorder %s114, %s115
    %p129 = scmp.eq.s32.totalorder %s34, 2
    %p130 = por %p128, %p129
    %p132 = scmp.ne.s32.totalorder %s115, %s131
    %p133 = scmp.eq.s32.totalorder %s34, 0
    %p134 = por %p132, %p133
    %s135 = ssub.s32 %s28, %s35
    %p136 = scmp.eq.s32.totalorder %s135, 0
    %s138 = sadd.s32 %s137, 1
    %s139 = scalar_select %p136, %s137, %s138
    %p142 = pneg %p136
    %p143 = scmp.eq.s32.totalorder %s28, 2
    %p144 = por %p142, %p143
    %p145 = scmp.ne.s32.totalorder %s137, %s140
    %p146 = scmp.eq.s32.totalorder %s28, 0
    %p147 = por %p145, %p146
    %p148 = scmp.ne.s32.totalorder %s137, %s140
    %p149 = scmp.eq.s32.totalorder %s33, 2
    %p150 = por %p148, %p149
    %p151 = scmp.ne.s32.totalorder %s140, %s141
    %p152 = scmp.eq.s32.totalorder %s33, 0
    %p153 = por %p151, %p152
    %p154 = scmp.ne.s32.totalorder %s140, %s141
    %p155 = scmp.eq.s32.totalorder %s34, 2
    %p156 = por %p154, %p155
    %p158 = scmp.ne.s32.totalorder %s141, %s157
    %p159 = scmp.eq.s32.totalorder %s34, 0
    %p160 = por %p158, %p159
    %s161 = ssub.s32 %s28, %s35
    %p162 = scmp.eq.s32.totalorder %s161, 0
    %s164 = sadd.s32 %s163, 1
    %s165 = scalar_select %p162, %s163, %s164
    %p168 = pneg %p162
    %p169 = scmp.eq.s32.totalorder %s28, 2
    %p170 = por %p168, %p169
    %p171 = scmp.ne.s32.totalorder %s163, %s166
    %p172 = scmp.eq.s32.totalorder %s28, 0
    %p173 = por %p171, %p172
    %p174 = scmp.ne.s32.totalorder %s163, %s166
    %p175 = scmp.eq.s32.totalorder %s33, 2
    %p176 = por %p174, %p175
    %p177 = scmp.ne.s32.totalorder %s166, %s167
    %p178 = scmp.eq.s32.totalorder %s33, 0
    %p179 = por %p177, %p178
    %p180 = scmp.ne.s32.totalorder %s166, %s167
    %p181 = scmp.eq.s32.totalorder %s34, 2
    %p182 = por %p180, %p181
    %p184 = scmp.ne.s32.totalorder %s167, %s183
    %p185 = scmp.eq.s32.totalorder %s34, 0
    %p186 = por %p184, %p185
    %s187 = ssub.s32 %s28, %s35
    %p188 = scmp.eq.s32.totalorder %s187, 0
    %s190 = sadd.s32 %s189, 1
    %s191 = scalar_select %p188, %s189, %s190
    %p194 = pneg %p188
    %p195 = scmp.eq.s32.totalorder %s28, 2
    %p196 = por %p194, %p195
    %p197 = scmp.ne.s32.totalorder %s189, %s192
    %p198 = scmp.eq.s32.totalorder %s28, 0
    %p199 = por %p197, %p198
    %p200 = scmp.ne.s32.totalorder %s189, %s192
    %p201 = scmp.eq.s32.totalorder %s33, 2
    %p202 = por %p200, %p201
    %p203 = scmp.ne.s32.totalorder %s192, %s193
    %p204 = scmp.eq.s32.totalorder %s33, 0
    %p205 = por %p203, %p204
    %p206 = scmp.ne.s32.totalorder %s192, %s193
    %p207 = scmp.eq.s32.totalorder %s34, 2
    %p208 = por %p206, %p207
    %p210 = scmp.ne.s32.totalorder %s193, %s209
    %p211 = scmp.eq.s32.totalorder %s34, 0
    %p212 = por %p210, %p211
    %s213 = ssub.s32 %s28, %s35
    %p214 = scmp.eq.s32.totalorder %s213, 0
    %s216 = sadd.s32 %s215, 1
    %s217 = scalar_select %p214, %s215, %s216
    %p220 = pneg %p214
    %p221 = scmp.eq.s32.totalorder %s28, 2
    %p222 = por %p220, %p221
    %p223 = scmp.ne.s32.totalorder %s215, %s218
    %p224 = scmp.eq.s32.totalorder %s28, 0
    %p225 = por %p223, %p224
    %p226 = scmp.ne.s32.totalorder %s215, %s218
    %p227 = scmp.eq.s32.totalorder %s33, 2
    %p228 = por %p226, %p227
    %p229 = scmp.ne.s32.totalorder %s218, %s219
    %p230 = scmp.eq.s32.totalorder %s33, 0
    %p231 = por %p229, %p230
    %p232 = scmp.ne.s32.totalorder %s218, %s219
    %p233 = scmp.eq.s32.totalorder %s34, 2
    %p234 = por %p232, %p233
    %p236 = scmp.ne.s32.totalorder %s219, %s235
    %p237 = scmp.eq.s32.totalorder %s34, 0
    %p238 = por %p236, %p237
    %s239 = ssub.s32 %s28, %s35
    %p240 = scmp.eq.s32.totalorder %s239, 0
    %s242 = sadd.s32 %s241, 1
    %s243 = scalar_select %p240, %s241, %s242
    %p246 = pneg %p240
    %p247 = scmp.eq.s32.totalorder %s28, 2
    %p248 = por %p246, %p247
    %p249 = scmp.ne.s32.totalorder %s241, %s244
    %p250 = scmp.eq.s32.totalorder %s28, 0
    %p251 = por %p249, %p250
    %p252 = scmp.ne.s32.totalorder %s241, %s244
    %p253 = scmp.eq.s32.totalorder %s33, 2
    %p254 = por %p252, %p253
    %p255 = scmp.ne.s32.totalorder %s244, %s245
    %p256 = scmp.eq.s32.totalorder %s33, 0
    %p257 = por %p255, %p256
    %p258 = scmp.ne.s32.totalorder %s244, %s245
    %p259 = scmp.eq.s32.totalorder %s34, 2
    %p260 = por %p258, %p259
    %p262 = scmp.ne.s32.totalorder %s245, %s261
    %p263 = scmp.eq.s32.totalorder %s34, 0
    %p264 = por %p262, %p263
    %s265 = ssub.s32 %s28, %s35
    %p266 = scmp.eq.s32.totalorder %s265, 0
    %s268 = sadd.s32 %s267, 1
    %s269 = scalar_select %p266, %s267, %s268
    %p272 = pneg %p266
    %p273 = scmp.eq.s32.totalorder %s28, 2
    %p274 = por %p272, %p273
    %p275 = scmp.ne.s32.totalorder %s267, %s270
    %p276 = scmp.eq.s32.totalorder %s28, 0
    %p277 = por %p275, %p276
    %p278 = scmp.ne.s32.totalorder %s267, %s270
    %p279 = scmp.eq.s32.totalorder %s33, 2
    %p280 = por %p278, %p279
    %p281 = scmp.ne.s32.totalorder %s270, %s271
    %p282 = scmp.eq.s32.totalorder %s33, 0
    %p283 = por %p281, %p282
    %p284 = scmp.ne.s32.totalorder %s270, %s271
    %p285 = scmp.eq.s32.totalorder %s34, 2
    %p286 = por %p284, %p285
    %p288 = scmp.ne.s32.totalorder %s271, %s287
    %p289 = scmp.eq.s32.totalorder %s34, 0
    %p290 = por %p288, %p289
    %s291 = ssub.s32 %s28, %s35
    %p292 = scmp.eq.s32.totalorder %s291, 0
    %s294 = sadd.s32 %s293, 1
    %s295 = scalar_select %p292, %s293, %s294
    %p298 = pneg %p292
    %p299 = scmp.eq.s32.totalorder %s28, 2
    %p300 = por %p298, %p299
    %p301 = scmp.ne.s32.totalorder %s293, %s296
    %p302 = scmp.eq.s32.totalorder %s28, 0
    %p303 = por %p301, %p302
    %p304 = scmp.ne.s32.totalorder %s293, %s296
    %p305 = scmp.eq.s32.totalorder %s33, 2
    %p306 = por %p304, %p305
    %p307 = scmp.ne.s32.totalorder %s296, %s297
    %p308 = scmp.eq.s32.totalorder %s33, 0
    %p309 = por %p307, %p308
    %p310 = scmp.ne.s32.totalorder %s296, %s297
    %p311 = scmp.eq.s32.totalorder %s34, 2
    %p312 = por %p310, %p311
    %p314 = scmp.ne.s32.totalorder %s297, %s313
    %p315 = scmp.eq.s32.totalorder %s34, 0
    %p316 = por %p314, %p315
    %s317 = ssub.s32 %s28, %s35
    %p318 = scmp.eq.s32.totalorder %s317, 0
    %s320 = sadd.s32 %s319, 1
    %s321 = scalar_select %p318, %s319, %s320
    %p324 = pneg %p318
    %p325 = scmp.eq.s32.totalorder %s28, 2
    %p326 = por %p324, %p325
    %p327 = scmp.ne.s32.totalorder %s319, %s322
    %p328 = scmp.eq.s32.totalorder %s28, 0
    %p329 = por %p327, %p328
    %p330 = scmp.ne.s32.totalorder %s319, %s322
    %p331 = scmp.eq.s32.totalorder %s33, 2
    %p332 = por %p330, %p331
    %p333 = scmp.ne.s32.totalorder %s322, %s323
    %p334 = scmp.eq.s32.totalorder %s33, 0
    %p335 = por %p333, %p334
    %p336 = scmp.ne.s32.totalorder %s322, %s323
    %p337 = scmp.eq.s32.totalorder %s34, 2
    %p338 = por %p336, %p337
    %p340 = scmp.ne.s32.totalorder %s323, %s339
    %p341 = scmp.eq.s32.totalorder %s34, 0
    %p342 = por %p340, %p341
    %s343 = ssub.s32 %s28, %s35
    %p344 = scmp.eq.s32.totalorder %s343, 0
    %s346 = sadd.s32 %s345, 1
    %s347 = scalar_select %p344, %s345, %s346
    %p350 = pneg %p344
    %p351 = scmp.eq.s32.totalorder %s28, 2
    %p352 = por %p350, %p351
    %p353 = scmp.ne.s32.totalorder %s345, %s348
    %p354 = scmp.eq.s32.totalorder %s28, 0
    %p355 = por %p353, %p354
    %p356 = scmp.ne.s32.totalorder %s345, %s348
    %p357 = scmp.eq.s32.totalorder %s33, 2
    %p358 = por %p356, %p357
    %p359 = scmp.ne.s32.totalorder %s348, %s349
    %p360 = scmp.eq.s32.totalorder %s33, 0
    %p361 = por %p359, %p360
    %p362 = scmp.ne.s32.totalorder %s348, %s349
    %p363 = scmp.eq.s32.totalorder %s34, 2
    %p364 = por %p362, %p363
    %p366 = scmp.ne.s32.totalorder %s349, %s365
    %p367 = scmp.eq.s32.totalorder %s34, 0
    %p368 = por %p366, %p367
    %s369 = ssub.s32 %s28, %s35
    %p370 = scmp.eq.s32.totalorder %s369, 0
    %s372 = sadd.s32 %s371, 1
    %s373 = scalar_select %p370, %s371, %s372
    %p376 = pneg %p370
    %p377 = scmp.eq.s32.totalorder %s28, 2
    %p378 = por %p376, %p377
    %p379 = scmp.ne.s32.totalorder %s371, %s374
    %p380 = scmp.eq.s32.totalorder %s28, 0
    %p381 = por %p379, %p380
    %p382 = scmp.ne.s32.totalorder %s371, %s374
    %p383 = scmp.eq.s32.totalorder %s33, 2
    %p384 = por %p382, %p383
    %p385 = scmp.ne.s32.totalorder %s374, %s375
    %p386 = scmp.eq.s32.totalorder %s33, 0
    %p387 = por %p385, %p386
    %p388 = scmp.ne.s32.totalorder %s374, %s375
    %p389 = scmp.eq.s32.totalorder %s34, 2
    %p390 = por %p388, %p389
    %p392 = scmp.ne.s32.totalorder %s375, %s391
    %p393 = scmp.eq.s32.totalorder %s34, 0
    %p394 = por %p392, %p393
    %s395 = ssub.s32 %s28, %s35
    %p396 = scmp.eq.s32.totalorder %s395, 0
    %s398 = sadd.s32 %s397, 1
    %s399 = scalar_select %p396, %s397, %s398
    %p402 = pneg %p396
    %p403 = scmp.eq.s32.totalorder %s28, 2
    %p404 = por %p402, %p403
    %p405 = scmp.ne.s32.totalorder %s397, %s400
    %p406 = scmp.eq.s32.totalorder %s28, 0
    %p407 = por %p405, %p406
    %p408 = scmp.ne.s32.totalorder %s397, %s400
    %p409 = scmp.eq.s32.totalorder %s33, 2
    %p410 = por %p408, %p409
    %p411 = scmp.ne.s32.totalorder %s400, %s401
    %p412 = scmp.eq.s32.totalorder %s33, 0
    %p413 = por %p411, %p412
    %p414 = scmp.ne.s32.totalorder %s400, %s401
    %p415 = scmp.eq.s32.totalorder %s34, 2
    %p416 = por %p414, %p415
    %p418 = scmp.ne.s32.totalorder %s401, %s417
    %p419 = scmp.eq.s32.totalorder %s34, 0
    %p420 = por %p418, %p419
    %s421 = ssub.s32 %s28, %s35
    %p422 = scmp.eq.s32.totalorder %s421, 0
    %s424 = sadd.s32 %s423, 1
    %s425 = scalar_select %p422, %s423, %s424
    %p428 = pneg %p422
    %p429 = scmp.eq.s32.totalorder %s28, 2
    %p430 = por %p428, %p429
    %p431 = scmp.ne.s32.totalorder %s423, %s426
    %p432 = scmp.eq.s32.totalorder %s28, 0
    %p433 = por %p431, %p432
    %p434 = scmp.ne.s32.totalorder %s423, %s426
    %p435 = scmp.eq.s32.totalorder %s33, 2
    %p436 = por %p434, %p435
    %p437 = scmp.ne.s32.totalorder %s426, %s427
    %p438 = scmp.eq.s32.totalorder %s33, 0
    %p439 = por %p437, %p438
    %p440 = scmp.ne.s32.totalorder %s426, %s427
    %p441 = scmp.eq.s32.totalorder %s34, 2
    %p442 = por %p440, %p441
    %p444 = scmp.ne.s32.totalorder %s427, %s443
    %p445 = scmp.eq.s32.totalorder %s34, 0
    %p446 = por %p444, %p445
    %s447 = ssub.s32 %s28, %s35
    %p448 = scmp.eq.s32.totalorder %s447, 0
    %s450 = sadd.s32 %s449, 1
    %s451 = scalar_select %p448, %s449, %s450
    %p454 = pneg %p448
    %p455 = scmp.eq.s32.totalorder %s28, 2
    %p456 = por %p454, %p455
    %p457 = scmp.ne.s32.totalorder %s449, %s452
    %p458 = scmp.eq.s32.totalorder %s28, 0
    %p459 = por %p457, %p458
    %p460 = scmp.ne.s32.totalorder %s449, %s452
    %p461 = scmp.eq.s32.totalorder %s33, 2
    %p462 = por %p460, %p461
    %p463 = scmp.ne.s32.totalorder %s452, %s453
    %p464 = scmp.eq.s32.totalorder %s33, 0
    %p465 = por %p463, %p464
    %p466 = scmp.ne.s32.totalorder %s452, %s453
    %p467 = scmp.eq.s32.totalorder %s34, 2
    %p468 = por %p466, %p467
    %p470 = scmp.ne.s32.totalorder %s453, %s469
    %p471 = scmp.eq.s32.totalorder %s34, 0
    %p472 = por %p470, %p471
    %s473 = ssub.s32 %s28, %s35
    %p474 = scmp.eq.s32.totalorder %s473, 0
    %s476 = sadd.s32 %s475, 1
    %s477 = scalar_select %p474, %s475, %s476
    %p480 = pneg %p474
    %p481 = scmp.eq.s32.totalorder %s28, 2
    %p482 = por %p480, %p481
    %p483 = scmp.ne.s32.totalorder %s475, %s478
    %p484 = scmp.eq.s32.totalorder %s28, 0
    %p485 = por %p483, %p484
    %p486 = scmp.ne.s32.totalorder %s475, %s478
    %p487 = scmp.eq.s32.totalorder %s33, 2
    %p488 = por %p486, %p487
    %p489 = scmp.ne.s32.totalorder %s478, %s479
    %p490 = scmp.eq.s32.totalorder %s33, 0
    %p491 = por %p489, %p490
    %p492 = scmp.ne.s32.totalorder %s478, %s479
    %p493 = scmp.eq.s32.totalorder %s34, 2
    %p494 = por %p492, %p493
    %p496 = scmp.ne.s32.totalorder %s479, %s495
    %p497 = scmp.eq.s32.totalorder %s34, 0
    %p498 = por %p496, %p497
    %s499 = ssub.s32 %s28, %s35
    %p500 = scmp.eq.s32.totalorder %s499, 0
    %s502 = sadd.s32 %s501, 1
    %s503 = scalar_select %p500, %s501, %s502
    %p506 = pneg %p500
    %p507 = scmp.eq.s32.totalorder %s28, 2
    %p508 = por %p506, %p507
    %p509 = scmp.ne.s32.totalorder %s501, %s504
    %p510 = scmp.eq.s32.totalorder %s28, 0
    %p511 = por %p509, %p510
    %p512 = scmp.ne.s32.totalorder %s501, %s504
    %p513 = scmp.eq.s32.totalorder %s33, 2
    %p514 = por %p512, %p513
    %p515 = scmp.ne.s32.totalorder %s504, %s505
    %p516 = scmp.eq.s32.totalorder %s33, 0
    %p517 = por %p515, %p516
    %p518 = scmp.ne.s32.totalorder %s504, %s505
    %p519 = scmp.eq.s32.totalorder %s34, 2
    %p520 = por %p518, %p519
    %p522 = scmp.ne.s32.totalorder %s505, %s521
    %p523 = scmp.eq.s32.totalorder %s34, 0
    %p524 = por %p522, %p523
    %s525 = ssub.s32 %s28, %s35
    %p526 = scmp.eq.s32.totalorder %s525, 0
    %s528 = sadd.s32 %s527, 1
    %s529 = scalar_select %p526, %s527, %s528
    %p532 = pneg %p526
    %p533 = scmp.eq.s32.totalorder %s28, 2
    %p534 = por %p532, %p533
    %p535 = scmp.ne.s32.totalorder %s527, %s530
    %p536 = scmp.eq.s32.totalorder %s28, 0
    %p537 = por %p535, %p536
    %p538 = scmp.ne.s32.totalorder %s527, %s530
    %p539 = scmp.eq.s32.totalorder %s33, 2
    %p540 = por %p538, %p539
    %p541 = scmp.ne.s32.totalorder %s530, %s531
    %p542 = scmp.eq.s32.totalorder %s33, 0
    %p543 = por %p541, %p542
    %p544 = scmp.ne.s32.totalorder %s530, %s531
    %p545 = scmp.eq.s32.totalorder %s34, 2
    %p546 = por %p544, %p545
    %p548 = scmp.ne.s32.totalorder %s531, %s547
    %p549 = scmp.eq.s32.totalorder %s34, 0
    %p550 = por %p548, %p549
    %s551 = ssub.s32 %s28, %s35
    %p552 = scmp.eq.s32.totalorder %s551, 0
    %s554 = sadd.s32 %s553, 1
    %s555 = scalar_select %p552, %s553, %s554
    %p558 = pneg %p552
    %p559 = scmp.eq.s32.totalorder %s28, 2
    %p560 = por %p558, %p559
    %p561 = scmp.ne.s32.totalorder %s553, %s556
    %p562 = scmp.eq.s32.totalorder %s28, 0
    %p563 = por %p561, %p562
    %p564 = scmp.ne.s32.totalorder %s553, %s556
    %p565 = scmp.eq.s32.totalorder %s33, 2
    %p566 = por %p564, %p565
    %p567 = scmp.ne.s32.totalorder %s556, %s557
    %p568 = scmp.eq.s32.totalorder %s33, 0
    %p569 = por %p567, %p568
    %p570 = scmp.ne.s32.totalorder %s556, %s557
    %p571 = scmp.eq.s32.totalorder %s34, 2
    %p572 = por %p570, %p571
    %p574 = scmp.ne.s32.totalorder %s557, %s573
    %p575 = scmp.eq.s32.totalorder %s34, 0
    %p576 = por %p574, %p575
    %s577 = ssub.s32 %s28, %s35
    %p578 = scmp.eq.s32.totalorder %s577, 0
    %s580 = sadd.s32 %s579, 1
    %s581 = scalar_select %p578, %s579, %s580
    %p584 = pneg %p578
    %p585 = scmp.eq.s32.totalorder %s28, 2
    %p586 = por %p584, %p585
    %p587 = scmp.ne.s32.totalorder %s579, %s582
    %p588 = scmp.eq.s32.totalorder %s28, 0
    %p589 = por %p587, %p588
    %p590 = scmp.ne.s32.totalorder %s579, %s582
    %p591 = scmp.eq.s32.totalorder %s33, 2
    %p592 = por %p590, %p591
    %p593 = scmp.ne.s32.totalorder %s582, %s583
    %p594 = scmp.eq.s32.totalorder %s33, 0
    %p595 = por %p593, %p594
    %p596 = scmp.ne.s32.totalorder %s582, %s583
    %p597 = scmp.eq.s32.totalorder %s34, 2
    %p598 = por %p596, %p597
    %p600 = scmp.ne.s32.totalorder %s583, %s599
    %p601 = scmp.eq.s32.totalorder %s34, 0
    %p602 = por %p600, %p601
    %s603 = ssub.s32 %s28, %s35
    %p604 = scmp.eq.s32.totalorder %s603, 0
    %s606 = sadd.s32 %s605, 1
    %s607 = scalar_select %p604, %s605, %s606
    %p610 = pneg %p604
    %p611 = scmp.eq.s32.totalorder %s28, 2
    %p612 = por %p610, %p611
    %p613 = scmp.ne.s32.totalorder %s605, %s608
    %p614 = scmp.eq.s32.totalorder %s28, 0
    %p615 = por %p613, %p614
    %p616 = scmp.ne.s32.totalorder %s605, %s608
    %p617 = scmp.eq.s32.totalorder %s33, 2
    %p618 = por %p616, %p617
    %p619 = scmp.ne.s32.totalorder %s608, %s609
    %p620 = scmp.eq.s32.totalorder %s33, 0
    %p621 = por %p619, %p620
    %p622 = scmp.ne.s32.totalorder %s608, %s609
    %p623 = scmp.eq.s32.totalorder %s34, 2
    %p624 = por %p622, %p623
    %p626 = scmp.ne.s32.totalorder %s609, %s625
    %p627 = scmp.eq.s32.totalorder %s34, 0
    %p628 = por %p626, %p627
    %p629 = scmp.le.s32.totalorder 1, %s28
    %p630 = scmp.lt.s32.totalorder %s28, 4
    %p631 = pnand %p629, %p630
    %p632 = pneg %p631
    // Predicated region
    $region9: #{svgd_forward.1} parent=5 // pred_check
      _
    $region10: #{svgd_forward.1} parent=5 // pred_check_branch
      %634 = sbr.rel (%p631) target = $region12
    $region11: #{svgd_forward.1} parent=5 // pred_region
      %s635 = ssub.s32 %s28, 1
      // Predicated region
      $region13: #{svgd_forward.1} parent=11 // pred_check
        %p636 = pneg %p49
      $region14: #{svgd_forward.1} parent=11 // pred_check_branch
        %638 = sbr.rel (%p636) target = $region16
      $region15: #{svgd_forward.1} parent=11 // pred_region
        _
      $region16: #{svgd_forward.1} parent=11 // pred_fallthru
        _
    $region12: #{svgd_forward.1} parent=5 // pred_fallthru
      _
    %p639 = scmp.lt.s32.totalorder %s28, 3
    // Predicated region
    $region17: #{svgd_forward.1} parent=5 // pred_check
      %p640 = pneg %p639
    $region18: #{svgd_forward.1} parent=5 // pred_check_branch
      %642 = sbr.rel (%p640) target = $region20
    $region19: #{svgd_forward.1} parent=5 // pred_region
      // Predicated region
      $region21: #{svgd_forward.1} parent=19 // pred_check
        %p643 = pneg %p69
      $region22: #{svgd_forward.1} parent=19 // pred_check_branch
        %645 = sbr.rel (%p643) target = $region24
      $region23: #{svgd_forward.1} parent=19 // pred_region
        %p646 = scmp.lt.s32.totalorder %s28, 2
        %s647 = scalar_select %p646, %s28, 2
        %s648 = smul.addr %s647, 24
        %s649 = smul.addr %s648, 4
        %s650 = scalar_lea.vmem %s1, %s649
      $region24: #{svgd_forward.1} parent=19 // pred_fallthru
        _
      // Predicated region
      $region25: #{svgd_forward.1} parent=19 // pred_check
        %p651 = pneg %p95
      $region26: #{svgd_forward.1} parent=19 // pred_check_branch
        %653 = sbr.rel (%p651) target = $region28
      $region27: #{svgd_forward.1} parent=19 // pred_region
        %p654 = scmp.lt.s32.totalorder %s28, 2
        %s655 = scalar_select %p654, %s28, 2
        %s656 = scalar_lea.vmem %s2, %s655
      $region28: #{svgd_forward.1} parent=19 // pred_fallthru
        _
      // Predicated region
      $region29: #{svgd_forward.1} parent=19 // pred_check
        %p657 = pneg %p121
      $region30: #{svgd_forward.1} parent=19 // pred_check_branch
        %659 = sbr.rel (%p657) target = $region32
      $region31: #{svgd_forward.1} parent=19 // pred_region
        %p660 = scmp.lt.s32.totalorder %s28, 2
        %s661 = scalar_select %p660, %s28, 2
        %s662 = smul.addr %s661, 8
        %s663 = scalar_lea.vmem %s3, %s662
      $region32: #{svgd_forward.1} parent=19 // pred_fallthru
        _
      // Predicated region
      $region33: #{svgd_forward.1} parent=19 // pred_check
        %p664 = pneg %p147
      $region34: #{svgd_forward.1} parent=19 // pred_check_branch
        %666 = sbr.rel (%p664) target = $region36
      $region35: #{svgd_forward.1} parent=19 // pred_region
        %p667 = scmp.lt.s32.totalorder %s28, 2
        %s668 = scalar_select %p667, %s28, 2
        %s669 = scalar_lea.vmem %s4, %s668
      $region36: #{svgd_forward.1} parent=19 // pred_fallthru
        _
      // Predicated region
      $region37: #{svgd_forward.1} parent=19 // pred_check
        %p670 = pneg %p173
      $region38: #{svgd_forward.1} parent=19 // pred_check_branch
        %672 = sbr.rel (%p670) target = $region40
      $region39: #{svgd_forward.1} parent=19 // pred_region
        %p673 = scmp.lt.s32.totalorder %s28, 2
        %s674 = scalar_select %p673, %s28, 2
        %s675 = scalar_lea.vmem %s5, %s674
      $region40: #{svgd_forward.1} parent=19 // pred_fallthru
        _
      // Predicated region
      $region41: #{svgd_forward.1} parent=19 // pred_check
        %p676 = pneg %p199
      $region42: #{svgd_forward.1} parent=19 // pred_check_branch
        %678 = sbr.rel (%p676) target = $region44
      $region43: #{svgd_forward.1} parent=19 // pred_region
        %p679 = scmp.lt.s32.totalorder %s28, 2
        %s680 = scalar_select %p679, %s28, 2
        %s681 = smul.addr %s680, 2
        %s682 = scalar_lea.vmem %s6, %s681
      $region44: #{svgd_forward.1} parent=19 // pred_fallthru
        _
      // Predicated region
      $region45: #{svgd_forward.1} parent=19 // pred_check
        %p683 = pneg %p225
      $region46: #{svgd_forward.1} parent=19 // pred_check_branch
        %685 = sbr.rel (%p683) target = $region48
      $region47: #{svgd_forward.1} parent=19 // pred_region
        %p686 = scmp.lt.s32.totalorder %s28, 2
        %s687 = scalar_select %p686, %s28, 2
        %s688 = smul.addr %s687, 2
        %s689 = scalar_lea.vmem %s7, %s688
      $region48: #{svgd_forward.1} parent=19 // pred_fallthru
        _
      // Predicated region
      $region49: #{svgd_forward.1} parent=19 // pred_check
        %p690 = pneg %p251
      $region50: #{svgd_forward.1} parent=19 // pred_check_branch
        %692 = sbr.rel (%p690) target = $region52
      $region51: #{svgd_forward.1} parent=19 // pred_region
        %p693 = scmp.lt.s32.totalorder %s28, 2
        %s694 = scalar_select %p693, %s28, 2
        %s695 = smul.addr %s694, 96
        %s696 = smul.addr %s695, 4
        %s697 = scalar_lea.vmem %s8, %s696
      $region52: #{svgd_forward.1} parent=19 // pred_fallthru
        _
      // Predicated region
      $region53: #{svgd_forward.1} parent=19 // pred_check
        %p698 = pneg %p277
      $region54: #{svgd_forward.1} parent=19 // pred_check_branch
        %700 = sbr.rel (%p698) target = $region56
      $region55: #{svgd_forward.1} parent=19 // pred_region
        %p701 = scmp.lt.s32.totalorder %s28, 2
        %s702 = scalar_select %p701, %s28, 2
        %s703 = smul.addr %s702, 6
        %s704 = scalar_lea.vmem %s9, %s703
      $region56: #{svgd_forward.1} parent=19 // pred_fallthru
        _
      // Predicated region
      $region57: #{svgd_forward.1} parent=19 // pred_check
        %p705 = pneg %p303
      $region58: #{svgd_forward.1} parent=19 // pred_check_branch
        %707 = sbr.rel (%p705) target = $region60
      $region59: #{svgd_forward.1} parent=19 // pred_region
        %p708 = scmp.lt.s32.totalorder %s28, 2
        %s709 = scalar_select %p708, %s28, 2
        %s710 = smul.addr %s709, 32
        %s711 = smul.addr %s710, 4
        %s712 = scalar_lea.vmem %s10, %s711
      $region60: #{svgd_forward.1} parent=19 // pred_fallthru
        _
      // Predicated region
      $region61: #{svgd_forward.1} parent=19 // pred_check
        %p713 = pneg %p329
      $region62: #{svgd_forward.1} parent=19 // pred_check_branch
        %715 = sbr.rel (%p713) target = $region64
      $region63: #{svgd_forward.1} parent=19 // pred_region
        %p716 = scmp.lt.s32.totalorder %s28, 2
        %s717 = scalar_select %p716, %s28, 2
        %s718 = smul.addr %s717, 2
        %s719 = scalar_lea.vmem %s11, %s718
      $region64: #{svgd_forward.1} parent=19 // pred_fallthru
        _
      // Predicated region
      $region65: #{svgd_forward.1} parent=19 // pred_check
        %p720 = pneg %p355
      $region66: #{svgd_forward.1} parent=19 // pred_check_branch
        %722 = sbr.rel (%p720) target = $region68
      $region67: #{svgd_forward.1} parent=19 // pred_region
        %p723 = scmp.lt.s32.totalorder %s28, 2
        %s724 = scalar_select %p723, %s28, 2
        %s725 = smul.addr %s724, 2
        %s726 = scalar_lea.vmem %s12, %s725
      $region68: #{svgd_forward.1} parent=19 // pred_fallthru
        _
      // Predicated region
      $region69: #{svgd_forward.1} parent=19 // pred_check
        %p727 = pneg %p381
      $region70: #{svgd_forward.1} parent=19 // pred_check_branch
        %729 = sbr.rel (%p727) target = $region72
      $region71: #{svgd_forward.1} parent=19 // pred_region
        %p730 = scmp.lt.s32.totalorder %s28, 2
        %s731 = scalar_select %p730, %s28, 2
        %s732 = smul.addr %s731, 2
        %s733 = scalar_lea.vmem %s13, %s732
      $region72: #{svgd_forward.1} parent=19 // pred_fallthru
        _
      // Predicated region
      $region73: #{svgd_forward.1} parent=19 // pred_check
        %p734 = pneg %p407
      $region74: #{svgd_forward.1} parent=19 // pred_check_branch
        %736 = sbr.rel (%p734) target = $region76
      $region75: #{svgd_forward.1} parent=19 // pred_region
        %p737 = scmp.lt.s32.totalorder %s28, 2
        %s738 = scalar_select %p737, %s28, 2
        %s739 = smul.addr %s738, 128
        %s740 = smul.addr %s739, 4
        %s741 = scalar_lea.vmem %s14, %s740
      $region76: #{svgd_forward.1} parent=19 // pred_fallthru
        _
      // Predicated region
      $region77: #{svgd_forward.1} parent=19 // pred_check
        %p742 = pneg %p433
      $region78: #{svgd_forward.1} parent=19 // pred_check_branch
        %744 = sbr.rel (%p742) target = $region80
      $region79: #{svgd_forward.1} parent=19 // pred_region
        %p745 = scmp.lt.s32.totalorder %s28, 2
        %s746 = scalar_select %p745, %s28, 2
        %s747 = smul.addr %s746, 8
        %s748 = scalar_lea.vmem %s15, %s747
      $region80: #{svgd_forward.1} parent=19 // pred_fallthru
        _
      // Predicated region
      $region81: #{svgd_forward.1} parent=19 // pred_check
        %p749 = pneg %p459
      $region82: #{svgd_forward.1} parent=19 // pred_check_branch
        %751 = sbr.rel (%p749) target = $region84
      $region83: #{svgd_forward.1} parent=19 // pred_region
        %p752 = scmp.lt.s32.totalorder %s28, 2
        %s753 = scalar_select %p752, %s28, 2
        %s754 = smul.addr %s753, 128
        %s755 = smul.addr %s754, 4
        %s756 = scalar_lea.vmem %s16, %s755
      $region84: #{svgd_forward.1} parent=19 // pred_fallthru
        _
      // Predicated region
      $region85: #{svgd_forward.1} parent=19 // pred_check
        %p757 = pneg %p485
      $region86: #{svgd_forward.1} parent=19 // pred_check_branch
        %759 = sbr.rel (%p757) target = $region88
      $region87: #{svgd_forward.1} parent=19 // pred_region
        %p760 = scmp.lt.s32.totalorder %s28, 2
        %s761 = scalar_select %p760, %s28, 2
        %s762 = smul.addr %s761, 2
        %s763 = scalar_lea.vmem %s17, %s762
      $region88: #{svgd_forward.1} parent=19 // pred_fallthru
        _
      // Predicated region
      $region89: #{svgd_forward.1} parent=19 // pred_check
        %p764 = pneg %p511
      $region90: #{svgd_forward.1} parent=19 // pred_check_branch
        %766 = sbr.rel (%p764) target = $region92
      $region91: #{svgd_forward.1} parent=19 // pred_region
        %p767 = scmp.lt.s32.totalorder %s28, 2
        %s768 = scalar_select %p767, %s28, 2
        %s769 = scalar_lea.vmem %s18, %s768
      $region92: #{svgd_forward.1} parent=19 // pred_fallthru
        _
      // Predicated region
      $region93: #{svgd_forward.1} parent=19 // pred_check
        %p770 = pneg %p537
      $region94: #{svgd_forward.1} parent=19 // pred_check_branch
        %772 = sbr.rel (%p770) target = $region96
      $region95: #{svgd_forward.1} parent=19 // pred_region
        %p773 = scmp.lt.s32.totalorder %s28, 2
        %s774 = scalar_select %p773, %s28, 2
        %s775 = scalar_lea.vmem %s19, %s774
      $region96: #{svgd_forward.1} parent=19 // pred_fallthru
        _
      // Predicated region
      $region97: #{svgd_forward.1} parent=19 // pred_check
        %p776 = pneg %p563
      $region98: #{svgd_forward.1} parent=19 // pred_check_branch
        %778 = sbr.rel (%p776) target = $region100
      $region99: #{svgd_forward.1} parent=19 // pred_region
        %p779 = scmp.lt.s32.totalorder %s28, 2
        %s780 = scalar_select %p779, %s28, 2
        %s781 = smul.addr %s780, 16
        %s782 = smul.addr %s781, 4
        %s783 = scalar_lea.vmem %s20, %s782
      $region100: #{svgd_forward.1} parent=19 // pred_fallthru
        _
      // Predicated region
      $region101: #{svgd_forward.1} parent=19 // pred_check
        %p784 = pneg %p589
      $region102: #{svgd_forward.1} parent=19 // pred_check_branch
        %786 = sbr.rel (%p784) target = $region104
      $region103: #{svgd_forward.1} parent=19 // pred_region
        %p787 = scmp.lt.s32.totalorder %s28, 2
        %s788 = scalar_select %p787, %s28, 2
        %s789 = scalar_lea.vmem %s21, %s788
      $region104: #{svgd_forward.1} parent=19 // pred_fallthru
        _
    $region20: #{svgd_forward.1} parent=5 // pred_fallthru
      _
    %p790 = scmp.le.s32.totalorder 1, %s28
    %p791 = scmp.lt.s32.totalorder %s28, 4
    %p792 = pnand %p790, %p791
    %p793 = pneg %p792
    // Predicated region
    $region105: #{svgd_forward.1} parent=5 // pred_check
      _
    $region106: #{svgd_forward.1} parent=5 // pred_check_branch
      %795 = sbr.rel (%p792) target = $region108
    $region107: #{svgd_forward.1} parent=5 // pred_region
      %s796 = ssub.s32 %s28, 1
      %p797 = pneg %p49
      %p798 = pneg %p46
      %p799 = scmp.lt.s32.totalorder %s33, 2
      %s800 = scalar_select %p799, %s33, 2
      %s801 = smul.addr %s800, 24
      %s802 = smul.addr %s801, 4
      %s803 = scalar_lea.vmem %s1, %s802
      %p804 = pneg %p75
      %p805 = pneg %p72
      %p806 = scmp.lt.s32.totalorder %s33, 2
      %s807 = scalar_select %p806, %s33, 2
      %s808 = scalar_lea.vmem %s2, %s807
      %p809 = pneg %p101
      %p810 = pneg %p98
      %p811 = scmp.lt.s32.totalorder %s33, 2
      %s812 = scalar_select %p811, %s33, 2
      %s813 = smul.addr %s812, 8
      %s814 = scalar_lea.vmem %s3, %s813
      %p815 = pneg %p127
      %p816 = pneg %p124
      %p817 = scmp.lt.s32.totalorder %s33, 2
      %s818 = scalar_select %p817, %s33, 2
      %s819 = scalar_lea.vmem %s4, %s818
      %p820 = pneg %p153
      %p821 = pneg %p150
      %p822 = scmp.lt.s32.totalorder %s33, 2
      %s823 = scalar_select %p822, %s33, 2
      %s824 = scalar_lea.vmem %s5, %s823
      %p825 = pneg %p179
      %p826 = pneg %p176
      %p827 = scmp.lt.s32.totalorder %s33, 2
      %s828 = scalar_select %p827, %s33, 2
      %s829 = smul.addr %s828, 2
      %s830 = scalar_lea.vmem %s6, %s829
      %p831 = pneg %p205
      %p832 = pneg %p202
      %p833 = scmp.lt.s32.totalorder %s33, 2
      %s834 = scalar_select %p833, %s33, 2
      %s835 = smul.addr %s834, 2
      %s836 = scalar_lea.vmem %s7, %s835
      %p837 = pneg %p231
      %p838 = pneg %p228
      %p839 = scmp.lt.s32.totalorder %s33, 2
      %s840 = scalar_select %p839, %s33, 2
      %s841 = smul.addr %s840, 96
      %s842 = smul.addr %s841, 4
      %s843 = scalar_lea.vmem %s8, %s842
      %p844 = pneg %p257
      %p845 = pneg %p254
      %p846 = scmp.lt.s32.totalorder %s33, 2
      %s847 = scalar_select %p846, %s33, 2
      %s848 = smul.addr %s847, 6
      %s849 = scalar_lea.vmem %s9, %s848
      %p850 = pneg %p283
      %p851 = pneg %p280
      %p852 = scmp.lt.s32.totalorder %s33, 2
      %s853 = scalar_select %p852, %s33, 2
      %s854 = smul.addr %s853, 32
      %s855 = smul.addr %s854, 4
      %s856 = scalar_lea.vmem %s10, %s855
      %p857 = pneg %p309
      %p858 = pneg %p306
      %p859 = scmp.lt.s32.totalorder %s33, 2
      %s860 = scalar_select %p859, %s33, 2
      %s861 = smul.addr %s860, 2
      %s862 = scalar_lea.vmem %s11, %s861
      %p863 = pneg %p335
      %p864 = pneg %p332
      %p865 = scmp.lt.s32.totalorder %s33, 2
      %s866 = scalar_select %p865, %s33, 2
      %s867 = smul.addr %s866, 2
      %s868 = scalar_lea.vmem %s12, %s867
      %p869 = pneg %p361
      %p870 = pneg %p358
      %p871 = scmp.lt.s32.totalorder %s33, 2
      %s872 = scalar_select %p871, %s33, 2
      %s873 = smul.addr %s872, 2
      %s874 = scalar_lea.vmem %s13, %s873
      %p875 = pneg %p387
      %p876 = pneg %p384
      %p877 = scmp.lt.s32.totalorder %s33, 2
      %s878 = scalar_select %p877, %s33, 2
      %s879 = smul.addr %s878, 128
      %s880 = smul.addr %s879, 4
      %s881 = scalar_lea.vmem %s14, %s880
      %p882 = pneg %p413
      %p883 = pneg %p410
      %p884 = scmp.lt.s32.totalorder %s33, 2
      %s885 = scalar_select %p884, %s33, 2
      %s886 = smul.addr %s885, 8
      %s887 = scalar_lea.vmem %s15, %s886
      %p888 = pneg %p439
      %p889 = pneg %p436
      %p890 = scmp.lt.s32.totalorder %s33, 2
      %s891 = scalar_select %p890, %s33, 2
      %s892 = smul.addr %s891, 128
      %s893 = smul.addr %s892, 4
      %s894 = scalar_lea.vmem %s16, %s893
      %p895 = pneg %p465
      %p896 = pneg %p462
      %p897 = scmp.lt.s32.totalorder %s33, 2
      %s898 = scalar_select %p897, %s33, 2
      %s899 = smul.addr %s898, 2
      %s900 = scalar_lea.vmem %s17, %s899
      %p901 = pneg %p491
      %p902 = pneg %p488
      %p903 = scmp.lt.s32.totalorder %s33, 2
      %s904 = scalar_select %p903, %s33, 2
      %s905 = scalar_lea.vmem %s18, %s904
      %p906 = pneg %p517
      %p907 = pneg %p514
      %p908 = scmp.lt.s32.totalorder %s33, 2
      %s909 = scalar_select %p908, %s33, 2
      %s910 = scalar_lea.vmem %s19, %s909
      %p911 = pneg %p543
      %p912 = pneg %p540
      %p913 = scmp.lt.s32.totalorder %s33, 2
      %s914 = scalar_select %p913, %s33, 2
      %s915 = smul.addr %s914, 16
      %s916 = smul.addr %s915, 4
      %s917 = scalar_lea.vmem %s20, %s916
      %p918 = pneg %p569
      %p919 = pneg %p566
      %p920 = scmp.lt.s32.totalorder %s33, 2
      %s921 = scalar_select %p920, %s33, 2
      %s922 = scalar_lea.vmem %s21, %s921
      %p923 = pneg %p595
      %p924 = pneg %p592
      %p925 = pneg %p621
      %p926 = pneg %p618
      %p927 = scmp.lt.s32.totalorder %s33, 2
      %s928 = scalar_select %p927, %s33, 2
      %s929 = smul.addr %s928, 2
      %s930 = scalar_lea.vmem %s22, %s929
      %p931 = scmp.lt.s32.totalorder %s33, 2
      %s932 = scalar_select %p931, %s33, 2
      %s933 = smul.addr %s932, 24
      %s934 = smul.addr %s933, 4
      %s935 = scalar_lea.vmem %s1, %s934
      %p936 = scmp.lt.s32.totalorder %s33, 2
      %s937 = scalar_select %p936, %s33, 2
      %s938 = scalar_lea.vmem %s2, %s937
      %p939 = scmp.lt.s32.totalorder %s33, 2
      %s940 = scalar_select %p939, %s33, 2
      %s941 = smul.addr %s940, 8
      %s942 = scalar_lea.vmem %s3, %s941
      %p943 = scmp.lt.s32.totalorder %s33, 2
      %s944 = scalar_select %p943, %s33, 2
      %s945 = scalar_lea.vmem %s4, %s944
      %p946 = scmp.lt.s32.totalorder %s33, 2
      %s947 = scalar_select %p946, %s33, 2
      %s948 = scalar_lea.vmem %s5, %s947
      %p949 = scmp.lt.s32.totalorder %s33, 2
      %s950 = scalar_select %p949, %s33, 2
      %s951 = smul.addr %s950, 2
      %s952 = scalar_lea.vmem %s6, %s951
      %p953 = scmp.lt.s32.totalorder %s33, 2
      %s954 = scalar_select %p953, %s33, 2
      %s955 = smul.addr %s954, 2
      %s956 = scalar_lea.vmem %s7, %s955
      %p957 = scmp.lt.s32.totalorder %s33, 2
      %s958 = scalar_select %p957, %s33, 2
      %s959 = smul.addr %s958, 96
      %s960 = smul.addr %s959, 4
      %s961 = scalar_lea.vmem %s8, %s960
      %p962 = scmp.lt.s32.totalorder %s33, 2
      %s963 = scalar_select %p962, %s33, 2
      %s964 = smul.addr %s963, 6
      %s965 = scalar_lea.vmem %s9, %s964
      %p966 = scmp.lt.s32.totalorder %s33, 2
      %s967 = scalar_select %p966, %s33, 2
      %s968 = smul.addr %s967, 32
      %s969 = smul.addr %s968, 4
      %s970 = scalar_lea.vmem %s10, %s969
      %p971 = scmp.lt.s32.totalorder %s33, 2
      %s972 = scalar_select %p971, %s33, 2
      %s973 = smul.addr %s972, 2
      %s974 = scalar_lea.vmem %s11, %s973
      %p975 = scmp.lt.s32.totalorder %s33, 2
      %s976 = scalar_select %p975, %s33, 2
      %s977 = smul.addr %s976, 2
      %s978 = scalar_lea.vmem %s12, %s977
      %p979 = scmp.lt.s32.totalorder %s33, 2
      %s980 = scalar_select %p979, %s33, 2
      %s981 = smul.addr %s980, 2
      %s982 = scalar_lea.vmem %s13, %s981
      %p983 = scmp.lt.s32.totalorder %s33, 2
      %s984 = scalar_select %p983, %s33, 2
      %s985 = smul.addr %s984, 128
      %s986 = smul.addr %s985, 4
      %s987 = scalar_lea.vmem %s14, %s986
      %p988 = scmp.lt.s32.totalorder %s33, 2
      %s989 = scalar_select %p988, %s33, 2
      %s990 = smul.addr %s989, 8
      %s991 = scalar_lea.vmem %s15, %s990
      %p992 = scmp.lt.s32.totalorder %s33, 2
      %s993 = scalar_select %p992, %s33, 2
      %s994 = smul.addr %s993, 128
      %s995 = smul.addr %s994, 4
      %s996 = scalar_lea.vmem %s16, %s995
      %p997 = scmp.lt.s32.totalorder %s33, 2
      %s998 = scalar_select %p997, %s33, 2
      %s999 = smul.addr %s998, 2
      %s1000 = scalar_lea.vmem %s17, %s999
      %p1001 = scmp.lt.s32.totalorder %s33, 2
      %s1002 = scalar_select %p1001, %s33, 2
      %s1003 = scalar_lea.vmem %s18, %s1002
      %p1004 = scmp.lt.s32.totalorder %s33, 2
      %s1005 = scalar_select %p1004, %s33, 2
      %s1006 = scalar_lea.vmem %s19, %s1005
      %p1007 = scmp.lt.s32.totalorder %s33, 2
      %s1008 = scalar_select %p1007, %s33, 2
      %s1009 = smul.addr %s1008, 16
      %s1010 = smul.addr %s1009, 4
      %s1011 = scalar_lea.vmem %s20, %s1010
      %p1012 = scmp.lt.s32.totalorder %s33, 2
      %s1013 = scalar_select %p1012, %s33, 2
      %s1014 = scalar_lea.vmem %s21, %s1013
      %p1015 = scmp.lt.s32.totalorder %s33, 2
      %s1016 = scalar_select %p1015, %s33, 2
      %s1017 = smul.addr %s1016, 2
      %s1018 = scalar_lea.vmem %s22, %s1017
      %v1020 = vld [vmem:[%s942] sm:$0x1f]
      %v1021 = vld [vmem:[%s945] sm:$0x1]
      %v1022 = vld [vmem:[%s948] sm:$0x1]
      %v1023 = vld [vmem:[%s938] sm:$0x1]
      %v1024 = vadd.f32 %v1023, %v1020
      %vm1025 = vcmask 1040384
      %v1026 = vsel %vm1025, %v1024, 0.0
      %1027 = vadd.xlane.f32.xlu0 %v1026
      %v1028 = vpop.xlane.xlu0 %1027
      %v1029 = vrcp.pop 128.0
      %v1030 = vmul.f32 %v1028, %v1029
      %v1031 = vsub.f32 %v1024, %v1030
      %v1032 = vmul.f32 %v1031, %v1031
      %v1033 = vsel %vm1025, %v1032, 0.0
      %1034 = vadd.xlane.f32.xlu0 %v1033
      %v1035 = vpop.xlane.xlu0 %1034
      %v1036 = vmul.f32 %v1035, %v1029
      %v1037 = vadd.f32 %v1036, 1e-05
      %v1038 = vrsqrt.pop %v1037
      %v1039 = vmul.f32 %v1031, %v1038
      %v1040 = vmul.f32 %v1039, %v1021
      %v1041 = vadd.f32 %v1040, %v1022
      %v1042 = vld [vmem:[%s935] sm:$0xf]
      %v1043 = vld [vmem:[%s935 + $0x4] sm:$0xf]
      %v1044 = vld [vmem:[%s935 + $0x8] sm:$0xf]
      %v1045 = vld [vmem:[%s935 + $0xc] sm:$0xf]
      %v1046 = vld [vmem:[%s935 + $0x10] sm:$0xf]
      %v1047 = vld [vmem:[%s935 + $0x14] sm:$0xf]
      %v1048 = vld [vmem:[%s935 + $0x18] sm:$0xf]
      %v1049 = vld [vmem:[%s935 + $0x1c] sm:$0xf]
      %v1050 = vld [vmem:[%s935 + $0x20] sm:$0xf]
      %v1051 = vld [vmem:[%s935 + $0x24] sm:$0xf]
      %v1052 = vld [vmem:[%s935 + $0x28] sm:$0xf]
      %v1053 = vld [vmem:[%s935 + $0x2c] sm:$0xf]
      %v1054 = vld [vmem:[%s935 + $0x30] sm:$0xf]
      %v1055 = vld [vmem:[%s935 + $0x34] sm:$0xf]
      %v1056 = vld [vmem:[%s935 + $0x38] sm:$0xf]
      %v1057 = vld [vmem:[%s935 + $0x3c] sm:$0xf]
      %v1058 = vld [vmem:[%s935 + $0x40] sm:$0xf]
      %v1059 = vld [vmem:[%s935 + $0x44] sm:$0xf]
      %v1060 = vld [vmem:[%s935 + $0x48] sm:$0xf]
      %v1061 = vld [vmem:[%s935 + $0x4c] sm:$0xf]
      %v1062 = vld [vmem:[%s935 + $0x50] sm:$0xf]
      %v1063 = vld [vmem:[%s935 + $0x54] sm:$0xf]
      %v1064 = vld [vmem:[%s935 + $0x58] sm:$0xf]
      %v1065 = vld [vmem:[%s935 + $0x5c] sm:$0xf]
      %v1066 = vld [vmem:[%s0] sm:$0xff]
      %v1068 = vcombine.high %v1066, %v1066
      %v1070 = vpack.c.bf16 %v1066, %v1066
      %v1071 = vpack.c.bf16 %v1068, %v1068
      %1072 = vst [vmem:[#allocation2] sm:$0x1] %v1041
      %v1097 = vunpack.c.l.b16 %v1042
      %v1098 = vunpack.c.l.b16 %v1043
      %v1099 = vunpack.c.l.b16 %v1044
      %v1100 = vunpack.c.l.b16 %v1045
      %v1101 = vunpack.c.l.b16 %v1046
      %v1102 = vunpack.c.l.b16 %v1047
      %v1103 = vunpack.c.l.b16 %v1048
      %v1104 = vunpack.c.l.b16 %v1049
      %v1105 = vunpack.c.l.b16 %v1050
      %v1106 = vunpack.c.l.b16 %v1051
      %v1107 = vunpack.c.l.b16 %v1052
      %v1108 = vunpack.c.l.b16 %v1053
      %v1109 = vunpack.c.l.b16 %v1054
      %v1110 = vunpack.c.l.b16 %v1055
      %v1111 = vunpack.c.l.b16 %v1056
      %v1112 = vunpack.c.l.b16 %v1057
      %v1113 = vunpack.c.l.b16 %v1058
      %v1114 = vunpack.c.l.b16 %v1059
      %v1115 = vunpack.c.l.b16 %v1060
      %v1116 = vunpack.c.l.b16 %v1061
      %v1117 = vunpack.c.l.b16 %v1062
      %v1118 = vunpack.c.l.b16 %v1063
      %v1119 = vunpack.c.l.b16 %v1064
      %v1120 = vunpack.c.l.b16 %v1065
      %v1121 = vpack.c.b16 %v1098, %v1097
      %v1122 = vpack.c.b16 %v1100, %v1099
      %v1123 = vpack.c.b16 %v1102, %v1101
      %v1124 = vpack.c.b16 %v1104, %v1103
      %v1125 = vpack.c.b16 %v1106, %v1105
      %v1126 = vpack.c.b16 %v1108, %v1107
      %v1127 = vpack.c.b16 %v1110, %v1109
      %v1128 = vpack.c.b16 %v1112, %v1111
      %v1129 = vpack.c.b16 %v1114, %v1113
      %v1130 = vpack.c.b16 %v1116, %v1115
      %v1131 = vpack.c.b16 %v1118, %v1117
      %v1132 = vpack.c.b16 %v1120, %v1119
      %v1146 = vrot.slane %v1020, 1
      %vm1148 = vcmask 523264
      %v1150 = vsel %vm1148, %v1071, 0
      %1152 = vmatprep.subr.bf16.mxu0 0
      %1153 = vmatpush1.bf16.msra.mxu0 %v1121
      %1154 = vmatprep.subr.bf16.mxu0 0
      %1155 = vmatpush1.bf16.msra.mxu0 %v1122
      %1156 = vmatprep.subr.bf16.mxu0 0
      %1157 = vmatpush1.bf16.msra.mxu0 %v1123
      %1158 = vmatprep.subr.bf16.mxu0 0
      %1159 = vmatpush1.bf16.msra.mxu0 %v1124
      %1160 = vmatprep.subr.bf16.mxu0 0
      %1161 = vmatpush1.bf16.msra.mxu0 %v1125
      %1162 = vmatprep.subr.bf16.mxu0 0
      %1163 = vmatpush1.bf16.msra.mxu0 %v1126
      %1164 = vmatprep.subr.bf16.mxu0 0
      %1165 = vmatpush1.bf16.msra.mxu0 %v1127
      %1166 = vmatprep.subr.bf16.mxu0 0
      %1167 = vmatpush1.bf16.msra.mxu0 %v1128
      %1168 = vmatprep.subr.bf16.mxu0 0
      %1169 = vmatpush1.bf16.msra.mxu0 %v1129
      %1170 = vmatprep.subr.bf16.mxu0 0
      %1171 = vmatpush1.bf16.msra.mxu0 %v1130
      %1172 = vmatprep.subr.bf16.mxu0 0
      %1173 = vmatpush1.bf16.msra.mxu0 %v1131
      %1174 = vmatprep.subr.bf16.mxu0 0
      %1175 = vmatpush1.bf16.msra.mxu0 %v1132
      %1176 = vmatprep.subr.bf16.mxu0 0
      %1177 = vmatpush1.bf16.msra.mxu0 0
      %1178 = vmatprep.subr.bf16.mxu0 0
      %1179 = vmatpush1.bf16.msra.mxu0 0
      %1180 = vmatprep.subr.bf16.mxu0 0
      %1181 = vmatpush1.bf16.msra.mxu0 0
      %1182 = vmatprep.subr.bf16.mxu0 0
      %1183 = vmatpush1.bf16.msra.mxu0 0
      %1184 = vmatprep.mubr.bf16.mxu0 %v1150
      %1185 = vmatmul.mubr.bf16.gmra.mrb[0].mxu0 %v1070
      %v1186 = vpop.f32.mrb[0].mxu0
      %v1187 = vadd.f32 %v1146, %v1186
      %v1188 = vpop.f32.mrb[0].mxu0
      %v1189 = vpop.f32.mrb[0].mxu0
      %v1190 = vpop.f32.mrb[0].mxu0
      %1191 = vdwg.mxu0
      %vm1192 = vcmask 1043456
      %v1193 = vsel %vm1192, %v1187, 0.0
      %1194 = vadd.xlane.f32.xlu0 %v1193
      %v1195 = vpop.xlane.xlu0 %1194
      %v1196 = vmul.f32 %v1195, %v1029
      %v1197 = vsub.f32 %v1187, %v1196
      %v1198 = vmul.f32 %v1197, %v1197
      %v1199 = vsel %vm1192, %v1198, 0.0
      %1200 = vadd.xlane.f32.xlu0 %v1199
      %v1201 = vpop.xlane.xlu0 %1200
      %v1202 = vmul.f32 %v1201, %v1029
      %v1203 = vadd.f32 %v1202, 1e-05
      %v1204 = vrsqrt.pop %v1203
      %v1205 = vmul.f32 %v1197, %v1204
      %v1207 = vlaneseq
      %v1208 = vshrl.u32 %v1207, 7
      %v1209 = vsub.s32 0, %v1208
      %v1210 = vrot.slane %v1021, %v1209
      %v1212 = vmul.f32 %v1205, %v1210
      %v1214 = vlaneseq
      %v1215 = vshrl.u32 %v1214, 7
      %v1216 = vsub.s32 0, %v1215
      %v1217 = vrot.slane %v1022, %v1216
      %v1219 = vadd.f32 %v1212, %v1217
      %1220 = vst [vmem:[#allocation2 + $0x1] sm:$0xf] %v1219
      %s1221 = scalar_lea.vmem %s0, 8
      %v1222 = vld [vmem:[%s1221] sm:$0xff]
      %v1224 = vcombine.high %v1222, %v1222
      %v1226 = vpack.c.bf16 %v1222, %v1222
      %v1227 = vpack.c.bf16 %v1224, %v1224
      %s1228 = scalar_lea.vmem [#allocation2], 8
      %1229 = vst [vmem:[%s1228] sm:$0x1] %v1041
      %v1231 = vsel %vm1148, %v1227, 0
      %1233 = vmatprep.subr.bf16.mxu0 0
      %1234 = vmatpush1.bf16.msra.mxu0 %v1121
      %1235 = vmatprep.subr.bf16.mxu0 0
      %1236 = vmatpush1.bf16.msra.mxu0 %v1122
      %1237 = vmatprep.subr.bf16.mxu0 0
      %1238 = vmatpush1.bf16.msra.mxu0 %v1123
      %1239 = vmatprep.subr.bf16.mxu0 0
      %1240 = vmatpush1.bf16.msra.mxu0 %v1124
      %1241 = vmatprep.subr.bf16.mxu0 0
      %1242 = vmatpush1.bf16.msra.mxu0 %v1125
      %1243 = vmatprep.subr.bf16.mxu0 0
      %1244 = vmatpush1.bf16.msra.mxu0 %v1126
      %1245 = vmatprep.subr.bf16.mxu0 0
      %1246 = vmatpush1.bf16.msra.mxu0 %v1127
      %1247 = vmatprep.subr.bf16.mxu0 0
      %1248 = vmatpush1.bf16.msra.mxu0 %v1128
      %1249 = vmatprep.subr.bf16.mxu0 0
      %1250 = vmatpush1.bf16.msra.mxu0 %v1129
      %1251 = vmatprep.subr.bf16.mxu0 0
      %1252 = vmatpush1.bf16.msra.mxu0 %v1130
      %1253 = vmatprep.subr.bf16.mxu0 0
      %1254 = vmatpush1.bf16.msra.mxu0 %v1131
      %1255 = vmatprep.subr.bf16.mxu0 0
      %1256 = vmatpush1.bf16.msra.mxu0 %v1132
      %1257 = vmatprep.subr.bf16.mxu0 0
      %1258 = vmatpush1.bf16.msra.mxu0 0
      %1259 = vmatprep.subr.bf16.mxu0 0
      %1260 = vmatpush1.bf16.msra.mxu0 0
      %1261 = vmatprep.subr.bf16.mxu0 0
      %1262 = vmatpush1.bf16.msra.mxu0 0
      %1263 = vmatprep.subr.bf16.mxu0 0
      %1264 = vmatpush1.bf16.msra.mxu0 0
      %1265 = vmatprep.mubr.bf16.mxu0 %v1231
      %1266 = vmatmul.mubr.bf16.gmra.mrb[0].mxu0 %v1226
      %v1267 = vpop.f32.mrb[0].mxu0
      %v1268 = vadd.f32 %v1146, %v1267
      %v1269 = vpop.f32.mrb[0].mxu0
      %v1270 = vpop.f32.mrb[0].mxu0
      %v1271 = vpop.f32.mrb[0].mxu0
      %1272 = vdwg.mxu0
      %v1273 = vsel %vm1192, %v1268, 0.0
      %1274 = vadd.xlane.f32.xlu0 %v1273
      %v1275 = vpop.xlane.xlu0 %1274
      %v1276 = vmul.f32 %v1275, %v1029
      %v1277 = vsub.f32 %v1268, %v1276
      %v1278 = vmul.f32 %v1277, %v1277
      %v1279 = vsel %vm1192, %v1278, 0.0
      %1280 = vadd.xlane.f32.xlu0 %v1279
      %v1281 = vpop.xlane.xlu0 %1280
      %v1282 = vmul.f32 %v1281, %v1029
      %v1283 = vadd.f32 %v1282, 1e-05
      %v1284 = vrsqrt.pop %v1283
      %v1285 = vmul.f32 %v1277, %v1284
      %v1286 = vmul.f32 %v1285, %v1210
      %v1287 = vadd.f32 %v1286, %v1217
      %1288 = vst [vmem:[%s1228 + $0x1] sm:$0xf] %v1287
      %v1289 = vld [vmem:[%s952] sm:$0x1]
      %v1290 = vld [vmem:[%s956] sm:$0x1]
      %v1291 = vld [vmem:[%s961] sm:$0xff]
      %v1292 = vld [vmem:[%s961 + $0x8] sm:$0xf]
      %v1293 = vld [vmem:[%s961 + $0xc] sm:$0xff]
      %v1294 = vld [vmem:[%s961 + $0x14] sm:$0xf]
      %v1295 = vld [vmem:[%s961 + $0x18] sm:$0xff]
      %v1296 = vld [vmem:[%s961 + $0x20] sm:$0xf]
      %v1297 = vld [vmem:[%s961 + $0x24] sm:$0xff]
      %v1298 = vld [vmem:[%s961 + $0x2c] sm:$0xf]
      %v1299 = vld [vmem:[%s961 + $0x30] sm:$0xff]
      %v1300 = vld [vmem:[%s961 + $0x38] sm:$0xf]
      %v1301 = vld [vmem:[%s961 + $0x3c] sm:$0xff]
      %v1302 = vld [vmem:[%s961 + $0x44] sm:$0xf]
      %v1303 = vld [vmem:[%s961 + $0x48] sm:$0xff]
      %v1304 = vld [vmem:[%s961 + $0x50] sm:$0xf]
      %v1305 = vld [vmem:[%s961 + $0x54] sm:$0xff]
      %v1306 = vld [vmem:[%s961 + $0x5c] sm:$0xf]
      %v1307 = vld [vmem:[%s961 + $0x60] sm:$0xff]
      %v1308 = vld [vmem:[%s961 + $0x68] sm:$0xf]
      %v1309 = vld [vmem:[%s961 + $0x6c] sm:$0xff]
      %v1310 = vld [vmem:[%s961 + $0x74] sm:$0xf]
      %v1311 = vld [vmem:[%s961 + $0x78] sm:$0xff]
      %v1312 = vld [vmem:[%s961 + $0x80] sm:$0xf]
      %v1313 = vld [vmem:[%s961 + $0x84] sm:$0xff]
      %v1314 = vld [vmem:[%s961 + $0x8c] sm:$0xf]
      %v1315 = vld [vmem:[%s961 + $0x90] sm:$0xff]
      %v1316 = vld [vmem:[%s961 + $0x98] sm:$0xf]
      %v1317 = vld [vmem:[%s961 + $0x9c] sm:$0xff]
      %v1318 = vld [vmem:[%s961 + $0xa4] sm:$0xf]
      %v1319 = vld [vmem:[%s961 + $0xa8] sm:$0xff]
      %v1320 = vld [vmem:[%s961 + $0xb0] sm:$0xf]
      %v1321 = vld [vmem:[%s961 + $0xb4] sm:$0xff]
      %v1322 = vld [vmem:[%s961 + $0xbc] sm:$0xf]
      %v1323 = vld [vmem:[%s965] sm:$0x7]
      %v1324 = vld [vmem:[%s970] sm:$0xf]
      %v1325 = vld [vmem:[%s970 + $0x4] sm:$0xf]
      %v1326 = vld [vmem:[%s970 + $0x8] sm:$0xf]
      %v1327 = vld [vmem:[%s970 + $0xc] sm:$0xf]
      %v1328 = vld [vmem:[%s970 + $0x10] sm:$0xf]
      %v1329 = vld [vmem:[%s970 + $0x14] sm:$0xf]
      %v1330 = vld [vmem:[%s970 + $0x18] sm:$0xf]
      %v1331 = vld [vmem:[%s970 + $0x1c] sm:$0xf]
      %v1332 = vld [vmem:[%s970 + $0x20] sm:$0xf]
      %v1333 = vld [vmem:[%s970 + $0x24] sm:$0xf]
      %v1334 = vld [vmem:[%s970 + $0x28] sm:$0xf]
      %v1335 = vld [vmem:[%s970 + $0x2c] sm:$0xf]
      %v1336 = vld [vmem:[%s970 + $0x30] sm:$0xf]
      %v1337 = vld [vmem:[%s970 + $0x34] sm:$0xf]
      %v1338 = vld [vmem:[%s970 + $0x38] sm:$0xf]
      %v1339 = vld [vmem:[%s970 + $0x3c] sm:$0xf]
      %v1340 = vld [vmem:[%s974] sm:$0x1]
      %v1341 = vld [vmem:[%s978] sm:$0x1]
      %v1342 = vld [vmem:[%s982] sm:$0x1]
      %v1343 = vld [vmem:[%s987] sm:$0xff]
      %v1344 = vld [vmem:[%s987 + $0x8] sm:$0xff]
      %v1345 = vld [vmem:[%s987 + $0x10] sm:$0xff]
      %v1346 = vld [vmem:[%s987 + $0x18] sm:$0xff]
      %v1347 = vld [vmem:[%s987 + $0x20] sm:$0xff]
      %v1348 = vld [vmem:[%s987 + $0x28] sm:$0xff]
      %v1349 = vld [vmem:[%s987 + $0x30] sm:$0xff]
      %v1350 = vld [vmem:[%s987 + $0x38] sm:$0xff]
      %v1351 = vld [vmem:[%s987 + $0x40] sm:$0xff]
      %v1352 = vld [vmem:[%s987 + $0x48] sm:$0xff]
      %v1353 = vld [vmem:[%s987 + $0x50] sm:$0xff]
      %v1354 = vld [vmem:[%s987 + $0x58] sm:$0xff]
      %v1355 = vld [vmem:[%s987 + $0x60] sm:$0xff]
      %v1356 = vld [vmem:[%s987 + $0x68] sm:$0xff]
      %v1357 = vld [vmem:[%s987 + $0x70] sm:$0xff]
      %v1358 = vld [vmem:[%s987 + $0x78] sm:$0xff]
      %v1359 = vld [vmem:[%s987 + $0x80] sm:$0xff]
      %v1360 = vld [vmem:[%s987 + $0x88] sm:$0xff]
      %v1361 = vld [vmem:[%s987 + $0x90] sm:$0xff]
      %v1362 = vld [vmem:[%s987 + $0x98] sm:$0xff]
      %v1363 = vld [vmem:[%s987 + $0xa0] sm:$0xff]
      %v1364 = vld [vmem:[%s987 + $0xa8] sm:$0xff]
      %v1365 = vld [vmem:[%s987 + $0xb0] sm:$0xff]
      %v1366 = vld [vmem:[%s987 + $0xb8] sm:$0xff]
      %v1367 = vld [vmem:[%s987 + $0xc0] sm:$0xff]
      %v1368 = vld [vmem:[%s987 + $0xc8] sm:$0xff]
      %v1369 = vld [vmem:[%s987 + $0xd0] sm:$0xff]
      %v1370 = vld [vmem:[%s987 + $0xd8] sm:$0xff]
      %v1371 = vld [vmem:[%s987 + $0xe0] sm:$0xff]
      %v1372 = vld [vmem:[%s987 + $0xe8] sm:$0xff]
      %v1373 = vld [vmem:[%s987 + $0xf0] sm:$0xff]
      %v1374 = vld [vmem:[%s987 + $0xf8] sm:$0xff]
      %v1375 = vld [vmem:[%s991] sm:$0xf]
      %v1376 = vld [vmem:[%s996] sm:$0xf]
      %v1377 = vld [vmem:[%s996 + $0x4] sm:$0xf]
      %v1378 = vld [vmem:[%s996 + $0x8] sm:$0xf]
      %v1379 = vld [vmem:[%s996 + $0xc] sm:$0xf]
      %v1380 = vld [vmem:[%s996 + $0x10] sm:$0xf]
      %v1381 = vld [vmem:[%s996 + $0x14] sm:$0xf]
      %v1382 = vld [vmem:[%s996 + $0x18] sm:$0xf]
      %v1383 = vld [vmem:[%s996 + $0x1c] sm:$0xf]
      %v1384 = vld [vmem:[%s996 + $0x20] sm:$0xf]
      %v1385 = vld [vmem:[%s996 + $0x24] sm:$0xf]
      %v1386 = vld [vmem:[%s996 + $0x28] sm:$0xf]
      %v1387 = vld [vmem:[%s996 + $0x2c] sm:$0xf]
      %v1388 = vld [vmem:[%s996 + $0x30] sm:$0xf]
      %v1389 = vld [vmem:[%s996 + $0x34] sm:$0xf]
      %v1390 = vld [vmem:[%s996 + $0x38] sm:$0xf]
      %v1391 = vld [vmem:[%s996 + $0x3c] sm:$0xf]
      %v1392 = vld [vmem:[%s996 + $0x40] sm:$0xf]
      %v1393 = vld [vmem:[%s996 + $0x44] sm:$0xf]
      %v1394 = vld [vmem:[%s996 + $0x48] sm:$0xf]
      %v1395 = vld [vmem:[%s996 + $0x4c] sm:$0xf]
      %v1396 = vld [vmem:[%s996 + $0x50] sm:$0xf]
      %v1397 = vld [vmem:[%s996 + $0x54] sm:$0xf]
      %v1398 = vld [vmem:[%s996 + $0x58] sm:$0xf]
      %v1399 = vld [vmem:[%s996 + $0x5c] sm:$0xf]
      %v1400 = vld [vmem:[%s996 + $0x60] sm:$0xf]
      %v1401 = vld [vmem:[%s996 + $0x64] sm:$0xf]
      %v1402 = vld [vmem:[%s996 + $0x68] sm:$0xf]
      %v1403 = vld [vmem:[%s996 + $0x6c] sm:$0xf]
      %v1404 = vld [vmem:[%s996 + $0x70] sm:$0xf]
      %v1405 = vld [vmem:[%s996 + $0x74] sm:$0xf]
      %v1406 = vld [vmem:[%s996 + $0x78] sm:$0xf]
      %v1407 = vld [vmem:[%s996 + $0x7c] sm:$0xf]
      %v1408 = vld [vmem:[%s996 + $0x80] sm:$0xf]
      %v1409 = vld [vmem:[%s996 + $0x84] sm:$0xf]
      %v1410 = vld [vmem:[%s996 + $0x88] sm:$0xf]
      %v1411 = vld [vmem:[%s996 + $0x8c] sm:$0xf]
      %v1412 = vld [vmem:[%s996 + $0x90] sm:$0xf]
      %v1413 = vld [vmem:[%s996 + $0x94] sm:$0xf]
      %v1414 = vld [vmem:[%s996 + $0x98] sm:$0xf]
      %v1415 = vld [vmem:[%s996 + $0x9c] sm:$0xf]
      %v1416 = vld [vmem:[%s996 + $0xa0] sm:$0xf]
      %v1417 = vld [vmem:[%s996 + $0xa4] sm:$0xf]
      %v1418 = vld [vmem:[%s996 + $0xa8] sm:$0xf]
      %v1419 = vld [vmem:[%s996 + $0xac] sm:$0xf]
      %v1420 = vld [vmem:[%s996 + $0xb0] sm:$0xf]
      %v1421 = vld [vmem:[%s996 + $0xb4] sm:$0xf]
      %v1422 = vld [vmem:[%s996 + $0xb8] sm:$0xf]
      %v1423 = vld [vmem:[%s996 + $0xbc] sm:$0xf]
      %v1424 = vld [vmem:[%s996 + $0xc0] sm:$0xf]
      %v1425 = vld [vmem:[%s996 + $0xc4] sm:$0xf]
      %v1426 = vld [vmem:[%s996 + $0xc8] sm:$0xf]
      %v1427 = vld [vmem:[%s996 + $0xcc] sm:$0xf]
      %v1428 = vld [vmem:[%s996 + $0xd0] sm:$0xf]
      %v1429 = vld [vmem:[%s996 + $0xd4] sm:$0xf]
      %v1430 = vld [vmem:[%s996 + $0xd8] sm:$0xf]
      %v1431 = vld [vmem:[%s996 + $0xdc] sm:$0xf]
      %v1432 = vld [vmem:[%s996 + $0xe0] sm:$0xf]
      %v1433 = vld [vmem:[%s996 + $0xe4] sm:$0xf]
      %v1434 = vld [vmem:[%s996 + $0xe8] sm:$0xf]
      %v1435 = vld [vmem:[%s996 + $0xec] sm:$0xf]
      %v1436 = vld [vmem:[%s996 + $0xf0] sm:$0xf]
      %v1437 = vld [vmem:[%s996 + $0xf4] sm:$0xf]
      %v1438 = vld [vmem:[%s996 + $0xf8] sm:$0xf]
      %v1439 = vld [vmem:[%s996 + $0xfc] sm:$0xf]
      %v1440 = vld [vmem:[%s1000] sm:$0x1]
      %v1441 = vld [vmem:[#allocation2] sm:$0x1f]
      %vm1442 = vcmask 1044480
      %v1443 = vsel %vm1442, %v1441, 0.0
      %1444 = vadd.xlane.f32.xlu0 %v1443
      %v1445 = vpop.xlane.xlu0 %1444
      %v1446 = vmul.f32 %v1445, %v1029
      %v1447 = vsub.f32 %v1441, %v1446
      %v1448 = vmul.f32 %v1447, %v1447
      %v1449 = vsel %vm1442, %v1448, 0.0
      %1450 = vadd.xlane.f32.xlu0 %v1449
      %v1451 = vpop.xlane.xlu0 %1450
      %v1452 = vmul.f32 %v1451, %v1029
      %v1453 = vadd.f32 %v1452, 1e-05
      %v1454 = vrsqrt.pop %v1453
      %v1455 = vmul.f32 %v1447, %v1454
      %v1457 = vlaneseq
      %v1458 = vshrl.u32 %v1457, 7
      %v1459 = vsub.s32 0, %v1458
      %v1460 = vrot.slane %v1289, %v1459
      %v1462 = vmul.f32 %v1455, %v1460
      %v1464 = vlaneseq
      %v1465 = vshrl.u32 %v1464, 7
      %v1466 = vsub.s32 0, %v1465
      %v1467 = vrot.slane %v1290, %v1466
      %v1469 = vadd.f32 %v1462, %v1467
      %v1470 = vpack.c.bf16 %v1469, %v1469
      %v1472 = vlaneseq
      %v1473 = vshrl.u32 %v1472, 7
      %v1474 = vsub.s32 0, %v1473
      %v1475 = vrot.slane %v1323, %v1474
      %v1476 = vlaneseq
      %v1477 = vshrl.u32 %v1476, 7
      %v1478 = vsub.s32 1, %v1477
      %v1479 = vrot.slane %v1323, %v1478
      %v1480 = vlaneseq
      %v1481 = vshrl.u32 %v1480, 7
      %v1482 = vsub.s32 2, %v1481
      %v1483 = vrot.slane %v1323, %v1482
      %v1519 = vunpack.c.l.b16 %v1291
      %v1520 = vunpack.c.h.b16 %v1291
      %v1521 = vunpack.c.l.b16 %v1292
      %v1522 = vunpack.c.l.b16 %v1293
      %v1523 = vunpack.c.h.b16 %v1293
      %v1524 = vunpack.c.l.b16 %v1294
      %v1525 = vunpack.c.l.b16 %v1295
      %v1526 = vunpack.c.h.b16 %v1295
      %v1527 = vunpack.c.l.b16 %v1296
      %v1528 = vunpack.c.l.b16 %v1297
      %v1529 = vunpack.c.h.b16 %v1297
      %v1530 = vunpack.c.l.b16 %v1298
      %v1531 = vunpack.c.l.b16 %v1299
      %v1532 = vunpack.c.h.b16 %v1299
      %v1533 = vunpack.c.l.b16 %v1300
      %v1534 = vunpack.c.l.b16 %v1301
      %v1535 = vunpack.c.h.b16 %v1301
      %v1536 = vunpack.c.l.b16 %v1302
      %v1537 = vunpack.c.l.b16 %v1303
      %v1538 = vunpack.c.h.b16 %v1303
      %v1539 = vunpack.c.l.b16 %v1304
      %v1540 = vunpack.c.l.b16 %v1305
      %v1541 = vunpack.c.h.b16 %v1305
      %v1542 = vunpack.c.l.b16 %v1306
      %v1543 = vunpack.c.l.b16 %v1307
      %v1544 = vunpack.c.h.b16 %v1307
      %v1545 = vunpack.c.l.b16 %v1308
      %v1546 = vunpack.c.l.b16 %v1309
      %v1547 = vunpack.c.h.b16 %v1309
      %v1548 = vunpack.c.l.b16 %v1310
      %v1549 = vunpack.c.l.b16 %v1311
      %v1550 = vunpack.c.h.b16 %v1311
      %v1551 = vunpack.c.l.b16 %v1312
      %v1552 = vunpack.c.l.b16 %v1313
      %v1553 = vunpack.c.h.b16 %v1313
      %v1554 = vunpack.c.l.b16 %v1314
      %v1555 = vunpack.c.l.b16 %v1315
      %v1556 = vunpack.c.h.b16 %v1315
      %v1557 = vunpack.c.l.b16 %v1316
      %v1558 = vunpack.c.l.b16 %v1317
      %v1559 = vunpack.c.h.b16 %v1317
      %v1560 = vunpack.c.l.b16 %v1318
      %v1561 = vunpack.c.l.b16 %v1319
      %v1562 = vunpack.c.h.b16 %v1319
      %v1563 = vunpack.c.l.b16 %v1320
      %v1564 = vunpack.c.l.b16 %v1321
      %v1565 = vunpack.c.h.b16 %v1321
      %v1566 = vunpack.c.l.b16 %v1322
      %v1567 = vpack.c.b16 %v1522, %v1519
      %v1568 = vpack.c.b16 %v1523, %v1520
      %v1569 = vpack.c.b16 %v1524, %v1521
      %v1570 = vpack.c.b16 %v1528, %v1525
      %v1571 = vpack.c.b16 %v1529, %v1526
      %v1572 = vpack.c.b16 %v1530, %v1527
      %v1573 = vpack.c.b16 %v1534, %v1531
      %v1574 = vpack.c.b16 %v1535, %v1532
      %v1575 = vpack.c.b16 %v1536, %v1533
      %v1576 = vpack.c.b16 %v1540, %v1537
      %v1577 = vpack.c.b16 %v1541, %v1538
      %v1578 = vpack.c.b16 %v1542, %v1539
      %v1579 = vpack.c.b16 %v1546, %v1543
      %v1580 = vpack.c.b16 %v1547, %v1544
      %v1581 = vpack.c.b16 %v1548, %v1545
      %v1582 = vpack.c.b16 %v1552, %v1549
      %v1583 = vpack.c.b16 %v1553, %v1550
      %v1584 = vpack.c.b16 %v1554, %v1551
      %v1585 = vpack.c.b16 %v1558, %v1555
      %v1586 = vpack.c.b16 %v1559, %v1556
      %v1587 = vpack.c.b16 %v1560, %v1557
      %v1588 = vpack.c.b16 %v1564, %v1561
      %v1589 = vpack.c.b16 %v1565, %v1562
      %v1590 = vpack.c.b16 %v1566, %v1563
      %1615 = vmatprep.subr.bf16.mxu0 %v1568
      %1616 = vmatpush1.bf16.msra.mxu0 %v1567
      %1617 = vmatprep.subr.bf16.mxu0 %v1571
      %1618 = vmatpush1.bf16.msra.mxu0 %v1570
      %1619 = vmatprep.subr.bf16.mxu0 %v1574
      %1620 = vmatpush1.bf16.msra.mxu0 %v1573
      %1621 = vmatprep.subr.bf16.mxu0 %v1577
      %1622 = vmatpush1.bf16.msra.mxu0 %v1576
      %1623 = vmatprep.subr.bf16.mxu0 %v1580
      %1624 = vmatpush1.bf16.msra.mxu0 %v1579
      %1625 = vmatprep.subr.bf16.mxu0 %v1583
      %1626 = vmatpush1.bf16.msra.mxu0 %v1582
      %1627 = vmatprep.subr.bf16.mxu0 %v1586
      %1628 = vmatpush1.bf16.msra.mxu0 %v1585
      %1629 = vmatprep.subr.bf16.mxu0 %v1589
      %1630 = vmatpush1.bf16.msra.mxu0 %v1588
      %1631 = vmatprep.subr.bf16.mxu0 0
      %1632 = vmatpush1.bf16.msra.mxu0 0
      %1633 = vmatprep.subr.bf16.mxu0 0
      %1634 = vmatpush1.bf16.msra.mxu0 0
      %1635 = vmatprep.subr.bf16.mxu0 0
      %1636 = vmatpush1.bf16.msra.mxu0 0
      %1637 = vmatprep.subr.bf16.mxu0 0
      %1638 = vmatpush1.bf16.msra.mxu0 0
      %1639 = vmatprep.subr.bf16.mxu0 0
      %1640 = vmatpush1.bf16.msra.mxu0 0
      %1641 = vmatprep.subr.bf16.mxu0 0
      %1642 = vmatpush1.bf16.msra.mxu0 0
      %1643 = vmatprep.subr.bf16.mxu0 0
      %1644 = vmatpush1.bf16.msra.mxu0 0
      %1645 = vmatprep.subr.bf16.mxu0 0
      %1646 = vmatpush1.bf16.msra.mxu0 0
      %1647 = vmatprep.mubr.bf16.mxu0 0
      %1648 = vmatmul.mubr.bf16.gmra.mrb[0].mxu0 %v1470
      %v1649 = vpop.f32.mrb[0].mxu0
      %v1650 = vadd.f32 %v1475, %v1649
      %v1651 = vpop.f32.mrb[0].mxu0
      %v1652 = vadd.f32 %v1479, %v1651
      %v1653 = vpop.f32.mrb[0].mxu0
      %v1654 = vpop.f32.mrb[0].mxu0
      %1655 = vdwg.mxu0
      %1656 = vmatprep.subr.bf16.mxu0 0
      %1657 = vmatpush1.bf16.msra.mxu0 %v1569
      %1658 = vmatprep.subr.bf16.mxu0 0
      %1659 = vmatpush1.bf16.msra.mxu0 %v1572
      %1660 = vmatprep.subr.bf16.mxu0 0
      %1661 = vmatpush1.bf16.msra.mxu0 %v1575
      %1662 = vmatprep.subr.bf16.mxu0 0
      %1663 = vmatpush1.bf16.msra.mxu0 %v1578
      %1664 = vmatprep.subr.bf16.mxu0 0
      %1665 = vmatpush1.bf16.msra.mxu0 %v1581
      %1666 = vmatprep.subr.bf16.mxu0 0
      %1667 = vmatpush1.bf16.msra.mxu0 %v1584
      %1668 = vmatprep.subr.bf16.mxu0 0
      %1669 = vmatpush1.bf16.msra.mxu0 %v1587
      %1670 = vmatprep.subr.bf16.mxu0 0
      %1671 = vmatpush1.bf16.msra.mxu0 %v1590
      %1672 = vmatprep.subr.bf16.mxu0 0
      %1673 = vmatpush1.bf16.msra.mxu0 0
      %1674 = vmatprep.subr.bf16.mxu0 0
      %1675 = vmatpush1.bf16.msra.mxu0 0
      %1676 = vmatprep.subr.bf16.mxu0 0
      %1677 = vmatpush1.bf16.msra.mxu0 0
      %1678 = vmatprep.subr.bf16.mxu0 0
      %1679 = vmatpush1.bf16.msra.mxu0 0
      %1680 = vmatprep.subr.bf16.mxu0 0
      %1681 = vmatpush1.bf16.msra.mxu0 0
      %1682 = vmatprep.subr.bf16.mxu0 0
      %1683 = vmatpush1.bf16.msra.mxu0 0
      %1684 = vmatprep.subr.bf16.mxu0 0
      %1685 = vmatpush1.bf16.msra.mxu0 0
      %1686 = vmatprep.subr.bf16.mxu0 0
      %1687 = vmatpush1.bf16.msra.mxu0 0
      %1688 = vmatprep.mubr.bf16.mxu0 0
      %1689 = vmatmul.mubr.bf16.gmra.mrb[0].mxu0 %v1470
      %v1690 = vpop.f32.mrb[0].mxu0
      %v1691 = vadd.f32 %v1483, %v1690
      %v1692 = vpop.f32.mrb[0].mxu0
      %v1693 = vpop.f32.mrb[0].mxu0
      %v1694 = vpop.f32.mrb[0].mxu0
      %1695 = vdwg.mxu0
      %v1696 = vpack.c.bf16 %v1650, %v1650
      %v1697 = vpack.c.bf16 %v1652, %v1652
      %v1698 = vpack.c.bf16 %v1691, %v1691
      %vm1699 = vcmask 261120
      %v1701 = vsel %vm1699, %v1696, 0
      %v1704 = vsel %vm1699, %v1697, 0
      %1706 = vmatprep.subr.bf16.mxu0 0
      %1707 = vmatpush1.bf16.xpose.msra.mxu0 %v1704
      %1708 = vmatprep.subr.bf16.mxu0 0
      %1709 = vmatpush1.bf16.xpose.msra.mxu0 0
      %1710 = vmatprep.subr.bf16.mxu0 0
      %1711 = vmatpush1.bf16.xpose.msra.mxu0 0
      %1712 = vmatprep.subr.bf16.mxu0 0
      %1713 = vmatpush1.bf16.xpose.msra.mxu0 0
      %1714 = vmatprep.subr.bf16.mxu0 0
      %1715 = vmatpush1.bf16.xpose.msra.mxu0 0
      %1716 = vmatprep.subr.bf16.mxu0 0
      %1717 = vmatpush1.bf16.xpose.msra.mxu0 0
      %1718 = vmatprep.subr.bf16.mxu0 0
      %1719 = vmatpush1.bf16.xpose.msra.mxu0 0
      %1720 = vmatprep.subr.bf16.mxu0 0
      %1721 = vmatpush1.bf16.xpose.msra.mxu0 0
      %1722 = vmatprep.subr.bf16.mxu0 0
      %1723 = vmatpush1.bf16.xpose.msra.mxu0 0
      %1724 = vmatprep.subr.bf16.mxu0 0
      %1725 = vmatpush1.bf16.xpose.msra.mxu0 0
      %1726 = vmatprep.subr.bf16.mxu0 0
      %1727 = vmatpush1.bf16.xpose.msra.mxu0 0
      %1728 = vmatprep.subr.bf16.mxu0 0
      %1729 = vmatpush1.bf16.xpose.msra.mxu0 0
      %1730 = vmatprep.subr.bf16.mxu0 0
      %1731 = vmatpush1.bf16.xpose.msra.mxu0 0
      %1732 = vmatprep.subr.bf16.mxu0 0
      %1733 = vmatpush1.bf16.xpose.msra.mxu0 0
      %1734 = vmatprep.subr.bf16.mxu0 0
      %1735 = vmatpush1.bf16.xpose.msra.mxu0 0
      %1736 = vmatprep.subr.bf16.mxu0 0
      %1737 = vmatpush1.bf16.xpose.msra.mxu0 0
      %1738 = vmatprep.mubr.bf16.mxu0 0
      %1739 = vmatmul.mubr.bf16.gmra.mrb[0].mxu0 %v1701
      %v1740 = vpop.f32.mrb[0].mxu0
      %v1741 = vadd.f32 0.0, %v1740
      %v1742 = vpop.f32.mrb[0].mxu0
      %v1743 = vpop.f32.mrb[0].mxu0
      %v1744 = vpop.f32.mrb[0].mxu0
      %1745 = vdwg.mxu0
      %v1746 = vmul.f32 %v1741, 0.17677669
      %vm1747 = vcmask 36864
      %v1748 = vsel %vm1747, %v1746, -inf
      %1749 = vmax.xlane.f32.xlu0 %v1748
      %v1750 = vpop.xlane.xlu0 %1749
      %v1751 = vsub.f32 %v1746, %v1750
      %v1752 = vmul.f32 %v1751, 1.442695
      %v1753 = vpow.pop %v1752
      %v1754 = vsel %vm1747, %v1753, 0.0
      %1755 = vadd.xlane.f32.xlu0 %v1754
      %v1756 = vpop.xlane.xlu0 %1755
      %v1757 = vrcp.pop %v1756
      %v1758 = vmul.f32 %v1753, %v1757
      %v1759 = vpack.c.bf16 %v1758, %v1758
      %vm1760 = vcmask 39936
      %v1762 = vsel %vm1760, %v1759, 0
      %vm1764 = vcmask 1041408
      %vm1765 = vcmask 1042432
      %v1766 = vsel %vm1764, 4294967295, 65535
      %v1767 = vsel %vm1765, %v1766, 0
      %v1769 = vand.u32 %v1698, %v1767
      %1771 = vmatprep.subr.bf16.mxu0 0
      %1772 = vmatpush1.bf16.msra.mxu0 %v1769
      %1773 = vmatprep.subr.bf16.mxu0 0
      %1774 = vmatpush1.bf16.msra.mxu0 0
      %1775 = vmatprep.subr.bf16.mxu0 0
      %1776 = vmatpush1.bf16.msra.mxu0 0
      %1777 = vmatprep.subr.bf16.mxu0 0
      %1778 = vmatpush1.bf16.msra.mxu0 0
      %1779 = vmatprep.subr.bf16.mxu0 0
      %1780 = vmatpush1.bf16.msra.mxu0 0
      %1781 = vmatprep.subr.bf16.mxu0 0
      %1782 = vmatpush1.bf16.msra.mxu0 0
      %1783 = vmatprep.subr.bf16.mxu0 0
      %1784 = vmatpush1.bf16.msra.mxu0 0
      %1785 = vmatprep.subr.bf16.mxu0 0
      %1786 = vmatpush1.bf16.msra.mxu0 0
      %1787 = vmatprep.subr.bf16.mxu0 0
      %1788 = vmatpush1.bf16.msra.mxu0 0
      %1789 = vmatprep.subr.bf16.mxu0 0
      %1790 = vmatpush1.bf16.msra.mxu0 0
      %1791 = vmatprep.subr.bf16.mxu0 0
      %1792 = vmatpush1.bf16.msra.mxu0 0
      %1793 = vmatprep.subr.bf16.mxu0 0
      %1794 = vmatpush1.bf16.msra.mxu0 0
      %1795 = vmatprep.subr.bf16.mxu0 0
      %1796 = vmatpush1.bf16.msra.mxu0 0
      %1797 = vmatprep.subr.bf16.mxu0 0
      %1798 = vmatpush1.bf16.msra.mxu0 0
      %1799 = vmatprep.subr.bf16.mxu0 0
      %1800 = vmatpush1.bf16.msra.mxu0 0
      %1801 = vmatprep.subr.bf16.mxu0 0
      %1802 = vmatpush1.bf16.msra.mxu0 0
      %1803 = vmatprep.mubr.bf16.mxu0 0
      %1804 = vmatmul.mubr.bf16.gmra.mrb[0].mxu0 %v1762
      %v1805 = vpop.f32.mrb[0].mxu0
      %v1806 = vadd.f32 0.0, %v1805
      %v1807 = vpop.f32.mrb[0].mxu0
      %v1808 = vpop.f32.mrb[0].mxu0
      %v1809 = vpop.f32.mrb[0].mxu0
      %1810 = vdwg.mxu0
      %v1811 = vpack.c.bf16 %v1806, %v1806
      %1813 = vrot.lane.b32.xlu0 %v1696, 96
      %v1814 = vpop.permute.xlu0 %1813
      %1816 = vrot.lane.b32.xlu0 %v1697, 96
      %v1817 = vpop.permute.xlu0 %1816
      %v1819 = vsel %vm1699, %v1814, 0
      %v1822 = vsel %vm1699, %v1817, 0
      %1824 = vmatprep.subr.bf16.mxu0 0
      %1825 = vmatpush1.bf16.xpose.msra.mxu0 %v1822
      %1826 = vmatprep.subr.bf16.mxu0 0
      %1827 = vmatpush1.bf16.xpose.msra.mxu0 0
      %1828 = vmatprep.subr.bf16.mxu0 0
      %1829 = vmatpush1.bf16.xpose.msra.mxu0 0
      %1830 = vmatprep.subr.bf16.mxu0 0
      %1831 = vmatpush1.bf16.xpose.msra.mxu0 0
      %1832 = vmatprep.subr.bf16.mxu0 0
      %1833 = vmatpush1.bf16.xpose.msra.mxu0 0
      %1834 = vmatprep.subr.bf16.mxu0 0
      %1835 = vmatpush1.bf16.xpose.msra.mxu0 0
      %1836 = vmatprep.subr.bf16.mxu0 0
      %1837 = vmatpush1.bf16.xpose.msra.mxu0 0
      %1838 = vmatprep.subr.bf16.mxu0 0
      %1839 = vmatpush1.bf16.xpose.msra.mxu0 0
      %1840 = vmatprep.subr.bf16.mxu0 0
      %1841 = vmatpush1.bf16.xpose.msra.mxu0 0
      %1842 = vmatprep.subr.bf16.mxu0 0
      %1843 = vmatpush1.bf16.xpose.msra.mxu0 0
      %1844 = vmatprep.subr.bf16.mxu0 0
      %1845 = vmatpush1.bf16.xpose.msra.mxu0 0
      %1846 = vmatprep.subr.bf16.mxu0 0
      %1847 = vmatpush1.bf16.xpose.msra.mxu0 0
      %1848 = vmatprep.subr.bf16.mxu0 0
      %1849 = vmatpush1.bf16.xpose.msra.mxu0 0
      %1850 = vmatprep.subr.bf16.mxu0 0
      %1851 = vmatpush1.bf16.xpose.msra.mxu0 0
      %1852 = vmatprep.subr.bf16.mxu0 0
      %1853 = vmatpush1.bf16.xpose.msra.mxu0 0
      %1854 = vmatprep.subr.bf16.mxu0 0
      %1855 = vmatpush1.bf16.xpose.msra.mxu0 0
      %1856 = vmatprep.mubr.bf16.mxu0 0
      %1857 = vmatmul.mubr.bf16.gmra.mrb[0].mxu0 %v1819
      %v1858 = vpop.f32.mrb[0].mxu0
      %v1859 = vadd.f32 0.0, %v1858
      %v1860 = vpop.f32.mrb[0].mxu0
      %v1861 = vpop.f32.mrb[0].mxu0
      %v1862 = vpop.f32.mrb[0].mxu0
      %1863 = vdwg.mxu0
      %v1864 = vmul.f32 %v1859, 0.17677669
      %v1865 = vsel %vm1747, %v1864, -inf
      %1866 = vmax.xlane.f32.xlu0 %v1865
      %v1867 = vpop.xlane.xlu0 %1866
      %v1868 = vsub.f32 %v1864, %v1867
      %v1869 = vmul.f32 %v1868, 1.442695
      %v1870 = vpow.pop %v1869
      %v1871 = vsel %vm1747, %v1870, 0.0
      %1872 = vadd.xlane.f32.xlu0 %v1871
      %v1873 = vpop.xlane.xlu0 %1872
      %v1874 = vrcp.pop %v1873
      %v1875 = vmul.f32 %v1870, %v1874
      %v1876 = vpack.c.bf16 %v1875, %v1875
      %1878 = vrot.lane.b32.xlu0 %v1698, 96
      %v1879 = vpop.permute.xlu0 %1878
      %v1881 = vsel %vm1760, %v1876, 0
      %v1884 = vand.u32 %v1879, %v1767
      %1886 = vmatprep.subr.bf16.mxu0 0
      %1887 = vmatpush1.bf16.msra.mxu0 %v1884
      %1888 = vmatprep.subr.bf16.mxu0 0
      %1889 = vmatpush1.bf16.msra.mxu0 0
      %1890 = vmatprep.subr.bf16.mxu0 0
      %1891 = vmatpush1.bf16.msra.mxu0 0
      %1892 = vmatprep.subr.bf16.mxu0 0
      %1893 = vmatpush1.bf16.msra.mxu0 0
      %1894 = vmatprep.subr.bf16.mxu0 0
      %1895 = vmatpush1.bf16.msra.mxu0 0
      %1896 = vmatprep.subr.bf16.mxu0 0
      %1897 = vmatpush1.bf16.msra.mxu0 0
      %1898 = vmatprep.subr.bf16.mxu0 0
      %1899 = vmatpush1.bf16.msra.mxu0 0
      %1900 = vmatprep.subr.bf16.mxu0 0
      %1901 = vmatpush1.bf16.msra.mxu0 0
      %1902 = vmatprep.subr.bf16.mxu0 0
      %1903 = vmatpush1.bf16.msra.mxu0 0
      %1904 = vmatprep.subr.bf16.mxu0 0
      %1905 = vmatpush1.bf16.msra.mxu0 0
      %1906 = vmatprep.subr.bf16.mxu0 0
      %1907 = vmatpush1.bf16.msra.mxu0 0
      %1908 = vmatprep.subr.bf16.mxu0 0
      %1909 = vmatpush1.bf16.msra.mxu0 0
      %1910 = vmatprep.subr.bf16.mxu0 0
      %1911 = vmatpush1.bf16.msra.mxu0 0
      %1912 = vmatprep.subr.bf16.mxu0 0
      %1913 = vmatpush1.bf16.msra.mxu0 0
      %1914 = vmatprep.subr.bf16.mxu0 0
      %1915 = vmatpush1.bf16.msra.mxu0 0
      %1916 = vmatprep.subr.bf16.mxu0 0
      %1917 = vmatpush1.bf16.msra.mxu0 0
      %1918 = vmatprep.mubr.bf16.mxu0 0
      %1919 = vmatmul.mubr.bf16.gmra.mrb[0].mxu0 %v1881
      %v1920 = vpop.f32.mrb[0].mxu0
      %v1921 = vadd.f32 0.0, %v1920
      %v1922 = vpop.f32.mrb[0].mxu0
      %v1923 = vpop.f32.mrb[0].mxu0
      %v1924 = vpop.f32.mrb[0].mxu0
      %1925 = vdwg.mxu0
      %v1926 = vpack.c.bf16 %v1921, %v1921
      %v1931 = vunpack.c.l.b16 %v1328
      %v1932 = vunpack.c.l.b16 %v1329
      %v1933 = vunpack.c.l.b16 %v1330
      %v1934 = vunpack.c.l.b16 %v1331
      %v1935 = vpack.c.b16 %v1932, %v1931
      %v1936 = vpack.c.b16 %v1934, %v1933
      %v1940 = vsel %vm1699, %v1926, 0
      %1942 = vmatprep.subr.bf16.mxu0 0
      %1943 = vmatpush1.bf16.msra.mxu0 %v1935
      %1944 = vmatprep.subr.bf16.mxu0 0
      %1945 = vmatpush1.bf16.msra.mxu0 %v1936
      %1946 = vmatprep.subr.bf16.mxu0 0
      %1947 = vmatpush1.bf16.msra.mxu0 0
      %1948 = vmatprep.subr.bf16.mxu0 0
      %1949 = vmatpush1.bf16.msra.mxu0 0
      %1950 = vmatprep.subr.bf16.mxu0 0
      %1951 = vmatpush1.bf16.msra.mxu0 0
      %1952 = vmatprep.subr.bf16.mxu0 0
      %1953 = vmatpush1.bf16.msra.mxu0 0
      %1954 = vmatprep.subr.bf16.mxu0 0
      %1955 = vmatpush1.bf16.msra.mxu0 0
      %1956 = vmatprep.subr.bf16.mxu0 0
      %1957 = vmatpush1.bf16.msra.mxu0 0
      %1958 = vmatprep.subr.bf16.mxu0 0
      %1959 = vmatpush1.bf16.msra.mxu0 0
      %1960 = vmatprep.subr.bf16.mxu0 0
      %1961 = vmatpush1.bf16.msra.mxu0 0
      %1962 = vmatprep.subr.bf16.mxu0 0
      %1963 = vmatpush1.bf16.msra.mxu0 0
      %1964 = vmatprep.subr.bf16.mxu0 0
      %1965 = vmatpush1.bf16.msra.mxu0 0
      %1966 = vmatprep.subr.bf16.mxu0 0
      %1967 = vmatpush1.bf16.msra.mxu0 0
      %1968 = vmatprep.subr.bf16.mxu0 0
      %1969 = vmatpush1.bf16.msra.mxu0 0
      %1970 = vmatprep.subr.bf16.mxu0 0
      %1971 = vmatpush1.bf16.msra.mxu0 0
      %1972 = vmatprep.subr.bf16.mxu0 0
      %1973 = vmatpush1.bf16.msra.mxu0 0
      %1974 = vmatprep.mubr.bf16.mxu0 0
      %1975 = vmatmul.mubr.bf16.gmra.mrb[0].mxu0 %v1940
      %v1976 = vpop.f32.mrb[0].mxu0
      %v1977 = vadd.f32 0.0, %v1976
      %v1978 = vpop.f32.mrb[0].mxu0
      %v1979 = vpop.f32.mrb[0].mxu0
      %v1980 = vpop.f32.mrb[0].mxu0
      %1981 = vdwg.mxu0
      %v1986 = vunpack.c.l.b16 %v1324
      %v1987 = vunpack.c.l.b16 %v1325
      %v1988 = vunpack.c.l.b16 %v1326
      %v1989 = vunpack.c.l.b16 %v1327
      %v1990 = vpack.c.b16 %v1987, %v1986
      %v1991 = vpack.c.b16 %v1989, %v1988
      %v1995 = vsel %vm1699, %v1811, 0
      %1997 = vmatprep.subr.bf16.mxu0 0
      %1998 = vmatpush1.bf16.msra.mxu0 %v1990
      %1999 = vmatprep.subr.bf16.mxu0 0
      %2000 = vmatpush1.bf16.msra.mxu0 %v1991
      %2001 = vmatprep.subr.bf16.mxu0 0
      %2002 = vmatpush1.bf16.msra.mxu0 0
      %2003 = vmatprep.subr.bf16.mxu0 0
      %2004 = vmatpush1.bf16.msra.mxu0 0
      %2005 = vmatprep.subr.bf16.mxu0 0
      %2006 = vmatpush1.bf16.msra.mxu0 0
      %2007 = vmatprep.subr.bf16.mxu0 0
      %2008 = vmatpush1.bf16.msra.mxu0 0
      %2009 = vmatprep.subr.bf16.mxu0 0
      %2010 = vmatpush1.bf16.msra.mxu0 0
      %2011 = vmatprep.subr.bf16.mxu0 0
      %2012 = vmatpush1.bf16.msra.mxu0 0
      %2013 = vmatprep.subr.bf16.mxu0 0
      %2014 = vmatpush1.bf16.msra.mxu0 0
      %2015 = vmatprep.subr.bf16.mxu0 0
      %2016 = vmatpush1.bf16.msra.mxu0 0
      %2017 = vmatprep.subr.bf16.mxu0 0
      %2018 = vmatpush1.bf16.msra.mxu0 0
      %2019 = vmatprep.subr.bf16.mxu0 0
      %2020 = vmatpush1.bf16.msra.mxu0 0
      %2021 = vmatprep.subr.bf16.mxu0 0
      %2022 = vmatpush1.bf16.msra.mxu0 0
      %2023 = vmatprep.subr.bf16.mxu0 0
      %2024 = vmatpush1.bf16.msra.mxu0 0
      %2025 = vmatprep.subr.bf16.mxu0 0
      %2026 = vmatpush1.bf16.msra.mxu0 0
      %2027 = vmatprep.subr.bf16.mxu0 0
      %2028 = vmatpush1.bf16.msra.mxu0 0
      %2029 = vmatprep.mubr.bf16.mxu0 0
      %2030 = vmatmul.mubr.bf16.gmra.mrb[0].mxu0 %v1995
      %v2031 = vpop.f32.mrb[0].mxu0
      %v2032 = vadd.f32 %v1977, %v2031
      %v2033 = vpop.f32.mrb[0].mxu0
      %v2034 = vpop.f32.mrb[0].mxu0
      %v2035 = vpop.f32.mrb[0].mxu0
      %2036 = vdwg.mxu0
      %2037 = vrot.lane.b32.xlu0 %v1696, 64
      %v2038 = vpop.permute.xlu0 %2037
      %2039 = vrot.lane.b32.xlu0 %v1697, 64
      %v2040 = vpop.permute.xlu0 %2039
      %v2042 = vsel %vm1699, %v2038, 0
      %v2045 = vsel %vm1699, %v2040, 0
      %2047 = vmatprep.subr.bf16.mxu0 0
      %2048 = vmatpush1.bf16.xpose.msra.mxu0 %v2045
      %2049 = vmatprep.subr.bf16.mxu0 0
      %2050 = vmatpush1.bf16.xpose.msra.mxu0 0
      %2051 = vmatprep.subr.bf16.mxu0 0
      %2052 = vmatpush1.bf16.xpose.msra.mxu0 0
      %2053 = vmatprep.subr.bf16.mxu0 0
      %2054 = vmatpush1.bf16.xpose.msra.mxu0 0
      %2055 = vmatprep.subr.bf16.mxu0 0
      %2056 = vmatpush1.bf16.xpose.msra.mxu0 0
      %2057 = vmatprep.subr.bf16.mxu0 0
      %2058 = vmatpush1.bf16.xpose.msra.mxu0 0
      %2059 = vmatprep.subr.bf16.mxu0 0
      %2060 = vmatpush1.bf16.xpose.msra.mxu0 0
      %2061 = vmatprep.subr.bf16.mxu0 0
      %2062 = vmatpush1.bf16.xpose.msra.mxu0 0
      %2063 = vmatprep.subr.bf16.mxu0 0
      %2064 = vmatpush1.bf16.xpose.msra.mxu0 0
      %2065 = vmatprep.subr.bf16.mxu0 0
      %2066 = vmatpush1.bf16.xpose.msra.mxu0 0
      %2067 = vmatprep.subr.bf16.mxu0 0
      %2068 = vmatpush1.bf16.xpose.msra.mxu0 0
      %2069 = vmatprep.subr.bf16.mxu0 0
      %2070 = vmatpush1.bf16.xpose.msra.mxu0 0
      %2071 = vmatprep.subr.bf16.mxu0 0
      %2072 = vmatpush1.bf16.xpose.msra.mxu0 0
      %2073 = vmatprep.subr.bf16.mxu0 0
      %2074 = vmatpush1.bf16.xpose.msra.mxu0 0
      %2075 = vmatprep.subr.bf16.mxu0 0
      %2076 = vmatpush1.bf16.xpose.msra.mxu0 0
      %2077 = vmatprep.subr.bf16.mxu0 0
      %2078 = vmatpush1.bf16.xpose.msra.mxu0 0
      %2079 = vmatprep.mubr.bf16.mxu0 0
      %2080 = vmatmul.mubr.bf16.gmra.mrb[0].mxu0 %v2042
      %v2081 = vpop.f32.mrb[0].mxu0
      %v2082 = vadd.f32 0.0, %v2081
      %v2083 = vpop.f32.mrb[0].mxu0
      %v2084 = vpop.f32.mrb[0].mxu0
      %v2085 = vpop.f32.mrb[0].mxu0
      %2086 = vdwg.mxu0
      %v2087 = vmul.f32 %v2082, 0.17677669
      %v2088 = vsel %vm1747, %v2087, -inf
      %2089 = vmax.xlane.f32.xlu0 %v2088
      %v2090 = vpop.xlane.xlu0 %2089
      %v2091 = vsub.f32 %v2087, %v2090
      %v2092 = vmul.f32 %v2091, 1.442695
      %v2093 = vpow.pop %v2092
      %v2094 = vsel %vm1747, %v2093, 0.0
      %2095 = vadd.xlane.f32.xlu0 %v2094
      %v2096 = vpop.xlane.xlu0 %2095
      %v2097 = vrcp.pop %v2096
      %v2098 = vmul.f32 %v2093, %v2097
      %v2099 = vpack.c.bf16 %v2098, %v2098
      %2100 = vrot.lane.b32.xlu0 %v1698, 64
      %v2101 = vpop.permute.xlu0 %2100
      %v2103 = vsel %vm1760, %v2099, 0
      %v2106 = vand.u32 %v2101, %v1767
      %2108 = vmatprep.subr.bf16.mxu0 0
      %2109 = vmatpush1.bf16.msra.mxu0 %v2106
      %2110 = vmatprep.subr.bf16.mxu0 0
      %2111 = vmatpush1.bf16.msra.mxu0 0
      %2112 = vmatprep.subr.bf16.mxu0 0
      %2113 = vmatpush1.bf16.msra.mxu0 0
      %2114 = vmatprep.subr.bf16.mxu0 0
      %2115 = vmatpush1.bf16.msra.mxu0 0
      %2116 = vmatprep.subr.bf16.mxu0 0
      %2117 = vmatpush1.bf16.msra.mxu0 0
      %2118 = vmatprep.subr.bf16.mxu0 0
      %2119 = vmatpush1.bf16.msra.mxu0 0
      %2120 = vmatprep.subr.bf16.mxu0 0
      %2121 = vmatpush1.bf16.msra.mxu0 0
      %2122 = vmatprep.subr.bf16.mxu0 0
      %2123 = vmatpush1.bf16.msra.mxu0 0
      %2124 = vmatprep.subr.bf16.mxu0 0
      %2125 = vmatpush1.bf16.msra.mxu0 0
      %2126 = vmatprep.subr.bf16.mxu0 0
      %2127 = vmatpush1.bf16.msra.mxu0 0
      %2128 = vmatprep.subr.bf16.mxu0 0
      %2129 = vmatpush1.bf16.msra.mxu0 0
      %2130 = vmatprep.subr.bf16.mxu0 0
      %2131 = vmatpush1.bf16.msra.mxu0 0
      %2132 = vmatprep.subr.bf16.mxu0 0
      %2133 = vmatpush1.bf16.msra.mxu0 0
      %2134 = vmatprep.subr.bf16.mxu0 0
      %2135 = vmatpush1.bf16.msra.mxu0 0
      %2136 = vmatprep.subr.bf16.mxu0 0
      %2137 = vmatpush1.bf16.msra.mxu0 0
      %2138 = vmatprep.subr.bf16.mxu0 0
      %2139 = vmatpush1.bf16.msra.mxu0 0
      %2140 = vmatprep.mubr.bf16.mxu0 0
      %2141 = vmatmul.mubr.bf16.gmra.mrb[0].mxu0 %v2103
      %v2142 = vpop.f32.mrb[0].mxu0
      %v2143 = vadd.f32 0.0, %v2142
      %v2144 = vpop.f32.mrb[0].mxu0
      %v2145 = vpop.f32.mrb[0].mxu0
      %v2146 = vpop.f32.mrb[0].mxu0
      %2147 = vdwg.mxu0
      %v2148 = vpack.c.bf16 %v2143, %v2143
      %v2153 = vunpack.c.l.b16 %v1332
      %v2154 = vunpack.c.l.b16 %v1333
      %v2155 = vunpack.c.l.b16 %v1334
      %v2156 = vunpack.c.l.b16 %v1335
      %v2157 = vpack.c.b16 %v2154, %v2153
      %v2158 = vpack.c.b16 %v2156, %v2155
      %v2162 = vsel %vm1699, %v2148, 0
      %2164 = vmatprep.subr.bf16.mxu0 0
      %2165 = vmatpush1.bf16.msra.mxu0 %v2157
      %2166 = vmatprep.subr.bf16.mxu0 0
      %2167 = vmatpush1.bf16.msra.mxu0 %v2158
      %2168 = vmatprep.subr.bf16.mxu0 0
      %2169 = vmatpush1.bf16.msra.mxu0 0
      %2170 = vmatprep.subr.bf16.mxu0 0
      %2171 = vmatpush1.bf16.msra.mxu0 0
      %2172 = vmatprep.subr.bf16.mxu0 0
      %2173 = vmatpush1.bf16.msra.mxu0 0
      %2174 = vmatprep.subr.bf16.mxu0 0
      %2175 = vmatpush1.bf16.msra.mxu0 0
      %2176 = vmatprep.subr.bf16.mxu0 0
      %2177 = vmatpush1.bf16.msra.mxu0 0
      %2178 = vmatprep.subr.bf16.mxu0 0
      %2179 = vmatpush1.bf16.msra.mxu0 0
      %2180 = vmatprep.subr.bf16.mxu0 0
      %2181 = vmatpush1.bf16.msra.mxu0 0
      %2182 = vmatprep.subr.bf16.mxu0 0
      %2183 = vmatpush1.bf16.msra.mxu0 0
      %2184 = vmatprep.subr.bf16.mxu0 0
      %2185 = vmatpush1.bf16.msra.mxu0 0
      %2186 = vmatprep.subr.bf16.mxu0 0
      %2187 = vmatpush1.bf16.msra.mxu0 0
      %2188 = vmatprep.subr.bf16.mxu0 0
      %2189 = vmatpush1.bf16.msra.mxu0 0
      %2190 = vmatprep.subr.bf16.mxu0 0
      %2191 = vmatpush1.bf16.msra.mxu0 0
      %2192 = vmatprep.subr.bf16.mxu0 0
      %2193 = vmatpush1.bf16.msra.mxu0 0
      %2194 = vmatprep.subr.bf16.mxu0 0
      %2195 = vmatpush1.bf16.msra.mxu0 0
      %2196 = vmatprep.mubr.bf16.mxu0 0
      %2197 = vmatmul.mubr.bf16.gmra.mrb[0].mxu0 %v2162
      %v2198 = vpop.f32.mrb[0].mxu0
      %v2199 = vadd.f32 0.0, %v2198
      %v2200 = vpop.f32.mrb[0].mxu0
      %v2201 = vpop.f32.mrb[0].mxu0
      %v2202 = vpop.f32.mrb[0].mxu0
      %2203 = vdwg.mxu0
      %v2204 = vadd.f32 %v2032, %v2199
      %2205 = vrot.lane.b32.xlu0 %v1696, 32
      %v2206 = vpop.permute.xlu0 %2205
      %2207 = vrot.lane.b32.xlu0 %v1697, 32
      %v2208 = vpop.permute.xlu0 %2207
      %v2210 = vsel %vm1699, %v2206, 0
      %v2213 = vsel %vm1699, %v2208, 0
      %2215 = vmatprep.subr.bf16.mxu0 0
      %2216 = vmatpush1.bf16.xpose.msra.mxu0 %v2213
      %2217 = vmatprep.subr.bf16.mxu0 0
      %2218 = vmatpush1.bf16.xpose.msra.mxu0 0
      %2219 = vmatprep.subr.bf16.mxu0 0
      %2220 = vmatpush1.bf16.xpose.msra.mxu0 0
      %2221 = vmatprep.subr.bf16.mxu0 0
      %2222 = vmatpush1.bf16.xpose.msra.mxu0 0
      %2223 = vmatprep.subr.bf16.mxu0 0
      %2224 = vmatpush1.bf16.xpose.msra.mxu0 0
      %2225 = vmatprep.subr.bf16.mxu0 0
      %2226 = vmatpush1.bf16.xpose.msra.mxu0 0
      %2227 = vmatprep.subr.bf16.mxu0 0
      %2228 = vmatpush1.bf16.xpose.msra.mxu0 0
      %2229 = vmatprep.subr.bf16.mxu0 0
      %2230 = vmatpush1.bf16.xpose.msra.mxu0 0
      %2231 = vmatprep.subr.bf16.mxu0 0
      %2232 = vmatpush1.bf16.xpose.msra.mxu0 0
      %2233 = vmatprep.subr.bf16.mxu0 0
      %2234 = vmatpush1.bf16.xpose.msra.mxu0 0
      %2235 = vmatprep.subr.bf16.mxu0 0
      %2236 = vmatpush1.bf16.xpose.msra.mxu0 0
      %2237 = vmatprep.subr.bf16.mxu0 0
      %2238 = vmatpush1.bf16.xpose.msra.mxu0 0
      %2239 = vmatprep.subr.bf16.mxu0 0
      %2240 = vmatpush1.bf16.xpose.msra.mxu0 0
      %2241 = vmatprep.subr.bf16.mxu0 0
      %2242 = vmatpush1.bf16.xpose.msra.mxu0 0
      %2243 = vmatprep.subr.bf16.mxu0 0
      %2244 = vmatpush1.bf16.xpose.msra.mxu0 0
      %2245 = vmatprep.subr.bf16.mxu0 0
      %2246 = vmatpush1.bf16.xpose.msra.mxu0 0
      %2247 = vmatprep.mubr.bf16.mxu0 0
      %2248 = vmatmul.mubr.bf16.gmra.mrb[0].mxu0 %v2210
      %v2249 = vpop.f32.mrb[0].mxu0
      %v2250 = vadd.f32 0.0, %v2249
      %v2251 = vpop.f32.mrb[0].mxu0
      %v2252 = vpop.f32.mrb[0].mxu0
      %v2253 = vpop.f32.mrb[0].mxu0
      %2254 = vdwg.mxu0
      %v2255 = vmul.f32 %v2250, 0.17677669
      %v2256 = vsel %vm1747, %v2255, -inf
      %2257 = vmax.xlane.f32.xlu0 %v2256
      %v2258 = vpop.xlane.xlu0 %2257
      %v2259 = vsub.f32 %v2255, %v2258
      %v2260 = vmul.f32 %v2259, 1.442695
      %v2261 = vpow.pop %v2260
      %v2262 = vsel %vm1747, %v2261, 0.0
      %2263 = vadd.xlane.f32.xlu0 %v2262
      %v2264 = vpop.xlane.xlu0 %2263
      %v2265 = vrcp.pop %v2264
      %v2266 = vmul.f32 %v2261, %v2265
      %v2267 = vpack.c.bf16 %v2266, %v2266
      %2268 = vrot.lane.b32.xlu0 %v1698, 32
      %v2269 = vpop.permute.xlu0 %2268
      %v2271 = vsel %vm1760, %v2267, 0
      %v2274 = vand.u32 %v2269, %v1767
      %2276 = vmatprep.subr.bf16.mxu0 0
      %2277 = vmatpush1.bf16.msra.mxu0 %v2274
      %2278 = vmatprep.subr.bf16.mxu0 0
      %2279 = vmatpush1.bf16.msra.mxu0 0
      %2280 = vmatprep.subr.bf16.mxu0 0
      %2281 = vmatpush1.bf16.msra.mxu0 0
      %2282 = vmatprep.subr.bf16.mxu0 0
      %2283 = vmatpush1.bf16.msra.mxu0 0
      %2284 = vmatprep.subr.bf16.mxu0 0
      %2285 = vmatpush1.bf16.msra.mxu0 0
      %2286 = vmatprep.subr.bf16.mxu0 0
      %2287 = vmatpush1.bf16.msra.mxu0 0
      %2288 = vmatprep.subr.bf16.mxu0 0
      %2289 = vmatpush1.bf16.msra.mxu0 0
      %2290 = vmatprep.subr.bf16.mxu0 0
      %2291 = vmatpush1.bf16.msra.mxu0 0
      %2292 = vmatprep.subr.bf16.mxu0 0
      %2293 = vmatpush1.bf16.msra.mxu0 0
      %2294 = vmatprep.subr.bf16.mxu0 0
      %2295 = vmatpush1.bf16.msra.mxu0 0
      %2296 = vmatprep.subr.bf16.mxu0 0
      %2297 = vmatpush1.bf16.msra.mxu0 0
      %2298 = vmatprep.subr.bf16.mxu0 0
      %2299 = vmatpush1.bf16.msra.mxu0 0
      %2300 = vmatprep.subr.bf16.mxu0 0
      %2301 = vmatpush1.bf16.msra.mxu0 0
      %2302 = vmatprep.subr.bf16.mxu0 0
      %2303 = vmatpush1.bf16.msra.mxu0 0
      %2304 = vmatprep.subr.bf16.mxu0 0
      %2305 = vmatpush1.bf16.msra.mxu0 0
      %2306 = vmatprep.subr.bf16.mxu0 0
      %2307 = vmatpush1.bf16.msra.mxu0 0
      %2308 = vmatprep.mubr.bf16.mxu0 0
      %2309 = vmatmul.mubr.bf16.gmra.mrb[0].mxu0 %v2271
      %v2310 = vpop.f32.mrb[0].mxu0
      %v2311 = vadd.f32 0.0, %v2310
      %v2312 = vpop.f32.mrb[0].mxu0
      %v2313 = vpop.f32.mrb[0].mxu0
      %v2314 = vpop.f32.mrb[0].mxu0
      %2315 = vdwg.mxu0
      %v2316 = vpack.c.bf16 %v2311, %v2311
      %v2321 = vunpack.c.l.b16 %v1336
      %v2322 = vunpack.c.l.b16 %v1337
      %v2323 = vunpack.c.l.b16 %v1338
      %v2324 = vunpack.c.l.b16 %v1339
      %v2325 = vpack.c.b16 %v2322, %v2321
      %v2326 = vpack.c.b16 %v2324, %v2323
      %v2330 = vsel %vm1699, %v2316, 0
      %2332 = vmatprep.subr.bf16.mxu0 0
      %2333 = vmatpush1.bf16.msra.mxu0 %v2325
      %2334 = vmatprep.subr.bf16.mxu0 0
      %2335 = vmatpush1.bf16.msra.mxu0 %v2326
      %2336 = vmatprep.subr.bf16.mxu0 0
      %2337 = vmatpush1.bf16.msra.mxu0 0
      %2338 = vmatprep.subr.bf16.mxu0 0
      %2339 = vmatpush1.bf16.msra.mxu0 0
      %2340 = vmatprep.subr.bf16.mxu0 0
      %2341 = vmatpush1.bf16.msra.mxu0 0
      %2342 = vmatprep.subr.bf16.mxu0 0
      %2343 = vmatpush1.bf16.msra.mxu0 0
      %2344 = vmatprep.subr.bf16.mxu0 0
      %2345 = vmatpush1.bf16.msra.mxu0 0
      %2346 = vmatprep.subr.bf16.mxu0 0
      %2347 = vmatpush1.bf16.msra.mxu0 0
      %2348 = vmatprep.subr.bf16.mxu0 0
      %2349 = vmatpush1.bf16.msra.mxu0 0
      %2350 = vmatprep.subr.bf16.mxu0 0
      %2351 = vmatpush1.bf16.msra.mxu0 0
      %2352 = vmatprep.subr.bf16.mxu0 0
      %2353 = vmatpush1.bf16.msra.mxu0 0
      %2354 = vmatprep.subr.bf16.mxu0 0
      %2355 = vmatpush1.bf16.msra.mxu0 0
      %2356 = vmatprep.subr.bf16.mxu0 0
      %2357 = vmatpush1.bf16.msra.mxu0 0
      %2358 = vmatprep.subr.bf16.mxu0 0
      %2359 = vmatpush1.bf16.msra.mxu0 0
      %2360 = vmatprep.subr.bf16.mxu0 0
      %2361 = vmatpush1.bf16.msra.mxu0 0
      %2362 = vmatprep.subr.bf16.mxu0 0
      %2363 = vmatpush1.bf16.msra.mxu0 0
      %2364 = vmatprep.mubr.bf16.mxu0 0
      %2365 = vmatmul.mubr.bf16.gmra.mrb[0].mxu0 %v2330
      %v2366 = vpop.f32.mrb[0].mxu0
      %v2367 = vadd.f32 0.0, %v2366
      %v2368 = vpop.f32.mrb[0].mxu0
      %v2369 = vpop.f32.mrb[0].mxu0
      %v2370 = vpop.f32.mrb[0].mxu0
      %2371 = vdwg.mxu0
      %v2372 = vadd.f32 %v2204, %v2367
      %v2373 = vadd.f32 %v1441, %v2372
      %v2375 = vlaneseq
      %v2376 = vshrl.u32 %v2375, 7
      %v2377 = vsub.s32 0, %v2376
      %v2378 = vrot.slane %v1340, %v2377
      %v2380 = vadd.f32 %v2373, %v2378
      %v2381 = vsel %vm1442, %v2380, 0.0
      %2382 = vadd.xlane.f32.xlu0 %v2381
      %v2383 = vpop.xlane.xlu0 %2382
      %v2384 = vmul.f32 %v2383, %v1029
      %v2385 = vsub.f32 %v2380, %v2384
      %v2386 = vmul.f32 %v2385, %v2385
      %v2387 = vsel %vm1442, %v2386, 0.0
      %2388 = vadd.xlane.f32.xlu0 %v2387
      %v2389 = vpop.xlane.xlu0 %2388
      %v2390 = vmul.f32 %v2389, %v1029
      %v2391 = vadd.f32 %v2390, 1e-05
      %v2392 = vrsqrt.pop %v2391
      %v2393 = vmul.f32 %v2385, %v2392
      %v2395 = vlaneseq
      %v2396 = vshrl.u32 %v2395, 7
      %v2397 = vsub.s32 0, %v2396
      %v2398 = vrot.slane %v1341, %v2397
      %v2400 = vmul.f32 %v2393, %v2398
      %v2402 = vlaneseq
      %v2403 = vshrl.u32 %v2402, 7
      %v2404 = vsub.s32 0, %v2403
      %v2405 = vrot.slane %v1342, %v2404
      %v2407 = vadd.f32 %v2400, %v2405
      %v2408 = vpack.c.bf16 %v2407, %v2407
      %v2410 = vlaneseq
      %v2411 = vshrl.u32 %v2410, 7
      %v2412 = vsub.s32 0, %v2411
      %v2413 = vrot.slane %v1375, %v2412
      %v2414 = vlaneseq
      %v2415 = vshrl.u32 %v2414, 7
      %v2416 = vsub.s32 1, %v2415
      %v2417 = vrot.slane %v1375, %v2416
      %v2418 = vlaneseq
      %v2419 = vshrl.u32 %v2418, 7
      %v2420 = vsub.s32 2, %v2419
      %v2421 = vrot.slane %v1375, %v2420
      %v2422 = vlaneseq
      %v2423 = vshrl.u32 %v2422, 7
      %v2424 = vsub.s32 3, %v2423
      %v2425 = vrot.slane %v1375, %v2424
      %v2462 = vunpack.c.l.b16 %v1343
      %v2463 = vunpack.c.h.b16 %v1343
      %v2464 = vunpack.c.l.b16 %v1344
      %v2465 = vunpack.c.h.b16 %v1344
      %v2466 = vunpack.c.l.b16 %v1345
      %v2467 = vunpack.c.h.b16 %v1345
      %v2468 = vunpack.c.l.b16 %v1346
      %v2469 = vunpack.c.h.b16 %v1346
      %v2470 = vunpack.c.l.b16 %v1347
      %v2471 = vunpack.c.h.b16 %v1347
      %v2472 = vunpack.c.l.b16 %v1348
      %v2473 = vunpack.c.h.b16 %v1348
      %v2474 = vunpack.c.l.b16 %v1349
      %v2475 = vunpack.c.h.b16 %v1349
      %v2476 = vunpack.c.l.b16 %v1350
      %v2477 = vunpack.c.h.b16 %v1350
      %v2478 = vunpack.c.l.b16 %v1351
      %v2479 = vunpack.c.h.b16 %v1351
      %v2480 = vunpack.c.l.b16 %v1352
      %v2481 = vunpack.c.h.b16 %v1352
      %v2482 = vunpack.c.l.b16 %v1353
      %v2483 = vunpack.c.h.b16 %v1353
      %v2484 = vunpack.c.l.b16 %v1354
      %v2485 = vunpack.c.h.b16 %v1354
      %v2486 = vunpack.c.l.b16 %v1355
      %v2487 = vunpack.c.h.b16 %v1355
      %v2488 = vunpack.c.l.b16 %v1356
      %v2489 = vunpack.c.h.b16 %v1356
      %v2490 = vunpack.c.l.b16 %v1357
      %v2491 = vunpack.c.h.b16 %v1357
      %v2492 = vunpack.c.l.b16 %v1358
      %v2493 = vunpack.c.h.b16 %v1358
      %v2494 = vunpack.c.l.b16 %v1359
      %v2495 = vunpack.c.h.b16 %v1359
      %v2496 = vunpack.c.l.b16 %v1360
      %v2497 = vunpack.c.h.b16 %v1360
      %v2498 = vunpack.c.l.b16 %v1361
      %v2499 = vunpack.c.h.b16 %v1361
      %v2500 = vunpack.c.l.b16 %v1362
      %v2501 = vunpack.c.h.b16 %v1362
      %v2502 = vunpack.c.l.b16 %v1363
      %v2503 = vunpack.c.h.b16 %v1363
      %v2504 = vunpack.c.l.b16 %v1364
      %v2505 = vunpack.c.h.b16 %v1364
      %v2506 = vunpack.c.l.b16 %v1365
      %v2507 = vunpack.c.h.b16 %v1365
      %v2508 = vunpack.c.l.b16 %v1366
      %v2509 = vunpack.c.h.b16 %v1366
      %v2510 = vunpack.c.l.b16 %v1367
      %v2511 = vunpack.c.h.b16 %v1367
      %v2512 = vunpack.c.l.b16 %v1368
      %v2513 = vunpack.c.h.b16 %v1368
      %v2514 = vunpack.c.l.b16 %v1369
      %v2515 = vunpack.c.h.b16 %v1369
      %v2516 = vunpack.c.l.b16 %v1370
      %v2517 = vunpack.c.h.b16 %v1370
      %v2518 = vunpack.c.l.b16 %v1371
      %v2519 = vunpack.c.h.b16 %v1371
      %v2520 = vunpack.c.l.b16 %v1372
      %v2521 = vunpack.c.h.b16 %v1372
      %v2522 = vunpack.c.l.b16 %v1373
      %v2523 = vunpack.c.h.b16 %v1373
      %v2524 = vunpack.c.l.b16 %v1374
      %v2525 = vunpack.c.h.b16 %v1374
      %v2526 = vpack.c.b16 %v2466, %v2462
      %v2527 = vpack.c.b16 %v2467, %v2463
      %v2528 = vpack.c.b16 %v2468, %v2464
      %v2529 = vpack.c.b16 %v2469, %v2465
      %v2530 = vpack.c.b16 %v2474, %v2470
      %v2531 = vpack.c.b16 %v2475, %v2471
      %v2532 = vpack.c.b16 %v2476, %v2472
      %v2533 = vpack.c.b16 %v2477, %v2473
      %v2534 = vpack.c.b16 %v2482, %v2478
      %v2535 = vpack.c.b16 %v2483, %v2479
      %v2536 = vpack.c.b16 %v2484, %v2480
      %v2537 = vpack.c.b16 %v2485, %v2481
      %v2538 = vpack.c.b16 %v2490, %v2486
      %v2539 = vpack.c.b16 %v2491, %v2487
      %v2540 = vpack.c.b16 %v2492, %v2488
      %v2541 = vpack.c.b16 %v2493, %v2489
      %v2542 = vpack.c.b16 %v2498, %v2494
      %v2543 = vpack.c.b16 %v2499, %v2495
      %v2544 = vpack.c.b16 %v2500, %v2496
      %v2545 = vpack.c.b16 %v2501, %v2497
      %v2546 = vpack.c.b16 %v2506, %v2502
      %v2547 = vpack.c.b16 %v2507, %v2503
      %v2548 = vpack.c.b16 %v2508, %v2504
      %v2549 = vpack.c.b16 %v2509, %v2505
      %v2550 = vpack.c.b16 %v2514, %v2510
      %v2551 = vpack.c.b16 %v2515, %v2511
      %v2552 = vpack.c.b16 %v2516, %v2512
      %v2553 = vpack.c.b16 %v2517, %v2513
      %v2554 = vpack.c.b16 %v2522, %v2518
      %v2555 = vpack.c.b16 %v2523, %v2519
      %v2556 = vpack.c.b16 %v2524, %v2520
      %v2557 = vpack.c.b16 %v2525, %v2521
      %2590 = vmatprep.subr.bf16.mxu0 %v2527
      %2591 = vmatpush1.bf16.msra.mxu0 %v2526
      %2592 = vmatprep.subr.bf16.mxu0 %v2531
      %2593 = vmatpush1.bf16.msra.mxu0 %v2530
      %2594 = vmatprep.subr.bf16.mxu0 %v2535
      %2595 = vmatpush1.bf16.msra.mxu0 %v2534
      %2596 = vmatprep.subr.bf16.mxu0 %v2539
      %2597 = vmatpush1.bf16.msra.mxu0 %v2538
      %2598 = vmatprep.subr.bf16.mxu0 %v2543
      %2599 = vmatpush1.bf16.msra.mxu0 %v2542
      %2600 = vmatprep.subr.bf16.mxu0 %v2547
      %2601 = vmatpush1.bf16.msra.mxu0 %v2546
      %2602 = vmatprep.subr.bf16.mxu0 %v2551
      %2603 = vmatpush1.bf16.msra.mxu0 %v2550
      %2604 = vmatprep.subr.bf16.mxu0 %v2555
      %2605 = vmatpush1.bf16.msra.mxu0 %v2554
      %2606 = vmatprep.subr.bf16.mxu0 0
      %2607 = vmatpush1.bf16.msra.mxu0 0
      %2608 = vmatprep.subr.bf16.mxu0 0
      %2609 = vmatpush1.bf16.msra.mxu0 0
      %2610 = vmatprep.subr.bf16.mxu0 0
      %2611 = vmatpush1.bf16.msra.mxu0 0
      %2612 = vmatprep.subr.bf16.mxu0 0
      %2613 = vmatpush1.bf16.msra.mxu0 0
      %2614 = vmatprep.subr.bf16.mxu0 0
      %2615 = vmatpush1.bf16.msra.mxu0 0
      %2616 = vmatprep.subr.bf16.mxu0 0
      %2617 = vmatpush1.bf16.msra.mxu0 0
      %2618 = vmatprep.subr.bf16.mxu0 0
      %2619 = vmatpush1.bf16.msra.mxu0 0
      %2620 = vmatprep.subr.bf16.mxu0 0
      %2621 = vmatpush1.bf16.msra.mxu0 0
      %2622 = vmatprep.mubr.bf16.mxu0 0
      %2623 = vmatmul.mubr.bf16.gmra.mrb[0].mxu0 %v2408
      %v2624 = vpop.f32.mrb[0].mxu0
      %v2625 = vadd.f32 %v2413, %v2624
      %v2626 = vpop.f32.mrb[0].mxu0
      %v2627 = vadd.f32 %v2417, %v2626
      %v2628 = vpop.f32.mrb[0].mxu0
      %v2629 = vpop.f32.mrb[0].mxu0
      %2630 = vdwg.mxu0
      %2631 = vmatprep.subr.bf16.mxu0 %v2529
      %2632 = vmatpush1.bf16.msra.mxu0 %v2528
      %2633 = vmatprep.subr.bf16.mxu0 %v2533
      %2634 = vmatpush1.bf16.msra.mxu0 %v2532
      %2635 = vmatprep.subr.bf16.mxu0 %v2537
      %2636 = vmatpush1.bf16.msra.mxu0 %v2536
      %2637 = vmatprep.subr.bf16.mxu0 %v2541
      %2638 = vmatpush1.bf16.msra.mxu0 %v2540
      %2639 = vmatprep.subr.bf16.mxu0 %v2545
      %2640 = vmatpush1.bf16.msra.mxu0 %v2544
      %2641 = vmatprep.subr.bf16.mxu0 %v2549
      %2642 = vmatpush1.bf16.msra.mxu0 %v2548
      %2643 = vmatprep.subr.bf16.mxu0 %v2553
      %2644 = vmatpush1.bf16.msra.mxu0 %v2552
      %2645 = vmatprep.subr.bf16.mxu0 %v2557
      %2646 = vmatpush1.bf16.msra.mxu0 %v2556
      %2647 = vmatprep.subr.bf16.mxu0 0
      %2648 = vmatpush1.bf16.msra.mxu0 0
      %2649 = vmatprep.subr.bf16.mxu0 0
      %2650 = vmatpush1.bf16.msra.mxu0 0
      %2651 = vmatprep.subr.bf16.mxu0 0
      %2652 = vmatpush1.bf16.msra.mxu0 0
      %2653 = vmatprep.subr.bf16.mxu0 0
      %2654 = vmatpush1.bf16.msra.mxu0 0
      %2655 = vmatprep.subr.bf16.mxu0 0
      %2656 = vmatpush1.bf16.msra.mxu0 0
      %2657 = vmatprep.subr.bf16.mxu0 0
      %2658 = vmatpush1.bf16.msra.mxu0 0
      %2659 = vmatprep.subr.bf16.mxu0 0
      %2660 = vmatpush1.bf16.msra.mxu0 0
      %2661 = vmatprep.subr.bf16.mxu0 0
      %2662 = vmatpush1.bf16.msra.mxu0 0
      %2663 = vmatprep.mubr.bf16.mxu0 0
      %2664 = vmatmul.mubr.bf16.gmra.mrb[0].mxu0 %v2408
      %v2665 = vpop.f32.mrb[0].mxu0
      %v2666 = vadd.f32 %v2421, %v2665
      %v2667 = vpop.f32.mrb[0].mxu0
      %v2668 = vadd.f32 %v2425, %v2667
      %v2669 = vpop.f32.mrb[0].mxu0
      %v2670 = vpop.f32.mrb[0].mxu0
      %2671 = vdwg.mxu0
      %v2672 = vmul.f32 %v2625, 1.702
      %v2673 = vmul.f32 %v2627, 1.702
      %v2674 = vmul.f32 %v2666, 1.702
      %v2675 = vmul.f32 %v2668, 1.702
      %v2676 = vxor.u32 %v2672, 2147483648
      %v2677 = vxor.u32 %v2673, 2147483648
      %v2678 = vxor.u32 %v2674, 2147483648
      %v2679 = vxor.u32 %v2675, 2147483648
      %v2680 = vmul.f32 %v2676, 1.442695
      %v2681 = vpow.pop %v2680
      %v2682 = vmul.f32 %v2677, 1.442695
      %v2683 = vpow.pop %v2682
      %v2684 = vmul.f32 %v2678, 1.442695
      %v2685 = vpow.pop %v2684
      %v2686 = vmul.f32 %v2679, 1.442695
      %v2687 = vpow.pop %v2686
      %v2688 = vadd.f32 %v2681, 1.0
      %v2689 = vadd.f32 %v2683, 1.0
      %v2690 = vadd.f32 %v2685, 1.0
      %v2691 = vadd.f32 %v2687, 1.0
      %v2692 = vrcp.pop %v2688
      %v2693 = vmul.f32 1.0, %v2692
      %v2694 = vrcp.pop %v2689
      %v2695 = vmul.f32 1.0, %v2694
      %v2696 = vrcp.pop %v2690
      %v2697 = vmul.f32 1.0, %v2696
      %v2698 = vrcp.pop %v2691
      %v2699 = vmul.f32 1.0, %v2698
      %v2700 = vmul.f32 %v2625, %v2693
      %v2701 = vmul.f32 %v2627, %v2695
      %v2702 = vmul.f32 %v2666, %v2697
      %v2703 = vmul.f32 %v2668, %v2699
      %v2704 = vpack.c.bf16 %v2700, %v2700
      %v2705 = vpack.c.bf16 %v2701, %v2701
      %v2706 = vpack.c.bf16 %v2702, %v2702
      %v2707 = vpack.c.bf16 %v2703, %v2703
      %v2709 = vlaneseq
      %v2710 = vshrl.u32 %v2709, 7
      %v2711 = vsub.s32 0, %v2710
      %v2712 = vrot.slane %v1440, %v2711
      %v2778 = vunpack.c.l.b16 %v1376
      %v2779 = vunpack.c.l.b16 %v1377
      %v2780 = vunpack.c.l.b16 %v1378
      %v2781 = vunpack.c.l.b16 %v1379
      %v2782 = vunpack.c.l.b16 %v1380
      %v2783 = vunpack.c.l.b16 %v1381
      %v2784 = vunpack.c.l.b16 %v1382
      %v2785 = vunpack.c.l.b16 %v1383
      %v2786 = vunpack.c.l.b16 %v1384
      %v2787 = vunpack.c.l.b16 %v1385
      %v2788 = vunpack.c.l.b16 %v1386
      %v2789 = vunpack.c.l.b16 %v1387
      %v2790 = vunpack.c.l.b16 %v1388
      %v2791 = vunpack.c.l.b16 %v1389
      %v2792 = vunpack.c.l.b16 %v1390
      %v2793 = vunpack.c.l.b16 %v1391
      %v2794 = vunpack.c.l.b16 %v1392
      %v2795 = vunpack.c.l.b16 %v1393
      %v2796 = vunpack.c.l.b16 %v1394
      %v2797 = vunpack.c.l.b16 %v1395
      %v2798 = vunpack.c.l.b16 %v1396
      %v2799 = vunpack.c.l.b16 %v1397
      %v2800 = vunpack.c.l.b16 %v1398
      %v2801 = vunpack.c.l.b16 %v1399
      %v2802 = vunpack.c.l.b16 %v1400
      %v2803 = vunpack.c.l.b16 %v1401
      %v2804 = vunpack.c.l.b16 %v1402
      %v2805 = vunpack.c.l.b16 %v1403
      %v2806 = vunpack.c.l.b16 %v1404
      %v2807 = vunpack.c.l.b16 %v1405
      %v2808 = vunpack.c.l.b16 %v1406
      %v2809 = vunpack.c.l.b16 %v1407
      %v2810 = vunpack.c.l.b16 %v1408
      %v2811 = vunpack.c.l.b16 %v1409
      %v2812 = vunpack.c.l.b16 %v1410
      %v2813 = vunpack.c.l.b16 %v1411
      %v2814 = vunpack.c.l.b16 %v1412
      %v2815 = vunpack.c.l.b16 %v1413
      %v2816 = vunpack.c.l.b16 %v1414
      %v2817 = vunpack.c.l.b16 %v1415
      %v2818 = vunpack.c.l.b16 %v1416
      %v2819 = vunpack.c.l.b16 %v1417
      %v2820 = vunpack.c.l.b16 %v1418
      %v2821 = vunpack.c.l.b16 %v1419
      %v2822 = vunpack.c.l.b16 %v1420
      %v2823 = vunpack.c.l.b16 %v1421
      %v2824 = vunpack.c.l.b16 %v1422
      %v2825 = vunpack.c.l.b16 %v1423
      %v2826 = vunpack.c.l.b16 %v1424
      %v2827 = vunpack.c.l.b16 %v1425
      %v2828 = vunpack.c.l.b16 %v1426
      %v2829 = vunpack.c.l.b16 %v1427
      %v2830 = vunpack.c.l.b16 %v1428
      %v2831 = vunpack.c.l.b16 %v1429
      %v2832 = vunpack.c.l.b16 %v1430
      %v2833 = vunpack.c.l.b16 %v1431
      %v2834 = vunpack.c.l.b16 %v1432
      %v2835 = vunpack.c.l.b16 %v1433
      %v2836 = vunpack.c.l.b16 %v1434
      %v2837 = vunpack.c.l.b16 %v1435
      %v2838 = vunpack.c.l.b16 %v1436
      %v2839 = vunpack.c.l.b16 %v1437
      %v2840 = vunpack.c.l.b16 %v1438
      %v2841 = vunpack.c.l.b16 %v1439
      %v2842 = vpack.c.b16 %v2779, %v2778
      %v2843 = vpack.c.b16 %v2781, %v2780
      %v2844 = vpack.c.b16 %v2783, %v2782
      %v2845 = vpack.c.b16 %v2785, %v2784
      %v2846 = vpack.c.b16 %v2787, %v2786
      %v2847 = vpack.c.b16 %v2789, %v2788
      %v2848 = vpack.c.b16 %v2791, %v2790
      %v2849 = vpack.c.b16 %v2793, %v2792
      %v2850 = vpack.c.b16 %v2795, %v2794
      %v2851 = vpack.c.b16 %v2797, %v2796
      %v2852 = vpack.c.b16 %v2799, %v2798
      %v2853 = vpack.c.b16 %v2801, %v2800
      %v2854 = vpack.c.b16 %v2803, %v2802
      %v2855 = vpack.c.b16 %v2805, %v2804
      %v2856 = vpack.c.b16 %v2807, %v2806
      %v2857 = vpack.c.b16 %v2809, %v2808
      %v2858 = vpack.c.b16 %v2811, %v2810
      %v2859 = vpack.c.b16 %v2813, %v2812
      %v2860 = vpack.c.b16 %v2815, %v2814
      %v2861 = vpack.c.b16 %v2817, %v2816
      %v2862 = vpack.c.b16 %v2819, %v2818
      %v2863 = vpack.c.b16 %v2821, %v2820
      %v2864 = vpack.c.b16 %v2823, %v2822
      %v2865 = vpack.c.b16 %v2825, %v2824
      %v2866 = vpack.c.b16 %v2827, %v2826
      %v2867 = vpack.c.b16 %v2829, %v2828
      %v2868 = vpack.c.b16 %v2831, %v2830
      %v2869 = vpack.c.b16 %v2833, %v2832
      %v2870 = vpack.c.b16 %v2835, %v2834
      %v2871 = vpack.c.b16 %v2837, %v2836
      %v2872 = vpack.c.b16 %v2839, %v2838
      %v2873 = vpack.c.b16 %v2841, %v2840
      %2906 = vmatprep.subr.bf16.mxu0 0
      %2907 = vmatpush1.bf16.msra.mxu0 %v2842
      %2908 = vmatprep.subr.bf16.mxu0 0
      %2909 = vmatpush1.bf16.msra.mxu0 %v2843
      %2910 = vmatprep.subr.bf16.mxu0 0
      %2911 = vmatpush1.bf16.msra.mxu0 %v2844
      %2912 = vmatprep.subr.bf16.mxu0 0
      %2913 = vmatpush1.bf16.msra.mxu0 %v2845
      %2914 = vmatprep.subr.bf16.mxu0 0
      %2915 = vmatpush1.bf16.msra.mxu0 %v2846
      %2916 = vmatprep.subr.bf16.mxu0 0
      %2917 = vmatpush1.bf16.msra.mxu0 %v2847
      %2918 = vmatprep.subr.bf16.mxu0 0
      %2919 = vmatpush1.bf16.msra.mxu0 %v2848
      %2920 = vmatprep.subr.bf16.mxu0 0
      %2921 = vmatpush1.bf16.msra.mxu0 %v2849
      %2922 = vmatprep.subr.bf16.mxu0 0
      %2923 = vmatpush1.bf16.msra.mxu0 %v2850
      %2924 = vmatprep.subr.bf16.mxu0 0
      %2925 = vmatpush1.bf16.msra.mxu0 %v2851
      %2926 = vmatprep.subr.bf16.mxu0 0
      %2927 = vmatpush1.bf16.msra.mxu0 %v2852
      %2928 = vmatprep.subr.bf16.mxu0 0
      %2929 = vmatpush1.bf16.msra.mxu0 %v2853
      %2930 = vmatprep.subr.bf16.mxu0 0
      %2931 = vmatpush1.bf16.msra.mxu0 %v2854
      %2932 = vmatprep.subr.bf16.mxu0 0
      %2933 = vmatpush1.bf16.msra.mxu0 %v2855
      %2934 = vmatprep.subr.bf16.mxu0 0
      %2935 = vmatpush1.bf16.msra.mxu0 %v2856
      %2936 = vmatprep.subr.bf16.mxu0 0
      %2937 = vmatpush1.bf16.msra.mxu0 %v2857
      %2938 = vmatprep.mubr.bf16.mxu0 %v2705
      %2939 = vmatmul.mubr.bf16.gmra.mrb[0].mxu0 %v2704
      %v2940 = vpop.f32.mrb[0].mxu0
      %v2941 = vadd.f32 %v2712, %v2940
      %v2942 = vpop.f32.mrb[0].mxu0
      %v2943 = vpop.f32.mrb[0].mxu0
      %v2944 = vpop.f32.mrb[0].mxu0
      %2945 = vdwg.mxu0
      %2946 = vmatprep.subr.bf16.mxu0 0
      %2947 = vmatpush1.bf16.msra.mxu0 %v2858
      %2948 = vmatprep.subr.bf16.mxu0 0
      %2949 = vmatpush1.bf16.msra.mxu0 %v2859
      %2950 = vmatprep.subr.bf16.mxu0 0
      %2951 = vmatpush1.bf16.msra.mxu0 %v2860
      %2952 = vmatprep.subr.bf16.mxu0 0
      %2953 = vmatpush1.bf16.msra.mxu0 %v2861
      %2954 = vmatprep.subr.bf16.mxu0 0
      %2955 = vmatpush1.bf16.msra.mxu0 %v2862
      %2956 = vmatprep.subr.bf16.mxu0 0
      %2957 = vmatpush1.bf16.msra.mxu0 %v2863
      %2958 = vmatprep.subr.bf16.mxu0 0
      %2959 = vmatpush1.bf16.msra.mxu0 %v2864
      %2960 = vmatprep.subr.bf16.mxu0 0
      %2961 = vmatpush1.bf16.msra.mxu0 %v2865
      %2962 = vmatprep.subr.bf16.mxu0 0
      %2963 = vmatpush1.bf16.msra.mxu0 %v2866
      %2964 = vmatprep.subr.bf16.mxu0 0
      %2965 = vmatpush1.bf16.msra.mxu0 %v2867
      %2966 = vmatprep.subr.bf16.mxu0 0
      %2967 = vmatpush1.bf16.msra.mxu0 %v2868
      %2968 = vmatprep.subr.bf16.mxu0 0
      %2969 = vmatpush1.bf16.msra.mxu0 %v2869
      %2970 = vmatprep.subr.bf16.mxu0 0
      %2971 = vmatpush1.bf16.msra.mxu0 %v2870
      %2972 = vmatprep.subr.bf16.mxu0 0
      %2973 = vmatpush1.bf16.msra.mxu0 %v2871
      %2974 = vmatprep.subr.bf16.mxu0 0
      %2975 = vmatpush1.bf16.msra.mxu0 %v2872
      %2976 = vmatprep.subr.bf16.mxu0 0
      %2977 = vmatpush1.bf16.msra.mxu0 %v2873
      %2978 = vmatprep.mubr.bf16.mxu0 %v2707
      %2979 = vmatmul.mubr.bf16.gmra.mrb[0].mxu0 %v2706
      %v2980 = vpop.f32.mrb[0].mxu0
      %v2981 = vadd.f32 %v2941, %v2980
      %v2982 = vpop.f32.mrb[0].mxu0
      %v2983 = vpop.f32.mrb[0].mxu0
      %v2984 = vpop.f32.mrb[0].mxu0
      %2985 = vdwg.mxu0
      %v2986 = vadd.f32 %v2380, %v2981
      %2987 = vst [vmem:[#allocation2] sm:$0x1f] %v2986
      %v2988 = vld [vmem:[%s1228] sm:$0x1f]
      %v2989 = vsel %vm1442, %v2988, 0.0
      %2990 = vadd.xlane.f32.xlu0 %v2989
      %v2991 = vpop.xlane.xlu0 %2990
      %v2992 = vmul.f32 %v2991, %v1029
      %v2993 = vsub.f32 %v2988, %v2992
      %v2994 = vmul.f32 %v2993, %v2993
      %v2995 = vsel %vm1442, %v2994, 0.0
      %2996 = vadd.xlane.f32.xlu0 %v2995
      %v2997 = vpop.xlane.xlu0 %2996
      %v2998 = vmul.f32 %v2997, %v1029
      %v2999 = vadd.f32 %v2998, 1e-05
      %v3000 = vrsqrt.pop %v2999
      %v3001 = vmul.f32 %v2993, %v3000
      %v3002 = vmul.f32 %v3001, %v1460
      %v3003 = vadd.f32 %v3002, %v1467
      %v3004 = vpack.c.bf16 %v3003, %v3003
      %3005 = vmatprep.subr.bf16.mxu0 %v1568
      %3006 = vmatpush1.bf16.msra.mxu0 %v1567
      %3007 = vmatprep.subr.bf16.mxu0 %v1571
      %3008 = vmatpush1.bf16.msra.mxu0 %v1570
      %3009 = vmatprep.subr.bf16.mxu0 %v1574
      %3010 = vmatpush1.bf16.msra.mxu0 %v1573
      %3011 = vmatprep.subr.bf16.mxu0 %v1577
      %3012 = vmatpush1.bf16.msra.mxu0 %v1576
      %3013 = vmatprep.subr.bf16.mxu0 %v1580
      %3014 = vmatpush1.bf16.msra.mxu0 %v1579
      %3015 = vmatprep.subr.bf16.mxu0 %v1583
      %3016 = vmatpush1.bf16.msra.mxu0 %v1582
      %3017 = vmatprep.subr.bf16.mxu0 %v1586
      %3018 = vmatpush1.bf16.msra.mxu0 %v1585
      %3019 = vmatprep.subr.bf16.mxu0 %v1589
      %3020 = vmatpush1.bf16.msra.mxu0 %v1588
      %3021 = vmatprep.subr.bf16.mxu0 0
      %3022 = vmatpush1.bf16.msra.mxu0 0
      %3023 = vmatprep.subr.bf16.mxu0 0
      %3024 = vmatpush1.bf16.msra.mxu0 0
      %3025 = vmatprep.subr.bf16.mxu0 0
      %3026 = vmatpush1.bf16.msra.mxu0 0
      %3027 = vmatprep.subr.bf16.mxu0 0
      %3028 = vmatpush1.bf16.msra.mxu0 0
      %3029 = vmatprep.subr.bf16.mxu0 0
      %3030 = vmatpush1.bf16.msra.mxu0 0
      %3031 = vmatprep.subr.bf16.mxu0 0
      %3032 = vmatpush1.bf16.msra.mxu0 0
      %3033 = vmatprep.subr.bf16.mxu0 0
      %3034 = vmatpush1.bf16.msra.mxu0 0
      %3035 = vmatprep.subr.bf16.mxu0 0
      %3036 = vmatpush1.bf16.msra.mxu0 0
      %3037 = vmatprep.mubr.bf16.mxu0 0
      %3038 = vmatmul.mubr.bf16.gmra.mrb[0].mxu0 %v3004
      %v3039 = vpop.f32.mrb[0].mxu0
      %v3040 = vadd.f32 %v1475, %v3039
      %v3041 = vpop.f32.mrb[0].mxu0
      %v3042 = vadd.f32 %v1479, %v3041
      %v3043 = vpop.f32.mrb[0].mxu0
      %v3044 = vpop.f32.mrb[0].mxu0
      %3045 = vdwg.mxu0
      %3046 = vmatprep.subr.bf16.mxu0 0
      %3047 = vmatpush1.bf16.msra.mxu0 %v1569
      %3048 = vmatprep.subr.bf16.mxu0 0
      %3049 = vmatpush1.bf16.msra.mxu0 %v1572
      %3050 = vmatprep.subr.bf16.mxu0 0
      %3051 = vmatpush1.bf16.msra.mxu0 %v1575
      %3052 = vmatprep.subr.bf16.mxu0 0
      %3053 = vmatpush1.bf16.msra.mxu0 %v1578
      %3054 = vmatprep.subr.bf16.mxu0 0
      %3055 = vmatpush1.bf16.msra.mxu0 %v1581
      %3056 = vmatprep.subr.bf16.mxu0 0
      %3057 = vmatpush1.bf16.msra.mxu0 %v1584
      %3058 = vmatprep.subr.bf16.mxu0 0
      %3059 = vmatpush1.bf16.msra.mxu0 %v1587
      %3060 = vmatprep.subr.bf16.mxu0 0
      %3061 = vmatpush1.bf16.msra.mxu0 %v1590
      %3062 = vmatprep.subr.bf16.mxu0 0
      %3063 = vmatpush1.bf16.msra.mxu0 0
      %3064 = vmatprep.subr.bf16.mxu0 0
      %3065 = vmatpush1.bf16.msra.mxu0 0
      %3066 = vmatprep.subr.bf16.mxu0 0
      %3067 = vmatpush1.bf16.msra.mxu0 0
      %3068 = vmatprep.subr.bf16.mxu0 0
      %3069 = vmatpush1.bf16.msra.mxu0 0
      %3070 = vmatprep.subr.bf16.mxu0 0
      %3071 = vmatpush1.bf16.msra.mxu0 0
      %3072 = vmatprep.subr.bf16.mxu0 0
      %3073 = vmatpush1.bf16.msra.mxu0 0
      %3074 = vmatprep.subr.bf16.mxu0 0
      %3075 = vmatpush1.bf16.msra.mxu0 0
      %3076 = vmatprep.subr.bf16.mxu0 0
      %3077 = vmatpush1.bf16.msra.mxu0 0
      %3078 = vmatprep.mubr.bf16.mxu0 0
      %3079 = vmatmul.mubr.bf16.gmra.mrb[0].mxu0 %v3004
      %v3080 = vpop.f32.mrb[0].mxu0
      %v3081 = vadd.f32 %v1483, %v3080
      %v3082 = vpop.f32.mrb[0].mxu0
      %v3083 = vpop.f32.mrb[0].mxu0
      %v3084 = vpop.f32.mrb[0].mxu0
      %3085 = vdwg.mxu0
      %v3086 = vpack.c.bf16 %v3040, %v3040
      %v3087 = vpack.c.bf16 %v3042, %v3042
      %v3088 = vpack.c.bf16 %v3081, %v3081
      %v3090 = vsel %vm1699, %v3086, 0
      %v3093 = vsel %vm1699, %v3087, 0
      %3095 = vmatprep.subr.bf16.mxu0 0
      %3096 = vmatpush1.bf16.xpose.msra.mxu0 %v3093
      %3097 = vmatprep.subr.bf16.mxu0 0
      %3098 = vmatpush1.bf16.xpose.msra.mxu0 0
      %3099 = vmatprep.subr.bf16.mxu0 0
      %3100 = vmatpush1.bf16.xpose.msra.mxu0 0
      %3101 = vmatprep.subr.bf16.mxu0 0
      %3102 = vmatpush1.bf16.xpose.msra.mxu0 0
      %3103 = vmatprep.subr.bf16.mxu0 0
      %3104 = vmatpush1.bf16.xpose.msra.mxu0 0
      %3105 = vmatprep.subr.bf16.mxu0 0
      %3106 = vmatpush1.bf16.xpose.msra.mxu0 0
      %3107 = vmatprep.subr.bf16.mxu0 0
      %3108 = vmatpush1.bf16.xpose.msra.mxu0 0
      %3109 = vmatprep.subr.bf16.mxu0 0
      %3110 = vmatpush1.bf16.xpose.msra.mxu0 0
      %3111 = vmatprep.subr.bf16.mxu0 0
      %3112 = vmatpush1.bf16.xpose.msra.mxu0 0
      %3113 = vmatprep.subr.bf16.mxu0 0
      %3114 = vmatpush1.bf16.xpose.msra.mxu0 0
      %3115 = vmatprep.subr.bf16.mxu0 0
      %3116 = vmatpush1.bf16.xpose.msra.mxu0 0
      %3117 = vmatprep.subr.bf16.mxu0 0
      %3118 = vmatpush1.bf16.xpose.msra.mxu0 0
      %3119 = vmatprep.subr.bf16.mxu0 0
      %3120 = vmatpush1.bf16.xpose.msra.mxu0 0
      %3121 = vmatprep.subr.bf16.mxu0 0
      %3122 = vmatpush1.bf16.xpose.msra.mxu0 0
      %3123 = vmatprep.subr.bf16.mxu0 0
      %3124 = vmatpush1.bf16.xpose.msra.mxu0 0
      %3125 = vmatprep.subr.bf16.mxu0 0
      %3126 = vmatpush1.bf16.xpose.msra.mxu0 0
      %3127 = vmatprep.mubr.bf16.mxu0 0
      %3128 = vmatmul.mubr.bf16.gmra.mrb[0].mxu0 %v3090
      %v3129 = vpop.f32.mrb[0].mxu0
      %v3130 = vadd.f32 0.0, %v3129
      %v3131 = vpop.f32.mrb[0].mxu0
      %v3132 = vpop.f32.mrb[0].mxu0
      %v3133 = vpop.f32.mrb[0].mxu0
      %3134 = vdwg.mxu0
      %v3135 = vmul.f32 %v3130, 0.17677669
      %v3136 = vsel %vm1747, %v3135, -inf
      %3137 = vmax.xlane.f32.xlu0 %v3136
      %v3138 = vpop.xlane.xlu0 %3137
      %v3139 = vsub.f32 %v3135, %v3138
      %v3140 = vmul.f32 %v3139, 1.442695
      %v3141 = vpow.pop %v3140
      %v3142 = vsel %vm1747, %v3141, 0.0
      %3143 = vadd.xlane.f32.xlu0 %v3142
      %v3144 = vpop.xlane.xlu0 %3143
      %v3145 = vrcp.pop %v3144
      %v3146 = vmul.f32 %v3141, %v3145
      %v3147 = vpack.c.bf16 %v3146, %v3146
      %v3149 = vsel %vm1760, %v3147, 0
      %v3152 = vand.u32 %v3088, %v1767
      %3154 = vmatprep.subr.bf16.mxu0 0
      %3155 = vmatpush1.bf16.msra.mxu0 %v3152
      %3156 = vmatprep.subr.bf16.mxu0 0
      %3157 = vmatpush1.bf16.msra.mxu0 0
      %3158 = vmatprep.subr.bf16.mxu0 0
      %3159 = vmatpush1.bf16.msra.mxu0 0
      %3160 = vmatprep.subr.bf16.mxu0 0
      %3161 = vmatpush1.bf16.msra.mxu0 0
      %3162 = vmatprep.subr.bf16.mxu0 0
      %3163 = vmatpush1.bf16.msra.mxu0 0
      %3164 = vmatprep.subr.bf16.mxu0 0
      %3165 = vmatpush1.bf16.msra.mxu0 0
      %3166 = vmatprep.subr.bf16.mxu0 0
      %3167 = vmatpush1.bf16.msra.mxu0 0
      %3168 = vmatprep.subr.bf16.mxu0 0
      %3169 = vmatpush1.bf16.msra.mxu0 0
      %3170 = vmatprep.subr.bf16.mxu0 0
      %3171 = vmatpush1.bf16.msra.mxu0 0
      %3172 = vmatprep.subr.bf16.mxu0 0
      %3173 = vmatpush1.bf16.msra.mxu0 0
      %3174 = vmatprep.subr.bf16.mxu0 0
      %3175 = vmatpush1.bf16.msra.mxu0 0
      %3176 = vmatprep.subr.bf16.mxu0 0
      %3177 = vmatpush1.bf16.msra.mxu0 0
      %3178 = vmatprep.subr.bf16.mxu0 0
      %3179 = vmatpush1.bf16.msra.mxu0 0
      %3180 = vmatprep.subr.bf16.mxu0 0
      %3181 = vmatpush1.bf16.msra.mxu0 0
      %3182 = vmatprep.subr.bf16.mxu0 0
      %3183 = vmatpush1.bf16.msra.mxu0 0
      %3184 = vmatprep.subr.bf16.mxu0 0
      %3185 = vmatpush1.bf16.msra.mxu0 0
      %3186 = vmatprep.mubr.bf16.mxu0 0
      %3187 = vmatmul.mubr.bf16.gmra.mrb[0].mxu0 %v3149
      %v3188 = vpop.f32.mrb[0].mxu0
      %v3189 = vadd.f32 0.0, %v3188
      %v3190 = vpop.f32.mrb[0].mxu0
      %v3191 = vpop.f32.mrb[0].mxu0
      %v3192 = vpop.f32.mrb[0].mxu0
      %3193 = vdwg.mxu0
      %v3194 = vpack.c.bf16 %v3189, %v3189
      %3196 = vrot.lane.b32.xlu0 %v3086, 96
      %v3197 = vpop.permute.xlu0 %3196
      %3199 = vrot.lane.b32.xlu0 %v3087, 96
      %v3200 = vpop.permute.xlu0 %3199
      %v3202 = vsel %vm1699, %v3197, 0
      %v3205 = vsel %vm1699, %v3200, 0
      %3207 = vmatprep.subr.bf16.mxu0 0
      %3208 = vmatpush1.bf16.xpose.msra.mxu0 %v3205
      %3209 = vmatprep.subr.bf16.mxu0 0
      %3210 = vmatpush1.bf16.xpose.msra.mxu0 0
      %3211 = vmatprep.subr.bf16.mxu0 0
      %3212 = vmatpush1.bf16.xpose.msra.mxu0 0
      %3213 = vmatprep.subr.bf16.mxu0 0
      %3214 = vmatpush1.bf16.xpose.msra.mxu0 0
      %3215 = vmatprep.subr.bf16.mxu0 0
      %3216 = vmatpush1.bf16.xpose.msra.mxu0 0
      %3217 = vmatprep.subr.bf16.mxu0 0
      %3218 = vmatpush1.bf16.xpose.msra.mxu0 0
      %3219 = vmatprep.subr.bf16.mxu0 0
      %3220 = vmatpush1.bf16.xpose.msra.mxu0 0
      %3221 = vmatprep.subr.bf16.mxu0 0
      %3222 = vmatpush1.bf16.xpose.msra.mxu0 0
      %3223 = vmatprep.subr.bf16.mxu0 0
      %3224 = vmatpush1.bf16.xpose.msra.mxu0 0
      %3225 = vmatprep.subr.bf16.mxu0 0
      %3226 = vmatpush1.bf16.xpose.msra.mxu0 0
      %3227 = vmatprep.subr.bf16.mxu0 0
      %3228 = vmatpush1.bf16.xpose.msra.mxu0 0
      %3229 = vmatprep.subr.bf16.mxu0 0
      %3230 = vmatpush1.bf16.xpose.msra.mxu0 0
      %3231 = vmatprep.subr.bf16.mxu0 0
      %3232 = vmatpush1.bf16.xpose.msra.mxu0 0
      %3233 = vmatprep.subr.bf16.mxu0 0
      %3234 = vmatpush1.bf16.xpose.msra.mxu0 0
      %3235 = vmatprep.subr.bf16.mxu0 0
      %3236 = vmatpush1.bf16.xpose.msra.mxu0 0
      %3237 = vmatprep.subr.bf16.mxu0 0
      %3238 = vmatpush1.bf16.xpose.msra.mxu0 0
      %3239 = vmatprep.mubr.bf16.mxu0 0
      %3240 = vmatmul.mubr.bf16.gmra.mrb[0].mxu0 %v3202
      %v3241 = vpop.f32.mrb[0].mxu0
      %v3242 = vadd.f32 0.0, %v3241
      %v3243 = vpop.f32.mrb[0].mxu0
      %v3244 = vpop.f32.mrb[0].mxu0
      %v3245 = vpop.f32.mrb[0].mxu0
      %3246 = vdwg.mxu0
      %v3247 = vmul.f32 %v3242, 0.17677669
      %v3248 = vsel %vm1747, %v3247, -inf
      %3249 = vmax.xlane.f32.xlu0 %v3248
      %v3250 = vpop.xlane.xlu0 %3249
      %v3251 = vsub.f32 %v3247, %v3250
      %v3252 = vmul.f32 %v3251, 1.442695
      %v3253 = vpow.pop %v3252
      %v3254 = vsel %vm1747, %v3253, 0.0
      %3255 = vadd.xlane.f32.xlu0 %v3254
      %v3256 = vpop.xlane.xlu0 %3255
      %v3257 = vrcp.pop %v3256
      %v3258 = vmul.f32 %v3253, %v3257
      %v3259 = vpack.c.bf16 %v3258, %v3258
      %3261 = vrot.lane.b32.xlu0 %v3088, 96
      %v3262 = vpop.permute.xlu0 %3261
      %v3264 = vsel %vm1760, %v3259, 0
      %v3267 = vand.u32 %v3262, %v1767
      %3269 = vmatprep.subr.bf16.mxu0 0
      %3270 = vmatpush1.bf16.msra.mxu0 %v3267
      %3271 = vmatprep.subr.bf16.mxu0 0
      %3272 = vmatpush1.bf16.msra.mxu0 0
      %3273 = vmatprep.subr.bf16.mxu0 0
      %3274 = vmatpush1.bf16.msra.mxu0 0
      %3275 = vmatprep.subr.bf16.mxu0 0
      %3276 = vmatpush1.bf16.msra.mxu0 0
      %3277 = vmatprep.subr.bf16.mxu0 0
      %3278 = vmatpush1.bf16.msra.mxu0 0
      %3279 = vmatprep.subr.bf16.mxu0 0
      %3280 = vmatpush1.bf16.msra.mxu0 0
      %3281 = vmatprep.subr.bf16.mxu0 0
      %3282 = vmatpush1.bf16.msra.mxu0 0
      %3283 = vmatprep.subr.bf16.mxu0 0
      %3284 = vmatpush1.bf16.msra.mxu0 0
      %3285 = vmatprep.subr.bf16.mxu0 0
      %3286 = vmatpush1.bf16.msra.mxu0 0
      %3287 = vmatprep.subr.bf16.mxu0 0
      %3288 = vmatpush1.bf16.msra.mxu0 0
      %3289 = vmatprep.subr.bf16.mxu0 0
      %3290 = vmatpush1.bf16.msra.mxu0 0
      %3291 = vmatprep.subr.bf16.mxu0 0
      %3292 = vmatpush1.bf16.msra.mxu0 0
      %3293 = vmatprep.subr.bf16.mxu0 0
      %3294 = vmatpush1.bf16.msra.mxu0 0
      %3295 = vmatprep.subr.bf16.mxu0 0
      %3296 = vmatpush1.bf16.msra.mxu0 0
      %3297 = vmatprep.subr.bf16.mxu0 0
      %3298 = vmatpush1.bf16.msra.mxu0 0
      %3299 = vmatprep.subr.bf16.mxu0 0
      %3300 = vmatpush1.bf16.msra.mxu0 0
      %3301 = vmatprep.mubr.bf16.mxu0 0
      %3302 = vmatmul.mubr.bf16.gmra.mrb[0].mxu0 %v3264
      %v3303 = vpop.f32.mrb[0].mxu0
      %v3304 = vadd.f32 0.0, %v3303
      %v3305 = vpop.f32.mrb[0].mxu0
      %v3306 = vpop.f32.mrb[0].mxu0
      %v3307 = vpop.f32.mrb[0].mxu0
      %3308 = vdwg.mxu0
      %v3309 = vpack.c.bf16 %v3304, %v3304
      %v3311 = vsel %vm1699, %v3309, 0
      %3313 = vmatprep.subr.bf16.mxu0 0
      %3314 = vmatpush1.bf16.msra.mxu0 %v1935
      %3315 = vmatprep.subr.bf16.mxu0 0
      %3316 = vmatpush1.bf16.msra.mxu0 %v1936
      %3317 = vmatprep.subr.bf16.mxu0 0
      %3318 = vmatpush1.bf16.msra.mxu0 0
      %3319 = vmatprep.subr.bf16.mxu0 0
      %3320 = vmatpush1.bf16.msra.mxu0 0
      %3321 = vmatprep.subr.bf16.mxu0 0
      %3322 = vmatpush1.bf16.msra.mxu0 0
      %3323 = vmatprep.subr.bf16.mxu0 0
      %3324 = vmatpush1.bf16.msra.mxu0 0
      %3325 = vmatprep.subr.bf16.mxu0 0
      %3326 = vmatpush1.bf16.msra.mxu0 0
      %3327 = vmatprep.subr.bf16.mxu0 0
      %3328 = vmatpush1.bf16.msra.mxu0 0
      %3329 = vmatprep.subr.bf16.mxu0 0
      %3330 = vmatpush1.bf16.msra.mxu0 0
      %3331 = vmatprep.subr.bf16.mxu0 0
      %3332 = vmatpush1.bf16.msra.mxu0 0
      %3333 = vmatprep.subr.bf16.mxu0 0
      %3334 = vmatpush1.bf16.msra.mxu0 0
      %3335 = vmatprep.subr.bf16.mxu0 0
      %3336 = vmatpush1.bf16.msra.mxu0 0
      %3337 = vmatprep.subr.bf16.mxu0 0
      %3338 = vmatpush1.bf16.msra.mxu0 0
      %3339 = vmatprep.subr.bf16.mxu0 0
      %3340 = vmatpush1.bf16.msra.mxu0 0
      %3341 = vmatprep.subr.bf16.mxu0 0
      %3342 = vmatpush1.bf16.msra.mxu0 0
      %3343 = vmatprep.subr.bf16.mxu0 0
      %3344 = vmatpush1.bf16.msra.mxu0 0
      %3345 = vmatprep.mubr.bf16.mxu0 0
      %3346 = vmatmul.mubr.bf16.gmra.mrb[0].mxu0 %v3311
      %v3347 = vpop.f32.mrb[0].mxu0
      %v3348 = vadd.f32 0.0, %v3347
      %v3349 = vpop.f32.mrb[0].mxu0
      %v3350 = vpop.f32.mrb[0].mxu0
      %v3351 = vpop.f32.mrb[0].mxu0
      %3352 = vdwg.mxu0
      %v3354 = vsel %vm1699, %v3194, 0
      %3356 = vmatprep.subr.bf16.mxu0 0
      %3357 = vmatpush1.bf16.msra.mxu0 %v1990
      %3358 = vmatprep.subr.bf16.mxu0 0
      %3359 = vmatpush1.bf16.msra.mxu0 %v1991
      %3360 = vmatprep.subr.bf16.mxu0 0
      %3361 = vmatpush1.bf16.msra.mxu0 0
      %3362 = vmatprep.subr.bf16.mxu0 0
      %3363 = vmatpush1.bf16.msra.mxu0 0
      %3364 = vmatprep.subr.bf16.mxu0 0
      %3365 = vmatpush1.bf16.msra.mxu0 0
      %3366 = vmatprep.subr.bf16.mxu0 0
      %3367 = vmatpush1.bf16.msra.mxu0 0
      %3368 = vmatprep.subr.bf16.mxu0 0
      %3369 = vmatpush1.bf16.msra.mxu0 0
      %3370 = vmatprep.subr.bf16.mxu0 0
      %3371 = vmatpush1.bf16.msra.mxu0 0
      %3372 = vmatprep.subr.bf16.mxu0 0
      %3373 = vmatpush1.bf16.msra.mxu0 0
      %3374 = vmatprep.subr.bf16.mxu0 0
      %3375 = vmatpush1.bf16.msra.mxu0 0
      %3376 = vmatprep.subr.bf16.mxu0 0
      %3377 = vmatpush1.bf16.msra.mxu0 0
      %3378 = vmatprep.subr.bf16.mxu0 0
      %3379 = vmatpush1.bf16.msra.mxu0 0
      %3380 = vmatprep.subr.bf16.mxu0 0
      %3381 = vmatpush1.bf16.msra.mxu0 0
      %3382 = vmatprep.subr.bf16.mxu0 0
      %3383 = vmatpush1.bf16.msra.mxu0 0
      %3384 = vmatprep.subr.bf16.mxu0 0
      %3385 = vmatpush1.bf16.msra.mxu0 0
      %3386 = vmatprep.subr.bf16.mxu0 0
      %3387 = vmatpush1.bf16.msra.mxu0 0
      %3388 = vmatprep.mubr.bf16.mxu0 0
      %3389 = vmatmul.mubr.bf16.gmra.mrb[0].mxu0 %v3354
      %v3390 = vpop.f32.mrb[0].mxu0
      %v3391 = vadd.f32 %v3348, %v3390
      %v3392 = vpop.f32.mrb[0].mxu0
      %v3393 = vpop.f32.mrb[0].mxu0
      %v3394 = vpop.f32.mrb[0].mxu0
      %3395 = vdwg.mxu0
      %3396 = vrot.lane.b32.xlu0 %v3086, 64
      %v3397 = vpop.permute.xlu0 %3396
      %3398 = vrot.lane.b32.xlu0 %v3087, 64
      %v3399 = vpop.permute.xlu0 %3398
      %v3401 = vsel %vm1699, %v3397, 0
      %v3404 = vsel %vm1699, %v3399, 0
      %3406 = vmatprep.subr.bf16.mxu0 0
      %3407 = vmatpush1.bf16.xpose.msra.mxu0 %v3404
      %3408 = vmatprep.subr.bf16.mxu0 0
      %3409 = vmatpush1.bf16.xpose.msra.mxu0 0
      %3410 = vmatprep.subr.bf16.mxu0 0
      %3411 = vmatpush1.bf16.xpose.msra.mxu0 0
      %3412 = vmatprep.subr.bf16.mxu0 0
      %3413 = vmatpush1.bf16.xpose.msra.mxu0 0
      %3414 = vmatprep.subr.bf16.mxu0 0
      %3415 = vmatpush1.bf16.xpose.msra.mxu0 0
      %3416 = vmatprep.subr.bf16.mxu0 0
      %3417 = vmatpush1.bf16.xpose.msra.mxu0 0
      %3418 = vmatprep.subr.bf16.mxu0 0
      %3419 = vmatpush1.bf16.xpose.msra.mxu0 0
      %3420 = vmatprep.subr.bf16.mxu0 0
      %3421 = vmatpush1.bf16.xpose.msra.mxu0 0
      %3422 = vmatprep.subr.bf16.mxu0 0
      %3423 = vmatpush1.bf16.xpose.msra.mxu0 0
      %3424 = vmatprep.subr.bf16.mxu0 0
      %3425 = vmatpush1.bf16.xpose.msra.mxu0 0
      %3426 = vmatprep.subr.bf16.mxu0 0
      %3427 = vmatpush1.bf16.xpose.msra.mxu0 0
      %3428 = vmatprep.subr.bf16.mxu0 0
      %3429 = vmatpush1.bf16.xpose.msra.mxu0 0
      %3430 = vmatprep.subr.bf16.mxu0 0
      %3431 = vmatpush1.bf16.xpose.msra.mxu0 0
      %3432 = vmatprep.subr.bf16.mxu0 0
      %3433 = vmatpush1.bf16.xpose.msra.mxu0 0
      %3434 = vmatprep.subr.bf16.mxu0 0
      %3435 = vmatpush1.bf16.xpose.msra.mxu0 0
      %3436 = vmatprep.subr.bf16.mxu0 0
      %3437 = vmatpush1.bf16.xpose.msra.mxu0 0
      %3438 = vmatprep.mubr.bf16.mxu0 0
      %3439 = vmatmul.mubr.bf16.gmra.mrb[0].mxu0 %v3401
      %v3440 = vpop.f32.mrb[0].mxu0
      %v3441 = vadd.f32 0.0, %v3440
      %v3442 = vpop.f32.mrb[0].mxu0
      %v3443 = vpop.f32.mrb[0].mxu0
      %v3444 = vpop.f32.mrb[0].mxu0
      %3445 = vdwg.mxu0
      %v3446 = vmul.f32 %v3441, 0.17677669
      %v3447 = vsel %vm1747, %v3446, -inf
      %3448 = vmax.xlane.f32.xlu0 %v3447
      %v3449 = vpop.xlane.xlu0 %3448
      %v3450 = vsub.f32 %v3446, %v3449
      %v3451 = vmul.f32 %v3450, 1.442695
      %v3452 = vpow.pop %v3451
      %v3453 = vsel %vm1747, %v3452, 0.0
      %3454 = vadd.xlane.f32.xlu0 %v3453
      %v3455 = vpop.xlane.xlu0 %3454
      %v3456 = vrcp.pop %v3455
      %v3457 = vmul.f32 %v3452, %v3456
      %v3458 = vpack.c.bf16 %v3457, %v3457
      %3459 = vrot.lane.b32.xlu0 %v3088, 64
      %v3460 = vpop.permute.xlu0 %3459
      %v3462 = vsel %vm1760, %v3458, 0
      %v3465 = vand.u32 %v3460, %v1767
      %3467 = vmatprep.subr.bf16.mxu0 0
      %3468 = vmatpush1.bf16.msra.mxu0 %v3465
      %3469 = vmatprep.subr.bf16.mxu0 0
      %3470 = vmatpush1.bf16.msra.mxu0 0
      %3471 = vmatprep.subr.bf16.mxu0 0
      %3472 = vmatpush1.bf16.msra.mxu0 0
      %3473 = vmatprep.subr.bf16.mxu0 0
      %3474 = vmatpush1.bf16.msra.mxu0 0
      %3475 = vmatprep.subr.bf16.mxu0 0
      %3476 = vmatpush1.bf16.msra.mxu0 0
      %3477 = vmatprep.subr.bf16.mxu0 0
      %3478 = vmatpush1.bf16.msra.mxu0 0
      %3479 = vmatprep.subr.bf16.mxu0 0
      %3480 = vmatpush1.bf16.msra.mxu0 0
      %3481 = vmatprep.subr.bf16.mxu0 0
      %3482 = vmatpush1.bf16.msra.mxu0 0
      %3483 = vmatprep.subr.bf16.mxu0 0
      %3484 = vmatpush1.bf16.msra.mxu0 0
      %3485 = vmatprep.subr.bf16.mxu0 0
      %3486 = vmatpush1.bf16.msra.mxu0 0
      %3487 = vmatprep.subr.bf16.mxu0 0
      %3488 = vmatpush1.bf16.msra.mxu0 0
      %3489 = vmatprep.subr.bf16.mxu0 0
      %3490 = vmatpush1.bf16.msra.mxu0 0
      %3491 = vmatprep.subr.bf16.mxu0 0
      %3492 = vmatpush1.bf16.msra.mxu0 0
      %3493 = vmatprep.subr.bf16.mxu0 0
      %3494 = vmatpush1.bf16.msra.mxu0 0
      %3495 = vmatprep.subr.bf16.mxu0 0
      %3496 = vmatpush1.bf16.msra.mxu0 0
      %3497 = vmatprep.subr.bf16.mxu0 0
      %3498 = vmatpush1.bf16.msra.mxu0 0
      %3499 = vmatprep.mubr.bf16.mxu0 0
      %3500 = vmatmul.mubr.bf16.gmra.mrb[0].mxu0 %v3462
      %v3501 = vpop.f32.mrb[0].mxu0
      %v3502 = vadd.f32 0.0, %v3501
      %v3503 = vpop.f32.mrb[0].mxu0
      %v3504 = vpop.f32.mrb[0].mxu0
      %v3505 = vpop.f32.mrb[0].mxu0
      %3506 = vdwg.mxu0
      %v3507 = vpack.c.bf16 %v3502, %v3502
      %v3509 = vsel %vm1699, %v3507, 0
      %3511 = vmatprep.subr.bf16.mxu0 0
      %3512 = vmatpush1.bf16.msra.mxu0 %v2157
      %3513 = vmatprep.subr.bf16.mxu0 0
      %3514 = vmatpush1.bf16.msra.mxu0 %v2158
      %3515 = vmatprep.subr.bf16.mxu0 0
      %3516 = vmatpush1.bf16.msra.mxu0 0
      %3517 = vmatprep.subr.bf16.mxu0 0
      %3518 = vmatpush1.bf16.msra.mxu0 0
      %3519 = vmatprep.subr.bf16.mxu0 0
      %3520 = vmatpush1.bf16.msra.mxu0 0
      %3521 = vmatprep.subr.bf16.mxu0 0
      %3522 = vmatpush1.bf16.msra.mxu0 0
      %3523 = vmatprep.subr.bf16.mxu0 0
      %3524 = vmatpush1.bf16.msra.mxu0 0
      %3525 = vmatprep.subr.bf16.mxu0 0
      %3526 = vmatpush1.bf16.msra.mxu0 0
      %3527 = vmatprep.subr.bf16.mxu0 0
      %3528 = vmatpush1.bf16.msra.mxu0 0
      %3529 = vmatprep.subr.bf16.mxu0 0
      %3530 = vmatpush1.bf16.msra.mxu0 0
      %3531 = vmatprep.subr.bf16.mxu0 0
      %3532 = vmatpush1.bf16.msra.mxu0 0
      %3533 = vmatprep.subr.bf16.mxu0 0
      %3534 = vmatpush1.bf16.msra.mxu0 0
      %3535 = vmatprep.subr.bf16.mxu0 0
      %3536 = vmatpush1.bf16.msra.mxu0 0
      %3537 = vmatprep.subr.bf16.mxu0 0
      %3538 = vmatpush1.bf16.msra.mxu0 0
      %3539 = vmatprep.subr.bf16.mxu0 0
      %3540 = vmatpush1.bf16.msra.mxu0 0
      %3541 = vmatprep.subr.bf16.mxu0 0
      %3542 = vmatpush1.bf16.msra.mxu0 0
      %3543 = vmatprep.mubr.bf16.mxu0 0
      %3544 = vmatmul.mubr.bf16.gmra.mrb[0].mxu0 %v3509
      %v3545 = vpop.f32.mrb[0].mxu0
      %v3546 = vadd.f32 0.0, %v3545
      %v3547 = vpop.f32.mrb[0].mxu0
      %v3548 = vpop.f32.mrb[0].mxu0
      %v3549 = vpop.f32.mrb[0].mxu0
      %3550 = vdwg.mxu0
      %v3551 = vadd.f32 %v3391, %v3546
      %3552 = vrot.lane.b32.xlu0 %v3086, 32
      %v3553 = vpop.permute.xlu0 %3552
      %3554 = vrot.lane.b32.xlu0 %v3087, 32
      %v3555 = vpop.permute.xlu0 %3554
      %v3557 = vsel %vm1699, %v3553, 0
      %v3560 = vsel %vm1699, %v3555, 0
      %3562 = vmatprep.subr.bf16.mxu0 0
      %3563 = vmatpush1.bf16.xpose.msra.mxu0 %v3560
      %3564 = vmatprep.subr.bf16.mxu0 0
      %3565 = vmatpush1.bf16.xpose.msra.mxu0 0
      %3566 = vmatprep.subr.bf16.mxu0 0
      %3567 = vmatpush1.bf16.xpose.msra.mxu0 0
      %3568 = vmatprep.subr.bf16.mxu0 0
      %3569 = vmatpush1.bf16.xpose.msra.mxu0 0
      %3570 = vmatprep.subr.bf16.mxu0 0
      %3571 = vmatpush1.bf16.xpose.msra.mxu0 0
      %3572 = vmatprep.subr.bf16.mxu0 0
      %3573 = vmatpush1.bf16.xpose.msra.mxu0 0
      %3574 = vmatprep.subr.bf16.mxu0 0
      %3575 = vmatpush1.bf16.xpose.msra.mxu0 0
      %3576 = vmatprep.subr.bf16.mxu0 0
      %3577 = vmatpush1.bf16.xpose.msra.mxu0 0
      %3578 = vmatprep.subr.bf16.mxu0 0
      %3579 = vmatpush1.bf16.xpose.msra.mxu0 0
      %3580 = vmatprep.subr.bf16.mxu0 0
      %3581 = vmatpush1.bf16.xpose.msra.mxu0 0
      %3582 = vmatprep.subr.bf16.mxu0 0
      %3583 = vmatpush1.bf16.xpose.msra.mxu0 0
      %3584 = vmatprep.subr.bf16.mxu0 0
      %3585 = vmatpush1.bf16.xpose.msra.mxu0 0
      %3586 = vmatprep.subr.bf16.mxu0 0
      %3587 = vmatpush1.bf16.xpose.msra.mxu0 0
      %3588 = vmatprep.subr.bf16.mxu0 0
      %3589 = vmatpush1.bf16.xpose.msra.mxu0 0
      %3590 = vmatprep.subr.bf16.mxu0 0
      %3591 = vmatpush1.bf16.xpose.msra.mxu0 0
      %3592 = vmatprep.subr.bf16.mxu0 0
      %3593 = vmatpush1.bf16.xpose.msra.mxu0 0
      %3594 = vmatprep.mubr.bf16.mxu0 0
      %3595 = vmatmul.mubr.bf16.gmra.mrb[0].mxu0 %v3557
      %v3596 = vpop.f32.mrb[0].mxu0
      %v3597 = vadd.f32 0.0, %v3596
      %v3598 = vpop.f32.mrb[0].mxu0
      %v3599 = vpop.f32.mrb[0].mxu0
      %v3600 = vpop.f32.mrb[0].mxu0
      %3601 = vdwg.mxu0
      %v3602 = vmul.f32 %v3597, 0.17677669
      %v3603 = vsel %vm1747, %v3602, -inf
      %3604 = vmax.xlane.f32.xlu0 %v3603
      %v3605 = vpop.xlane.xlu0 %3604
      %v3606 = vsub.f32 %v3602, %v3605
      %v3607 = vmul.f32 %v3606, 1.442695
      %v3608 = vpow.pop %v3607
      %v3609 = vsel %vm1747, %v3608, 0.0
      %3610 = vadd.xlane.f32.xlu0 %v3609
      %v3611 = vpop.xlane.xlu0 %3610
      %v3612 = vrcp.pop %v3611
      %v3613 = vmul.f32 %v3608, %v3612
      %v3614 = vpack.c.bf16 %v3613, %v3613
      %3615 = vrot.lane.b32.xlu0 %v3088, 32
      %v3616 = vpop.permute.xlu0 %3615
      %v3618 = vsel %vm1760, %v3614, 0
      %v3621 = vand.u32 %v3616, %v1767
      %3623 = vmatprep.subr.bf16.mxu0 0
      %3624 = vmatpush1.bf16.msra.mxu0 %v3621
      %3625 = vmatprep.subr.bf16.mxu0 0
      %3626 = vmatpush1.bf16.msra.mxu0 0
      %3627 = vmatprep.subr.bf16.mxu0 0
      %3628 = vmatpush1.bf16.msra.mxu0 0
      %3629 = vmatprep.subr.bf16.mxu0 0
      %3630 = vmatpush1.bf16.msra.mxu0 0
      %3631 = vmatprep.subr.bf16.mxu0 0
      %3632 = vmatpush1.bf16.msra.mxu0 0
      %3633 = vmatprep.subr.bf16.mxu0 0
      %3634 = vmatpush1.bf16.msra.mxu0 0
      %3635 = vmatprep.subr.bf16.mxu0 0
      %3636 = vmatpush1.bf16.msra.mxu0 0
      %3637 = vmatprep.subr.bf16.mxu0 0
      %3638 = vmatpush1.bf16.msra.mxu0 0
      %3639 = vmatprep.subr.bf16.mxu0 0
      %3640 = vmatpush1.bf16.msra.mxu0 0
      %3641 = vmatprep.subr.bf16.mxu0 0
      %3642 = vmatpush1.bf16.msra.mxu0 0
      %3643 = vmatprep.subr.bf16.mxu0 0
      %3644 = vmatpush1.bf16.msra.mxu0 0
      %3645 = vmatprep.subr.bf16.mxu0 0
      %3646 = vmatpush1.bf16.msra.mxu0 0
      %3647 = vmatprep.subr.bf16.mxu0 0
      %3648 = vmatpush1.bf16.msra.mxu0 0
      %3649 = vmatprep.subr.bf16.mxu0 0
      %3650 = vmatpush1.bf16.msra.mxu0 0
      %3651 = vmatprep.subr.bf16.mxu0 0
      %3652 = vmatpush1.bf16.msra.mxu0 0
      %3653 = vmatprep.subr.bf16.mxu0 0
      %3654 = vmatpush1.bf16.msra.mxu0 0
      %3655 = vmatprep.mubr.bf16.mxu0 0
      %3656 = vmatmul.mubr.bf16.gmra.mrb[0].mxu0 %v3618
      %v3657 = vpop.f32.mrb[0].mxu0
      %v3658 = vadd.f32 0.0, %v3657
      %v3659 = vpop.f32.mrb[0].mxu0
      %v3660 = vpop.f32.mrb[0].mxu0
      %v3661 = vpop.f32.mrb[0].mxu0
      %3662 = vdwg.mxu0
      %v3663 = vpack.c.bf16 %v3658, %v3658
      %v3665 = vsel %vm1699, %v3663, 0
      %3667 = vmatprep.subr.bf16.mxu0 0
      %3668 = vmatpush1.bf16.msra.mxu0 %v2325
      %3669 = vmatprep.subr.bf16.mxu0 0
      %3670 = vmatpush1.bf16.msra.mxu0 %v2326
      %3671 = vmatprep.subr.bf16.mxu0 0
      %3672 = vmatpush1.bf16.msra.mxu0 0
      %3673 = vmatprep.subr.bf16.mxu0 0
      %3674 = vmatpush1.bf16.msra.mxu0 0
      %3675 = vmatprep.subr.bf16.mxu0 0
      %3676 = vmatpush1.bf16.msra.mxu0 0
      %3677 = vmatprep.subr.bf16.mxu0 0
      %3678 = vmatpush1.bf16.msra.mxu0 0
      %3679 = vmatprep.subr.bf16.mxu0 0
      %3680 = vmatpush1.bf16.msra.mxu0 0
      %3681 = vmatprep.subr.bf16.mxu0 0
      %3682 = vmatpush1.bf16.msra.mxu0 0
      %3683 = vmatprep.subr.bf16.mxu0 0
      %3684 = vmatpush1.bf16.msra.mxu0 0
      %3685 = vmatprep.subr.bf16.mxu0 0
      %3686 = vmatpush1.bf16.msra.mxu0 0
      %3687 = vmatprep.subr.bf16.mxu0 0
      %3688 = vmatpush1.bf16.msra.mxu0 0
      %3689 = vmatprep.subr.bf16.mxu0 0
      %3690 = vmatpush1.bf16.msra.mxu0 0
      %3691 = vmatprep.subr.bf16.mxu0 0
      %3692 = vmatpush1.bf16.msra.mxu0 0
      %3693 = vmatprep.subr.bf16.mxu0 0
      %3694 = vmatpush1.bf16.msra.mxu0 0
      %3695 = vmatprep.subr.bf16.mxu0 0
      %3696 = vmatpush1.bf16.msra.mxu0 0
      %3697 = vmatprep.subr.bf16.mxu0 0
      %3698 = vmatpush1.bf16.msra.mxu0 0
      %3699 = vmatprep.mubr.bf16.mxu0 0
      %3700 = vmatmul.mubr.bf16.gmra.mrb[0].mxu0 %v3665
      %v3701 = vpop.f32.mrb[0].mxu0
      %v3702 = vadd.f32 0.0, %v3701
      %v3703 = vpop.f32.mrb[0].mxu0
      %v3704 = vpop.f32.mrb[0].mxu0
      %v3705 = vpop.f32.mrb[0].mxu0
      %3706 = vdwg.mxu0
      %v3707 = vadd.f32 %v3551, %v3702
      %v3708 = vadd.f32 %v2988, %v3707
      %v3709 = vadd.f32 %v3708, %v2378
      %v3710 = vsel %vm1442, %v3709, 0.0
      %3711 = vadd.xlane.f32.xlu0 %v3710
      %v3712 = vpop.xlane.xlu0 %3711
      %v3713 = vmul.f32 %v3712, %v1029
      %v3714 = vsub.f32 %v3709, %v3713
      %v3715 = vmul.f32 %v3714, %v3714
      %v3716 = vsel %vm1442, %v3715, 0.0
      %3717 = vadd.xlane.f32.xlu0 %v3716
      %v3718 = vpop.xlane.xlu0 %3717
      %v3719 = vmul.f32 %v3718, %v1029
      %v3720 = vadd.f32 %v3719, 1e-05
      %v3721 = vrsqrt.pop %v3720
      %v3722 = vmul.f32 %v3714, %v3721
      %v3723 = vmul.f32 %v3722, %v2398
      %v3724 = vadd.f32 %v3723, %v2405
      %v3725 = vpack.c.bf16 %v3724, %v3724
      %3726 = vmatprep.subr.bf16.mxu0 %v2527
      %3727 = vmatpush1.bf16.msra.mxu0 %v2526
      %3728 = vmatprep.subr.bf16.mxu0 %v2531
      %3729 = vmatpush1.bf16.msra.mxu0 %v2530
      %3730 = vmatprep.subr.bf16.mxu0 %v2535
      %3731 = vmatpush1.bf16.msra.mxu0 %v2534
      %3732 = vmatprep.subr.bf16.mxu0 %v2539
      %3733 = vmatpush1.bf16.msra.mxu0 %v2538
      %3734 = vmatprep.subr.bf16.mxu0 %v2543
      %3735 = vmatpush1.bf16.msra.mxu0 %v2542
      %3736 = vmatprep.subr.bf16.mxu0 %v2547
      %3737 = vmatpush1.bf16.msra.mxu0 %v2546
      %3738 = vmatprep.subr.bf16.mxu0 %v2551
      %3739 = vmatpush1.bf16.msra.mxu0 %v2550
      %3740 = vmatprep.subr.bf16.mxu0 %v2555
      %3741 = vmatpush1.bf16.msra.mxu0 %v2554
      %3742 = vmatprep.subr.bf16.mxu0 0
      %3743 = vmatpush1.bf16.msra.mxu0 0
      %3744 = vmatprep.subr.bf16.mxu0 0
      %3745 = vmatpush1.bf16.msra.mxu0 0
      %3746 = vmatprep.subr.bf16.mxu0 0
      %3747 = vmatpush1.bf16.msra.mxu0 0
      %3748 = vmatprep.subr.bf16.mxu0 0
      %3749 = vmatpush1.bf16.msra.mxu0 0
      %3750 = vmatprep.subr.bf16.mxu0 0
      %3751 = vmatpush1.bf16.msra.mxu0 0
      %3752 = vmatprep.subr.bf16.mxu0 0
      %3753 = vmatpush1.bf16.msra.mxu0 0
      %3754 = vmatprep.subr.bf16.mxu0 0
      %3755 = vmatpush1.bf16.msra.mxu0 0
      %3756 = vmatprep.subr.bf16.mxu0 0
      %3757 = vmatpush1.bf16.msra.mxu0 0
      %3758 = vmatprep.mubr.bf16.mxu0 0
      %3759 = vmatmul.mubr.bf16.gmra.mrb[0].mxu0 %v3725
      %v3760 = vpop.f32.mrb[0].mxu0
      %v3761 = vadd.f32 %v2413, %v3760
      %v3762 = vpop.f32.mrb[0].mxu0
      %v3763 = vadd.f32 %v2417, %v3762
      %v3764 = vpop.f32.mrb[0].mxu0
      %v3765 = vpop.f32.mrb[0].mxu0
      %3766 = vdwg.mxu0
      %3767 = vmatprep.subr.bf16.mxu0 %v2529
      %3768 = vmatpush1.bf16.msra.mxu0 %v2528
      %3769 = vmatprep.subr.bf16.mxu0 %v2533
      %3770 = vmatpush1.bf16.msra.mxu0 %v2532
      %3771 = vmatprep.subr.bf16.mxu0 %v2537
      %3772 = vmatpush1.bf16.msra.mxu0 %v2536
      %3773 = vmatprep.subr.bf16.mxu0 %v2541
      %3774 = vmatpush1.bf16.msra.mxu0 %v2540
      %3775 = vmatprep.subr.bf16.mxu0 %v2545
      %3776 = vmatpush1.bf16.msra.mxu0 %v2544
      %3777 = vmatprep.subr.bf16.mxu0 %v2549
      %3778 = vmatpush1.bf16.msra.mxu0 %v2548
      %3779 = vmatprep.subr.bf16.mxu0 %v2553
      %3780 = vmatpush1.bf16.msra.mxu0 %v2552
      %3781 = vmatprep.subr.bf16.mxu0 %v2557
      %3782 = vmatpush1.bf16.msra.mxu0 %v2556
      %3783 = vmatprep.subr.bf16.mxu0 0
      %3784 = vmatpush1.bf16.msra.mxu0 0
      %3785 = vmatprep.subr.bf16.mxu0 0
      %3786 = vmatpush1.bf16.msra.mxu0 0
      %3787 = vmatprep.subr.bf16.mxu0 0
      %3788 = vmatpush1.bf16.msra.mxu0 0
      %3789 = vmatprep.subr.bf16.mxu0 0
      %3790 = vmatpush1.bf16.msra.mxu0 0
      %3791 = vmatprep.subr.bf16.mxu0 0
      %3792 = vmatpush1.bf16.msra.mxu0 0
      %3793 = vmatprep.subr.bf16.mxu0 0
      %3794 = vmatpush1.bf16.msra.mxu0 0
      %3795 = vmatprep.subr.bf16.mxu0 0
      %3796 = vmatpush1.bf16.msra.mxu0 0
      %3797 = vmatprep.subr.bf16.mxu0 0
      %3798 = vmatpush1.bf16.msra.mxu0 0
      %3799 = vmatprep.mubr.bf16.mxu0 0
      %3800 = vmatmul.mubr.bf16.gmra.mrb[0].mxu0 %v3725
      %v3801 = vpop.f32.mrb[0].mxu0
      %v3802 = vadd.f32 %v2421, %v3801
      %v3803 = vpop.f32.mrb[0].mxu0
      %v3804 = vadd.f32 %v2425, %v3803
      %v3805 = vpop.f32.mrb[0].mxu0
      %v3806 = vpop.f32.mrb[0].mxu0
      %3807 = vdwg.mxu0
      %v3808 = vmul.f32 %v3761, 1.702
      %v3809 = vmul.f32 %v3763, 1.702
      %v3810 = vmul.f32 %v3802, 1.702
      %v3811 = vmul.f32 %v3804, 1.702
      %v3812 = vxor.u32 %v3808, 2147483648
      %v3813 = vxor.u32 %v3809, 2147483648
      %v3814 = vxor.u32 %v3810, 2147483648
      %v3815 = vxor.u32 %v3811, 2147483648
      %v3816 = vmul.f32 %v3812, 1.442695
      %v3817 = vpow.pop %v3816
      %v3818 = vmul.f32 %v3813, 1.442695
      %v3819 = vpow.pop %v3818
      %v3820 = vmul.f32 %v3814, 1.442695
      %v3821 = vpow.pop %v3820
      %v3822 = vmul.f32 %v3815, 1.442695
      %v3823 = vpow.pop %v3822
      %v3824 = vadd.f32 %v3817, 1.0
      %v3825 = vadd.f32 %v3819, 1.0
      %v3826 = vadd.f32 %v3821, 1.0
      %v3827 = vadd.f32 %v3823, 1.0
      %v3828 = vrcp.pop %v3824
      %v3829 = vmul.f32 1.0, %v3828
      %v3830 = vrcp.pop %v3825
      %v3831 = vmul.f32 1.0, %v3830
      %v3832 = vrcp.pop %v3826
      %v3833 = vmul.f32 1.0, %v3832
      %v3834 = vrcp.pop %v3827
      %v3835 = vmul.f32 1.0, %v3834
      %v3836 = vmul.f32 %v3761, %v3829
      %v3837 = vmul.f32 %v3763, %v3831
      %v3838 = vmul.f32 %v3802, %v3833
      %v3839 = vmul.f32 %v3804, %v3835
      %v3840 = vpack.c.bf16 %v3836, %v3836
      %v3841 = vpack.c.bf16 %v3837, %v3837
      %v3842 = vpack.c.bf16 %v3838, %v3838
      %v3843 = vpack.c.bf16 %v3839, %v3839
      %3844 = vmatprep.subr.bf16.mxu0 0
      %3845 = vmatpush1.bf16.msra.mxu0 %v2842
      %3846 = vmatprep.subr.bf16.mxu0 0
      %3847 = vmatpush1.bf16.msra.mxu0 %v2843
      %3848 = vmatprep.subr.bf16.mxu0 0
      %3849 = vmatpush1.bf16.msra.mxu0 %v2844
      %3850 = vmatprep.subr.bf16.mxu0 0
      %3851 = vmatpush1.bf16.msra.mxu0 %v2845
      %3852 = vmatprep.subr.bf16.mxu0 0
      %3853 = vmatpush1.bf16.msra.mxu0 %v2846
      %3854 = vmatprep.subr.bf16.mxu0 0
      %3855 = vmatpush1.bf16.msra.mxu0 %v2847
      %3856 = vmatprep.subr.bf16.mxu0 0
      %3857 = vmatpush1.bf16.msra.mxu0 %v2848
      %3858 = vmatprep.subr.bf16.mxu0 0
      %3859 = vmatpush1.bf16.msra.mxu0 %v2849
      %3860 = vmatprep.subr.bf16.mxu0 0
      %3861 = vmatpush1.bf16.msra.mxu0 %v2850
      %3862 = vmatprep.subr.bf16.mxu0 0
      %3863 = vmatpush1.bf16.msra.mxu0 %v2851
      %3864 = vmatprep.subr.bf16.mxu0 0
      %3865 = vmatpush1.bf16.msra.mxu0 %v2852
      %3866 = vmatprep.subr.bf16.mxu0 0
      %3867 = vmatpush1.bf16.msra.mxu0 %v2853
      %3868 = vmatprep.subr.bf16.mxu0 0
      %3869 = vmatpush1.bf16.msra.mxu0 %v2854
      %3870 = vmatprep.subr.bf16.mxu0 0
      %3871 = vmatpush1.bf16.msra.mxu0 %v2855
      %3872 = vmatprep.subr.bf16.mxu0 0
      %3873 = vmatpush1.bf16.msra.mxu0 %v2856
      %3874 = vmatprep.subr.bf16.mxu0 0
      %3875 = vmatpush1.bf16.msra.mxu0 %v2857
      %3876 = vmatprep.mubr.bf16.mxu0 %v3841
      %3877 = vmatmul.mubr.bf16.gmra.mrb[0].mxu0 %v3840
      %v3878 = vpop.f32.mrb[0].mxu0
      %v3879 = vadd.f32 %v2712, %v3878
      %v3880 = vpop.f32.mrb[0].mxu0
      %v3881 = vpop.f32.mrb[0].mxu0
      %v3882 = vpop.f32.mrb[0].mxu0
      %3883 = vdwg.mxu0
      %3884 = vmatprep.subr.bf16.mxu0 0
      %3885 = vmatpush1.bf16.msra.mxu0 %v2858
      %3886 = vmatprep.subr.bf16.mxu0 0
      %3887 = vmatpush1.bf16.msra.mxu0 %v2859
      %3888 = vmatprep.subr.bf16.mxu0 0
      %3889 = vmatpush1.bf16.msra.mxu0 %v2860
      %3890 = vmatprep.subr.bf16.mxu0 0
      %3891 = vmatpush1.bf16.msra.mxu0 %v2861
      %3892 = vmatprep.subr.bf16.mxu0 0
      %3893 = vmatpush1.bf16.msra.mxu0 %v2862
      %3894 = vmatprep.subr.bf16.mxu0 0
      %3895 = vmatpush1.bf16.msra.mxu0 %v2863
      %3896 = vmatprep.subr.bf16.mxu0 0
      %3897 = vmatpush1.bf16.msra.mxu0 %v2864
      %3898 = vmatprep.subr.bf16.mxu0 0
      %3899 = vmatpush1.bf16.msra.mxu0 %v2865
      %3900 = vmatprep.subr.bf16.mxu0 0
      %3901 = vmatpush1.bf16.msra.mxu0 %v2866
      %3902 = vmatprep.subr.bf16.mxu0 0
      %3903 = vmatpush1.bf16.msra.mxu0 %v2867
      %3904 = vmatprep.subr.bf16.mxu0 0
      %3905 = vmatpush1.bf16.msra.mxu0 %v2868
      %3906 = vmatprep.subr.bf16.mxu0 0
      %3907 = vmatpush1.bf16.msra.mxu0 %v2869
      %3908 = vmatprep.subr.bf16.mxu0 0
      %3909 = vmatpush1.bf16.msra.mxu0 %v2870
      %3910 = vmatprep.subr.bf16.mxu0 0
      %3911 = vmatpush1.bf16.msra.mxu0 %v2871
      %3912 = vmatprep.subr.bf16.mxu0 0
      %3913 = vmatpush1.bf16.msra.mxu0 %v2872
      %3914 = vmatprep.subr.bf16.mxu0 0
      %3915 = vmatpush1.bf16.msra.mxu0 %v2873
      %3916 = vmatprep.mubr.bf16.mxu0 %v3843
      %3917 = vmatmul.mubr.bf16.gmra.mrb[0].mxu0 %v3842
      %v3918 = vpop.f32.mrb[0].mxu0
      %v3919 = vadd.f32 %v3879, %v3918
      %v3920 = vpop.f32.mrb[0].mxu0
      %v3921 = vpop.f32.mrb[0].mxu0
      %v3922 = vpop.f32.mrb[0].mxu0
      %3923 = vdwg.mxu0
      %v3924 = vadd.f32 %v3709, %v3919
      %3925 = vst [vmem:[%s1228] sm:$0x1f] %v3924
      %s3926 = scalar_lea.vmem %s952, 1
      %v3927 = vld [vmem:[%s3926] sm:$0x1]
      %s3928 = scalar_lea.vmem %s956, 1
      %v3929 = vld [vmem:[%s3928] sm:$0x1]
      %s3930 = scalar_lea.vmem %s961, 192
      %v3931 = vld [vmem:[%s3930] sm:$0xff]
      %v3932 = vld [vmem:[%s3930 + $0x8] sm:$0xf]
      %v3933 = vld [vmem:[%s3930 + $0xc] sm:$0xff]
      %v3934 = vld [vmem:[%s3930 + $0x14] sm:$0xf]
      %v3935 = vld [vmem:[%s3930 + $0x18] sm:$0xff]
      %v3936 = vld [vmem:[%s3930 + $0x20] sm:$0xf]
      %v3937 = vld [vmem:[%s3930 + $0x24] sm:$0xff]
      %v3938 = vld [vmem:[%s3930 + $0x2c] sm:$0xf]
      %v3939 = vld [vmem:[%s3930 + $0x30] sm:$0xff]
      %v3940 = vld [vmem:[%s3930 + $0x38] sm:$0xf]
      %v3941 = vld [vmem:[%s3930 + $0x3c] sm:$0xff]
      %v3942 = vld [vmem:[%s3930 + $0x44] sm:$0xf]
      %v3943 = vld [vmem:[%s3930 + $0x48] sm:$0xff]
      %v3944 = vld [vmem:[%s3930 + $0x50] sm:$0xf]
      %v3945 = vld [vmem:[%s3930 + $0x54] sm:$0xff]
      %v3946 = vld [vmem:[%s3930 + $0x5c] sm:$0xf]
      %v3947 = vld [vmem:[%s3930 + $0x60] sm:$0xff]
      %v3948 = vld [vmem:[%s3930 + $0x68] sm:$0xf]
      %v3949 = vld [vmem:[%s3930 + $0x6c] sm:$0xff]
      %v3950 = vld [vmem:[%s3930 + $0x74] sm:$0xf]
      %v3951 = vld [vmem:[%s3930 + $0x78] sm:$0xff]
      %v3952 = vld [vmem:[%s3930 + $0x80] sm:$0xf]
      %v3953 = vld [vmem:[%s3930 + $0x84] sm:$0xff]
      %v3954 = vld [vmem:[%s3930 + $0x8c] sm:$0xf]
      %v3955 = vld [vmem:[%s3930 + $0x90] sm:$0xff]
      %v3956 = vld [vmem:[%s3930 + $0x98] sm:$0xf]
      %v3957 = vld [vmem:[%s3930 + $0x9c] sm:$0xff]
      %v3958 = vld [vmem:[%s3930 + $0xa4] sm:$0xf]
      %v3959 = vld [vmem:[%s3930 + $0xa8] sm:$0xff]
      %v3960 = vld [vmem:[%s3930 + $0xb0] sm:$0xf]
      %v3961 = vld [vmem:[%s3930 + $0xb4] sm:$0xff]
      %v3962 = vld [vmem:[%s3930 + $0xbc] sm:$0xf]
      %s3963 = scalar_lea.vmem %s965, 3
      %v3964 = vld [vmem:[%s3963] sm:$0x7]
      %s3965 = scalar_lea.vmem %s970, 64
      %v3966 = vld [vmem:[%s3965] sm:$0xf]
      %v3967 = vld [vmem:[%s3965 + $0x4] sm:$0xf]
      %v3968 = vld [vmem:[%s3965 + $0x8] sm:$0xf]
      %v3969 = vld [vmem:[%s3965 + $0xc] sm:$0xf]
      %v3970 = vld [vmem:[%s3965 + $0x10] sm:$0xf]
      %v3971 = vld [vmem:[%s3965 + $0x14] sm:$0xf]
      %v3972 = vld [vmem:[%s3965 + $0x18] sm:$0xf]
      %v3973 = vld [vmem:[%s3965 + $0x1c] sm:$0xf]
      %v3974 = vld [vmem:[%s3965 + $0x20] sm:$0xf]
      %v3975 = vld [vmem:[%s3965 + $0x24] sm:$0xf]
      %v3976 = vld [vmem:[%s3965 + $0x28] sm:$0xf]
      %v3977 = vld [vmem:[%s3965 + $0x2c] sm:$0xf]
      %v3978 = vld [vmem:[%s3965 + $0x30] sm:$0xf]
      %v3979 = vld [vmem:[%s3965 + $0x34] sm:$0xf]
      %v3980 = vld [vmem:[%s3965 + $0x38] sm:$0xf]
      %v3981 = vld [vmem:[%s3965 + $0x3c] sm:$0xf]
      %s3982 = scalar_lea.vmem %s974, 1
      %v3983 = vld [vmem:[%s3982] sm:$0x1]
      %s3984 = scalar_lea.vmem %s978, 1
      %v3985 = vld [vmem:[%s3984] sm:$0x1]
      %s3986 = scalar_lea.vmem %s982, 1
      %v3987 = vld [vmem:[%s3986] sm:$0x1]
      %s3988 = scalar_lea.vmem %s987, 256
      %v3989 = vld [vmem:[%s3988] sm:$0xff]
      %v3990 = vld [vmem:[%s3988 + $0x8] sm:$0xff]
      %v3991 = vld [vmem:[%s3988 + $0x10] sm:$0xff]
      %v3992 = vld [vmem:[%s3988 + $0x18] sm:$0xff]
      %v3993 = vld [vmem:[%s3988 + $0x20] sm:$0xff]
      %v3994 = vld [vmem:[%s3988 + $0x28] sm:$0xff]
      %v3995 = vld [vmem:[%s3988 + $0x30] sm:$0xff]
      %v3996 = vld [vmem:[%s3988 + $0x38] sm:$0xff]
      %v3997 = vld [vmem:[%s3988 + $0x40] sm:$0xff]
      %v3998 = vld [vmem:[%s3988 + $0x48] sm:$0xff]
      %v3999 = vld [vmem:[%s3988 + $0x50] sm:$0xff]
      %v4000 = vld [vmem:[%s3988 + $0x58] sm:$0xff]
      %v4001 = vld [vmem:[%s3988 + $0x60] sm:$0xff]
      %v4002 = vld [vmem:[%s3988 + $0x68] sm:$0xff]
      %v4003 = vld [vmem:[%s3988 + $0x70] sm:$0xff]
      %v4004 = vld [vmem:[%s3988 + $0x78] sm:$0xff]
      %v4005 = vld [vmem:[%s3988 + $0x80] sm:$0xff]
      %v4006 = vld [vmem:[%s3988 + $0x88] sm:$0xff]
      %v4007 = vld [vmem:[%s3988 + $0x90] sm:$0xff]
      %v4008 = vld [vmem:[%s3988 + $0x98] sm:$0xff]
      %v4009 = vld [vmem:[%s3988 + $0xa0] sm:$0xff]
      %v4010 = vld [vmem:[%s3988 + $0xa8] sm:$0xff]
      %v4011 = vld [vmem:[%s3988 + $0xb0] sm:$0xff]
      %v4012 = vld [vmem:[%s3988 + $0xb8] sm:$0xff]
      %v4013 = vld [vmem:[%s3988 + $0xc0] sm:$0xff]
      %v4014 = vld [vmem:[%s3988 + $0xc8] sm:$0xff]
      %v4015 = vld [vmem:[%s3988 + $0xd0] sm:$0xff]
      %v4016 = vld [vmem:[%s3988 + $0xd8] sm:$0xff]
      %v4017 = vld [vmem:[%s3988 + $0xe0] sm:$0xff]
      %v4018 = vld [vmem:[%s3988 + $0xe8] sm:$0xff]
      %v4019 = vld [vmem:[%s3988 + $0xf0] sm:$0xff]
      %v4020 = vld [vmem:[%s3988 + $0xf8] sm:$0xff]
      %s4021 = scalar_lea.vmem %s991, 4
      %v4022 = vld [vmem:[%s4021] sm:$0xf]
      %s4023 = scalar_lea.vmem %s996, 256
      %v4024 = vld [vmem:[%s4023] sm:$0xf]
      %v4025 = vld [vmem:[%s4023 + $0x4] sm:$0xf]
      %v4026 = vld [vmem:[%s4023 + $0x8] sm:$0xf]
      %v4027 = vld [vmem:[%s4023 + $0xc] sm:$0xf]
      %v4028 = vld [vmem:[%s4023 + $0x10] sm:$0xf]
      %v4029 = vld [vmem:[%s4023 + $0x14] sm:$0xf]
      %v4030 = vld [vmem:[%s4023 + $0x18] sm:$0xf]
      %v4031 = vld [vmem:[%s4023 + $0x1c] sm:$0xf]
      %v4032 = vld [vmem:[%s4023 + $0x20] sm:$0xf]
      %v4033 = vld [vmem:[%s4023 + $0x24] sm:$0xf]
      %v4034 = vld [vmem:[%s4023 + $0x28] sm:$0xf]
      %v4035 = vld [vmem:[%s4023 + $0x2c] sm:$0xf]
      %v4036 = vld [vmem:[%s4023 + $0x30] sm:$0xf]
      %v4037 = vld [vmem:[%s4023 + $0x34] sm:$0xf]
      %v4038 = vld [vmem:[%s4023 + $0x38] sm:$0xf]
      %v4039 = vld [vmem:[%s4023 + $0x3c] sm:$0xf]
      %v4040 = vld [vmem:[%s4023 + $0x40] sm:$0xf]
      %v4041 = vld [vmem:[%s4023 + $0x44] sm:$0xf]
      %v4042 = vld [vmem:[%s4023 + $0x48] sm:$0xf]
      %v4043 = vld [vmem:[%s4023 + $0x4c] sm:$0xf]
      %v4044 = vld [vmem:[%s4023 + $0x50] sm:$0xf]
      %v4045 = vld [vmem:[%s4023 + $0x54] sm:$0xf]
      %v4046 = vld [vmem:[%s4023 + $0x58] sm:$0xf]
      %v4047 = vld [vmem:[%s4023 + $0x5c] sm:$0xf]
      %v4048 = vld [vmem:[%s4023 + $0x60] sm:$0xf]
      %v4049 = vld [vmem:[%s4023 + $0x64] sm:$0xf]
      %v4050 = vld [vmem:[%s4023 + $0x68] sm:$0xf]
      %v4051 = vld [vmem:[%s4023 + $0x6c] sm:$0xf]
      %v4052 = vld [vmem:[%s4023 + $0x70] sm:$0xf]
      %v4053 = vld [vmem:[%s4023 + $0x74] sm:$0xf]
      %v4054 = vld [vmem:[%s4023 + $0x78] sm:$0xf]
      %v4055 = vld [vmem:[%s4023 + $0x7c] sm:$0xf]
      %v4056 = vld [vmem:[%s4023 + $0x80] sm:$0xf]
      %v4057 = vld [vmem:[%s4023 + $0x84] sm:$0xf]
      %v4058 = vld [vmem:[%s4023 + $0x88] sm:$0xf]
      %v4059 = vld [vmem:[%s4023 + $0x8c] sm:$0xf]
      %v4060 = vld [vmem:[%s4023 + $0x90] sm:$0xf]
      %v4061 = vld [vmem:[%s4023 + $0x94] sm:$0xf]
      %v4062 = vld [vmem:[%s4023 + $0x98] sm:$0xf]
      %v4063 = vld [vmem:[%s4023 + $0x9c] sm:$0xf]
      %v4064 = vld [vmem:[%s4023 + $0xa0] sm:$0xf]
      %v4065 = vld [vmem:[%s4023 + $0xa4] sm:$0xf]
      %v4066 = vld [vmem:[%s4023 + $0xa8] sm:$0xf]
      %v4067 = vld [vmem:[%s4023 + $0xac] sm:$0xf]
      %v4068 = vld [vmem:[%s4023 + $0xb0] sm:$0xf]
      %v4069 = vld [vmem:[%s4023 + $0xb4] sm:$0xf]
      %v4070 = vld [vmem:[%s4023 + $0xb8] sm:$0xf]
      %v4071 = vld [vmem:[%s4023 + $0xbc] sm:$0xf]
      %v4072 = vld [vmem:[%s4023 + $0xc0] sm:$0xf]
      %v4073 = vld [vmem:[%s4023 + $0xc4] sm:$0xf]
      %v4074 = vld [vmem:[%s4023 + $0xc8] sm:$0xf]
      %v4075 = vld [vmem:[%s4023 + $0xcc] sm:$0xf]
      %v4076 = vld [vmem:[%s4023 + $0xd0] sm:$0xf]
      %v4077 = vld [vmem:[%s4023 + $0xd4] sm:$0xf]
      %v4078 = vld [vmem:[%s4023 + $0xd8] sm:$0xf]
      %v4079 = vld [vmem:[%s4023 + $0xdc] sm:$0xf]
      %v4080 = vld [vmem:[%s4023 + $0xe0] sm:$0xf]
      %v4081 = vld [vmem:[%s4023 + $0xe4] sm:$0xf]
      %v4082 = vld [vmem:[%s4023 + $0xe8] sm:$0xf]
      %v4083 = vld [vmem:[%s4023 + $0xec] sm:$0xf]
      %v4084 = vld [vmem:[%s4023 + $0xf0] sm:$0xf]
      %v4085 = vld [vmem:[%s4023 + $0xf4] sm:$0xf]
      %v4086 = vld [vmem:[%s4023 + $0xf8] sm:$0xf]
      %v4087 = vld [vmem:[%s4023 + $0xfc] sm:$0xf]
      %s4088 = scalar_lea.vmem %s1000, 1
      %v4089 = vld [vmem:[%s4088] sm:$0x1]
      %v4090 = vld [vmem:[#allocation2] sm:$0x1f]
      %v4091 = vsel %vm1442, %v4090, 0.0
      %4092 = vadd.xlane.f32.xlu0 %v4091
      %v4093 = vpop.xlane.xlu0 %4092
      %v4094 = vmul.f32 %v4093, %v1029
      %v4095 = vsub.f32 %v4090, %v4094
      %v4096 = vmul.f32 %v4095, %v4095
      %v4097 = vsel %vm1442, %v4096, 0.0
      %4098 = vadd.xlane.f32.xlu0 %v4097
      %v4099 = vpop.xlane.xlu0 %4098
      %v4100 = vmul.f32 %v4099, %v1029
      %v4101 = vadd.f32 %v4100, 1e-05
      %v4102 = vrsqrt.pop %v4101
      %v4103 = vmul.f32 %v4095, %v4102
      %v4105 = vlaneseq
      %v4106 = vshrl.u32 %v4105, 7
      %v4107 = vsub.s32 0, %v4106
      %v4108 = vrot.slane %v3927, %v4107
      %v4110 = vmul.f32 %v4103, %v4108
      %v4112 = vlaneseq
      %v4113 = vshrl.u32 %v4112, 7
      %v4114 = vsub.s32 0, %v4113
      %v4115 = vrot.slane %v3929, %v4114
      %v4117 = vadd.f32 %v4110, %v4115
      %v4118 = vpack.c.bf16 %v4117, %v4117
      %v4120 = vlaneseq
      %v4121 = vshrl.u32 %v4120, 7
      %v4122 = vsub.s32 0, %v4121
      %v4123 = vrot.slane %v3964, %v4122
      %v4124 = vlaneseq
      %v4125 = vshrl.u32 %v4124, 7
      %v4126 = vsub.s32 1, %v4125
      %v4127 = vrot.slane %v3964, %v4126
      %v4128 = vlaneseq
      %v4129 = vshrl.u32 %v4128, 7
      %v4130 = vsub.s32 2, %v4129
      %v4131 = vrot.slane %v3964, %v4130
      %v4167 = vunpack.c.l.b16 %v3931
      %v4168 = vunpack.c.h.b16 %v3931
      %v4169 = vunpack.c.l.b16 %v3932
      %v4170 = vunpack.c.l.b16 %v3933
      %v4171 = vunpack.c.h.b16 %v3933
      %v4172 = vunpack.c.l.b16 %v3934
      %v4173 = vunpack.c.l.b16 %v3935
      %v4174 = vunpack.c.h.b16 %v3935
      %v4175 = vunpack.c.l.b16 %v3936
      %v4176 = vunpack.c.l.b16 %v3937
      %v4177 = vunpack.c.h.b16 %v3937
      %v4178 = vunpack.c.l.b16 %v3938
      %v4179 = vunpack.c.l.b16 %v3939
      %v4180 = vunpack.c.h.b16 %v3939
      %v4181 = vunpack.c.l.b16 %v3940
      %v4182 = vunpack.c.l.b16 %v3941
      %v4183 = vunpack.c.h.b16 %v3941
      %v4184 = vunpack.c.l.b16 %v3942
      %v4185 = vunpack.c.l.b16 %v3943
      %v4186 = vunpack.c.h.b16 %v3943
      %v4187 = vunpack.c.l.b16 %v3944
      %v4188 = vunpack.c.l.b16 %v3945
      %v4189 = vunpack.c.h.b16 %v3945
      %v4190 = vunpack.c.l.b16 %v3946
      %v4191 = vunpack.c.l.b16 %v3947
      %v4192 = vunpack.c.h.b16 %v3947
      %v4193 = vunpack.c.l.b16 %v3948
      %v4194 = vunpack.c.l.b16 %v3949
      %v4195 = vunpack.c.h.b16 %v3949
      %v4196 = vunpack.c.l.b16 %v3950
      %v4197 = vunpack.c.l.b16 %v3951
      %v4198 = vunpack.c.h.b16 %v3951
      %v4199 = vunpack.c.l.b16 %v3952
      %v4200 = vunpack.c.l.b16 %v3953
      %v4201 = vunpack.c.h.b16 %v3953
      %v4202 = vunpack.c.l.b16 %v3954
      %v4203 = vunpack.c.l.b16 %v3955
      %v4204 = vunpack.c.h.b16 %v3955
      %v4205 = vunpack.c.l.b16 %v3956
      %v4206 = vunpack.c.l.b16 %v3957
      %v4207 = vunpack.c.h.b16 %v3957
      %v4208 = vunpack.c.l.b16 %v3958
      %v4209 = vunpack.c.l.b16 %v3959
      %v4210 = vunpack.c.h.b16 %v3959
      %v4211 = vunpack.c.l.b16 %v3960
      %v4212 = vunpack.c.l.b16 %v3961
      %v4213 = vunpack.c.h.b16 %v3961
      %v4214 = vunpack.c.l.b16 %v3962
      %v4215 = vpack.c.b16 %v4170, %v4167
      %v4216 = vpack.c.b16 %v4171, %v4168
      %v4217 = vpack.c.b16 %v4172, %v4169
      %v4218 = vpack.c.b16 %v4176, %v4173
      %v4219 = vpack.c.b16 %v4177, %v4174
      %v4220 = vpack.c.b16 %v4178, %v4175
      %v4221 = vpack.c.b16 %v4182, %v4179
      %v4222 = vpack.c.b16 %v4183, %v4180
      %v4223 = vpack.c.b16 %v4184, %v4181
      %v4224 = vpack.c.b16 %v4188, %v4185
      %v4225 = vpack.c.b16 %v4189, %v4186
      %v4226 = vpack.c.b16 %v4190, %v4187
      %v4227 = vpack.c.b16 %v4194, %v4191
      %v4228 = vpack.c.b16 %v4195, %v4192
      %v4229 = vpack.c.b16 %v4196, %v4193
      %v4230 = vpack.c.b16 %v4200, %v4197
      %v4231 = vpack.c.b16 %v4201, %v4198
      %v4232 = vpack.c.b16 %v4202, %v4199
      %v4233 = vpack.c.b16 %v4206, %v4203
      %v4234 = vpack.c.b16 %v4207, %v4204
      %v4235 = vpack.c.b16 %v4208, %v4205
      %v4236 = vpack.c.b16 %v4212, %v4209
      %v4237 = vpack.c.b16 %v4213, %v4210
      %v4238 = vpack.c.b16 %v4214, %v4211
      %4263 = vmatprep.subr.bf16.mxu0 %v4216
      %4264 = vmatpush1.bf16.msra.mxu0 %v4215
      %4265 = vmatprep.subr.bf16.mxu0 %v4219
      %4266 = vmatpush1.bf16.msra.mxu0 %v4218
      %4267 = vmatprep.subr.bf16.mxu0 %v4222
      %4268 = vmatpush1.bf16.msra.mxu0 %v4221
      %4269 = vmatprep.subr.bf16.mxu0 %v4225
      %4270 = vmatpush1.bf16.msra.mxu0 %v4224
      %4271 = vmatprep.subr.bf16.mxu0 %v4228
      %4272 = vmatpush1.bf16.msra.mxu0 %v4227
      %4273 = vmatprep.subr.bf16.mxu0 %v4231
      %4274 = vmatpush1.bf16.msra.mxu0 %v4230
      %4275 = vmatprep.subr.bf16.mxu0 %v4234
      %4276 = vmatpush1.bf16.msra.mxu0 %v4233
      %4277 = vmatprep.subr.bf16.mxu0 %v4237
      %4278 = vmatpush1.bf16.msra.mxu0 %v4236
      %4279 = vmatprep.subr.bf16.mxu0 0
      %4280 = vmatpush1.bf16.msra.mxu0 0
      %4281 = vmatprep.subr.bf16.mxu0 0
      %4282 = vmatpush1.bf16.msra.mxu0 0
      %4283 = vmatprep.subr.bf16.mxu0 0
      %4284 = vmatpush1.bf16.msra.mxu0 0
      %4285 = vmatprep.subr.bf16.mxu0 0
      %4286 = vmatpush1.bf16.msra.mxu0 0
      %4287 = vmatprep.subr.bf16.mxu0 0
      %4288 = vmatpush1.bf16.msra.mxu0 0
      %4289 = vmatprep.subr.bf16.mxu0 0
      %4290 = vmatpush1.bf16.msra.mxu0 0
      %4291 = vmatprep.subr.bf16.mxu0 0
      %4292 = vmatpush1.bf16.msra.mxu0 0
      %4293 = vmatprep.subr.bf16.mxu0 0
      %4294 = vmatpush1.bf16.msra.mxu0 0
      %4295 = vmatprep.mubr.bf16.mxu0 0
      %4296 = vmatmul.mubr.bf16.gmra.mrb[0].mxu0 %v4118
      %v4297 = vpop.f32.mrb[0].mxu0
      %v4298 = vadd.f32 %v4123, %v4297
      %v4299 = vpop.f32.mrb[0].mxu0
      %v4300 = vadd.f32 %v4127, %v4299
      %v4301 = vpop.f32.mrb[0].mxu0
      %v4302 = vpop.f32.mrb[0].mxu0
      %4303 = vdwg.mxu0
      %4304 = vmatprep.subr.bf16.mxu0 0
      %4305 = vmatpush1.bf16.msra.mxu0 %v4217
      %4306 = vmatprep.subr.bf16.mxu0 0
      %4307 = vmatpush1.bf16.msra.mxu0 %v4220
      %4308 = vmatprep.subr.bf16.mxu0 0
      %4309 = vmatpush1.bf16.msra.mxu0 %v4223
      %4310 = vmatprep.subr.bf16.mxu0 0
      %4311 = vmatpush1.bf16.msra.mxu0 %v4226
      %4312 = vmatprep.subr.bf16.mxu0 0
      %4313 = vmatpush1.bf16.msra.mxu0 %v4229
      %4314 = vmatprep.subr.bf16.mxu0 0
      %4315 = vmatpush1.bf16.msra.mxu0 %v4232
      %4316 = vmatprep.subr.bf16.mxu0 0
      %4317 = vmatpush1.bf16.msra.mxu0 %v4235
      %4318 = vmatprep.subr.bf16.mxu0 0
      %4319 = vmatpush1.bf16.msra.mxu0 %v4238
      %4320 = vmatprep.subr.bf16.mxu0 0
      %4321 = vmatpush1.bf16.msra.mxu0 0
      %4322 = vmatprep.subr.bf16.mxu0 0
      %4323 = vmatpush1.bf16.msra.mxu0 0
      %4324 = vmatprep.subr.bf16.mxu0 0
      %4325 = vmatpush1.bf16.msra.mxu0 0
      %4326 = vmatprep.subr.bf16.mxu0 0
      %4327 = vmatpush1.bf16.msra.mxu0 0
      %4328 = vmatprep.subr.bf16.mxu0 0
      %4329 = vmatpush1.bf16.msra.mxu0 0
      %4330 = vmatprep.subr.bf16.mxu0 0
      %4331 = vmatpush1.bf16.msra.mxu0 0
      %4332 = vmatprep.subr.bf16.mxu0 0
      %4333 = vmatpush1.bf16.msra.mxu0 0
      %4334 = vmatprep.subr.bf16.mxu0 0
      %4335 = vmatpush1.bf16.msra.mxu0 0
      %4336 = vmatprep.mubr.bf16.mxu0 0
      %4337 = vmatmul.mubr.bf16.gmra.mrb[0].mxu0 %v4118
      %v4338 = vpop.f32.mrb[0].mxu0
      %v4339 = vadd.f32 %v4131, %v4338
      %v4340 = vpop.f32.mrb[0].mxu0
      %v4341 = vpop.f32.mrb[0].mxu0
      %v4342 = vpop.f32.mrb[0].mxu0
      %4343 = vdwg.mxu0
      %v4344 = vpack.c.bf16 %v4298, %v4298
      %v4345 = vpack.c.bf16 %v4300, %v4300
      %v4346 = vpack.c.bf16 %v4339, %v4339
      %v4348 = vsel %vm1699, %v4344, 0
      %v4351 = vsel %vm1699, %v4345, 0
      %4353 = vmatprep.subr.bf16.mxu0 0
      %4354 = vmatpush1.bf16.xpose.msra.mxu0 %v4351
      %4355 = vmatprep.subr.bf16.mxu0 0
      %4356 = vmatpush1.bf16.xpose.msra.mxu0 0
      %4357 = vmatprep.subr.bf16.mxu0 0
      %4358 = vmatpush1.bf16.xpose.msra.mxu0 0
      %4359 = vmatprep.subr.bf16.mxu0 0
      %4360 = vmatpush1.bf16.xpose.msra.mxu0 0
      %4361 = vmatprep.subr.bf16.mxu0 0
      %4362 = vmatpush1.bf16.xpose.msra.mxu0 0
      %4363 = vmatprep.subr.bf16.mxu0 0
      %4364 = vmatpush1.bf16.xpose.msra.mxu0 0
      %4365 = vmatprep.subr.bf16.mxu0 0
      %4366 = vmatpush1.bf16.xpose.msra.mxu0 0
      %4367 = vmatprep.subr.bf16.mxu0 0
      %4368 = vmatpush1.bf16.xpose.msra.mxu0 0
      %4369 = vmatprep.subr.bf16.mxu0 0
      %4370 = vmatpush1.bf16.xpose.msra.mxu0 0
      %4371 = vmatprep.subr.bf16.mxu0 0
      %4372 = vmatpush1.bf16.xpose.msra.mxu0 0
      %4373 = vmatprep.subr.bf16.mxu0 0
      %4374 = vmatpush1.bf16.xpose.msra.mxu0 0
      %4375 = vmatprep.subr.bf16.mxu0 0
      %4376 = vmatpush1.bf16.xpose.msra.mxu0 0
      %4377 = vmatprep.subr.bf16.mxu0 0
      %4378 = vmatpush1.bf16.xpose.msra.mxu0 0
      %4379 = vmatprep.subr.bf16.mxu0 0
      %4380 = vmatpush1.bf16.xpose.msra.mxu0 0
      %4381 = vmatprep.subr.bf16.mxu0 0
      %4382 = vmatpush1.bf16.xpose.msra.mxu0 0
      %4383 = vmatprep.subr.bf16.mxu0 0
      %4384 = vmatpush1.bf16.xpose.msra.mxu0 0
      %4385 = vmatprep.mubr.bf16.mxu0 0
      %4386 = vmatmul.mubr.bf16.gmra.mrb[0].mxu0 %v4348
      %v4387 = vpop.f32.mrb[0].mxu0
      %v4388 = vadd.f32 0.0, %v4387
      %v4389 = vpop.f32.mrb[0].mxu0
      %v4390 = vpop.f32.mrb[0].mxu0
      %v4391 = vpop.f32.mrb[0].mxu0
      %4392 = vdwg.mxu0
      %v4393 = vmul.f32 %v4388, 0.17677669
      %v4394 = vsel %vm1747, %v4393, -inf
      %4395 = vmax.xlane.f32.xlu0 %v4394
      %v4396 = vpop.xlane.xlu0 %4395
      %v4397 = vsub.f32 %v4393, %v4396
      %v4398 = vmul.f32 %v4397, 1.442695
      %v4399 = vpow.pop %v4398
      %v4400 = vsel %vm1747, %v4399, 0.0
      %4401 = vadd.xlane.f32.xlu0 %v4400
      %v4402 = vpop.xlane.xlu0 %4401
      %v4403 = vrcp.pop %v4402
      %v4404 = vmul.f32 %v4399, %v4403
      %v4405 = vpack.c.bf16 %v4404, %v4404
      %v4407 = vsel %vm1760, %v4405, 0
      %v4410 = vand.u32 %v4346, %v1767
      %4412 = vmatprep.subr.bf16.mxu0 0
      %4413 = vmatpush1.bf16.msra.mxu0 %v4410
      %4414 = vmatprep.subr.bf16.mxu0 0
      %4415 = vmatpush1.bf16.msra.mxu0 0
      %4416 = vmatprep.subr.bf16.mxu0 0
      %4417 = vmatpush1.bf16.msra.mxu0 0
      %4418 = vmatprep.subr.bf16.mxu0 0
      %4419 = vmatpush1.bf16.msra.mxu0 0
      %4420 = vmatprep.subr.bf16.mxu0 0
      %4421 = vmatpush1.bf16.msra.mxu0 0
      %4422 = vmatprep.subr.bf16.mxu0 0
      %4423 = vmatpush1.bf16.msra.mxu0 0
      %4424 = vmatprep.subr.bf16.mxu0 0
      %4425 = vmatpush1.bf16.msra.mxu0 0
      %4426 = vmatprep.subr.bf16.mxu0 0
      %4427 = vmatpush1.bf16.msra.mxu0 0
      %4428 = vmatprep.subr.bf16.mxu0 0
      %4429 = vmatpush1.bf16.msra.mxu0 0
      %4430 = vmatprep.subr.bf16.mxu0 0
      %4431 = vmatpush1.bf16.msra.mxu0 0
      %4432 = vmatprep.subr.bf16.mxu0 0
      %4433 = vmatpush1.bf16.msra.mxu0 0
      %4434 = vmatprep.subr.bf16.mxu0 0
      %4435 = vmatpush1.bf16.msra.mxu0 0
      %4436 = vmatprep.subr.bf16.mxu0 0
      %4437 = vmatpush1.bf16.msra.mxu0 0
      %4438 = vmatprep.subr.bf16.mxu0 0
      %4439 = vmatpush1.bf16.msra.mxu0 0
      %4440 = vmatprep.subr.bf16.mxu0 0
      %4441 = vmatpush1.bf16.msra.mxu0 0
      %4442 = vmatprep.subr.bf16.mxu0 0
      %4443 = vmatpush1.bf16.msra.mxu0 0
      %4444 = vmatprep.mubr.bf16.mxu0 0
      %4445 = vmatmul.mubr.bf16.gmra.mrb[0].mxu0 %v4407
      %v4446 = vpop.f32.mrb[0].mxu0
      %v4447 = vadd.f32 0.0, %v4446
      %v4448 = vpop.f32.mrb[0].mxu0
      %v4449 = vpop.f32.mrb[0].mxu0
      %v4450 = vpop.f32.mrb[0].mxu0
      %4451 = vdwg.mxu0
      %v4452 = vpack.c.bf16 %v4447, %v4447
      %4454 = vrot.lane.b32.xlu0 %v4344, 96
      %v4455 = vpop.permute.xlu0 %4454
      %4457 = vrot.lane.b32.xlu0 %v4345, 96
      %v4458 = vpop.permute.xlu0 %4457
      %v4460 = vsel %vm1699, %v4455, 0
      %v4463 = vsel %vm1699, %v4458, 0
      %4465 = vmatprep.subr.bf16.mxu0 0
      %4466 = vmatpush1.bf16.xpose.msra.mxu0 %v4463
      %4467 = vmatprep.subr.bf16.mxu0 0
      %4468 = vmatpush1.bf16.xpose.msra.mxu0 0
      %4469 = vmatprep.subr.bf16.mxu0 0
      %4470 = vmatpush1.bf16.xpose.msra.mxu0 0
      %4471 = vmatprep.subr.bf16.mxu0 0
      %4472 = vmatpush1.bf16.xpose.msra.mxu0 0
      %4473 = vmatprep.subr.bf16.mxu0 0
      %4474 = vmatpush1.bf16.xpose.msra.mxu0 0
      %4475 = vmatprep.subr.bf16.mxu0 0
      %4476 = vmatpush1.bf16.xpose.msra.mxu0 0
      %4477 = vmatprep.subr.bf16.mxu0 0
      %4478 = vmatpush1.bf16.xpose.msra.mxu0 0
      %4479 = vmatprep.subr.bf16.mxu0 0
      %4480 = vmatpush1.bf16.xpose.msra.mxu0 0
      %4481 = vmatprep.subr.bf16.mxu0 0
      %4482 = vmatpush1.bf16.xpose.msra.mxu0 0
      %4483 = vmatprep.subr.bf16.mxu0 0
      %4484 = vmatpush1.bf16.xpose.msra.mxu0 0
      %4485 = vmatprep.subr.bf16.mxu0 0
      %4486 = vmatpush1.bf16.xpose.msra.mxu0 0
      %4487 = vmatprep.subr.bf16.mxu0 0
      %4488 = vmatpush1.bf16.xpose.msra.mxu0 0
      %4489 = vmatprep.subr.bf16.mxu0 0
      %4490 = vmatpush1.bf16.xpose.msra.mxu0 0
      %4491 = vmatprep.subr.bf16.mxu0 0
      %4492 = vmatpush1.bf16.xpose.msra.mxu0 0
      %4493 = vmatprep.subr.bf16.mxu0 0
      %4494 = vmatpush1.bf16.xpose.msra.mxu0 0
      %4495 = vmatprep.subr.bf16.mxu0 0
      %4496 = vmatpush1.bf16.xpose.msra.mxu0 0
      %4497 = vmatprep.mubr.bf16.mxu0 0
      %4498 = vmatmul.mubr.bf16.gmra.mrb[0].mxu0 %v4460
      %v4499 = vpop.f32.mrb[0].mxu0
      %v4500 = vadd.f32 0.0, %v4499
      %v4501 = vpop.f32.mrb[0].mxu0
      %v4502 = vpop.f32.mrb[0].mxu0
      %v4503 = vpop.f32.mrb[0].mxu0
      %4504 = vdwg.mxu0
      %v4505 = vmul.f32 %v4500, 0.17677669
      %v4506 = vsel %vm1747, %v4505, -inf
      %4507 = vmax.xlane.f32.xlu0 %v4506
      %v4508 = vpop.xlane.xlu0 %4507
      %v4509 = vsub.f32 %v4505, %v4508
      %v4510 = vmul.f32 %v4509, 1.442695
      %v4511 = vpow.pop %v4510
      %v4512 = vsel %vm1747, %v4511, 0.0
      %4513 = vadd.xlane.f32.xlu0 %v4512
      %v4514 = vpop.xlane.xlu0 %4513
      %v4515 = vrcp.pop %v4514
      %v4516 = vmul.f32 %v4511, %v4515
      %v4517 = vpack.c.bf16 %v4516, %v4516
      %4519 = vrot.lane.b32.xlu0 %v4346, 96
      %v4520 = vpop.permute.xlu0 %4519
      %v4522 = vsel %vm1760, %v4517, 0
      %v4525 = vand.u32 %v4520, %v1767
      %4527 = vmatprep.subr.bf16.mxu0 0
      %4528 = vmatpush1.bf16.msra.mxu0 %v4525
      %4529 = vmatprep.subr.bf16.mxu0 0
      %4530 = vmatpush1.bf16.msra.mxu0 0
      %4531 = vmatprep.subr.bf16.mxu0 0
      %4532 = vmatpush1.bf16.msra.mxu0 0
      %4533 = vmatprep.subr.bf16.mxu0 0
      %4534 = vmatpush1.bf16.msra.mxu0 0
      %4535 = vmatprep.subr.bf16.mxu0 0
      %4536 = vmatpush1.bf16.msra.mxu0 0
      %4537 = vmatprep.subr.bf16.mxu0 0
      %4538 = vmatpush1.bf16.msra.mxu0 0
      %4539 = vmatprep.subr.bf16.mxu0 0
      %4540 = vmatpush1.bf16.msra.mxu0 0
      %4541 = vmatprep.subr.bf16.mxu0 0
      %4542 = vmatpush1.bf16.msra.mxu0 0
      %4543 = vmatprep.subr.bf16.mxu0 0
      %4544 = vmatpush1.bf16.msra.mxu0 0
      %4545 = vmatprep.subr.bf16.mxu0 0
      %4546 = vmatpush1.bf16.msra.mxu0 0
      %4547 = vmatprep.subr.bf16.mxu0 0
      %4548 = vmatpush1.bf16.msra.mxu0 0
      %4549 = vmatprep.subr.bf16.mxu0 0
      %4550 = vmatpush1.bf16.msra.mxu0 0
      %4551 = vmatprep.subr.bf16.mxu0 0
      %4552 = vmatpush1.bf16.msra.mxu0 0
      %4553 = vmatprep.subr.bf16.mxu0 0
      %4554 = vmatpush1.bf16.msra.mxu0 0
      %4555 = vmatprep.subr.bf16.mxu0 0
      %4556 = vmatpush1.bf16.msra.mxu0 0
      %4557 = vmatprep.subr.bf16.mxu0 0
      %4558 = vmatpush1.bf16.msra.mxu0 0
      %4559 = vmatprep.mubr.bf16.mxu0 0
      %4560 = vmatmul.mubr.bf16.gmra.mrb[0].mxu0 %v4522
      %v4561 = vpop.f32.mrb[0].mxu0
      %v4562 = vadd.f32 0.0, %v4561
      %v4563 = vpop.f32.mrb[0].mxu0
      %v4564 = vpop.f32.mrb[0].mxu0
      %v4565 = vpop.f32.mrb[0].mxu0
      %4566 = vdwg.mxu0
      %v4567 = vpack.c.bf16 %v4562, %v4562
      %v4572 = vunpack.c.l.b16 %v3970
      %v4573 = vunpack.c.l.b16 %v3971
      %v4574 = vunpack.c.l.b16 %v3972
      %v4575 = vunpack.c.l.b16 %v3973
      %v4576 = vpack.c.b16 %v4573, %v4572
      %v4577 = vpack.c.b16 %v4575, %v4574
      %v4581 = vsel %vm1699, %v4567, 0
      %4583 = vmatprep.subr.bf16.mxu0 0
      %4584 = vmatpush1.bf16.msra.mxu0 %v4576
      %4585 = vmatprep.subr.bf16.mxu0 0
      %4586 = vmatpush1.bf16.msra.mxu0 %v4577
      %4587 = vmatprep.subr.bf16.mxu0 0
      %4588 = vmatpush1.bf16.msra.mxu0 0
      %4589 = vmatprep.subr.bf16.mxu0 0
      %4590 = vmatpush1.bf16.msra.mxu0 0
      %4591 = vmatprep.subr.bf16.mxu0 0
      %4592 = vmatpush1.bf16.msra.mxu0 0
      %4593 = vmatprep.subr.bf16.mxu0 0
      %4594 = vmatpush1.bf16.msra.mxu0 0
      %4595 = vmatprep.subr.bf16.mxu0 0
      %4596 = vmatpush1.bf16.msra.mxu0 0
      %4597 = vmatprep.subr.bf16.mxu0 0
      %4598 = vmatpush1.bf16.msra.mxu0 0
      %4599 = vmatprep.subr.bf16.mxu0 0
      %4600 = vmatpush1.bf16.msra.mxu0 0
      %4601 = vmatprep.subr.bf16.mxu0 0
      %4602 = vmatpush1.bf16.msra.mxu0 0
      %4603 = vmatprep.subr.bf16.mxu0 0
      %4604 = vmatpush1.bf16.msra.mxu0 0
      %4605 = vmatprep.subr.bf16.mxu0 0
      %4606 = vmatpush1.bf16.msra.mxu0 0
      %4607 = vmatprep.subr.bf16.mxu0 0
      %4608 = vmatpush1.bf16.msra.mxu0 0
      %4609 = vmatprep.subr.bf16.mxu0 0
      %4610 = vmatpush1.bf16.msra.mxu0 0
      %4611 = vmatprep.subr.bf16.mxu0 0
      %4612 = vmatpush1.bf16.msra.mxu0 0
      %4613 = vmatprep.subr.bf16.mxu0 0
      %4614 = vmatpush1.bf16.msra.mxu0 0
      %4615 = vmatprep.mubr.bf16.mxu0 0
      %4616 = vmatmul.mubr.bf16.gmra.mrb[0].mxu0 %v4581
      %v4617 = vpop.f32.mrb[0].mxu0
      %v4618 = vadd.f32 0.0, %v4617
      %v4619 = vpop.f32.mrb[0].mxu0
      %v4620 = vpop.f32.mrb[0].mxu0
      %v4621 = vpop.f32.mrb[0].mxu0
      %4622 = vdwg.mxu0
      %v4627 = vunpack.c.l.b16 %v3966
      %v4628 = vunpack.c.l.b16 %v3967
      %v4629 = vunpack.c.l.b16 %v3968
      %v4630 = vunpack.c.l.b16 %v3969
      %v4631 = vpack.c.b16 %v4628, %v4627
      %v4632 = vpack.c.b16 %v4630, %v4629
      %v4636 = vsel %vm1699, %v4452, 0
      %4638 = vmatprep.subr.bf16.mxu0 0
      %4639 = vmatpush1.bf16.msra.mxu0 %v4631
      %4640 = vmatprep.subr.bf16.mxu0 0
      %4641 = vmatpush1.bf16.msra.mxu0 %v4632
      %4642 = vmatprep.subr.bf16.mxu0 0
      %4643 = vmatpush1.bf16.msra.mxu0 0
      %4644 = vmatprep.subr.bf16.mxu0 0
      %4645 = vmatpush1.bf16.msra.mxu0 0
      %4646 = vmatprep.subr.bf16.mxu0 0
      %4647 = vmatpush1.bf16.msra.mxu0 0
      %4648 = vmatprep.subr.bf16.mxu0 0
      %4649 = vmatpush1.bf16.msra.mxu0 0
      %4650 = vmatprep.subr.bf16.mxu0 0
      %4651 = vmatpush1.bf16.msra.mxu0 0
      %4652 = vmatprep.subr.bf16.mxu0 0
      %4653 = vmatpush1.bf16.msra.mxu0 0
      %4654 = vmatprep.subr.bf16.mxu0 0
      %4655 = vmatpush1.bf16.msra.mxu0 0
      %4656 = vmatprep.subr.bf16.mxu0 0
      %4657 = vmatpush1.bf16.msra.mxu0 0
      %4658 = vmatprep.subr.bf16.mxu0 0
      %4659 = vmatpush1.bf16.msra.mxu0 0
      %4660 = vmatprep.subr.bf16.mxu0 0
      %4661 = vmatpush1.bf16.msra.mxu0 0
      %4662 = vmatprep.subr.bf16.mxu0 0
      %4663 = vmatpush1.bf16.msra.mxu0 0
      %4664 = vmatprep.subr.bf16.mxu0 0
      %4665 = vmatpush1.bf16.msra.mxu0 0
      %4666 = vmatprep.subr.bf16.mxu0 0
      %4667 = vmatpush1.bf16.msra.mxu0 0
      %4668 = vmatprep.subr.bf16.mxu0 0
      %4669 = vmatpush1.bf16.msra.mxu0 0
      %4670 = vmatprep.mubr.bf16.mxu0 0
      %4671 = vmatmul.mubr.bf16.gmra.mrb[0].mxu0 %v4636
      %v4672 = vpop.f32.mrb[0].mxu0
      %v4673 = vadd.f32 %v4618, %v4672
      %v4674 = vpop.f32.mrb[0].mxu0
      %v4675 = vpop.f32.mrb[0].mxu0
      %v4676 = vpop.f32.mrb[0].mxu0
      %4677 = vdwg.mxu0
      %4678 = vrot.lane.b32.xlu0 %v4344, 64
      %v4679 = vpop.permute.xlu0 %4678
      %4680 = vrot.lane.b32.xlu0 %v4345, 64
      %v4681 = vpop.permute.xlu0 %4680
      %v4683 = vsel %vm1699, %v4679, 0
      %v4686 = vsel %vm1699, %v4681, 0
      %4688 = vmatprep.subr.bf16.mxu0 0
      %4689 = vmatpush1.bf16.xpose.msra.mxu0 %v4686
      %4690 = vmatprep.subr.bf16.mxu0 0
      %4691 = vmatpush1.bf16.xpose.msra.mxu0 0
      %4692 = vmatprep.subr.bf16.mxu0 0
      %4693 = vmatpush1.bf16.xpose.msra.mxu0 0
      %4694 = vmatprep.subr.bf16.mxu0 0
      %4695 = vmatpush1.bf16.xpose.msra.mxu0 0
      %4696 = vmatprep.subr.bf16.mxu0 0
      %4697 = vmatpush1.bf16.xpose.msra.mxu0 0
      %4698 = vmatprep.subr.bf16.mxu0 0
      %4699 = vmatpush1.bf16.xpose.msra.mxu0 0
      %4700 = vmatprep.subr.bf16.mxu0 0
      %4701 = vmatpush1.bf16.xpose.msra.mxu0 0
      %4702 = vmatprep.subr.bf16.mxu0 0
      %4703 = vmatpush1.bf16.xpose.msra.mxu0 0
      %4704 = vmatprep.subr.bf16.mxu0 0
      %4705 = vmatpush1.bf16.xpose.msra.mxu0 0
      %4706 = vmatprep.subr.bf16.mxu0 0
      %4707 = vmatpush1.bf16.xpose.msra.mxu0 0
      %4708 = vmatprep.subr.bf16.mxu0 0
      %4709 = vmatpush1.bf16.xpose.msra.mxu0 0
      %4710 = vmatprep.subr.bf16.mxu0 0
      %4711 = vmatpush1.bf16.xpose.msra.mxu0 0
      %4712 = vmatprep.subr.bf16.mxu0 0
      %4713 = vmatpush1.bf16.xpose.msra.mxu0 0
      %4714 = vmatprep.subr.bf16.mxu0 0
      %4715 = vmatpush1.bf16.xpose.msra.mxu0 0
      %4716 = vmatprep.subr.bf16.mxu0 0
      %4717 = vmatpush1.bf16.xpose.msra.mxu0 0
      %4718 = vmatprep.subr.bf16.mxu0 0
      %4719 = vmatpush1.bf16.xpose.msra.mxu0 0
      %4720 = vmatprep.mubr.bf16.mxu0 0
      %4721 = vmatmul.mubr.bf16.gmra.mrb[0].mxu0 %v4683
      %v4722 = vpop.f32.mrb[0].mxu0
      %v4723 = vadd.f32 0.0, %v4722
      %v4724 = vpop.f32.mrb[0].mxu0
      %v4725 = vpop.f32.mrb[0].mxu0
      %v4726 = vpop.f32.mrb[0].mxu0
      %4727 = vdwg.mxu0
      %v4728 = vmul.f32 %v4723, 0.17677669
      %v4729 = vsel %vm1747, %v4728, -inf
      %4730 = vmax.xlane.f32.xlu0 %v4729
      %v4731 = vpop.xlane.xlu0 %4730
      %v4732 = vsub.f32 %v4728, %v4731
      %v4733 = vmul.f32 %v4732, 1.442695
      %v4734 = vpow.pop %v4733
      %v4735 = vsel %vm1747, %v4734, 0.0
      %4736 = vadd.xlane.f32.xlu0 %v4735
      %v4737 = vpop.xlane.xlu0 %4736
      %v4738 = vrcp.pop %v4737
      %v4739 = vmul.f32 %v4734, %v4738
      %v4740 = vpack.c.bf16 %v4739, %v4739
      %4741 = vrot.lane.b32.xlu0 %v4346, 64
      %v4742 = vpop.permute.xlu0 %4741
      %v4744 = vsel %vm1760, %v4740, 0
      %v4747 = vand.u32 %v4742, %v1767
      %4749 = vmatprep.subr.bf16.mxu0 0
      %4750 = vmatpush1.bf16.msra.mxu0 %v4747
      %4751 = vmatprep.subr.bf16.mxu0 0
      %4752 = vmatpush1.bf16.msra.mxu0 0
      %4753 = vmatprep.subr.bf16.mxu0 0
      %4754 = vmatpush1.bf16.msra.mxu0 0
      %4755 = vmatprep.subr.bf16.mxu0 0
      %4756 = vmatpush1.bf16.msra.mxu0 0
      %4757 = vmatprep.subr.bf16.mxu0 0
      %4758 = vmatpush1.bf16.msra.mxu0 0
      %4759 = vmatprep.subr.bf16.mxu0 0
      %4760 = vmatpush1.bf16.msra.mxu0 0
      %4761 = vmatprep.subr.bf16.mxu0 0
      %4762 = vmatpush1.bf16.msra.mxu0 0
      %4763 = vmatprep.subr.bf16.mxu0 0
      %4764 = vmatpush1.bf16.msra.mxu0 0
      %4765 = vmatprep.subr.bf16.mxu0 0
      %4766 = vmatpush1.bf16.msra.mxu0 0
      %4767 = vmatprep.subr.bf16.mxu0 0
      %4768 = vmatpush1.bf16.msra.mxu0 0
      %4769 = vmatprep.subr.bf16.mxu0 0
      %4770 = vmatpush1.bf16.msra.mxu0 0
      %4771 = vmatprep.subr.bf16.mxu0 0
      %4772 = vmatpush1.bf16.msra.mxu0 0
      %4773 = vmatprep.subr.bf16.mxu0 0
      %4774 = vmatpush1.bf16.msra.mxu0 0
      %4775 = vmatprep.subr.bf16.mxu0 0
      %4776 = vmatpush1.bf16.msra.mxu0 0
      %4777 = vmatprep.subr.bf16.mxu0 0
      %4778 = vmatpush1.bf16.msra.mxu0 0
      %4779 = vmatprep.subr.bf16.mxu0 0
      %4780 = vmatpush1.bf16.msra.mxu0 0
      %4781 = vmatprep.mubr.bf16.mxu0 0
      %4782 = vmatmul.mubr.bf16.gmra.mrb[0].mxu0 %v4744
      %v4783 = vpop.f32.mrb[0].mxu0
      %v4784 = vadd.f32 0.0, %v4783
      %v4785 = vpop.f32.mrb[0].mxu0
      %v4786 = vpop.f32.mrb[0].mxu0
      %v4787 = vpop.f32.mrb[0].mxu0
      %4788 = vdwg.mxu0
      %v4789 = vpack.c.bf16 %v4784, %v4784
      %v4794 = vunpack.c.l.b16 %v3974
      %v4795 = vunpack.c.l.b16 %v3975
      %v4796 = vunpack.c.l.b16 %v3976
      %v4797 = vunpack.c.l.b16 %v3977
      %v4798 = vpack.c.b16 %v4795, %v4794
      %v4799 = vpack.c.b16 %v4797, %v4796
      %v4803 = vsel %vm1699, %v4789, 0
      %4805 = vmatprep.subr.bf16.mxu0 0
      %4806 = vmatpush1.bf16.msra.mxu0 %v4798
      %4807 = vmatprep.subr.bf16.mxu0 0
      %4808 = vmatpush1.bf16.msra.mxu0 %v4799
      %4809 = vmatprep.subr.bf16.mxu0 0
      %4810 = vmatpush1.bf16.msra.mxu0 0
      %4811 = vmatprep.subr.bf16.mxu0 0
      %4812 = vmatpush1.bf16.msra.mxu0 0
      %4813 = vmatprep.subr.bf16.mxu0 0
      %4814 = vmatpush1.bf16.msra.mxu0 0
      %4815 = vmatprep.subr.bf16.mxu0 0
      %4816 = vmatpush1.bf16.msra.mxu0 0
      %4817 = vmatprep.subr.bf16.mxu0 0
      %4818 = vmatpush1.bf16.msra.mxu0 0
      %4819 = vmatprep.subr.bf16.mxu0 0
      %4820 = vmatpush1.bf16.msra.mxu0 0
      %4821 = vmatprep.subr.bf16.mxu0 0
      %4822 = vmatpush1.bf16.msra.mxu0 0
      %4823 = vmatprep.subr.bf16.mxu0 0
      %4824 = vmatpush1.bf16.msra.mxu0 0
      %4825 = vmatprep.subr.bf16.mxu0 0
      %4826 = vmatpush1.bf16.msra.mxu0 0
      %4827 = vmatprep.subr.bf16.mxu0 0
      %4828 = vmatpush1.bf16.msra.mxu0 0
      %4829 = vmatprep.subr.bf16.mxu0 0
      %4830 = vmatpush1.bf16.msra.mxu0 0
      %4831 = vmatprep.subr.bf16.mxu0 0
      %4832 = vmatpush1.bf16.msra.mxu0 0
      %4833 = vmatprep.subr.bf16.mxu0 0
      %4834 = vmatpush1.bf16.msra.mxu0 0
      %4835 = vmatprep.subr.bf16.mxu0 0
      %4836 = vmatpush1.bf16.msra.mxu0 0
      %4837 = vmatprep.mubr.bf16.mxu0 0
      %4838 = vmatmul.mubr.bf16.gmra.mrb[0].mxu0 %v4803
      %v4839 = vpop.f32.mrb[0].mxu0
      %v4840 = vadd.f32 0.0, %v4839
      %v4841 = vpop.f32.mrb[0].mxu0
      %v4842 = vpop.f32.mrb[0].mxu0
      %v4843 = vpop.f32.mrb[0].mxu0
      %4844 = vdwg.mxu0
      %v4845 = vadd.f32 %v4673, %v4840
      %4846 = vrot.lane.b32.xlu0 %v4344, 32
      %v4847 = vpop.permute.xlu0 %4846
      %4848 = vrot.lane.b32.xlu0 %v4345, 32
      %v4849 = vpop.permute.xlu0 %4848
      %v4851 = vsel %vm1699, %v4847, 0
      %v4854 = vsel %vm1699, %v4849, 0
      %4856 = vmatprep.subr.bf16.mxu0 0
      %4857 = vmatpush1.bf16.xpose.msra.mxu0 %v4854
      %4858 = vmatprep.subr.bf16.mxu0 0
      %4859 = vmatpush1.bf16.xpose.msra.mxu0 0
      %4860 = vmatprep.subr.bf16.mxu0 0
      %4861 = vmatpush1.bf16.xpose.msra.mxu0 0
      %4862 = vmatprep.subr.bf16.mxu0 0
      %4863 = vmatpush1.bf16.xpose.msra.mxu0 0
      %4864 = vmatprep.subr.bf16.mxu0 0
      %4865 = vmatpush1.bf16.xpose.msra.mxu0 0
      %4866 = vmatprep.subr.bf16.mxu0 0
      %4867 = vmatpush1.bf16.xpose.msra.mxu0 0
      %4868 = vmatprep.subr.bf16.mxu0 0
      %4869 = vmatpush1.bf16.xpose.msra.mxu0 0
      %4870 = vmatprep.subr.bf16.mxu0 0
      %4871 = vmatpush1.bf16.xpose.msra.mxu0 0
      %4872 = vmatprep.subr.bf16.mxu0 0
      %4873 = vmatpush1.bf16.xpose.msra.mxu0 0
      %4874 = vmatprep.subr.bf16.mxu0 0
      %4875 = vmatpush1.bf16.xpose.msra.mxu0 0
      %4876 = vmatprep.subr.bf16.mxu0 0
      %4877 = vmatpush1.bf16.xpose.msra.mxu0 0
      %4878 = vmatprep.subr.bf16.mxu0 0
      %4879 = vmatpush1.bf16.xpose.msra.mxu0 0
      %4880 = vmatprep.subr.bf16.mxu0 0
      %4881 = vmatpush1.bf16.xpose.msra.mxu0 0
      %4882 = vmatprep.subr.bf16.mxu0 0
      %4883 = vmatpush1.bf16.xpose.msra.mxu0 0
      %4884 = vmatprep.subr.bf16.mxu0 0
      %4885 = vmatpush1.bf16.xpose.msra.mxu0 0
      %4886 = vmatprep.subr.bf16.mxu0 0
      %4887 = vmatpush1.bf16.xpose.msra.mxu0 0
      %4888 = vmatprep.mubr.bf16.mxu0 0
      %4889 = vmatmul.mubr.bf16.gmra.mrb[0].mxu0 %v4851
      %v4890 = vpop.f32.mrb[0].mxu0
      %v4891 = vadd.f32 0.0, %v4890
      %v4892 = vpop.f32.mrb[0].mxu0
      %v4893 = vpop.f32.mrb[0].mxu0
      %v4894 = vpop.f32.mrb[0].mxu0
      %4895 = vdwg.mxu0
      %v4896 = vmul.f32 %v4891, 0.17677669
      %v4897 = vsel %vm1747, %v4896, -inf
      %4898 = vmax.xlane.f32.xlu0 %v4897
      %v4899 = vpop.xlane.xlu0 %4898
      %v4900 = vsub.f32 %v4896, %v4899
      %v4901 = vmul.f32 %v4900, 1.442695
      %v4902 = vpow.pop %v4901
      %v4903 = vsel %vm1747, %v4902, 0.0
      %4904 = vadd.xlane.f32.xlu0 %v4903
      %v4905 = vpop.xlane.xlu0 %4904
      %v4906 = vrcp.pop %v4905
      %v4907 = vmul.f32 %v4902, %v4906
      %v4908 = vpack.c.bf16 %v4907, %v4907
      %4909 = vrot.lane.b32.xlu0 %v4346, 32
      %v4910 = vpop.permute.xlu0 %4909
      %v4912 = vsel %vm1760, %v4908, 0
      %v4915 = vand.u32 %v4910, %v1767
      %4917 = vmatprep.subr.bf16.mxu0 0
      %4918 = vmatpush1.bf16.msra.mxu0 %v4915
      %4919 = vmatprep.subr.bf16.mxu0 0
      %4920 = vmatpush1.bf16.msra.mxu0 0
      %4921 = vmatprep.subr.bf16.mxu0 0
      %4922 = vmatpush1.bf16.msra.mxu0 0
      %4923 = vmatprep.subr.bf16.mxu0 0
      %4924 = vmatpush1.bf16.msra.mxu0 0
      %4925 = vmatprep.subr.bf16.mxu0 0
      %4926 = vmatpush1.bf16.msra.mxu0 0
      %4927 = vmatprep.subr.bf16.mxu0 0
      %4928 = vmatpush1.bf16.msra.mxu0 0
      %4929 = vmatprep.subr.bf16.mxu0 0
      %4930 = vmatpush1.bf16.msra.mxu0 0
      %4931 = vmatprep.subr.bf16.mxu0 0
      %4932 = vmatpush1.bf16.msra.mxu0 0
      %4933 = vmatprep.subr.bf16.mxu0 0
      %4934 = vmatpush1.bf16.msra.mxu0 0
      %4935 = vmatprep.subr.bf16.mxu0 0
      %4936 = vmatpush1.bf16.msra.mxu0 0
      %4937 = vmatprep.subr.bf16.mxu0 0
      %4938 = vmatpush1.bf16.msra.mxu0 0
      %4939 = vmatprep.subr.bf16.mxu0 0
      %4940 = vmatpush1.bf16.msra.mxu0 0
      %4941 = vmatprep.subr.bf16.mxu0 0
      %4942 = vmatpush1.bf16.msra.mxu0 0
      %4943 = vmatprep.subr.bf16.mxu0 0
      %4944 = vmatpush1.bf16.msra.mxu0 0
      %4945 = vmatprep.subr.bf16.mxu0 0
      %4946 = vmatpush1.bf16.msra.mxu0 0
      %4947 = vmatprep.subr.bf16.mxu0 0
      %4948 = vmatpush1.bf16.msra.mxu0 0
      %4949 = vmatprep.mubr.bf16.mxu0 0
      %4950 = vmatmul.mubr.bf16.gmra.mrb[0].mxu0 %v4912
      %v4951 = vpop.f32.mrb[0].mxu0
      %v4952 = vadd.f32 0.0, %v4951
      %v4953 = vpop.f32.mrb[0].mxu0
      %v4954 = vpop.f32.mrb[0].mxu0
      %v4955 = vpop.f32.mrb[0].mxu0
      %4956 = vdwg.mxu0
      %v4957 = vpack.c.bf16 %v4952, %v4952
      %v4962 = vunpack.c.l.b16 %v3978
      %v4963 = vunpack.c.l.b16 %v3979
      %v4964 = vunpack.c.l.b16 %v3980
      %v4965 = vunpack.c.l.b16 %v3981
      %v4966 = vpack.c.b16 %v4963, %v4962
      %v4967 = vpack.c.b16 %v4965, %v4964
      %v4971 = vsel %vm1699, %v4957, 0
      %4973 = vmatprep.subr.bf16.mxu0 0
      %4974 = vmatpush1.bf16.msra.mxu0 %v4966
      %4975 = vmatprep.subr.bf16.mxu0 0
      %4976 = vmatpush1.bf16.msra.mxu0 %v4967
      %4977 = vmatprep.subr.bf16.mxu0 0
      %4978 = vmatpush1.bf16.msra.mxu0 0
      %4979 = vmatprep.subr.bf16.mxu0 0
      %4980 = vmatpush1.bf16.msra.mxu0 0
      %4981 = vmatprep.subr.bf16.mxu0 0
      %4982 = vmatpush1.bf16.msra.mxu0 0
      %4983 = vmatprep.subr.bf16.mxu0 0
      %4984 = vmatpush1.bf16.msra.mxu0 0
      %4985 = vmatprep.subr.bf16.mxu0 0
      %4986 = vmatpush1.bf16.msra.mxu0 0
      %4987 = vmatprep.subr.bf16.mxu0 0
      %4988 = vmatpush1.bf16.msra.mxu0 0
      %4989 = vmatprep.subr.bf16.mxu0 0
      %4990 = vmatpush1.bf16.msra.mxu0 0
      %4991 = vmatprep.subr.bf16.mxu0 0
      %4992 = vmatpush1.bf16.msra.mxu0 0
      %4993 = vmatprep.subr.bf16.mxu0 0
      %4994 = vmatpush1.bf16.msra.mxu0 0
      %4995 = vmatprep.subr.bf16.mxu0 0
      %4996 = vmatpush1.bf16.msra.mxu0 0
      %4997 = vmatprep.subr.bf16.mxu0 0
      %4998 = vmatpush1.bf16.msra.mxu0 0
      %4999 = vmatprep.subr.bf16.mxu0 0
      %5000 = vmatpush1.bf16.msra.mxu0 0
      %5001 = vmatprep.subr.bf16.mxu0 0
      %5002 = vmatpush1.bf16.msra.mxu0 0
      %5003 = vmatprep.subr.bf16.mxu0 0
      %5004 = vmatpush1.bf16.msra.mxu0 0
      %5005 = vmatprep.mubr.bf16.mxu0 0
      %5006 = vmatmul.mubr.bf16.gmra.mrb[0].mxu0 %v4971
      %v5007 = vpop.f32.mrb[0].mxu0
      %v5008 = vadd.f32 0.0, %v5007
      %v5009 = vpop.f32.mrb[0].mxu0
      %v5010 = vpop.f32.mrb[0].mxu0
      %v5011 = vpop.f32.mrb[0].mxu0
      %5012 = vdwg.mxu0
      %v5013 = vadd.f32 %v4845, %v5008
      %v5014 = vadd.f32 %v4090, %v5013
      %v5016 = vlaneseq
      %v5017 = vshrl.u32 %v5016, 7
      %v5018 = vsub.s32 0, %v5017
      %v5019 = vrot.slane %v3983, %v5018
      %v5021 = vadd.f32 %v5014, %v5019
      %v5022 = vsel %vm1442, %v5021, 0.0
      %5023 = vadd.xlane.f32.xlu0 %v5022
      %v5024 = vpop.xlane.xlu0 %5023
      %v5025 = vmul.f32 %v5024, %v1029
      %v5026 = vsub.f32 %v5021, %v5025
      %v5027 = vmul.f32 %v5026, %v5026
      %v5028 = vsel %vm1442, %v5027, 0.0
      %5029 = vadd.xlane.f32.xlu0 %v5028
      %v5030 = vpop.xlane.xlu0 %5029
      %v5031 = vmul.f32 %v5030, %v1029
      %v5032 = vadd.f32 %v5031, 1e-05
      %v5033 = vrsqrt.pop %v5032
      %v5034 = vmul.f32 %v5026, %v5033
      %v5036 = vlaneseq
      %v5037 = vshrl.u32 %v5036, 7
      %v5038 = vsub.s32 0, %v5037
      %v5039 = vrot.slane %v3985, %v5038
      %v5041 = vmul.f32 %v5034, %v5039
      %v5043 = vlaneseq
      %v5044 = vshrl.u32 %v5043, 7
      %v5045 = vsub.s32 0, %v5044
      %v5046 = vrot.slane %v3987, %v5045
      %v5048 = vadd.f32 %v5041, %v5046
      %v5049 = vpack.c.bf16 %v5048, %v5048
      %v5051 = vlaneseq
      %v5052 = vshrl.u32 %v5051, 7
      %v5053 = vsub.s32 0, %v5052
      %v5054 = vrot.slane %v4022, %v5053
      %v5055 = vlaneseq
      %v5056 = vshrl.u32 %v5055, 7
      %v5057 = vsub.s32 1, %v5056
      %v5058 = vrot.slane %v4022, %v5057
      %v5059 = vlaneseq
      %v5060 = vshrl.u32 %v5059, 7
      %v5061 = vsub.s32 2, %v5060
      %v5062 = vrot.slane %v4022, %v5061
      %v5063 = vlaneseq
      %v5064 = vshrl.u32 %v5063, 7
      %v5065 = vsub.s32 3, %v5064
      %v5066 = vrot.slane %v4022, %v5065
      %v5103 = vunpack.c.l.b16 %v3989
      %v5104 = vunpack.c.h.b16 %v3989
      %v5105 = vunpack.c.l.b16 %v3990
      %v5106 = vunpack.c.h.b16 %v3990
      %v5107 = vunpack.c.l.b16 %v3991
      %v5108 = vunpack.c.h.b16 %v3991
      %v5109 = vunpack.c.l.b16 %v3992
      %v5110 = vunpack.c.h.b16 %v3992
      %v5111 = vunpack.c.l.b16 %v3993
      %v5112 = vunpack.c.h.b16 %v3993
      %v5113 = vunpack.c.l.b16 %v3994
      %v5114 = vunpack.c.h.b16 %v3994
      %v5115 = vunpack.c.l.b16 %v3995
      %v5116 = vunpack.c.h.b16 %v3995
      %v5117 = vunpack.c.l.b16 %v3996
      %v5118 = vunpack.c.h.b16 %v3996
      %v5119 = vunpack.c.l.b16 %v3997
      %v5120 = vunpack.c.h.b16 %v3997
      %v5121 = vunpack.c.l.b16 %v3998
      %v5122 = vunpack.c.h.b16 %v3998
      %v5123 = vunpack.c.l.b16 %v3999
      %v5124 = vunpack.c.h.b16 %v3999
      %v5125 = vunpack.c.l.b16 %v4000
      %v5126 = vunpack.c.h.b16 %v4000
      %v5127 = vunpack.c.l.b16 %v4001
      %v5128 = vunpack.c.h.b16 %v4001
      %v5129 = vunpack.c.l.b16 %v4002
      %v5130 = vunpack.c.h.b16 %v4002
      %v5131 = vunpack.c.l.b16 %v4003
      %v5132 = vunpack.c.h.b16 %v4003
      %v5133 = vunpack.c.l.b16 %v4004
      %v5134 = vunpack.c.h.b16 %v4004
      %v5135 = vunpack.c.l.b16 %v4005
      %v5136 = vunpack.c.h.b16 %v4005
      %v5137 = vunpack.c.l.b16 %v4006
      %v5138 = vunpack.c.h.b16 %v4006
      %v5139 = vunpack.c.l.b16 %v4007
      %v5140 = vunpack.c.h.b16 %v4007
      %v5141 = vunpack.c.l.b16 %v4008
      %v5142 = vunpack.c.h.b16 %v4008
      %v5143 = vunpack.c.l.b16 %v4009
      %v5144 = vunpack.c.h.b16 %v4009
      %v5145 = vunpack.c.l.b16 %v4010
      %v5146 = vunpack.c.h.b16 %v4010
      %v5147 = vunpack.c.l.b16 %v4011
      %v5148 = vunpack.c.h.b16 %v4011
      %v5149 = vunpack.c.l.b16 %v4012
      %v5150 = vunpack.c.h.b16 %v4012
      %v5151 = vunpack.c.l.b16 %v4013
      %v5152 = vunpack.c.h.b16 %v4013
      %v5153 = vunpack.c.l.b16 %v4014
      %v5154 = vunpack.c.h.b16 %v4014
      %v5155 = vunpack.c.l.b16 %v4015
      %v5156 = vunpack.c.h.b16 %v4015
      %v5157 = vunpack.c.l.b16 %v4016
      %v5158 = vunpack.c.h.b16 %v4016
      %v5159 = vunpack.c.l.b16 %v4017
      %v5160 = vunpack.c.h.b16 %v4017
      %v5161 = vunpack.c.l.b16 %v4018
      %v5162 = vunpack.c.h.b16 %v4018
      %v5163 = vunpack.c.l.b16 %v4019
      %v5164 = vunpack.c.h.b16 %v4019
      %v5165 = vunpack.c.l.b16 %v4020
      %v5166 = vunpack.c.h.b16 %v4020
      %v5167 = vpack.c.b16 %v5107, %v5103
      %v5168 = vpack.c.b16 %v5108, %v5104
      %v5169 = vpack.c.b16 %v5109, %v5105
      %v5170 = vpack.c.b16 %v5110, %v5106
      %v5171 = vpack.c.b16 %v5115, %v5111
      %v5172 = vpack.c.b16 %v5116, %v5112
      %v5173 = vpack.c.b16 %v5117, %v5113
      %v5174 = vpack.c.b16 %v5118, %v5114
      %v5175 = vpack.c.b16 %v5123, %v5119
      %v5176 = vpack.c.b16 %v5124, %v5120
      %v5177 = vpack.c.b16 %v5125, %v5121
      %v5178 = vpack.c.b16 %v5126, %v5122
      %v5179 = vpack.c.b16 %v5131, %v5127
      %v5180 = vpack.c.b16 %v5132, %v5128
      %v5181 = vpack.c.b16 %v5133, %v5129
      %v5182 = vpack.c.b16 %v5134, %v5130
      %v5183 = vpack.c.b16 %v5139, %v5135
      %v5184 = vpack.c.b16 %v5140, %v5136
      %v5185 = vpack.c.b16 %v5141, %v5137
      %v5186 = vpack.c.b16 %v5142, %v5138
      %v5187 = vpack.c.b16 %v5147, %v5143
      %v5188 = vpack.c.b16 %v5148, %v5144
      %v5189 = vpack.c.b16 %v5149, %v5145
      %v5190 = vpack.c.b16 %v5150, %v5146
      %v5191 = vpack.c.b16 %v5155, %v5151
      %v5192 = vpack.c.b16 %v5156, %v5152
      %v5193 = vpack.c.b16 %v5157, %v5153
      %v5194 = vpack.c.b16 %v5158, %v5154
      %v5195 = vpack.c.b16 %v5163, %v5159
      %v5196 = vpack.c.b16 %v5164, %v5160
      %v5197 = vpack.c.b16 %v5165, %v5161
      %v5198 = vpack.c.b16 %v5166, %v5162
      %5231 = vmatprep.subr.bf16.mxu0 %v5168
      %5232 = vmatpush1.bf16.msra.mxu0 %v5167
      %5233 = vmatprep.subr.bf16.mxu0 %v5172
      %5234 = vmatpush1.bf16.msra.mxu0 %v5171
      %5235 = vmatprep.subr.bf16.mxu0 %v5176
      %5236 = vmatpush1.bf16.msra.mxu0 %v5175
      %5237 = vmatprep.subr.bf16.mxu0 %v5180
      %5238 = vmatpush1.bf16.msra.mxu0 %v5179
      %5239 = vmatprep.subr.bf16.mxu0 %v5184
      %5240 = vmatpush1.bf16.msra.mxu0 %v5183
      %5241 = vmatprep.subr.bf16.mxu0 %v5188
      %5242 = vmatpush1.bf16.msra.mxu0 %v5187
      %5243 = vmatprep.subr.bf16.mxu0 %v5192
      %5244 = vmatpush1.bf16.msra.mxu0 %v5191
      %5245 = vmatprep.subr.bf16.mxu0 %v5196
      %5246 = vmatpush1.bf16.msra.mxu0 %v5195
      %5247 = vmatprep.subr.bf16.mxu0 0
      %5248 = vmatpush1.bf16.msra.mxu0 0
      %5249 = vmatprep.subr.bf16.mxu0 0
      %5250 = vmatpush1.bf16.msra.mxu0 0
      %5251 = vmatprep.subr.bf16.mxu0 0
      %5252 = vmatpush1.bf16.msra.mxu0 0
      %5253 = vmatprep.subr.bf16.mxu0 0
      %5254 = vmatpush1.bf16.msra.mxu0 0
      %5255 = vmatprep.subr.bf16.mxu0 0
      %5256 = vmatpush1.bf16.msra.mxu0 0
      %5257 = vmatprep.subr.bf16.mxu0 0
      %5258 = vmatpush1.bf16.msra.mxu0 0
      %5259 = vmatprep.subr.bf16.mxu0 0
      %5260 = vmatpush1.bf16.msra.mxu0 0
      %5261 = vmatprep.subr.bf16.mxu0 0
      %5262 = vmatpush1.bf16.msra.mxu0 0
      %5263 = vmatprep.mubr.bf16.mxu0 0
      %5264 = vmatmul.mubr.bf16.gmra.mrb[0].mxu0 %v5049
      %v5265 = vpop.f32.mrb[0].mxu0
      %v5266 = vadd.f32 %v5054, %v5265
      %v5267 = vpop.f32.mrb[0].mxu0
      %v5268 = vadd.f32 %v5058, %v5267
      %v5269 = vpop.f32.mrb[0].mxu0
      %v5270 = vpop.f32.mrb[0].mxu0
      %5271 = vdwg.mxu0
      %5272 = vmatprep.subr.bf16.mxu0 %v5170
      %5273 = vmatpush1.bf16.msra.mxu0 %v5169
      %5274 = vmatprep.subr.bf16.mxu0 %v5174
      %5275 = vmatpush1.bf16.msra.mxu0 %v5173
      %5276 = vmatprep.subr.bf16.mxu0 %v5178
      %5277 = vmatpush1.bf16.msra.mxu0 %v5177
      %5278 = vmatprep.subr.bf16.mxu0 %v5182
      %5279 = vmatpush1.bf16.msra.mxu0 %v5181
      %5280 = vmatprep.subr.bf16.mxu0 %v5186
      %5281 = vmatpush1.bf16.msra.mxu0 %v5185
      %5282 = vmatprep.subr.bf16.mxu0 %v5190
      %5283 = vmatpush1.bf16.msra.mxu0 %v5189
      %5284 = vmatprep.subr.bf16.mxu0 %v5194
      %5285 = vmatpush1.bf16.msra.mxu0 %v5193
      %5286 = vmatprep.subr.bf16.mxu0 %v5198
      %5287 = vmatpush1.bf16.msra.mxu0 %v5197
      %5288 = vmatprep.subr.bf16.mxu0 0
      %5289 = vmatpush1.bf16.msra.mxu0 0
      %5290 = vmatprep.subr.bf16.mxu0 0
      %5291 = vmatpush1.bf16.msra.mxu0 0
      %5292 = vmatprep.subr.bf16.mxu0 0
      %5293 = vmatpush1.bf16.msra.mxu0 0
      %5294 = vmatprep.subr.bf16.mxu0 0
      %5295 = vmatpush1.bf16.msra.mxu0 0
      %5296 = vmatprep.subr.bf16.mxu0 0
      %5297 = vmatpush1.bf16.msra.mxu0 0
      %5298 = vmatprep.subr.bf16.mxu0 0
      %5299 = vmatpush1.bf16.msra.mxu0 0
      %5300 = vmatprep.subr.bf16.mxu0 0
      %5301 = vmatpush1.bf16.msra.mxu0 0
      %5302 = vmatprep.subr.bf16.mxu0 0
      %5303 = vmatpush1.bf16.msra.mxu0 0
      %5304 = vmatprep.mubr.bf16.mxu0 0
      %5305 = vmatmul.mubr.bf16.gmra.mrb[0].mxu0 %v5049
      %v5306 = vpop.f32.mrb[0].mxu0
      %v5307 = vadd.f32 %v5062, %v5306
      %v5308 = vpop.f32.mrb[0].mxu0
      %v5309 = vadd.f32 %v5066, %v5308
      %v5310 = vpop.f32.mrb[0].mxu0
      %v5311 = vpop.f32.mrb[0].mxu0
      %5312 = vdwg.mxu0
      %v5313 = vmul.f32 %v5266, 1.702
      %v5314 = vmul.f32 %v5268, 1.702
      %v5315 = vmul.f32 %v5307, 1.702
      %v5316 = vmul.f32 %v5309, 1.702
      %v5317 = vxor.u32 %v5313, 2147483648
      %v5318 = vxor.u32 %v5314, 2147483648
      %v5319 = vxor.u32 %v5315, 2147483648
      %v5320 = vxor.u32 %v5316, 2147483648
      %v5321 = vmul.f32 %v5317, 1.442695
      %v5322 = vpow.pop %v5321
      %v5323 = vmul.f32 %v5318, 1.442695
      %v5324 = vpow.pop %v5323
      %v5325 = vmul.f32 %v5319, 1.442695
      %v5326 = vpow.pop %v5325
      %v5327 = vmul.f32 %v5320, 1.442695
      %v5328 = vpow.pop %v5327
      %v5329 = vadd.f32 %v5322, 1.0
      %v5330 = vadd.f32 %v5324, 1.0
      %v5331 = vadd.f32 %v5326, 1.0
      %v5332 = vadd.f32 %v5328, 1.0
      %v5333 = vrcp.pop %v5329
      %v5334 = vmul.f32 1.0, %v5333
      %v5335 = vrcp.pop %v5330
      %v5336 = vmul.f32 1.0, %v5335
      %v5337 = vrcp.pop %v5331
      %v5338 = vmul.f32 1.0, %v5337
      %v5339 = vrcp.pop %v5332
      %v5340 = vmul.f32 1.0, %v5339
      %v5341 = vmul.f32 %v5266, %v5334
      %v5342 = vmul.f32 %v5268, %v5336
      %v5343 = vmul.f32 %v5307, %v5338
      %v5344 = vmul.f32 %v5309, %v5340
      %v5345 = vpack.c.bf16 %v5341, %v5341
      %v5346 = vpack.c.bf16 %v5342, %v5342
      %v5347 = vpack.c.bf16 %v5343, %v5343
      %v5348 = vpack.c.bf16 %v5344, %v5344
      %v5350 = vlaneseq
      %v5351 = vshrl.u32 %v5350, 7
      %v5352 = vsub.s32 0, %v5351
      %v5353 = vrot.slane %v4089, %v5352
      %v5419 = vunpack.c.l.b16 %v4024
      %v5420 = vunpack.c.l.b16 %v4025
      %v5421 = vunpack.c.l.b16 %v4026
      %v5422 = vunpack.c.l.b16 %v4027
      %v5423 = vunpack.c.l.b16 %v4028
      %v5424 = vunpack.c.l.b16 %v4029
      %v5425 = vunpack.c.l.b16 %v4030
      %v5426 = vunpack.c.l.b16 %v4031
      %v5427 = vunpack.c.l.b16 %v4032
      %v5428 = vunpack.c.l.b16 %v4033
      %v5429 = vunpack.c.l.b16 %v4034
      %v5430 = vunpack.c.l.b16 %v4035
      %v5431 = vunpack.c.l.b16 %v4036
      %v5432 = vunpack.c.l.b16 %v4037
      %v5433 = vunpack.c.l.b16 %v4038
      %v5434 = vunpack.c.l.b16 %v4039
      %v5435 = vunpack.c.l.b16 %v4040
      %v5436 = vunpack.c.l.b16 %v4041
      %v5437 = vunpack.c.l.b16 %v4042
      %v5438 = vunpack.c.l.b16 %v4043
      %v5439 = vunpack.c.l.b16 %v4044
      %v5440 = vunpack.c.l.b16 %v4045
      %v5441 = vunpack.c.l.b16 %v4046
      %v5442 = vunpack.c.l.b16 %v4047
      %v5443 = vunpack.c.l.b16 %v4048
      %v5444 = vunpack.c.l.b16 %v4049
      %v5445 = vunpack.c.l.b16 %v4050
      %v5446 = vunpack.c.l.b16 %v4051
      %v5447 = vunpack.c.l.b16 %v4052
      %v5448 = vunpack.c.l.b16 %v4053
      %v5449 = vunpack.c.l.b16 %v4054
      %v5450 = vunpack.c.l.b16 %v4055
      %v5451 = vunpack.c.l.b16 %v4056
      %v5452 = vunpack.c.l.b16 %v4057
      %v5453 = vunpack.c.l.b16 %v4058
      %v5454 = vunpack.c.l.b16 %v4059
      %v5455 = vunpack.c.l.b16 %v4060
      %v5456 = vunpack.c.l.b16 %v4061
      %v5457 = vunpack.c.l.b16 %v4062
      %v5458 = vunpack.c.l.b16 %v4063
      %v5459 = vunpack.c.l.b16 %v4064
      %v5460 = vunpack.c.l.b16 %v4065
      %v5461 = vunpack.c.l.b16 %v4066
      %v5462 = vunpack.c.l.b16 %v4067
      %v5463 = vunpack.c.l.b16 %v4068
      %v5464 = vunpack.c.l.b16 %v4069
      %v5465 = vunpack.c.l.b16 %v4070
      %v5466 = vunpack.c.l.b16 %v4071
      %v5467 = vunpack.c.l.b16 %v4072
      %v5468 = vunpack.c.l.b16 %v4073
      %v5469 = vunpack.c.l.b16 %v4074
      %v5470 = vunpack.c.l.b16 %v4075
      %v5471 = vunpack.c.l.b16 %v4076
      %v5472 = vunpack.c.l.b16 %v4077
      %v5473 = vunpack.c.l.b16 %v4078
      %v5474 = vunpack.c.l.b16 %v4079
      %v5475 = vunpack.c.l.b16 %v4080
      %v5476 = vunpack.c.l.b16 %v4081
      %v5477 = vunpack.c.l.b16 %v4082
      %v5478 = vunpack.c.l.b16 %v4083
      %v5479 = vunpack.c.l.b16 %v4084
      %v5480 = vunpack.c.l.b16 %v4085
      %v5481 = vunpack.c.l.b16 %v4086
      %v5482 = vunpack.c.l.b16 %v4087
      %v5483 = vpack.c.b16 %v5420, %v5419
      %v5484 = vpack.c.b16 %v5422, %v5421
      %v5485 = vpack.c.b16 %v5424, %v5423
      %v5486 = vpack.c.b16 %v5426, %v5425
      %v5487 = vpack.c.b16 %v5428, %v5427
      %v5488 = vpack.c.b16 %v5430, %v5429
      %v5489 = vpack.c.b16 %v5432, %v5431
      %v5490 = vpack.c.b16 %v5434, %v5433
      %v5491 = vpack.c.b16 %v5436, %v5435
      %v5492 = vpack.c.b16 %v5438, %v5437
      %v5493 = vpack.c.b16 %v5440, %v5439
      %v5494 = vpack.c.b16 %v5442, %v5441
      %v5495 = vpack.c.b16 %v5444, %v5443
      %v5496 = vpack.c.b16 %v5446, %v5445
      %v5497 = vpack.c.b16 %v5448, %v5447
      %v5498 = vpack.c.b16 %v5450, %v5449
      %v5499 = vpack.c.b16 %v5452, %v5451
      %v5500 = vpack.c.b16 %v5454, %v5453
      %v5501 = vpack.c.b16 %v5456, %v5455
      %v5502 = vpack.c.b16 %v5458, %v5457
      %v5503 = vpack.c.b16 %v5460, %v5459
      %v5504 = vpack.c.b16 %v5462, %v5461
      %v5505 = vpack.c.b16 %v5464, %v5463
      %v5506 = vpack.c.b16 %v5466, %v5465
      %v5507 = vpack.c.b16 %v5468, %v5467
      %v5508 = vpack.c.b16 %v5470, %v5469
      %v5509 = vpack.c.b16 %v5472, %v5471
      %v5510 = vpack.c.b16 %v5474, %v5473
      %v5511 = vpack.c.b16 %v5476, %v5475
      %v5512 = vpack.c.b16 %v5478, %v5477
      %v5513 = vpack.c.b16 %v5480, %v5479
      %v5514 = vpack.c.b16 %v5482, %v5481
      %5547 = vmatprep.subr.bf16.mxu0 0
      %5548 = vmatpush1.bf16.msra.mxu0 %v5483
      %5549 = vmatprep.subr.bf16.mxu0 0
      %5550 = vmatpush1.bf16.msra.mxu0 %v5484
      %5551 = vmatprep.subr.bf16.mxu0 0
      %5552 = vmatpush1.bf16.msra.mxu0 %v5485
      %5553 = vmatprep.subr.bf16.mxu0 0
      %5554 = vmatpush1.bf16.msra.mxu0 %v5486
      %5555 = vmatprep.subr.bf16.mxu0 0
      %5556 = vmatpush1.bf16.msra.mxu0 %v5487
      %5557 = vmatprep.subr.bf16.mxu0 0
      %5558 = vmatpush1.bf16.msra.mxu0 %v5488
      %5559 = vmatprep.subr.bf16.mxu0 0
      %5560 = vmatpush1.bf16.msra.mxu0 %v5489
      %5561 = vmatprep.subr.bf16.mxu0 0
      %5562 = vmatpush1.bf16.msra.mxu0 %v5490
      %5563 = vmatprep.subr.bf16.mxu0 0
      %5564 = vmatpush1.bf16.msra.mxu0 %v5491
      %5565 = vmatprep.subr.bf16.mxu0 0
      %5566 = vmatpush1.bf16.msra.mxu0 %v5492
      %5567 = vmatprep.subr.bf16.mxu0 0
      %5568 = vmatpush1.bf16.msra.mxu0 %v5493
      %5569 = vmatprep.subr.bf16.mxu0 0
      %5570 = vmatpush1.bf16.msra.mxu0 %v5494
      %5571 = vmatprep.subr.bf16.mxu0 0
      %5572 = vmatpush1.bf16.msra.mxu0 %v5495
      %5573 = vmatprep.subr.bf16.mxu0 0
      %5574 = vmatpush1.bf16.msra.mxu0 %v5496
      %5575 = vmatprep.subr.bf16.mxu0 0
      %5576 = vmatpush1.bf16.msra.mxu0 %v5497
      %5577 = vmatprep.subr.bf16.mxu0 0
      %5578 = vmatpush1.bf16.msra.mxu0 %v5498
      %5579 = vmatprep.mubr.bf16.mxu0 %v5346
      %5580 = vmatmul.mubr.bf16.gmra.mrb[0].mxu0 %v5345
      %v5581 = vpop.f32.mrb[0].mxu0
      %v5582 = vadd.f32 %v5353, %v5581
      %v5583 = vpop.f32.mrb[0].mxu0
      %v5584 = vpop.f32.mrb[0].mxu0
      %v5585 = vpop.f32.mrb[0].mxu0
      %5586 = vdwg.mxu0
      %5587 = vmatprep.subr.bf16.mxu0 0
      %5588 = vmatpush1.bf16.msra.mxu0 %v5499
      %5589 = vmatprep.subr.bf16.mxu0 0
      %5590 = vmatpush1.bf16.msra.mxu0 %v5500
      %5591 = vmatprep.subr.bf16.mxu0 0
      %5592 = vmatpush1.bf16.msra.mxu0 %v5501
      %5593 = vmatprep.subr.bf16.mxu0 0
      %5594 = vmatpush1.bf16.msra.mxu0 %v5502
      %5595 = vmatprep.subr.bf16.mxu0 0
      %5596 = vmatpush1.bf16.msra.mxu0 %v5503
      %5597 = vmatprep.subr.bf16.mxu0 0
      %5598 = vmatpush1.bf16.msra.mxu0 %v5504
      %5599 = vmatprep.subr.bf16.mxu0 0
      %5600 = vmatpush1.bf16.msra.mxu0 %v5505
      %5601 = vmatprep.subr.bf16.mxu0 0
      %5602 = vmatpush1.bf16.msra.mxu0 %v5506
      %5603 = vmatprep.subr.bf16.mxu0 0
      %5604 = vmatpush1.bf16.msra.mxu0 %v5507
      %5605 = vmatprep.subr.bf16.mxu0 0
      %5606 = vmatpush1.bf16.msra.mxu0 %v5508
      %5607 = vmatprep.subr.bf16.mxu0 0
      %5608 = vmatpush1.bf16.msra.mxu0 %v5509
      %5609 = vmatprep.subr.bf16.mxu0 0
      %5610 = vmatpush1.bf16.msra.mxu0 %v5510
      %5611 = vmatprep.subr.bf16.mxu0 0
      %5612 = vmatpush1.bf16.msra.mxu0 %v5511
      %5613 = vmatprep.subr.bf16.mxu0 0
      %5614 = vmatpush1.bf16.msra.mxu0 %v5512
      %5615 = vmatprep.subr.bf16.mxu0 0
      %5616 = vmatpush1.bf16.msra.mxu0 %v5513
      %5617 = vmatprep.subr.bf16.mxu0 0
      %5618 = vmatpush1.bf16.msra.mxu0 %v5514
      %5619 = vmatprep.mubr.bf16.mxu0 %v5348
      %5620 = vmatmul.mubr.bf16.gmra.mrb[0].mxu0 %v5347
      %v5621 = vpop.f32.mrb[0].mxu0
      %v5622 = vadd.f32 %v5582, %v5621
      %v5623 = vpop.f32.mrb[0].mxu0
      %v5624 = vpop.f32.mrb[0].mxu0
      %v5625 = vpop.f32.mrb[0].mxu0
      %5626 = vdwg.mxu0
      %v5627 = vadd.f32 %v5021, %v5622
      %5628 = vst [vmem:[#allocation2] sm:$0x1f] %v5627
      %v5629 = vld [vmem:[%s1228] sm:$0x1f]
      %v5630 = vsel %vm1442, %v5629, 0.0
      %5631 = vadd.xlane.f32.xlu0 %v5630
      %v5632 = vpop.xlane.xlu0 %5631
      %v5633 = vmul.f32 %v5632, %v1029
      %v5634 = vsub.f32 %v5629, %v5633
      %v5635 = vmul.f32 %v5634, %v5634
      %v5636 = vsel %vm1442, %v5635, 0.0
      %5637 = vadd.xlane.f32.xlu0 %v5636
      %v5638 = vpop.xlane.xlu0 %5637
      %v5639 = vmul.f32 %v5638, %v1029
      %v5640 = vadd.f32 %v5639, 1e-05
      %v5641 = vrsqrt.pop %v5640
      %v5642 = vmul.f32 %v5634, %v5641
      %v5643 = vmul.f32 %v5642, %v4108
      %v5644 = vadd.f32 %v5643, %v4115
      %v5645 = vpack.c.bf16 %v5644, %v5644
      %5646 = vmatprep.subr.bf16.mxu0 %v4216
      %5647 = vmatpush1.bf16.msra.mxu0 %v4215
      %5648 = vmatprep.subr.bf16.mxu0 %v4219
      %5649 = vmatpush1.bf16.msra.mxu0 %v4218
      %5650 = vmatprep.subr.bf16.mxu0 %v4222
      %5651 = vmatpush1.bf16.msra.mxu0 %v4221
      %5652 = vmatprep.subr.bf16.mxu0 %v4225
      %5653 = vmatpush1.bf16.msra.mxu0 %v4224
      %5654 = vmatprep.subr.bf16.mxu0 %v4228
      %5655 = vmatpush1.bf16.msra.mxu0 %v4227
      %5656 = vmatprep.subr.bf16.mxu0 %v4231
      %5657 = vmatpush1.bf16.msra.mxu0 %v4230
      %5658 = vmatprep.subr.bf16.mxu0 %v4234
      %5659 = vmatpush1.bf16.msra.mxu0 %v4233
      %5660 = vmatprep.subr.bf16.mxu0 %v4237
      %5661 = vmatpush1.bf16.msra.mxu0 %v4236
      %5662 = vmatprep.subr.bf16.mxu0 0
      %5663 = vmatpush1.bf16.msra.mxu0 0
      %5664 = vmatprep.subr.bf16.mxu0 0
      %5665 = vmatpush1.bf16.msra.mxu0 0
      %5666 = vmatprep.subr.bf16.mxu0 0
      %5667 = vmatpush1.bf16.msra.mxu0 0
      %5668 = vmatprep.subr.bf16.mxu0 0
      %5669 = vmatpush1.bf16.msra.mxu0 0
      %5670 = vmatprep.subr.bf16.mxu0 0
      %5671 = vmatpush1.bf16.msra.mxu0 0
      %5672 = vmatprep.subr.bf16.mxu0 0
      %5673 = vmatpush1.bf16.msra.mxu0 0
      %5674 = vmatprep.subr.bf16.mxu0 0
      %5675 = vmatpush1.bf16.msra.mxu0 0
      %5676 = vmatprep.subr.bf16.mxu0 0
      %5677 = vmatpush1.bf16.msra.mxu0 0
      %5678 = vmatprep.mubr.bf16.mxu0 0
      %5679 = vmatmul.mubr.bf16.gmra.mrb[0].mxu0 %v5645
      %v5680 = vpop.f32.mrb[0].mxu0
      %v5681 = vadd.f32 %v4123, %v5680
      %v5682 = vpop.f32.mrb[0].mxu0
      %v5683 = vadd.f32 %v4127, %v5682
      %v5684 = vpop.f32.mrb[0].mxu0
      %v5685 = vpop.f32.mrb[0].mxu0
      %5686 = vdwg.mxu0
      %5687 = vmatprep.subr.bf16.mxu0 0
      %5688 = vmatpush1.bf16.msra.mxu0 %v4217
      %5689 = vmatprep.subr.bf16.mxu0 0
      %5690 = vmatpush1.bf16.msra.mxu0 %v4220
      %5691 = vmatprep.subr.bf16.mxu0 0
      %5692 = vmatpush1.bf16.msra.mxu0 %v4223
      %5693 = vmatprep.subr.bf16.mxu0 0
      %5694 = vmatpush1.bf16.msra.mxu0 %v4226
      %5695 = vmatprep.subr.bf16.mxu0 0
      %5696 = vmatpush1.bf16.msra.mxu0 %v4229
      %5697 = vmatprep.subr.bf16.mxu0 0
      %5698 = vmatpush1.bf16.msra.mxu0 %v4232
      %5699 = vmatprep.subr.bf16.mxu0 0
      %5700 = vmatpush1.bf16.msra.mxu0 %v4235
      %5701 = vmatprep.subr.bf16.mxu0 0
      %5702 = vmatpush1.bf16.msra.mxu0 %v4238
      %5703 = vmatprep.subr.bf16.mxu0 0
      %5704 = vmatpush1.bf16.msra.mxu0 0
      %5705 = vmatprep.subr.bf16.mxu0 0
      %5706 = vmatpush1.bf16.msra.mxu0 0
      %5707 = vmatprep.subr.bf16.mxu0 0
      %5708 = vmatpush1.bf16.msra.mxu0 0
      %5709 = vmatprep.subr.bf16.mxu0 0
      %5710 = vmatpush1.bf16.msra.mxu0 0
      %5711 = vmatprep.subr.bf16.mxu0 0
      %5712 = vmatpush1.bf16.msra.mxu0 0
      %5713 = vmatprep.subr.bf16.mxu0 0
      %5714 = vmatpush1.bf16.msra.mxu0 0
      %5715 = vmatprep.subr.bf16.mxu0 0
      %5716 = vmatpush1.bf16.msra.mxu0 0
      %5717 = vmatprep.subr.bf16.mxu0 0
      %5718 = vmatpush1.bf16.msra.mxu0 0
      %5719 = vmatprep.mubr.bf16.mxu0 0
      %5720 = vmatmul.mubr.bf16.gmra.mrb[0].mxu0 %v5645
      %v5721 = vpop.f32.mrb[0].mxu0
      %v5722 = vadd.f32 %v4131, %v5721
      %v5723 = vpop.f32.mrb[0].mxu0
      %v5724 = vpop.f32.mrb[0].mxu0
      %v5725 = vpop.f32.mrb[0].mxu0
      %5726 = vdwg.mxu0
      %v5727 = vpack.c.bf16 %v5681, %v5681
      %v5728 = vpack.c.bf16 %v5683, %v5683
      %v5729 = vpack.c.bf16 %v5722, %v5722
      %v5731 = vsel %vm1699, %v5727, 0
      %v5734 = vsel %vm1699, %v5728, 0
      %5736 = vmatprep.subr.bf16.mxu0 0
      %5737 = vmatpush1.bf16.xpose.msra.mxu0 %v5734
      %5738 = vmatprep.subr.bf16.mxu0 0
      %5739 = vmatpush1.bf16.xpose.msra.mxu0 0
      %5740 = vmatprep.subr.bf16.mxu0 0
      %5741 = vmatpush1.bf16.xpose.msra.mxu0 0
      %5742 = vmatprep.subr.bf16.mxu0 0
      %5743 = vmatpush1.bf16.xpose.msra.mxu0 0
      %5744 = vmatprep.subr.bf16.mxu0 0
      %5745 = vmatpush1.bf16.xpose.msra.mxu0 0
      %5746 = vmatprep.subr.bf16.mxu0 0
      %5747 = vmatpush1.bf16.xpose.msra.mxu0 0
      %5748 = vmatprep.subr.bf16.mxu0 0
      %5749 = vmatpush1.bf16.xpose.msra.mxu0 0
      %5750 = vmatprep.subr.bf16.mxu0 0
      %5751 = vmatpush1.bf16.xpose.msra.mxu0 0
      %5752 = vmatprep.subr.bf16.mxu0 0
      %5753 = vmatpush1.bf16.xpose.msra.mxu0 0
      %5754 = vmatprep.subr.bf16.mxu0 0
      %5755 = vmatpush1.bf16.xpose.msra.mxu0 0
      %5756 = vmatprep.subr.bf16.mxu0 0
      %5757 = vmatpush1.bf16.xpose.msra.mxu0 0
      %5758 = vmatprep.subr.bf16.mxu0 0
      %5759 = vmatpush1.bf16.xpose.msra.mxu0 0
      %5760 = vmatprep.subr.bf16.mxu0 0
      %5761 = vmatpush1.bf16.xpose.msra.mxu0 0
      %5762 = vmatprep.subr.bf16.mxu0 0
      %5763 = vmatpush1.bf16.xpose.msra.mxu0 0
      %5764 = vmatprep.subr.bf16.mxu0 0
      %5765 = vmatpush1.bf16.xpose.msra.mxu0 0
      %5766 = vmatprep.subr.bf16.mxu0 0
      %5767 = vmatpush1.bf16.xpose.msra.mxu0 0
      %5768 = vmatprep.mubr.bf16.mxu0 0
      %5769 = vmatmul.mubr.bf16.gmra.mrb[0].mxu0 %v5731
      %v5770 = vpop.f32.mrb[0].mxu0
      %v5771 = vadd.f32 0.0, %v5770
      %v5772 = vpop.f32.mrb[0].mxu0
      %v5773 = vpop.f32.mrb[0].mxu0
      %v5774 = vpop.f32.mrb[0].mxu0
      %5775 = vdwg.mxu0
      %v5776 = vmul.f32 %v5771, 0.17677669
      %v5777 = vsel %vm1747, %v5776, -inf
      %5778 = vmax.xlane.f32.xlu0 %v5777
      %v5779 = vpop.xlane.xlu0 %5778
      %v5780 = vsub.f32 %v5776, %v5779
      %v5781 = vmul.f32 %v5780, 1.442695
      %v5782 = vpow.pop %v5781
      %v5783 = vsel %vm1747, %v5782, 0.0
      %5784 = vadd.xlane.f32.xlu0 %v5783
      %v5785 = vpop.xlane.xlu0 %5784
      %v5786 = vrcp.pop %v5785
      %v5787 = vmul.f32 %v5782, %v5786
      %v5788 = vpack.c.bf16 %v5787, %v5787
      %v5790 = vsel %vm1760, %v5788, 0
      %v5793 = vand.u32 %v5729, %v1767
      %5795 = vmatprep.subr.bf16.mxu0 0
      %5796 = vmatpush1.bf16.msra.mxu0 %v5793
      %5797 = vmatprep.subr.bf16.mxu0 0
      %5798 = vmatpush1.bf16.msra.mxu0 0
      %5799 = vmatprep.subr.bf16.mxu0 0
      %5800 = vmatpush1.bf16.msra.mxu0 0
      %5801 = vmatprep.subr.bf16.mxu0 0
      %5802 = vmatpush1.bf16.msra.mxu0 0
      %5803 = vmatprep.subr.bf16.mxu0 0
      %5804 = vmatpush1.bf16.msra.mxu0 0
      %5805 = vmatprep.subr.bf16.mxu0 0
      %5806 = vmatpush1.bf16.msra.mxu0 0
      %5807 = vmatprep.subr.bf16.mxu0 0
      %5808 = vmatpush1.bf16.msra.mxu0 0
      %5809 = vmatprep.subr.bf16.mxu0 0
      %5810 = vmatpush1.bf16.msra.mxu0 0
      %5811 = vmatprep.subr.bf16.mxu0 0
      %5812 = vmatpush1.bf16.msra.mxu0 0
      %5813 = vmatprep.subr.bf16.mxu0 0
      %5814 = vmatpush1.bf16.msra.mxu0 0
      %5815 = vmatprep.subr.bf16.mxu0 0
      %5816 = vmatpush1.bf16.msra.mxu0 0
      %5817 = vmatprep.subr.bf16.mxu0 0
      %5818 = vmatpush1.bf16.msra.mxu0 0
      %5819 = vmatprep.subr.bf16.mxu0 0
      %5820 = vmatpush1.bf16.msra.mxu0 0
      %5821 = vmatprep.subr.bf16.mxu0 0
      %5822 = vmatpush1.bf16.msra.mxu0 0
      %5823 = vmatprep.subr.bf16.mxu0 0
      %5824 = vmatpush1.bf16.msra.mxu0 0
      %5825 = vmatprep.subr.bf16.mxu0 0
      %5826 = vmatpush1.bf16.msra.mxu0 0
      %5827 = vmatprep.mubr.bf16.mxu0 0
      %5828 = vmatmul.mubr.bf16.gmra.mrb[0].mxu0 %v5790
      %v5829 = vpop.f32.mrb[0].mxu0
      %v5830 = vadd.f32 0.0, %v5829
      %v5831 = vpop.f32.mrb[0].mxu0
      %v5832 = vpop.f32.mrb[0].mxu0
      %v5833 = vpop.f32.mrb[0].mxu0
      %5834 = vdwg.mxu0
      %v5835 = vpack.c.bf16 %v5830, %v5830
      %5837 = vrot.lane.b32.xlu0 %v5727, 96
      %v5838 = vpop.permute.xlu0 %5837
      %5840 = vrot.lane.b32.xlu0 %v5728, 96
      %v5841 = vpop.permute.xlu0 %5840
      %v5843 = vsel %vm1699, %v5838, 0
      %v5846 = vsel %vm1699, %v5841, 0
      %5848 = vmatprep.subr.bf16.mxu0 0
      %5849 = vmatpush1.bf16.xpose.msra.mxu0 %v5846
      %5850 = vmatprep.subr.bf16.mxu0 0
      %5851 = vmatpush1.bf16.xpose.msra.mxu0 0
      %5852 = vmatprep.subr.bf16.mxu0 0
      %5853 = vmatpush1.bf16.xpose.msra.mxu0 0
      %5854 = vmatprep.subr.bf16.mxu0 0
      %5855 = vmatpush1.bf16.xpose.msra.mxu0 0
      %5856 = vmatprep.subr.bf16.mxu0 0
      %5857 = vmatpush1.bf16.xpose.msra.mxu0 0
      %5858 = vmatprep.subr.bf16.mxu0 0
      %5859 = vmatpush1.bf16.xpose.msra.mxu0 0
      %5860 = vmatprep.subr.bf16.mxu0 0
      %5861 = vmatpush1.bf16.xpose.msra.mxu0 0
      %5862 = vmatprep.subr.bf16.mxu0 0
      %5863 = vmatpush1.bf16.xpose.msra.mxu0 0
      %5864 = vmatprep.subr.bf16.mxu0 0
      %5865 = vmatpush1.bf16.xpose.msra.mxu0 0
      %5866 = vmatprep.subr.bf16.mxu0 0
      %5867 = vmatpush1.bf16.xpose.msra.mxu0 0
      %5868 = vmatprep.subr.bf16.mxu0 0
      %5869 = vmatpush1.bf16.xpose.msra.mxu0 0
      %5870 = vmatprep.subr.bf16.mxu0 0
      %5871 = vmatpush1.bf16.xpose.msra.mxu0 0
      %5872 = vmatprep.subr.bf16.mxu0 0
      %5873 = vmatpush1.bf16.xpose.msra.mxu0 0
      %5874 = vmatprep.subr.bf16.mxu0 0
      %5875 = vmatpush1.bf16.xpose.msra.mxu0 0
      %5876 = vmatprep.subr.bf16.mxu0 0
      %5877 = vmatpush1.bf16.xpose.msra.mxu0 0
      %5878 = vmatprep.subr.bf16.mxu0 0
      %5879 = vmatpush1.bf16.xpose.msra.mxu0 0
      %5880 = vmatprep.mubr.bf16.mxu0 0
      %5881 = vmatmul.mubr.bf16.gmra.mrb[0].mxu0 %v5843
      %v5882 = vpop.f32.mrb[0].mxu0
      %v5883 = vadd.f32 0.0, %v5882
      %v5884 = vpop.f32.mrb[0].mxu0
      %v5885 = vpop.f32.mrb[0].mxu0
      %v5886 = vpop.f32.mrb[0].mxu0
      %5887 = vdwg.mxu0
      %v5888 = vmul.f32 %v5883, 0.17677669
      %v5889 = vsel %vm1747, %v5888, -inf
      %5890 = vmax.xlane.f32.xlu0 %v5889
      %v5891 = vpop.xlane.xlu0 %5890
      %v5892 = vsub.f32 %v5888, %v5891
      %v5893 = vmul.f32 %v5892, 1.442695
      %v5894 = vpow.pop %v5893
      %v5895 = vsel %vm1747, %v5894, 0.0
      %5896 = vadd.xlane.f32.xlu0 %v5895
      %v5897 = vpop.xlane.xlu0 %5896
      %v5898 = vrcp.pop %v5897
      %v5899 = vmul.f32 %v5894, %v5898
      %v5900 = vpack.c.bf16 %v5899, %v5899
      %5902 = vrot.lane.b32.xlu0 %v5729, 96
      %v5903 = vpop.permute.xlu0 %5902
      %v5905 = vsel %vm1760, %v5900, 0
      %v5908 = vand.u32 %v5903, %v1767
      %5910 = vmatprep.subr.bf16.mxu0 0
      %5911 = vmatpush1.bf16.msra.mxu0 %v5908
      %5912 = vmatprep.subr.bf16.mxu0 0
      %5913 = vmatpush1.bf16.msra.mxu0 0
      %5914 = vmatprep.subr.bf16.mxu0 0
      %5915 = vmatpush1.bf16.msra.mxu0 0
      %5916 = vmatprep.subr.bf16.mxu0 0
      %5917 = vmatpush1.bf16.msra.mxu0 0
      %5918 = vmatprep.subr.bf16.mxu0 0
      %5919 = vmatpush1.bf16.msra.mxu0 0
      %5920 = vmatprep.subr.bf16.mxu0 0
      %5921 = vmatpush1.bf16.msra.mxu0 0
      %5922 = vmatprep.subr.bf16.mxu0 0
      %5923 = vmatpush1.bf16.msra.mxu0 0
      %5924 = vmatprep.subr.bf16.mxu0 0
      %5925 = vmatpush1.bf16.msra.mxu0 0
      %5926 = vmatprep.subr.bf16.mxu0 0
      %5927 = vmatpush1.bf16.msra.mxu0 0
      %5928 = vmatprep.subr.bf16.mxu0 0
      %5929 = vmatpush1.bf16.msra.mxu0 0
      %5930 = vmatprep.subr.bf16.mxu0 0
      %5931 = vmatpush1.bf16.msra.mxu0 0
      %5932 = vmatprep.subr.bf16.mxu0 0
      %5933 = vmatpush1.bf16.msra.mxu0 0
      %5934 = vmatprep.subr.bf16.mxu0 0
      %5935 = vmatpush1.bf16.msra.mxu0 0
      %5936 = vmatprep.subr.bf16.mxu0 0
      %5937 = vmatpush1.bf16.msra.mxu0 0
      %5938 = vmatprep.subr.bf16.mxu0 0
      %5939 = vmatpush1.bf16.msra.mxu0 0
      %5940 = vmatprep.subr.bf16.mxu0 0
      %5941 = vmatpush1.bf16.msra.mxu0 0
      %5942 = vmatprep.mubr.bf16.mxu0 0
      %5943 = vmatmul.mubr.bf16.gmra.mrb[0].mxu0 %v5905
      %v5944 = vpop.f32.mrb[0].mxu0
      %v5945 = vadd.f32 0.0, %v5944
      %v5946 = vpop.f32.mrb[0].mxu0
      %v5947 = vpop.f32.mrb[0].mxu0
      %v5948 = vpop.f32.mrb[0].mxu0
      %5949 = vdwg.mxu0
      %v5950 = vpack.c.bf16 %v5945, %v5945
      %v5952 = vsel %vm1699, %v5950, 0
      %5954 = vmatprep.subr.bf16.mxu0 0
      %5955 = vmatpush1.bf16.msra.mxu0 %v4576
      %5956 = vmatprep.subr.bf16.mxu0 0
      %5957 = vmatpush1.bf16.msra.mxu0 %v4577
      %5958 = vmatprep.subr.bf16.mxu0 0
      %5959 = vmatpush1.bf16.msra.mxu0 0
      %5960 = vmatprep.subr.bf16.mxu0 0
      %5961 = vmatpush1.bf16.msra.mxu0 0
      %5962 = vmatprep.subr.bf16.mxu0 0
      %5963 = vmatpush1.bf16.msra.mxu0 0
      %5964 = vmatprep.subr.bf16.mxu0 0
      %5965 = vmatpush1.bf16.msra.mxu0 0
      %5966 = vmatprep.subr.bf16.mxu0 0
      %5967 = vmatpush1.bf16.msra.mxu0 0
      %5968 = vmatprep.subr.bf16.mxu0 0
      %5969 = vmatpush1.bf16.msra.mxu0 0
      %5970 = vmatprep.subr.bf16.mxu0 0
      %5971 = vmatpush1.bf16.msra.mxu0 0
      %5972 = vmatprep.subr.bf16.mxu0 0
      %5973 = vmatpush1.bf16.msra.mxu0 0
      %5974 = vmatprep.subr.bf16.mxu0 0
      %5975 = vmatpush1.bf16.msra.mxu0 0
      %5976 = vmatprep.subr.bf16.mxu0 0
      %5977 = vmatpush1.bf16.msra.mxu0 0
      %5978 = vmatprep.subr.bf16.mxu0 0
      %5979 = vmatpush1.bf16.msra.mxu0 0
      %5980 = vmatprep.subr.bf16.mxu0 0
      %5981 = vmatpush1.bf16.msra.mxu0 0
      %5982 = vmatprep.subr.bf16.mxu0 0
      %5983 = vmatpush1.bf16.msra.mxu0 0
      %5984 = vmatprep.subr.bf16.mxu0 0
      %5985 = vmatpush1.bf16.msra.mxu0 0
      %5986 = vmatprep.mubr.bf16.mxu0 0
      %5987 = vmatmul.mubr.bf16.gmra.mrb[0].mxu0 %v5952
      %v5988 = vpop.f32.mrb[0].mxu0
      %v5989 = vadd.f32 0.0, %v5988
      %v5990 = vpop.f32.mrb[0].mxu0
      %v5991 = vpop.f32.mrb[0].mxu0
      %v5992 = vpop.f32.mrb[0].mxu0
      %5993 = vdwg.mxu0
      %v5995 = vsel %vm1699, %v5835, 0
      %5997 = vmatprep.subr.bf16.mxu0 0
      %5998 = vmatpush1.bf16.msra.mxu0 %v4631
      %5999 = vmatprep.subr.bf16.mxu0 0
      %6000 = vmatpush1.bf16.msra.mxu0 %v4632
      %6001 = vmatprep.subr.bf16.mxu0 0
      %6002 = vmatpush1.bf16.msra.mxu0 0
      %6003 = vmatprep.subr.bf16.mxu0 0
      %6004 = vmatpush1.bf16.msra.mxu0 0
      %6005 = vmatprep.subr.bf16.mxu0 0
      %6006 = vmatpush1.bf16.msra.mxu0 0
      %6007 = vmatprep.subr.bf16.mxu0 0
      %6008 = vmatpush1.bf16.msra.mxu0 0
      %6009 = vmatprep.subr.bf16.mxu0 0
      %6010 = vmatpush1.bf16.msra.mxu0 0
      %6011 = vmatprep.subr.bf16.mxu0 0
      %6012 = vmatpush1.bf16.msra.mxu0 0
      %6013 = vmatprep.subr.bf16.mxu0 0
      %6014 = vmatpush1.bf16.msra.mxu0 0
      %6015 = vmatprep.subr.bf16.mxu0 0
      %6016 = vmatpush1.bf16.msra.mxu0 0
      %6017 = vmatprep.subr.bf16.mxu0 0
      %6018 = vmatpush1.bf16.msra.mxu0 0
      %6019 = vmatprep.subr.bf16.mxu0 0
      %6020 = vmatpush1.bf16.msra.mxu0 0
      %6021 = vmatprep.subr.bf16.mxu0 0
      %6022 = vmatpush1.bf16.msra.mxu0 0
      %6023 = vmatprep.subr.bf16.mxu0 0
      %6024 = vmatpush1.bf16.msra.mxu0 0
      %6025 = vmatprep.subr.bf16.mxu0 0
      %6026 = vmatpush1.bf16.msra.mxu0 0
      %6027 = vmatprep.subr.bf16.mxu0 0
      %6028 = vmatpush1.bf16.msra.mxu0 0
      %6029 = vmatprep.mubr.bf16.mxu0 0
      %6030 = vmatmul.mubr.bf16.gmra.mrb[0].mxu0 %v5995
      %v6031 = vpop.f32.mrb[0].mxu0
      %v6032 = vadd.f32 %v5989, %v6031
      %v6033 = vpop.f32.mrb[0].mxu0
      %v6034 = vpop.f32.mrb[0].mxu0
      %v6035 = vpop.f32.mrb[0].mxu0
      %6036 = vdwg.mxu0
      %6037 = vrot.lane.b32.xlu0 %v5727, 64
      %v6038 = vpop.permute.xlu0 %6037
      %6039 = vrot.lane.b32.xlu0 %v5728, 64
      %v6040 = vpop.permute.xlu0 %6039
      %v6042 = vsel %vm1699, %v6038, 0
      %v6045 = vsel %vm1699, %v6040, 0
      %6047 = vmatprep.subr.bf16.mxu0 0
      %6048 = vmatpush1.bf16.xpose.msra.mxu0 %v6045
      %6049 = vmatprep.subr.bf16.mxu0 0
      %6050 = vmatpush1.bf16.xpose.msra.mxu0 0
      %6051 = vmatprep.subr.bf16.mxu0 0
      %6052 = vmatpush1.bf16.xpose.msra.mxu0 0
      %6053 = vmatprep.subr.bf16.mxu0 0
      %6054 = vmatpush1.bf16.xpose.msra.mxu0 0
      %6055 = vmatprep.subr.bf16.mxu0 0
      %6056 = vmatpush1.bf16.xpose.msra.mxu0 0
      %6057 = vmatprep.subr.bf16.mxu0 0
      %6058 = vmatpush1.bf16.xpose.msra.mxu0 0
      %6059 = vmatprep.subr.bf16.mxu0 0
      %6060 = vmatpush1.bf16.xpose.msra.mxu0 0
      %6061 = vmatprep.subr.bf16.mxu0 0
      %6062 = vmatpush1.bf16.xpose.msra.mxu0 0
      %6063 = vmatprep.subr.bf16.mxu0 0
      %6064 = vmatpush1.bf16.xpose.msra.mxu0 0
      %6065 = vmatprep.subr.bf16.mxu0 0
      %6066 = vmatpush1.bf16.xpose.msra.mxu0 0
      %6067 = vmatprep.subr.bf16.mxu0 0
      %6068 = vmatpush1.bf16.xpose.msra.mxu0 0
      %6069 = vmatprep.subr.bf16.mxu0 0
      %6070 = vmatpush1.bf16.xpose.msra.mxu0 0
      %6071 = vmatprep.subr.bf16.mxu0 0
      %6072 = vmatpush1.bf16.xpose.msra.mxu0 0
      %6073 = vmatprep.subr.bf16.mxu0 0
      %6074 = vmatpush1.bf16.xpose.msra.mxu0 0
      %6075 = vmatprep.subr.bf16.mxu0 0
      %6076 = vmatpush1.bf16.xpose.msra.mxu0 0
      %6077 = vmatprep.subr.bf16.mxu0 0
      %6078 = vmatpush1.bf16.xpose.msra.mxu0 0
      %6079 = vmatprep.mubr.bf16.mxu0 0
      %6080 = vmatmul.mubr.bf16.gmra.mrb[0].mxu0 %v6042
      %v6081 = vpop.f32.mrb[0].mxu0
      %v6082 = vadd.f32 0.0, %v6081
      %v6083 = vpop.f32.mrb[0].mxu0
      %v6084 = vpop.f32.mrb[0].mxu0
      %v6085 = vpop.f32.mrb[0].mxu0
      %6086 = vdwg.mxu0
      %v6087 = vmul.f32 %v6082, 0.17677669
      %v6088 = vsel %vm1747, %v6087, -inf
      %6089 = vmax.xlane.f32.xlu0 %v6088
      %v6090 = vpop.xlane.xlu0 %6089
      %v6091 = vsub.f32 %v6087, %v6090
      %v6092 = vmul.f32 %v6091, 1.442695
      %v6093 = vpow.pop %v6092
      %v6094 = vsel %vm1747, %v6093, 0.0
      %6095 = vadd.xlane.f32.xlu0 %v6094
      %v6096 = vpop.xlane.xlu0 %6095
      %v6097 = vrcp.pop %v6096
      %v6098 = vmul.f32 %v6093, %v6097
      %v6099 = vpack.c.bf16 %v6098, %v6098
      %6100 = vrot.lane.b32.xlu0 %v5729, 64
      %v6101 = vpop.permute.xlu0 %6100
      %v6103 = vsel %vm1760, %v6099, 0
      %v6106 = vand.u32 %v6101, %v1767
      %6108 = vmatprep.subr.bf16.mxu0 0
      %6109 = vmatpush1.bf16.msra.mxu0 %v6106
      %6110 = vmatprep.subr.bf16.mxu0 0
      %6111 = vmatpush1.bf16.msra.mxu0 0
      %6112 = vmatprep.subr.bf16.mxu0 0
      %6113 = vmatpush1.bf16.msra.mxu0 0
      %6114 = vmatprep.subr.bf16.mxu0 0
      %6115 = vmatpush1.bf16.msra.mxu0 0
      %6116 = vmatprep.subr.bf16.mxu0 0
      %6117 = vmatpush1.bf16.msra.mxu0 0
      %6118 = vmatprep.subr.bf16.mxu0 0
      %6119 = vmatpush1.bf16.msra.mxu0 0
      %6120 = vmatprep.subr.bf16.mxu0 0
      %6121 = vmatpush1.bf16.msra.mxu0 0
      %6122 = vmatprep.subr.bf16.mxu0 0
      %6123 = vmatpush1.bf16.msra.mxu0 0
      %6124 = vmatprep.subr.bf16.mxu0 0
      %6125 = vmatpush1.bf16.msra.mxu0 0
      %6126 = vmatprep.subr.bf16.mxu0 0
      %6127 = vmatpush1.bf16.msra.mxu0 0
      %6128 = vmatprep.subr.bf16.mxu0 0
      %6129 = vmatpush1.bf16.msra.mxu0 0
      %6130 = vmatprep.subr.bf16.mxu0 0
      %6131 = vmatpush1.bf16.msra.mxu0 0
      %6132 = vmatprep.subr.bf16.mxu0 0
      %6133 = vmatpush1.bf16.msra.mxu0 0
      %6134 = vmatprep.subr.bf16.mxu0 0
      %6135 = vmatpush1.bf16.msra.mxu0 0
      %6136 = vmatprep.subr.bf16.mxu0 0
      %6137 = vmatpush1.bf16.msra.mxu0 0
      %6138 = vmatprep.subr.bf16.mxu0 0
      %6139 = vmatpush1.bf16.msra.mxu0 0
      %6140 = vmatprep.mubr.bf16.mxu0 0
      %6141 = vmatmul.mubr.bf16.gmra.mrb[0].mxu0 %v6103
      %v6142 = vpop.f32.mrb[0].mxu0
      %v6143 = vadd.f32 0.0, %v6142
      %v6144 = vpop.f32.mrb[0].mxu0
      %v6145 = vpop.f32.mrb[0].mxu0
      %v6146 = vpop.f32.mrb[0].mxu0
      %6147 = vdwg.mxu0
      %v6148 = vpack.c.bf16 %v6143, %v6143
      %v6150 = vsel %vm1699, %v6148, 0
      %6152 = vmatprep.subr.bf16.mxu0 0
      %6153 = vmatpush1.bf16.msra.mxu0 %v4798
      %6154 = vmatprep.subr.bf16.mxu0 0
      %6155 = vmatpush1.bf16.msra.mxu0 %v4799
      %6156 = vmatprep.subr.bf16.mxu0 0
      %6157 = vmatpush1.bf16.msra.mxu0 0
      %6158 = vmatprep.subr.bf16.mxu0 0
      %6159 = vmatpush1.bf16.msra.mxu0 0
      %6160 = vmatprep.subr.bf16.mxu0 0
      %6161 = vmatpush1.bf16.msra.mxu0 0
      %6162 = vmatprep.subr.bf16.mxu0 0
      %6163 = vmatpush1.bf16.msra.mxu0 0
      %6164 = vmatprep.subr.bf16.mxu0 0
      %6165 = vmatpush1.bf16.msra.mxu0 0
      %6166 = vmatprep.subr.bf16.mxu0 0
      %6167 = vmatpush1.bf16.msra.mxu0 0
      %6168 = vmatprep.subr.bf16.mxu0 0
      %6169 = vmatpush1.bf16.msra.mxu0 0
      %6170 = vmatprep.subr.bf16.mxu0 0
      %6171 = vmatpush1.bf16.msra.mxu0 0
      %6172 = vmatprep.subr.bf16.mxu0 0
      %6173 = vmatpush1.bf16.msra.mxu0 0
      %6174 = vmatprep.subr.bf16.mxu0 0
      %6175 = vmatpush1.bf16.msra.mxu0 0
      %6176 = vmatprep.subr.bf16.mxu0 0
      %6177 = vmatpush1.bf16.msra.mxu0 0
      %6178 = vmatprep.subr.bf16.mxu0 0
      %6179 = vmatpush1.bf16.msra.mxu0 0
      %6180 = vmatprep.subr.bf16.mxu0 0
      %6181 = vmatpush1.bf16.msra.mxu0 0
      %6182 = vmatprep.subr.bf16.mxu0 0
      %6183 = vmatpush1.bf16.msra.mxu0 0
      %6184 = vmatprep.mubr.bf16.mxu0 0
      %6185 = vmatmul.mubr.bf16.gmra.mrb[0].mxu0 %v6150
      %v6186 = vpop.f32.mrb[0].mxu0
      %v6187 = vadd.f32 0.0, %v6186
      %v6188 = vpop.f32.mrb[0].mxu0
      %v6189 = vpop.f32.mrb[0].mxu0
      %v6190 = vpop.f32.mrb[0].mxu0
      %6191 = vdwg.mxu0
      %v6192 = vadd.f32 %v6032, %v6187
      %6193 = vrot.lane.b32.xlu0 %v5727, 32
      %v6194 = vpop.permute.xlu0 %6193
      %6195 = vrot.lane.b32.xlu0 %v5728, 32
      %v6196 = vpop.permute.xlu0 %6195
      %v6198 = vsel %vm1699, %v6194, 0
      %v6201 = vsel %vm1699, %v6196, 0
      %6203 = vmatprep.subr.bf16.mxu0 0
      %6204 = vmatpush1.bf16.xpose.msra.mxu0 %v6201
      %6205 = vmatprep.subr.bf16.mxu0 0
      %6206 = vmatpush1.bf16.xpose.msra.mxu0 0
      %6207 = vmatprep.subr.bf16.mxu0 0
      %6208 = vmatpush1.bf16.xpose.msra.mxu0 0
      %6209 = vmatprep.subr.bf16.mxu0 0
      %6210 = vmatpush1.bf16.xpose.msra.mxu0 0
      %6211 = vmatprep.subr.bf16.mxu0 0
      %6212 = vmatpush1.bf16.xpose.msra.mxu0 0
      %6213 = vmatprep.subr.bf16.mxu0 0
      %6214 = vmatpush1.bf16.xpose.msra.mxu0 0
      %6215 = vmatprep.subr.bf16.mxu0 0
      %6216 = vmatpush1.bf16.xpose.msra.mxu0 0
      %6217 = vmatprep.subr.bf16.mxu0 0
      %6218 = vmatpush1.bf16.xpose.msra.mxu0 0
      %6219 = vmatprep.subr.bf16.mxu0 0
      %6220 = vmatpush1.bf16.xpose.msra.mxu0 0
      %6221 = vmatprep.subr.bf16.mxu0 0
      %6222 = vmatpush1.bf16.xpose.msra.mxu0 0
      %6223 = vmatprep.subr.bf16.mxu0 0
      %6224 = vmatpush1.bf16.xpose.msra.mxu0 0
      %6225 = vmatprep.subr.bf16.mxu0 0
      %6226 = vmatpush1.bf16.xpose.msra.mxu0 0
      %6227 = vmatprep.subr.bf16.mxu0 0
      %6228 = vmatpush1.bf16.xpose.msra.mxu0 0
      %6229 = vmatprep.subr.bf16.mxu0 0
      %6230 = vmatpush1.bf16.xpose.msra.mxu0 0
      %6231 = vmatprep.subr.bf16.mxu0 0
      %6232 = vmatpush1.bf16.xpose.msra.mxu0 0
      %6233 = vmatprep.subr.bf16.mxu0 0
      %6234 = vmatpush1.bf16.xpose.msra.mxu0 0
      %6235 = vmatprep.mubr.bf16.mxu0 0
      %6236 = vmatmul.mubr.bf16.gmra.mrb[0].mxu0 %v6198
      %v6237 = vpop.f32.mrb[0].mxu0
      %v6238 = vadd.f32 0.0, %v6237
      %v6239 = vpop.f32.mrb[0].mxu0
      %v6240 = vpop.f32.mrb[0].mxu0
      %v6241 = vpop.f32.mrb[0].mxu0
      %6242 = vdwg.mxu0
      %v6243 = vmul.f32 %v6238, 0.17677669
      %v6244 = vsel %vm1747, %v6243, -inf
      %6245 = vmax.xlane.f32.xlu0 %v6244
      %v6246 = vpop.xlane.xlu0 %6245
      %v6247 = vsub.f32 %v6243, %v6246
      %v6248 = vmul.f32 %v6247, 1.442695
      %v6249 = vpow.pop %v6248
      %v6250 = vsel %vm1747, %v6249, 0.0
      %6251 = vadd.xlane.f32.xlu0 %v6250
      %v6252 = vpop.xlane.xlu0 %6251
      %v6253 = vrcp.pop %v6252
      %v6254 = vmul.f32 %v6249, %v6253
      %v6255 = vpack.c.bf16 %v6254, %v6254
      %6256 = vrot.lane.b32.xlu0 %v5729, 32
      %v6257 = vpop.permute.xlu0 %6256
      %v6259 = vsel %vm1760, %v6255, 0
      %v6262 = vand.u32 %v6257, %v1767
      %6264 = vmatprep.subr.bf16.mxu0 0
      %6265 = vmatpush1.bf16.msra.mxu0 %v6262
      %6266 = vmatprep.subr.bf16.mxu0 0
      %6267 = vmatpush1.bf16.msra.mxu0 0
      %6268 = vmatprep.subr.bf16.mxu0 0
      %6269 = vmatpush1.bf16.msra.mxu0 0
      %6270 = vmatprep.subr.bf16.mxu0 0
      %6271 = vmatpush1.bf16.msra.mxu0 0
      %6272 = vmatprep.subr.bf16.mxu0 0
      %6273 = vmatpush1.bf16.msra.mxu0 0
      %6274 = vmatprep.subr.bf16.mxu0 0
      %6275 = vmatpush1.bf16.msra.mxu0 0
      %6276 = vmatprep.subr.bf16.mxu0 0
      %6277 = vmatpush1.bf16.msra.mxu0 0
      %6278 = vmatprep.subr.bf16.mxu0 0
      %6279 = vmatpush1.bf16.msra.mxu0 0
      %6280 = vmatprep.subr.bf16.mxu0 0
      %6281 = vmatpush1.bf16.msra.mxu0 0
      %6282 = vmatprep.subr.bf16.mxu0 0
      %6283 = vmatpush1.bf16.msra.mxu0 0
      %6284 = vmatprep.subr.bf16.mxu0 0
      %6285 = vmatpush1.bf16.msra.mxu0 0
      %6286 = vmatprep.subr.bf16.mxu0 0
      %6287 = vmatpush1.bf16.msra.mxu0 0
      %6288 = vmatprep.subr.bf16.mxu0 0
      %6289 = vmatpush1.bf16.msra.mxu0 0
      %6290 = vmatprep.subr.bf16.mxu0 0
      %6291 = vmatpush1.bf16.msra.mxu0 0
      %6292 = vmatprep.subr.bf16.mxu0 0
      %6293 = vmatpush1.bf16.msra.mxu0 0
      %6294 = vmatprep.subr.bf16.mxu0 0
      %6295 = vmatpush1.bf16.msra.mxu0 0
      %6296 = vmatprep.mubr.bf16.mxu0 0
      %6297 = vmatmul.mubr.bf16.gmra.mrb[0].mxu0 %v6259
      %v6298 = vpop.f32.mrb[0].mxu0
      %v6299 = vadd.f32 0.0, %v6298
      %v6300 = vpop.f32.mrb[0].mxu0
      %v6301 = vpop.f32.mrb[0].mxu0
      %v6302 = vpop.f32.mrb[0].mxu0
      %6303 = vdwg.mxu0
      %v6304 = vpack.c.bf16 %v6299, %v6299
      %v6306 = vsel %vm1699, %v6304, 0
      %6308 = vmatprep.subr.bf16.mxu0 0
      %6309 = vmatpush1.bf16.msra.mxu0 %v4966
      %6310 = vmatprep.subr.bf16.mxu0 0
      %6311 = vmatpush1.bf16.msra.mxu0 %v4967
      %6312 = vmatprep.subr.bf16.mxu0 0
      %6313 = vmatpush1.bf16.msra.mxu0 0
      %6314 = vmatprep.subr.bf16.mxu0 0
      %6315 = vmatpush1.bf16.msra.mxu0 0
      %6316 = vmatprep.subr.bf16.mxu0 0
      %6317 = vmatpush1.bf16.msra.mxu0 0
      %6318 = vmatprep.subr.bf16.mxu0 0
      %6319 = vmatpush1.bf16.msra.mxu0 0
      %6320 = vmatprep.subr.bf16.mxu0 0
      %6321 = vmatpush1.bf16.msra.mxu0 0
      %6322 = vmatprep.subr.bf16.mxu0 0
      %6323 = vmatpush1.bf16.msra.mxu0 0
      %6324 = vmatprep.subr.bf16.mxu0 0
      %6325 = vmatpush1.bf16.msra.mxu0 0
      %6326 = vmatprep.subr.bf16.mxu0 0
      %6327 = vmatpush1.bf16.msra.mxu0 0
      %6328 = vmatprep.subr.bf16.mxu0 0
      %6329 = vmatpush1.bf16.msra.mxu0 0
      %6330 = vmatprep.subr.bf16.mxu0 0
      %6331 = vmatpush1.bf16.msra.mxu0 0
      %6332 = vmatprep.subr.bf16.mxu0 0
      %6333 = vmatpush1.bf16.msra.mxu0 0
      %6334 = vmatprep.subr.bf16.mxu0 0
      %6335 = vmatpush1.bf16.msra.mxu0 0
      %6336 = vmatprep.subr.bf16.mxu0 0
      %6337 = vmatpush1.bf16.msra.mxu0 0
      %6338 = vmatprep.subr.bf16.mxu0 0
      %6339 = vmatpush1.bf16.msra.mxu0 0
      %6340 = vmatprep.mubr.bf16.mxu0 0
      %6341 = vmatmul.mubr.bf16.gmra.mrb[0].mxu0 %v6306
      %v6342 = vpop.f32.mrb[0].mxu0
      %v6343 = vadd.f32 0.0, %v6342
      %v6344 = vpop.f32.mrb[0].mxu0
      %v6345 = vpop.f32.mrb[0].mxu0
      %v6346 = vpop.f32.mrb[0].mxu0
      %6347 = vdwg.mxu0
      %v6348 = vadd.f32 %v6192, %v6343
      %v6349 = vadd.f32 %v5629, %v6348
      %v6350 = vadd.f32 %v6349, %v5019
      %v6351 = vsel %vm1442, %v6350, 0.0
      %6352 = vadd.xlane.f32.xlu0 %v6351
      %v6353 = vpop.xlane.xlu0 %6352
      %v6354 = vmul.f32 %v6353, %v1029
      %v6355 = vsub.f32 %v6350, %v6354
      %v6356 = vmul.f32 %v6355, %v6355
      %v6357 = vsel %vm1442, %v6356, 0.0
      %6358 = vadd.xlane.f32.xlu0 %v6357
      %v6359 = vpop.xlane.xlu0 %6358
      %v6360 = vmul.f32 %v6359, %v1029
      %v6361 = vadd.f32 %v6360, 1e-05
      %v6362 = vrsqrt.pop %v6361
      %v6363 = vmul.f32 %v6355, %v6362
      %v6364 = vmul.f32 %v6363, %v5039
      %v6365 = vadd.f32 %v6364, %v5046
      %v6366 = vpack.c.bf16 %v6365, %v6365
      %6367 = vmatprep.subr.bf16.mxu0 %v5168
      %6368 = vmatpush1.bf16.msra.mxu0 %v5167
      %6369 = vmatprep.subr.bf16.mxu0 %v5172
      %6370 = vmatpush1.bf16.msra.mxu0 %v5171
      %6371 = vmatprep.subr.bf16.mxu0 %v5176
      %6372 = vmatpush1.bf16.msra.mxu0 %v5175
      %6373 = vmatprep.subr.bf16.mxu0 %v5180
      %6374 = vmatpush1.bf16.msra.mxu0 %v5179
      %6375 = vmatprep.subr.bf16.mxu0 %v5184
      %6376 = vmatpush1.bf16.msra.mxu0 %v5183
      %6377 = vmatprep.subr.bf16.mxu0 %v5188
      %6378 = vmatpush1.bf16.msra.mxu0 %v5187
      %6379 = vmatprep.subr.bf16.mxu0 %v5192
      %6380 = vmatpush1.bf16.msra.mxu0 %v5191
      %6381 = vmatprep.subr.bf16.mxu0 %v5196
      %6382 = vmatpush1.bf16.msra.mxu0 %v5195
      %6383 = vmatprep.subr.bf16.mxu0 0
      %6384 = vmatpush1.bf16.msra.mxu0 0
      %6385 = vmatprep.subr.bf16.mxu0 0
      %6386 = vmatpush1.bf16.msra.mxu0 0
      %6387 = vmatprep.subr.bf16.mxu0 0
      %6388 = vmatpush1.bf16.msra.mxu0 0
      %6389 = vmatprep.subr.bf16.mxu0 0
      %6390 = vmatpush1.bf16.msra.mxu0 0
      %6391 = vmatprep.subr.bf16.mxu0 0
      %6392 = vmatpush1.bf16.msra.mxu0 0
      %6393 = vmatprep.subr.bf16.mxu0 0
      %6394 = vmatpush1.bf16.msra.mxu0 0
      %6395 = vmatprep.subr.bf16.mxu0 0
      %6396 = vmatpush1.bf16.msra.mxu0 0
      %6397 = vmatprep.subr.bf16.mxu0 0
      %6398 = vmatpush1.bf16.msra.mxu0 0
      %6399 = vmatprep.mubr.bf16.mxu0 0
      %6400 = vmatmul.mubr.bf16.gmra.mrb[0].mxu0 %v6366
      %v6401 = vpop.f32.mrb[0].mxu0
      %v6402 = vadd.f32 %v5054, %v6401
      %v6403 = vpop.f32.mrb[0].mxu0
      %v6404 = vadd.f32 %v5058, %v6403
      %v6405 = vpop.f32.mrb[0].mxu0
      %v6406 = vpop.f32.mrb[0].mxu0
      %6407 = vdwg.mxu0
      %6408 = vmatprep.subr.bf16.mxu0 %v5170
      %6409 = vmatpush1.bf16.msra.mxu0 %v5169
      %6410 = vmatprep.subr.bf16.mxu0 %v5174
      %6411 = vmatpush1.bf16.msra.mxu0 %v5173
      %6412 = vmatprep.subr.bf16.mxu0 %v5178
      %6413 = vmatpush1.bf16.msra.mxu0 %v5177
      %6414 = vmatprep.subr.bf16.mxu0 %v5182
      %6415 = vmatpush1.bf16.msra.mxu0 %v5181
      %6416 = vmatprep.subr.bf16.mxu0 %v5186
      %6417 = vmatpush1.bf16.msra.mxu0 %v5185
      %6418 = vmatprep.subr.bf16.mxu0 %v5190
      %6419 = vmatpush1.bf16.msra.mxu0 %v5189
      %6420 = vmatprep.subr.bf16.mxu0 %v5194
      %6421 = vmatpush1.bf16.msra.mxu0 %v5193
      %6422 = vmatprep.subr.bf16.mxu0 %v5198
      %6423 = vmatpush1.bf16.msra.mxu0 %v5197
      %6424 = vmatprep.subr.bf16.mxu0 0
      %6425 = vmatpush1.bf16.msra.mxu0 0
      %6426 = vmatprep.subr.bf16.mxu0 0
      %6427 = vmatpush1.bf16.msra.mxu0 0
      %6428 = vmatprep.subr.bf16.mxu0 0
      %6429 = vmatpush1.bf16.msra.mxu0 0
      %6430 = vmatprep.subr.bf16.mxu0 0
      %6431 = vmatpush1.bf16.msra.mxu0 0
      %6432 = vmatprep.subr.bf16.mxu0 0
      %6433 = vmatpush1.bf16.msra.mxu0 0
      %6434 = vmatprep.subr.bf16.mxu0 0
      %6435 = vmatpush1.bf16.msra.mxu0 0
      %6436 = vmatprep.subr.bf16.mxu0 0
      %6437 = vmatpush1.bf16.msra.mxu0 0
      %6438 = vmatprep.subr.bf16.mxu0 0
      %6439 = vmatpush1.bf16.msra.mxu0 0
      %6440 = vmatprep.mubr.bf16.mxu0 0
      %6441 = vmatmul.mubr.bf16.gmra.mrb[0].mxu0 %v6366
      %v6442 = vpop.f32.mrb[0].mxu0
      %v6443 = vadd.f32 %v5062, %v6442
      %v6444 = vpop.f32.mrb[0].mxu0
      %v6445 = vadd.f32 %v5066, %v6444
      %v6446 = vpop.f32.mrb[0].mxu0
      %v6447 = vpop.f32.mrb[0].mxu0
      %6448 = vdwg.mxu0
      %v6449 = vmul.f32 %v6402, 1.702
      %v6450 = vmul.f32 %v6404, 1.702
      %v6451 = vmul.f32 %v6443, 1.702
      %v6452 = vmul.f32 %v6445, 1.702
      %v6453 = vxor.u32 %v6449, 2147483648
      %v6454 = vxor.u32 %v6450, 2147483648
      %v6455 = vxor.u32 %v6451, 2147483648
      %v6456 = vxor.u32 %v6452, 2147483648
      %v6457 = vmul.f32 %v6453, 1.442695
      %v6458 = vpow.pop %v6457
      %v6459 = vmul.f32 %v6454, 1.442695
      %v6460 = vpow.pop %v6459
      %v6461 = vmul.f32 %v6455, 1.442695
      %v6462 = vpow.pop %v6461
      %v6463 = vmul.f32 %v6456, 1.442695
      %v6464 = vpow.pop %v6463
      %v6465 = vadd.f32 %v6458, 1.0
      %v6466 = vadd.f32 %v6460, 1.0
      %v6467 = vadd.f32 %v6462, 1.0
      %v6468 = vadd.f32 %v6464, 1.0
      %v6469 = vrcp.pop %v6465
      %v6470 = vmul.f32 1.0, %v6469
      %v6471 = vrcp.pop %v6466
      %v6472 = vmul.f32 1.0, %v6471
      %v6473 = vrcp.pop %v6467
      %v6474 = vmul.f32 1.0, %v6473
      %v6475 = vrcp.pop %v6468
      %v6476 = vmul.f32 1.0, %v6475
      %v6477 = vmul.f32 %v6402, %v6470
      %v6478 = vmul.f32 %v6404, %v6472
      %v6479 = vmul.f32 %v6443, %v6474
      %v6480 = vmul.f32 %v6445, %v6476
      %v6481 = vpack.c.bf16 %v6477, %v6477
      %v6482 = vpack.c.bf16 %v6478, %v6478
      %v6483 = vpack.c.bf16 %v6479, %v6479
      %v6484 = vpack.c.bf16 %v6480, %v6480
      %6485 = vmatprep.subr.bf16.mxu0 0
      %6486 = vmatpush1.bf16.msra.mxu0 %v5483
      %6487 = vmatprep.subr.bf16.mxu0 0
      %6488 = vmatpush1.bf16.msra.mxu0 %v5484
      %6489 = vmatprep.subr.bf16.mxu0 0
      %6490 = vmatpush1.bf16.msra.mxu0 %v5485
      %6491 = vmatprep.subr.bf16.mxu0 0
      %6492 = vmatpush1.bf16.msra.mxu0 %v5486
      %6493 = vmatprep.subr.bf16.mxu0 0
      %6494 = vmatpush1.bf16.msra.mxu0 %v5487
      %6495 = vmatprep.subr.bf16.mxu0 0
      %6496 = vmatpush1.bf16.msra.mxu0 %v5488
      %6497 = vmatprep.subr.bf16.mxu0 0
      %6498 = vmatpush1.bf16.msra.mxu0 %v5489
      %6499 = vmatprep.subr.bf16.mxu0 0
      %6500 = vmatpush1.bf16.msra.mxu0 %v5490
      %6501 = vmatprep.subr.bf16.mxu0 0
      %6502 = vmatpush1.bf16.msra.mxu0 %v5491
      %6503 = vmatprep.subr.bf16.mxu0 0
      %6504 = vmatpush1.bf16.msra.mxu0 %v5492
      %6505 = vmatprep.subr.bf16.mxu0 0
      %6506 = vmatpush1.bf16.msra.mxu0 %v5493
      %6507 = vmatprep.subr.bf16.mxu0 0
      %6508 = vmatpush1.bf16.msra.mxu0 %v5494
      %6509 = vmatprep.subr.bf16.mxu0 0
      %6510 = vmatpush1.bf16.msra.mxu0 %v5495
      %6511 = vmatprep.subr.bf16.mxu0 0
      %6512 = vmatpush1.bf16.msra.mxu0 %v5496
      %6513 = vmatprep.subr.bf16.mxu0 0
      %6514 = vmatpush1.bf16.msra.mxu0 %v5497
      %6515 = vmatprep.subr.bf16.mxu0 0
      %6516 = vmatpush1.bf16.msra.mxu0 %v5498
      %6517 = vmatprep.mubr.bf16.mxu0 %v6482
      %6518 = vmatmul.mubr.bf16.gmra.mrb[0].mxu0 %v6481
      %v6519 = vpop.f32.mrb[0].mxu0
      %v6520 = vadd.f32 %v5353, %v6519
      %v6521 = vpop.f32.mrb[0].mxu0
      %v6522 = vpop.f32.mrb[0].mxu0
      %v6523 = vpop.f32.mrb[0].mxu0
      %6524 = vdwg.mxu0
      %6525 = vmatprep.subr.bf16.mxu0 0
      %6526 = vmatpush1.bf16.msra.mxu0 %v5499
      %6527 = vmatprep.subr.bf16.mxu0 0
      %6528 = vmatpush1.bf16.msra.mxu0 %v5500
      %6529 = vmatprep.subr.bf16.mxu0 0
      %6530 = vmatpush1.bf16.msra.mxu0 %v5501
      %6531 = vmatprep.subr.bf16.mxu0 0
      %6532 = vmatpush1.bf16.msra.mxu0 %v5502
      %6533 = vmatprep.subr.bf16.mxu0 0
      %6534 = vmatpush1.bf16.msra.mxu0 %v5503
      %6535 = vmatprep.subr.bf16.mxu0 0
      %6536 = vmatpush1.bf16.msra.mxu0 %v5504
      %6537 = vmatprep.subr.bf16.mxu0 0
      %6538 = vmatpush1.bf16.msra.mxu0 %v5505
      %6539 = vmatprep.subr.bf16.mxu0 0
      %6540 = vmatpush1.bf16.msra.mxu0 %v5506
      %6541 = vmatprep.subr.bf16.mxu0 0
      %6542 = vmatpush1.bf16.msra.mxu0 %v5507
      %6543 = vmatprep.subr.bf16.mxu0 0
      %6544 = vmatpush1.bf16.msra.mxu0 %v5508
      %6545 = vmatprep.subr.bf16.mxu0 0
      %6546 = vmatpush1.bf16.msra.mxu0 %v5509
      %6547 = vmatprep.subr.bf16.mxu0 0
      %6548 = vmatpush1.bf16.msra.mxu0 %v5510
      %6549 = vmatprep.subr.bf16.mxu0 0
      %6550 = vmatpush1.bf16.msra.mxu0 %v5511
      %6551 = vmatprep.subr.bf16.mxu0 0
      %6552 = vmatpush1.bf16.msra.mxu0 %v5512
      %6553 = vmatprep.subr.bf16.mxu0 0
      %6554 = vmatpush1.bf16.msra.mxu0 %v5513
      %6555 = vmatprep.subr.bf16.mxu0 0
      %6556 = vmatpush1.bf16.msra.mxu0 %v5514
      %6557 = vmatprep.mubr.bf16.mxu0 %v6484
      %6558 = vmatmul.mubr.bf16.gmra.mrb[0].mxu0 %v6483
      %v6559 = vpop.f32.mrb[0].mxu0
      %v6560 = vadd.f32 %v6520, %v6559
      %v6561 = vpop.f32.mrb[0].mxu0
      %v6562 = vpop.f32.mrb[0].mxu0
      %v6563 = vpop.f32.mrb[0].mxu0
      %6564 = vdwg.mxu0
      %v6565 = vadd.f32 %v6350, %v6560
      %6566 = vst [vmem:[%s1228] sm:$0x1f] %v6565
      %v6567 = vld [vmem:[%s1003] sm:$0x1]
      %v6568 = vld [vmem:[%s1006] sm:$0x1]
      %v6569 = vld [vmem:[%s1011] sm:$0xf]
      %v6570 = vld [vmem:[%s1011 + $0x4] sm:$0xf]
      %v6571 = vld [vmem:[%s1011 + $0x8] sm:$0xf]
      %v6572 = vld [vmem:[%s1011 + $0xc] sm:$0xf]
      %v6573 = vld [vmem:[%s1011 + $0x10] sm:$0xf]
      %v6574 = vld [vmem:[%s1011 + $0x14] sm:$0xf]
      %v6575 = vld [vmem:[%s1011 + $0x18] sm:$0xf]
      %v6576 = vld [vmem:[%s1011 + $0x1c] sm:$0xf]
      %v6577 = vld [vmem:[%s1011 + $0x20] sm:$0xf]
      %v6578 = vld [vmem:[%s1011 + $0x24] sm:$0xf]
      %v6579 = vld [vmem:[%s1011 + $0x28] sm:$0xf]
      %v6580 = vld [vmem:[%s1011 + $0x2c] sm:$0xf]
      %v6581 = vld [vmem:[%s1011 + $0x30] sm:$0xf]
      %v6582 = vld [vmem:[%s1011 + $0x34] sm:$0xf]
      %v6583 = vld [vmem:[%s1011 + $0x38] sm:$0xf]
      %v6584 = vld [vmem:[%s1011 + $0x3c] sm:$0xf]
      %v6585 = vld [vmem:[%s1014] sm:$0x1]
      %v6586 = vld [vmem:[#allocation2] sm:$0x1]
      %v6587 = vsel %vm1025, %v6586, 0.0
      %6588 = vadd.xlane.f32.xlu0 %v6587
      %v6589 = vpop.xlane.xlu0 %6588
      %v6590 = vmul.f32 %v6589, %v1029
      %v6591 = vsub.f32 %v6586, %v6590
      %v6592 = vmul.f32 %v6591, %v6591
      %v6593 = vsel %vm1025, %v6592, 0.0
      %6594 = vadd.xlane.f32.xlu0 %v6593
      %v6595 = vpop.xlane.xlu0 %6594
      %v6596 = vmul.f32 %v6595, %v1029
      %v6597 = vadd.f32 %v6596, 1e-05
      %v6598 = vrsqrt.pop %v6597
      %v6599 = vmul.f32 %v6591, %v6598
      %v6600 = vmul.f32 %v6599, %v6567
      %v6601 = vadd.f32 %v6600, %v6568
      %v6602 = vpack.c.bf16 %v6601, %v6601
      %v6619 = vunpack.c.l.b16 %v6569
      %v6620 = vunpack.c.l.b16 %v6570
      %v6621 = vunpack.c.l.b16 %v6571
      %v6622 = vunpack.c.l.b16 %v6572
      %v6623 = vunpack.c.l.b16 %v6573
      %v6624 = vunpack.c.l.b16 %v6574
      %v6625 = vunpack.c.l.b16 %v6575
      %v6626 = vunpack.c.l.b16 %v6576
      %v6627 = vunpack.c.l.b16 %v6577
      %v6628 = vunpack.c.l.b16 %v6578
      %v6629 = vunpack.c.l.b16 %v6579
      %v6630 = vunpack.c.l.b16 %v6580
      %v6631 = vunpack.c.l.b16 %v6581
      %v6632 = vunpack.c.l.b16 %v6582
      %v6633 = vunpack.c.l.b16 %v6583
      %v6634 = vunpack.c.l.b16 %v6584
      %v6635 = vpack.c.b16 %v6620, %v6619
      %v6636 = vpack.c.b16 %v6622, %v6621
      %v6637 = vpack.c.b16 %v6624, %v6623
      %v6638 = vpack.c.b16 %v6626, %v6625
      %v6639 = vpack.c.b16 %v6628, %v6627
      %v6640 = vpack.c.b16 %v6630, %v6629
      %v6641 = vpack.c.b16 %v6632, %v6631
      %v6642 = vpack.c.b16 %v6634, %v6633
      %6651 = vmatprep.subr.bf16.mxu0 0
      %6652 = vmatpush1.bf16.msra.mxu0 %v6635
      %6653 = vmatprep.subr.bf16.mxu0 0
      %6654 = vmatpush1.bf16.msra.mxu0 %v6636
      %6655 = vmatprep.subr.bf16.mxu0 0
      %6656 = vmatpush1.bf16.msra.mxu0 %v6637
      %6657 = vmatprep.subr.bf16.mxu0 0
      %6658 = vmatpush1.bf16.msra.mxu0 %v6638
      %6659 = vmatprep.subr.bf16.mxu0 0
      %6660 = vmatpush1.bf16.msra.mxu0 %v6639
      %6661 = vmatprep.subr.bf16.mxu0 0
      %6662 = vmatpush1.bf16.msra.mxu0 %v6640
      %6663 = vmatprep.subr.bf16.mxu0 0
      %6664 = vmatpush1.bf16.msra.mxu0 %v6641
      %6665 = vmatprep.subr.bf16.mxu0 0
      %6666 = vmatpush1.bf16.msra.mxu0 %v6642
      %6667 = vmatprep.subr.bf16.mxu0 0
      %6668 = vmatpush1.bf16.msra.mxu0 0
      %6669 = vmatprep.subr.bf16.mxu0 0
      %6670 = vmatpush1.bf16.msra.mxu0 0
      %6671 = vmatprep.subr.bf16.mxu0 0
      %6672 = vmatpush1.bf16.msra.mxu0 0
      %6673 = vmatprep.subr.bf16.mxu0 0
      %6674 = vmatpush1.bf16.msra.mxu0 0
      %6675 = vmatprep.subr.bf16.mxu0 0
      %6676 = vmatpush1.bf16.msra.mxu0 0
      %6677 = vmatprep.subr.bf16.mxu0 0
      %6678 = vmatpush1.bf16.msra.mxu0 0
      %6679 = vmatprep.subr.bf16.mxu0 0
      %6680 = vmatpush1.bf16.msra.mxu0 0
      %6681 = vmatprep.subr.bf16.mxu0 0
      %6682 = vmatpush1.bf16.msra.mxu0 0
      %6683 = vmatprep.mubr.bf16.mxu0 0
      %6684 = vmatmul.mubr.bf16.gmra.mrb[0].mxu0 %v6602
      %v6685 = vpop.f32.mrb[0].mxu0
      %v6686 = vadd.f32 %v6585, %v6685
      %v6687 = vpop.f32.mrb[0].mxu0
      %v6688 = vpop.f32.mrb[0].mxu0
      %v6689 = vpop.f32.mrb[0].mxu0
      %6690 = vdwg.mxu0
      %6691 = vst [vmem:[%s1018] sm:$0x1] %v6686
      %v6692 = vld [vmem:[%s1228] sm:$0x1]
      %v6693 = vsel %vm1025, %v6692, 0.0
      %6694 = vadd.xlane.f32.xlu0 %v6693
      %v6695 = vpop.xlane.xlu0 %6694
      %v6696 = vmul.f32 %v6695, %v1029
      %v6697 = vsub.f32 %v6692, %v6696
      %v6698 = vmul.f32 %v6697, %v6697
      %v6699 = vsel %vm1025, %v6698, 0.0
      %6700 = vadd.xlane.f32.xlu0 %v6699
      %v6701 = vpop.xlane.xlu0 %6700
      %v6702 = vmul.f32 %v6701, %v1029
      %v6703 = vadd.f32 %v6702, 1e-05
      %v6704 = vrsqrt.pop %v6703
      %v6705 = vmul.f32 %v6697, %v6704
      %v6706 = vmul.f32 %v6705, %v6567
      %v6707 = vadd.f32 %v6706, %v6568
      %v6708 = vpack.c.bf16 %v6707, %v6707
      %6709 = vmatprep.subr.bf16.mxu0 0
      %6710 = vmatpush1.bf16.msra.mxu0 %v6635
      %6711 = vmatprep.subr.bf16.mxu0 0
      %6712 = vmatpush1.bf16.msra.mxu0 %v6636
      %6713 = vmatprep.subr.bf16.mxu0 0
      %6714 = vmatpush1.bf16.msra.mxu0 %v6637
      %6715 = vmatprep.subr.bf16.mxu0 0
      %6716 = vmatpush1.bf16.msra.mxu0 %v6638
      %6717 = vmatprep.subr.bf16.mxu0 0
      %6718 = vmatpush1.bf16.msra.mxu0 %v6639
      %6719 = vmatprep.subr.bf16.mxu0 0
      %6720 = vmatpush1.bf16.msra.mxu0 %v6640
      %6721 = vmatprep.subr.bf16.mxu0 0
      %6722 = vmatpush1.bf16.msra.mxu0 %v6641
      %6723 = vmatprep.subr.bf16.mxu0 0
      %6724 = vmatpush1.bf16.msra.mxu0 %v6642
      %6725 = vmatprep.subr.bf16.mxu0 0
      %6726 = vmatpush1.bf16.msra.mxu0 0
      %6727 = vmatprep.subr.bf16.mxu0 0
      %6728 = vmatpush1.bf16.msra.mxu0 0
      %6729 = vmatprep.subr.bf16.mxu0 0
      %6730 = vmatpush1.bf16.msra.mxu0 0
      %6731 = vmatprep.subr.bf16.mxu0 0
      %6732 = vmatpush1.bf16.msra.mxu0 0
      %6733 = vmatprep.subr.bf16.mxu0 0
      %6734 = vmatpush1.bf16.msra.mxu0 0
      %6735 = vmatprep.subr.bf16.mxu0 0
      %6736 = vmatpush1.bf16.msra.mxu0 0
      %6737 = vmatprep.subr.bf16.mxu0 0
      %6738 = vmatpush1.bf16.msra.mxu0 0
      %6739 = vmatprep.subr.bf16.mxu0 0
      %6740 = vmatpush1.bf16.msra.mxu0 0
      %6741 = vmatprep.mubr.bf16.mxu0 0
      %6742 = vmatmul.mubr.bf16.gmra.mrb[0].mxu0 %v6708
      %v6743 = vpop.f32.mrb[0].mxu0
      %v6744 = vadd.f32 %v6585, %v6743
      %v6745 = vpop.f32.mrb[0].mxu0
      %v6746 = vpop.f32.mrb[0].mxu0
      %v6747 = vpop.f32.mrb[0].mxu0
      %6748 = vdwg.mxu0
      %6749 = vst [vmem:[%s1018 + $0x1] sm:$0x1] %v6744
      %p6750 = scmp.lt.s32.totalorder %s33, 2
      %s6751 = scalar_select %p6750, %s33, 2
      %s6752 = smul.addr %s6751, 2
      %s6753 = scalar_lea.vmem %s22, %s6752
      // Predicated region
      $region109: #{svgd_forward.1} parent=107 // pred_check
        %p6754 = pneg %p618
      $region110: #{svgd_forward.1} parent=107 // pred_check_branch
        %6756 = sbr.rel (%p6754) target = $region112
      $region111: #{svgd_forward.1} parent=107 // pred_region
        _
      $region112: #{svgd_forward.1} parent=107 // pred_fallthru
        _
    $region108: #{svgd_forward.1} parent=5 // pred_fallthru
      _
    %p6757 = scmp.le.s32.totalorder 2, %s28
    // Predicated region
    $region113: #{svgd_forward.1} parent=5 // pred_check
      %p6758 = pneg %p6757
    $region114: #{svgd_forward.1} parent=5 // pred_check_branch
      %6760 = sbr.rel (%p6758) target = $region116
    $region115: #{svgd_forward.1} parent=5 // pred_region
      %s6761 = ssub.s32 %s28, 2
      // Predicated region
      $region117: #{svgd_forward.1} parent=115 // pred_check
        %p6762 = pneg %p624
      $region118: #{svgd_forward.1} parent=115 // pred_check_branch
        %6764 = sbr.rel (%p6762) target = $region120
      $region119: #{svgd_forward.1} parent=115 // pred_region
        %p6765 = scmp.lt.s32.totalorder %s34, 2
        %s6766 = scalar_select %p6765, %s34, 2
        %s6767 = smul.addr %s6766, 2
        %s6768 = scalar_lea.vmem %s22, %s6767
      $region120: #{svgd_forward.1} parent=115 // pred_fallthru
        _
    $region116: #{svgd_forward.1} parent=5 // pred_fallthru
      _
  $region6: #{svgd_forward.1} parent=0 // loop_footer
    %s32 = sadd.s32 1, %s28
  $region7: #{svgd_forward.1} parent=0 // loop_footer_branch
    %27 = sbr.rel target = $region3
  $region8: #{svgd_forward.1} parent=0 // loop_exit
    _

</llo_original>
